<compile_context>
chip_gen: v7x
topology: tpu7x:2x2x1
jax: 0.10.0
libtpu: 0.0.40
codegen_flags: <defaults>
</compile_context>

<pallas_src>
import functools

import jax
import jax.numpy as jnp
import numpy as np
from jax.experimental import pallas as pl
from jax.experimental.pallas import tpu as pltpu

# Constants hard-coded by ResNetWSL.forward (ResNet-50 backbone, 448x448 inputs):
NUM_FTRS = 2048              # model.fc.in_features; the 2047-fold cat -> 2048 channels
HW_SIDE = 14                 # GAP = nn.AvgPool2d(14)
S = HW_SIDE * HW_SIDE        # 196 flattened spatial positions (lane axis in the kernel)
NUM_CLASSES = 4
NUM_MAPS = 4
K = NUM_CLASSES * NUM_MAPS   # downconv output channels
P = 3 * NUM_CLASSES          # fused projection rows: [pooled-downconv | W1 | W2]


def _wsl_kernel(block_b, x_ref, w_ref, bmc_ref, bc_ref, mc_ref, m_ref, vo_ref):
    """One grid step = block_b samples, each in native channel-major (C, S) layout."""
    inv_s = 1.0 / float(S)
    inv_cls = 1.0 / float(NUM_CLASSES)
    w = w_ref[...]            # (3*ncls, C)  fused stationary weights, f32
    bmc = bmc_ref[...]        # (ncls, 1)    class-pooled downconv bias
    bc = bc_ref[...]          # (ncls, 1)    classifier bias

    for b in range(block_b):                   # short static loop, per-sample live ranges
        xb = x_ref[b]                          # (C, S) f32, streamed into the MXU
        # rows [0:ncls)       -> class-wise-pooled downconv (m_c minus bias)
        # rows [ncls:2*ncls)  -> W1 @ x   (classifier half acting on x_ori)
        # rows [2*ncls:3*ncls)-> W2 @ x   (classifier half acting on u = m * x_ori)
        y = jnp.dot(w, xb, preferred_element_type=jnp.float32)    # (3*ncls, S)

        m_c = y[:NUM_CLASSES, :] + bmc                            # (ncls, S)
        p1 = y[NUM_CLASSES:2 * NUM_CLASSES, :]                    # (ncls, S)
        p2 = y[2 * NUM_CLASSES:, :]                               # (ncls, S)

        v = jnp.sum(m_c, axis=1, keepdims=True) * inv_s           # (ncls, 1)  GAP+pool
        m = jnp.sum(m_c * v, axis=0, keepdims=True) * inv_cls     # (1, S)
        # output = W1 @ GAP(x_ori) + W2 @ GAP(m * x_ori) + b = mean_s(p1 + m*p2) + b
        out = jnp.sum(p1 + m * p2, axis=1, keepdims=True) * inv_s + bc   # (ncls, 1)

        mc_ref[b] = m_c                        # lane-dense, class-major store
        m_ref[b] = m                           # lane-dense store
        vo_ref[b, :NUM_CLASSES] = v            # merged tiny output: [v ; output]
        vo_ref[b, NUM_CLASSES:] = out


def _vmem_capacity_bytes():
    try:
        info = pltpu.get_tpu_info()
        return int(getattr(info, "vmem_capacity_bytes", 64 * 1024 * 1024))
    except Exception:
        return 64 * 1024 * 1024


def _pick_block_b(n):
    """Samples per grid step.

    Big enough to amortize the ~0.35us/step pipeline overhead, small enough for the
    double-buffered f32 feature slabs to fit scoped VMEM (<=8 on 64 MiB parts like v7x,
    <=16 on 128 MiB parts like v5e/v6e).  Prefer a divisor of n (avoids a batch-padding
    copy of the dominant tensor) and keep >=2 grid steps (v7x has 2 TensorCores).
    """
    cap = 16 if _vmem_capacity_bytes() >= 100 * 1024 * 1024 else 8
    if n >= 2:
        cap = min(cap, max(1, n // 2))         # keep at least 2 grid steps
    cap = max(1, min(cap, n))
    best = 1
    for b in range(1, cap + 1):                # largest divisor of n within the cap
        if n % b == 0:
            best = b
    return best if 2 * best >= cap else cap    # pad the batch only if divisors are tiny


@functools.partial(jax.jit, static_argnames=("block_b",))
def _forward_impl(x_ori_nchw, w_down, b_down, w_cls, b_cls, *, block_b):
    N, C, H, W = x_ori_nchw.shape
    assert C == NUM_FTRS and H == HW_SIDE and W == HW_SIDE

    # Native layout: (N, C, H, W) -> (N, C, S) is a free contiguous reshape (no copy).
    x = x_ori_nchw.reshape(N, C, S)
    n_pad = ((N + block_b - 1) // block_b) * block_b
    if n_pad != N:                             # only hit when no good divisor of N exists
        x = jnp.pad(x, ((0, n_pad - N), (0, 0), (0, 0)))

    # Fold ClassWisePool(num_maps) + 1x1 downconv + both classifier halves into one
    # stationary (3*ncls, C) weight so a single skinny matmul per sample does all of
    # the 2048-deep contraction work on the MXU.
    pool_t = (jnp.repeat(jnp.eye(NUM_CLASSES, dtype=jnp.float32), NUM_MAPS, axis=0)
              * (1.0 / NUM_MAPS))                                     # (K, ncls)
    wmc = pool_t.T @ w_down.astype(jnp.float32)                       # (ncls, C)
    bmc = (pool_t.T @ b_down.astype(jnp.float32)).reshape(NUM_CLASSES, 1)
    wc = w_cls.astype(jnp.float32)                                    # (ncls, 2C)
    w_all = jnp.concatenate([wmc, wc[:, :NUM_FTRS], wc[:, NUM_FTRS:]], axis=0)  # (3*ncls, C)
    bc = b_cls.astype(jnp.float32).reshape(NUM_CLASSES, 1)

    grid = (n_pad // block_b,)
    kernel = functools.partial(_wsl_kernel, block_b)

    slab_bytes = NUM_FTRS * S * 4                                     # f32 per-sample slab
    vmem_limit = int(min(2 * block_b * slab_bytes + 4 * 1024 * 1024, 112 * 1024 * 1024))
    vmem_limit = max(vmem_limit, 32 * 1024 * 1024)

    cost = pl.CostEstimate(
        flops=2 * n_pad * S * NUM_FTRS * P,
        transcendentals=0,
        bytes_accessed=(n_pad * NUM_FTRS * S * 4            # f32 feature map, read once
                        + P * NUM_FTRS * 4                  # fused weights
                        + n_pad * (NUM_CLASSES + 1) * S * 4 # m_c + m
                        + n_pad * 2 * NUM_CLASSES * 4))     # v + output

    mc_out, m_out, vo_out = pl.pallas_call(
        kernel,
        out_shape=(
            jax.ShapeDtypeStruct((n_pad, NUM_CLASSES, S), jnp.float32),      # m_c (class-major)
            jax.ShapeDtypeStruct((n_pad, 1, S), jnp.float32),                # m
            jax.ShapeDtypeStruct((n_pad, 2 * NUM_CLASSES, 1), jnp.float32),  # [v ; output]
        ),
        grid_spec=pltpu.PrefetchScalarGridSpec(
            num_scalar_prefetch=0,
            grid=grid,
            in_specs=[
                pl.BlockSpec((block_b, NUM_FTRS, S), lambda n: (n, 0, 0)),   # native slab
                pl.BlockSpec((P, NUM_FTRS), lambda n: (0, 0)),               # fused weights
                pl.BlockSpec((NUM_CLASSES, 1), lambda n: (0, 0)),            # pooled bias
                pl.BlockSpec((NUM_CLASSES, 1), lambda n: (0, 0)),            # classifier bias
            ],
            out_specs=[
                pl.BlockSpec((block_b, NUM_CLASSES, S), lambda n: (n, 0, 0)),
                pl.BlockSpec((block_b, 1, S), lambda n: (n, 0, 0)),
                pl.BlockSpec((block_b, 2 * NUM_CLASSES, 1), lambda n: (n, 0, 0)),
            ],
        ),
        compiler_params=pltpu.CompilerParams(
            dimension_semantics=("parallel",),     # batch blocks are independent (v7x 2 TCs)
            vmem_limit_bytes=vmem_limit),
        cost_estimate=cost,
    )(x, w_all, bmc, bc)

    v = vo_out[:N, :NUM_CLASSES, 0]                                   # (N, ncls)
    output = vo_out[:N, NUM_CLASSES:, 0]                              # (N, ncls)
    m = m_out[:N].reshape(N, 1, HW_SIDE, HW_SIDE)                     # (N, 1, 14, 14)
    m_c = mc_out[:N].reshape(N, NUM_CLASSES, HW_SIDE, HW_SIDE)        # (N, ncls, 14, 14)
    return v, output, m, m_c


def resnet_wsl_forward(x_ori_nchw, w_down, b_down, w_cls, b_cls):
    """Pallas implementation of ResNetWSL.forward starting from the feature map."""
    block_b = _pick_block_b(int(x_ori_nchw.shape[0]))
    return _forward_impl(x_ori_nchw, w_down, b_down, w_cls, b_cls, block_b=block_b)


def resnet_wsl_reference(x_ori, w_down, b_down, w_cls, b_cls):
    """Plain-JAX reference matching the PyTorch forward (from x_ori onward)."""
    N = x_ori.shape[0]
    hi = jax.lax.Precision.HIGHEST
    f2 = jnp.einsum('kc,nchw->nkhw', w_down, x_ori, precision=hi) + b_down[None, :, None, None]
    gap = jnp.mean(f2, axis=(2, 3))                                          # (N, K)
    v = gap.reshape(N, NUM_CLASSES, NUM_MAPS).mean(axis=2)                   # (N, ncls)
    m_c = f2.reshape(N, NUM_CLASSES, NUM_MAPS, HW_SIDE, HW_SIDE).mean(axis=2)
    weighted = m_c * v[:, :, None, None]
    m = weighted.mean(axis=1, keepdims=True)                                 # (N,1,14,14)
    u = m * x_ori                                                            # cat(m x2048) * x_ori
    f_u = jnp.concatenate([x_ori, u], axis=1)                                # (N,4096,14,14)
    d = jnp.mean(f_u, axis=(2, 3))                                           # (N,4096)
    output = jnp.dot(d, w_cls.T, precision=hi) + b_cls
    return v, output, m, m_c


if __name__ == "__main__":
    key = jax.random.PRNGKey(0)
    k1, k2, k3, k4, k5 = jax.random.split(key, 5)
    # N=10 exercises multi-sample blocks and a 2-step grid (block_b=5 divides 10 -> no pad).
    N = 10

    # TODO(synk): the ResNet-50 backbone `self.features` is an externally supplied
    # pretrained submodule; the kernel consumes its (N, 2048, 14, 14) feature map
    # directly instead of re-implementing the backbone.
    x_ori = jax.random.normal(k1, (N, NUM_FTRS, HW_SIDE, HW_SIDE), jnp.float32)

    # Deterministic synthetic parameters (downconv 1x1 conv + Linear(4096, ncls)).
    w_down = 0.02 * jax.random.normal(k2, (K, NUM_FTRS), jnp.float32)
    b_down = 0.01 * jax.random.normal(k3, (K,), jnp.float32)
    w_cls = 0.02 * jax.random.normal(k4, (NUM_CLASSES, 2 * NUM_FTRS), jnp.float32)
    b_cls = 0.01 * jax.random.normal(k5, (NUM_CLASSES,), jnp.float32)

    v, output, m, m_c = jax.block_until_ready(
        resnet_wsl_forward(x_ori, w_down, b_down, w_cls, b_cls))

    # Tolerance absorbs MXU matmul precision differences over the 2048-deep contraction.
    v_r, out_r, m_r, mc_r = resnet_wsl_reference(x_ori, w_down, b_down, w_cls, b_cls)
    np.testing.assert_allclose(np.asarray(v), np.asarray(v_r), rtol=2e-2, atol=2e-2)
    np.testing.assert_allclose(np.asarray(output), np.asarray(out_r), rtol=2e-2, atol=2e-2)
    np.testing.assert_allclose(np.asarray(m), np.asarray(m_r), rtol=2e-2, atol=2e-2)
    np.testing.assert_allclose(np.asarray(m_c), np.asarray(mc_r), rtol=2e-2, atol=2e-2)

    assert v.shape == (N, NUM_CLASSES)
    assert output.shape == (N, NUM_CLASSES)
    assert m.shape == (N, 1, HW_SIDE, HW_SIDE)
    assert m_c.shape == (N, NUM_CLASSES, HW_SIDE, HW_SIDE)
    print("KERNEL_OK")
</pallas_src>

<mosaic_0001>
module attributes {stable_mosaic.version = 11 : i64} {
  func.func @_wsl_kernel(%arg0: i32, %arg1: memref<5x2048x196xf32, #tpu.memory_space<vmem>>, %arg2: memref<12x2048xf32, #tpu.memory_space<vmem>>, %arg3: memref<4x1xf32, #tpu.memory_space<vmem>>, %arg4: memref<4x1xf32, #tpu.memory_space<vmem>>, %arg5: memref<5x4x196xf32, #tpu.memory_space<vmem>>, %arg6: memref<5x1x196xf32, #tpu.memory_space<vmem>>, %arg7: memref<5x8x1xf32, #tpu.memory_space<vmem>>) attributes {dimension_semantics = [#tpu.dimension_semantics<parallel>], iteration_bounds = array<i64: 2>, scalar_prefetch = 0 : i64, scratch_operands = 0 : i64, tpu.core_type = #tpu.core_type<tc>, window_params = [{transform_indices = @transform_0, window_bounds = array<i64: 5, 2048, 196>}, {pipeline_mode = #tpu.pipeline_mode<synchronous>, transform_indices = @transform_1, window_bounds = array<i64: 12, 2048>}, {pipeline_mode = #tpu.pipeline_mode<synchronous>, transform_indices = @transform_2, window_bounds = array<i64: 4, 1>}, {pipeline_mode = #tpu.pipeline_mode<synchronous>, transform_indices = @transform_3, window_bounds = array<i64: 4, 1>}, {transform_indices = @transform_4, window_bounds = array<i64: 5, 4, 196>}, {transform_indices = @transform_5, window_bounds = array<i64: 5, 1, 196>}, {transform_indices = @transform_6, window_bounds = array<i64: 5, 8, 1>}]} {
    %c0 = arith.constant 0 : index
    %c0_0 = arith.constant 0 : index
    %0 = vector.load %arg2[%c0, %c0_0] : memref<12x2048xf32, #tpu.memory_space<vmem>>, vector<12x2048xf32>
    %c0_1 = arith.constant 0 : index
    %c0_2 = arith.constant 0 : index
    %1 = vector.load %arg3[%c0_1, %c0_2] : memref<4x1xf32, #tpu.memory_space<vmem>>, vector<4x1xf32>
    %c0_3 = arith.constant 0 : index
    %c0_4 = arith.constant 0 : index
    %2 = vector.load %arg4[%c0_3, %c0_4] : memref<4x1xf32, #tpu.memory_space<vmem>>, vector<4x1xf32>
    %c0_5 = arith.constant 0 : index
    %c0_6 = arith.constant 0 : index
    %c0_7 = arith.constant 0 : index
    %3 = vector.load %arg1[%c0_5, %c0_6, %c0_7] : memref<5x2048x196xf32, #tpu.memory_space<vmem>>, vector<1x2048x196xf32>
    %4 = vector.shape_cast %3 : vector<1x2048x196xf32> to vector<2048x196xf32>
    %cst = arith.constant dense<0.000000e+00> : vector<12x196xf32>
    %5 = tpu.matmul %0, %4, %cst {dimension_numbers = #tpu.dot_dimension_numbers<[1], [0], [0], [1], [0, 0, 1, 1], [], []>} : vector<12x2048xf32>, vector<2048x196xf32>, vector<12x196xf32> -> vector<12x196xf32>
    %6 = vector.extract_strided_slice %5 {offsets = [0, 0], sizes = [4, 196], strides = [1, 1]} : vector<12x196xf32> to vector<4x196xf32>
    %7 = vector.broadcast %1 : vector<4x1xf32> to vector<4x196xf32>
    %8 = arith.addf %6, %7 : vector<4x196xf32>
    %9 = vector.extract_strided_slice %5 {offsets = [4, 0], sizes = [4, 196], strides = [1, 1]} : vector<12x196xf32> to vector<4x196xf32>
    %10 = vector.extract_strided_slice %5 {offsets = [8, 0], sizes = [4, 196], strides = [1, 1]} : vector<12x196xf32> to vector<4x196xf32>
    %cst_8 = arith.constant dense<0.000000e+00> : vector<4xf32>
    %11 = vector.multi_reduction <add>, %8, %cst_8 [1] : vector<4x196xf32> to vector<4xf32>
    %12 = vector.shape_cast %11 : vector<4xf32> to vector<4x1xf32>
    %cst_9 = arith.constant 0.00510204071 : f32
    %13 = vector.broadcast %cst_9 : f32 to vector<4x1xf32>
    %14 = arith.mulf %12, %13 : vector<4x1xf32>
    %15 = vector.broadcast %14 : vector<4x1xf32> to vector<4x196xf32>
    %16 = arith.mulf %8, %15 : vector<4x196xf32>
    %cst_10 = arith.constant dense<0.000000e+00> : vector<196xf32>
    %17 = vector.multi_reduction <add>, %16, %cst_10 [0] : vector<4x196xf32> to vector<196xf32>
    %18 = vector.shape_cast %17 : vector<196xf32> to vector<1x196xf32>
    %cst_11 = arith.constant 2.500000e-01 : f32
    %19 = vector.broadcast %cst_11 : f32 to vector<1x196xf32>
    %20 = arith.mulf %18, %19 : vector<1x196xf32>
    %21 = vector.broadcast %20 : vector<1x196xf32> to vector<4x196xf32>
    %22 = arith.mulf %21, %10 : vector<4x196xf32>
    %23 = arith.addf %9, %22 : vector<4x196xf32>
    %cst_12 = arith.constant dense<0.000000e+00> : vector<4xf32>
    %24 = vector.multi_reduction <add>, %23, %cst_12 [1] : vector<4x196xf32> to vector<4xf32>
    %25 = vector.shape_cast %24 : vector<4xf32> to vector<4x1xf32>
    %cst_13 = arith.constant 0.00510204071 : f32
    %26 = vector.broadcast %cst_13 : f32 to vector<4x1xf32>
    %27 = arith.mulf %25, %26 : vector<4x1xf32>
    %28 = arith.addf %27, %2 : vector<4x1xf32>
    %c0_14 = arith.constant 0 : index
    %c0_15 = arith.constant 0 : index
    %c0_16 = arith.constant 0 : index
    %29 = vector.load %arg5[%c0_14, %c0_15, %c0_16] : memref<5x4x196xf32, #tpu.memory_space<vmem>>, vector<1x4x196xf32>
    %30 = vector.shape_cast %29 : vector<1x4x196xf32> to vector<4x196xf32>
    %31 = vector.shape_cast %8 : vector<4x196xf32> to vector<1x4x196xf32>
    tpu.vector_store %arg5[%c0_14, %c0_15, %c0_16], %31 {strides = array<i32>} : memref<5x4x196xf32, #tpu.memory_space<vmem>>, vector<1x4x196xf32>,
    %c0_17 = arith.constant 0 : index
    %c0_18 = arith.constant 0 : index
    %c0_19 = arith.constant 0 : index
    %32 = vector.load %arg6[%c0_17, %c0_18, %c0_19] : memref<5x1x196xf32, #tpu.memory_space<vmem>>, vector<1x1x196xf32>
    %33 = vector.shape_cast %32 : vector<1x1x196xf32> to vector<1x196xf32>
    %34 = vector.shape_cast %20 : vector<1x196xf32> to vector<1x1x196xf32>
    tpu.vector_store %arg6[%c0_17, %c0_18, %c0_19], %34 {strides = array<i32>} : memref<5x1x196xf32, #tpu.memory_space<vmem>>, vector<1x1x196xf32>,
    %c0_20 = arith.constant 0 : index
    %c0_21 = arith.constant 0 : index
    %c0_22 = arith.constant 0 : index
    %35 = vector.load %arg7[%c0_20, %c0_21, %c0_22] : memref<5x8x1xf32, #tpu.memory_space<vmem>>, vector<1x4x1xf32>
    %36 = vector.shape_cast %35 : vector<1x4x1xf32> to vector<4x1xf32>
    %37 = vector.shape_cast %14 : vector<4x1xf32> to vector<1x4x1xf32>
    tpu.vector_store %arg7[%c0_20, %c0_21, %c0_22], %37 {strides = array<i32>} : memref<5x8x1xf32, #tpu.memory_space<vmem>>, vector<1x4x1xf32>,
    %c0_23 = arith.constant 0 : index
    %c4 = arith.constant 4 : index
    %c0_24 = arith.constant 0 : index
    %38 = vector.load %arg7[%c0_23, %c4, %c0_24] : memref<5x8x1xf32, #tpu.memory_space<vmem>>, vector<1x4x1xf32>
    %39 = vector.shape_cast %38 : vector<1x4x1xf32> to vector<4x1xf32>
    %40 = vector.shape_cast %28 : vector<4x1xf32> to vector<1x4x1xf32>
    tpu.vector_store %arg7[%c0_23, %c4, %c0_24], %40 {strides = array<i32>} : memref<5x8x1xf32, #tpu.memory_space<vmem>>, vector<1x4x1xf32>,
    %c1 = arith.constant 1 : index
    %c0_25 = arith.constant 0 : index
    %c0_26 = arith.constant 0 : index
    %41 = vector.load %arg1[%c1, %c0_25, %c0_26] : memref<5x2048x196xf32, #tpu.memory_space<vmem>>, vector<1x2048x196xf32>
    %42 = vector.shape_cast %41 : vector<1x2048x196xf32> to vector<2048x196xf32>
    %cst_27 = arith.constant dense<0.000000e+00> : vector<12x196xf32>
    %43 = tpu.matmul %0, %42, %cst_27 {dimension_numbers = #tpu.dot_dimension_numbers<[1], [0], [0], [1], [0, 0, 1, 1], [], []>} : vector<12x2048xf32>, vector<2048x196xf32>, vector<12x196xf32> -> vector<12x196xf32>
    %44 = vector.extract_strided_slice %43 {offsets = [0, 0], sizes = [4, 196], strides = [1, 1]} : vector<12x196xf32> to vector<4x196xf32>
    %45 = vector.broadcast %1 : vector<4x1xf32> to vector<4x196xf32>
    %46 = arith.addf %44, %45 : vector<4x196xf32>
    %47 = vector.extract_strided_slice %43 {offsets = [4, 0], sizes = [4, 196], strides = [1, 1]} : vector<12x196xf32> to vector<4x196xf32>
    %48 = vector.extract_strided_slice %43 {offsets = [8, 0], sizes = [4, 196], strides = [1, 1]} : vector<12x196xf32> to vector<4x196xf32>
    %cst_28 = arith.constant dense<0.000000e+00> : vector<4xf32>
    %49 = vector.multi_reduction <add>, %46, %cst_28 [1] : vector<4x196xf32> to vector<4xf32>
    %50 = vector.shape_cast %49 : vector<4xf32> to vector<4x1xf32>
    %cst_29 = arith.constant 0.00510204071 : f32
    %51 = vector.broadcast %cst_29 : f32 to vector<4x1xf32>
    %52 = arith.mulf %50, %51 : vector<4x1xf32>
    %53 = vector.broadcast %52 : vector<4x1xf32> to vector<4x196xf32>
    %54 = arith.mulf %46, %53 : vector<4x196xf32>
    %cst_30 = arith.constant dense<0.000000e+00> : vector<196xf32>
    %55 = vector.multi_reduction <add>, %54, %cst_30 [0] : vector<4x196xf32> to vector<196xf32>
    %56 = vector.shape_cast %55 : vector<196xf32> to vector<1x196xf32>
    %cst_31 = arith.constant 2.500000e-01 : f32
    %57 = vector.broadcast %cst_31 : f32 to vector<1x196xf32>
    %58 = arith.mulf %56, %57 : vector<1x196xf32>
    %59 = vector.broadcast %58 : vector<1x196xf32> to vector<4x196xf32>
    %60 = arith.mulf %59, %48 : vector<4x196xf32>
    %61 = arith.addf %47, %60 : vector<4x196xf32>
    %cst_32 = arith.constant dense<0.000000e+00> : vector<4xf32>
    %62 = vector.multi_reduction <add>, %61, %cst_32 [1] : vector<4x196xf32> to vector<4xf32>
    %63 = vector.shape_cast %62 : vector<4xf32> to vector<4x1xf32>
    %cst_33 = arith.constant 0.00510204071 : f32
    %64 = vector.broadcast %cst_33 : f32 to vector<4x1xf32>
    %65 = arith.mulf %63, %64 : vector<4x1xf32>
    %66 = arith.addf %65, %2 : vector<4x1xf32>
    %c1_34 = arith.constant 1 : index
    %c0_35 = arith.constant 0 : index
    %c0_36 = arith.constant 0 : index
    %67 = vector.load %arg5[%c1_34, %c0_35, %c0_36] : memref<5x4x196xf32, #tpu.memory_space<vmem>>, vector<1x4x196xf32>
    %68 = vector.shape_cast %67 : vector<1x4x196xf32> to vector<4x196xf32>
    %69 = vector.shape_cast %46 : vector<4x196xf32> to vector<1x4x196xf32>
    tpu.vector_store %arg5[%c1_34, %c0_35, %c0_36], %69 {strides = array<i32>} : memref<5x4x196xf32, #tpu.memory_space<vmem>>, vector<1x4x196xf32>,
    %c1_37 = arith.constant 1 : index
    %c0_38 = arith.constant 0 : index
    %c0_39 = arith.constant 0 : index
    %70 = vector.load %arg6[%c1_37, %c0_38, %c0_39] : memref<5x1x196xf32, #tpu.memory_space<vmem>>, vector<1x1x196xf32>
    %71 = vector.shape_cast %70 : vector<1x1x196xf32> to vector<1x196xf32>
    %72 = vector.shape_cast %58 : vector<1x196xf32> to vector<1x1x196xf32>
    tpu.vector_store %arg6[%c1_37, %c0_38, %c0_39], %72 {strides = array<i32>} : memref<5x1x196xf32, #tpu.memory_space<vmem>>, vector<1x1x196xf32>,
    %c1_40 = arith.constant 1 : index
    %c0_41 = arith.constant 0 : index
    %c0_42 = arith.constant 0 : index
    %73 = vector.load %arg7[%c1_40, %c0_41, %c0_42] : memref<5x8x1xf32, #tpu.memory_space<vmem>>, vector<1x4x1xf32>
    %74 = vector.shape_cast %73 : vector<1x4x1xf32> to vector<4x1xf32>
    %75 = vector.shape_cast %52 : vector<4x1xf32> to vector<1x4x1xf32>
    tpu.vector_store %arg7[%c1_40, %c0_41, %c0_42], %75 {strides = array<i32>} : memref<5x8x1xf32, #tpu.memory_space<vmem>>, vector<1x4x1xf32>,
    %c1_43 = arith.constant 1 : index
    %c4_44 = arith.constant 4 : index
    %c0_45 = arith.constant 0 : index
    %76 = vector.load %arg7[%c1_43, %c4_44, %c0_45] : memref<5x8x1xf32, #tpu.memory_space<vmem>>, vector<1x4x1xf32>
    %77 = vector.shape_cast %76 : vector<1x4x1xf32> to vector<4x1xf32>
    %78 = vector.shape_cast %66 : vector<4x1xf32> to vector<1x4x1xf32>
    tpu.vector_store %arg7[%c1_43, %c4_44, %c0_45], %78 {strides = array<i32>} : memref<5x8x1xf32, #tpu.memory_space<vmem>>, vector<1x4x1xf32>,
    %c2 = arith.constant 2 : index
    %c0_46 = arith.constant 0 : index
    %c0_47 = arith.constant 0 : index
    %79 = vector.load %arg1[%c2, %c0_46, %c0_47] : memref<5x2048x196xf32, #tpu.memory_space<vmem>>, vector<1x2048x196xf32>
    %80 = vector.shape_cast %79 : vector<1x2048x196xf32> to vector<2048x196xf32>
    %cst_48 = arith.constant dense<0.000000e+00> : vector<12x196xf32>
    %81 = tpu.matmul %0, %80, %cst_48 {dimension_numbers = #tpu.dot_dimension_numbers<[1], [0], [0], [1], [0, 0, 1, 1], [], []>} : vector<12x2048xf32>, vector<2048x196xf32>, vector<12x196xf32> -> vector<12x196xf32>
    %82 = vector.extract_strided_slice %81 {offsets = [0, 0], sizes = [4, 196], strides = [1, 1]} : vector<12x196xf32> to vector<4x196xf32>
    %83 = vector.broadcast %1 : vector<4x1xf32> to vector<4x196xf32>
    %84 = arith.addf %82, %83 : vector<4x196xf32>
    %85 = vector.extract_strided_slice %81 {offsets = [4, 0], sizes = [4, 196], strides = [1, 1]} : vector<12x196xf32> to vector<4x196xf32>
    %86 = vector.extract_strided_slice %81 {offsets = [8, 0], sizes = [4, 196], strides = [1, 1]} : vector<12x196xf32> to vector<4x196xf32>
    %cst_49 = arith.constant dense<0.000000e+00> : vector<4xf32>
    %87 = vector.multi_reduction <add>, %84, %cst_49 [1] : vector<4x196xf32> to vector<4xf32>
    %88 = vector.shape_cast %87 : vector<4xf32> to vector<4x1xf32>
    %cst_50 = arith.constant 0.00510204071 : f32
    %89 = vector.broadcast %cst_50 : f32 to vector<4x1xf32>
    %90 = arith.mulf %88, %89 : vector<4x1xf32>
    %91 = vector.broadcast %90 : vector<4x1xf32> to vector<4x196xf32>
    %92 = arith.mulf %84, %91 : vector<4x196xf32>
    %cst_51 = arith.constant dense<0.000000e+00> : vector<196xf32>
    %93 = vector.multi_reduction <add>, %92, %cst_51 [0] : vector<4x196xf32> to vector<196xf32>
    %94 = vector.shape_cast %93 : vector<196xf32> to vector<1x196xf32>
    %cst_52 = arith.constant 2.500000e-01 : f32
    %95 = vector.broadcast %cst_52 : f32 to vector<1x196xf32>
    %96 = arith.mulf %94, %95 : vector<1x196xf32>
    %97 = vector.broadcast %96 : vector<1x196xf32> to vector<4x196xf32>
    %98 = arith.mulf %97, %86 : vector<4x196xf32>
    %99 = arith.addf %85, %98 : vector<4x196xf32>
    %cst_53 = arith.constant dense<0.000000e+00> : vector<4xf32>
    %100 = vector.multi_reduction <add>, %99, %cst_53 [1] : vector<4x196xf32> to vector<4xf32>
    %101 = vector.shape_cast %100 : vector<4xf32> to vector<4x1xf32>
    %cst_54 = arith.constant 0.00510204071 : f32
    %102 = vector.broadcast %cst_54 : f32 to vector<4x1xf32>
    %103 = arith.mulf %101, %102 : vector<4x1xf32>
    %104 = arith.addf %103, %2 : vector<4x1xf32>
    %c2_55 = arith.constant 2 : index
    %c0_56 = arith.constant 0 : index
    %c0_57 = arith.constant 0 : index
    %105 = vector.load %arg5[%c2_55, %c0_56, %c0_57] : memref<5x4x196xf32, #tpu.memory_space<vmem>>, vector<1x4x196xf32>
    %106 = vector.shape_cast %105 : vector<1x4x196xf32> to vector<4x196xf32>
    %107 = vector.shape_cast %84 : vector<4x196xf32> to vector<1x4x196xf32>
    tpu.vector_store %arg5[%c2_55, %c0_56, %c0_57], %107 {strides = array<i32>} : memref<5x4x196xf32, #tpu.memory_space<vmem>>, vector<1x4x196xf32>,
    %c2_58 = arith.constant 2 : index
    %c0_59 = arith.constant 0 : index
    %c0_60 = arith.constant 0 : index
    %108 = vector.load %arg6[%c2_58, %c0_59, %c0_60] : memref<5x1x196xf32, #tpu.memory_space<vmem>>, vector<1x1x196xf32>
    %109 = vector.shape_cast %108 : vector<1x1x196xf32> to vector<1x196xf32>
    %110 = vector.shape_cast %96 : vector<1x196xf32> to vector<1x1x196xf32>
    tpu.vector_store %arg6[%c2_58, %c0_59, %c0_60], %110 {strides = array<i32>} : memref<5x1x196xf32, #tpu.memory_space<vmem>>, vector<1x1x196xf32>,
    %c2_61 = arith.constant 2 : index
    %c0_62 = arith.constant 0 : index
    %c0_63 = arith.constant 0 : index
    %111 = vector.load %arg7[%c2_61, %c0_62, %c0_63] : memref<5x8x1xf32, #tpu.memory_space<vmem>>, vector<1x4x1xf32>
    %112 = vector.shape_cast %111 : vector<1x4x1xf32> to vector<4x1xf32>
    %113 = vector.shape_cast %90 : vector<4x1xf32> to vector<1x4x1xf32>
    tpu.vector_store %arg7[%c2_61, %c0_62, %c0_63], %113 {strides = array<i32>} : memref<5x8x1xf32, #tpu.memory_space<vmem>>, vector<1x4x1xf32>,
    %c2_64 = arith.constant 2 : index
    %c4_65 = arith.constant 4 : index
    %c0_66 = arith.constant 0 : index
    %114 = vector.load %arg7[%c2_64, %c4_65, %c0_66] : memref<5x8x1xf32, #tpu.memory_space<vmem>>, vector<1x4x1xf32>
    %115 = vector.shape_cast %114 : vector<1x4x1xf32> to vector<4x1xf32>
    %116 = vector.shape_cast %104 : vector<4x1xf32> to vector<1x4x1xf32>
    tpu.vector_store %arg7[%c2_64, %c4_65, %c0_66], %116 {strides = array<i32>} : memref<5x8x1xf32, #tpu.memory_space<vmem>>, vector<1x4x1xf32>,
    %c3 = arith.constant 3 : index
    %c0_67 = arith.constant 0 : index
    %c0_68 = arith.constant 0 : index
    %117 = vector.load %arg1[%c3, %c0_67, %c0_68] : memref<5x2048x196xf32, #tpu.memory_space<vmem>>, vector<1x2048x196xf32>
    %118 = vector.shape_cast %117 : vector<1x2048x196xf32> to vector<2048x196xf32>
    %cst_69 = arith.constant dense<0.000000e+00> : vector<12x196xf32>
    %119 = tpu.matmul %0, %118, %cst_69 {dimension_numbers = #tpu.dot_dimension_numbers<[1], [0], [0], [1], [0, 0, 1, 1], [], []>} : vector<12x2048xf32>, vector<2048x196xf32>, vector<12x196xf32> -> vector<12x196xf32>
    %120 = vector.extract_strided_slice %119 {offsets = [0, 0], sizes = [4, 196], strides = [1, 1]} : vector<12x196xf32> to vector<4x196xf32>
    %121 = vector.broadcast %1 : vector<4x1xf32> to vector<4x196xf32>
    %122 = arith.addf %120, %121 : vector<4x196xf32>
    %123 = vector.extract_strided_slice %119 {offsets = [4, 0], sizes = [4, 196], strides = [1, 1]} : vector<12x196xf32> to vector<4x196xf32>
    %124 = vector.extract_strided_slice %119 {offsets = [8, 0], sizes = [4, 196], strides = [1, 1]} : vector<12x196xf32> to vector<4x196xf32>
    %cst_70 = arith.constant dense<0.000000e+00> : vector<4xf32>
    %125 = vector.multi_reduction <add>, %122, %cst_70 [1] : vector<4x196xf32> to vector<4xf32>
    %126 = vector.shape_cast %125 : vector<4xf32> to vector<4x1xf32>
    %cst_71 = arith.constant 0.00510204071 : f32
    %127 = vector.broadcast %cst_71 : f32 to vector<4x1xf32>
    %128 = arith.mulf %126, %127 : vector<4x1xf32>
    %129 = vector.broadcast %128 : vector<4x1xf32> to vector<4x196xf32>
    %130 = arith.mulf %122, %129 : vector<4x196xf32>
    %cst_72 = arith.constant dense<0.000000e+00> : vector<196xf32>
    %131 = vector.multi_reduction <add>, %130, %cst_72 [0] : vector<4x196xf32> to vector<196xf32>
    %132 = vector.shape_cast %131 : vector<196xf32> to vector<1x196xf32>
    %cst_73 = arith.constant 2.500000e-01 : f32
    %133 = vector.broadcast %cst_73 : f32 to vector<1x196xf32>
    %134 = arith.mulf %132, %133 : vector<1x196xf32>
    %135 = vector.broadcast %134 : vector<1x196xf32> to vector<4x196xf32>
    %136 = arith.mulf %135, %124 : vector<4x196xf32>
    %137 = arith.addf %123, %136 : vector<4x196xf32>
    %cst_74 = arith.constant dense<0.000000e+00> : vector<4xf32>
    %138 = vector.multi_reduction <add>, %137, %cst_74 [1] : vector<4x196xf32> to vector<4xf32>
    %139 = vector.shape_cast %138 : vector<4xf32> to vector<4x1xf32>
    %cst_75 = arith.constant 0.00510204071 : f32
    %140 = vector.broadcast %cst_75 : f32 to vector<4x1xf32>
    %141 = arith.mulf %139, %140 : vector<4x1xf32>
    %142 = arith.addf %141, %2 : vector<4x1xf32>
    %c3_76 = arith.constant 3 : index
    %c0_77 = arith.constant 0 : index
    %c0_78 = arith.constant 0 : index
    %143 = vector.load %arg5[%c3_76, %c0_77, %c0_78] : memref<5x4x196xf32, #tpu.memory_space<vmem>>, vector<1x4x196xf32>
    %144 = vector.shape_cast %143 : vector<1x4x196xf32> to vector<4x196xf32>
    %145 = vector.shape_cast %122 : vector<4x196xf32> to vector<1x4x196xf32>
    tpu.vector_store %arg5[%c3_76, %c0_77, %c0_78], %145 {strides = array<i32>} : memref<5x4x196xf32, #tpu.memory_space<vmem>>, vector<1x4x196xf32>,
    %c3_79 = arith.constant 3 : index
    %c0_80 = arith.constant 0 : index
    %c0_81 = arith.constant 0 : index
    %146 = vector.load %arg6[%c3_79, %c0_80, %c0_81] : memref<5x1x196xf32, #tpu.memory_space<vmem>>, vector<1x1x196xf32>
    %147 = vector.shape_cast %146 : vector<1x1x196xf32> to vector<1x196xf32>
    %148 = vector.shape_cast %134 : vector<1x196xf32> to vector<1x1x196xf32>
    tpu.vector_store %arg6[%c3_79, %c0_80, %c0_81], %148 {strides = array<i32>} : memref<5x1x196xf32, #tpu.memory_space<vmem>>, vector<1x1x196xf32>,
    %c3_82 = arith.constant 3 : index
    %c0_83 = arith.constant 0 : index
    %c0_84 = arith.constant 0 : index
    %149 = vector.load %arg7[%c3_82, %c0_83, %c0_84] : memref<5x8x1xf32, #tpu.memory_space<vmem>>, vector<1x4x1xf32>
    %150 = vector.shape_cast %149 : vector<1x4x1xf32> to vector<4x1xf32>
    %151 = vector.shape_cast %128 : vector<4x1xf32> to vector<1x4x1xf32>
    tpu.vector_store %arg7[%c3_82, %c0_83, %c0_84], %151 {strides = array<i32>} : memref<5x8x1xf32, #tpu.memory_space<vmem>>, vector<1x4x1xf32>,
    %c3_85 = arith.constant 3 : index
    %c4_86 = arith.constant 4 : index
    %c0_87 = arith.constant 0 : index
    %152 = vector.load %arg7[%c3_85, %c4_86, %c0_87] : memref<5x8x1xf32, #tpu.memory_space<vmem>>, vector<1x4x1xf32>
    %153 = vector.shape_cast %152 : vector<1x4x1xf32> to vector<4x1xf32>
    %154 = vector.shape_cast %142 : vector<4x1xf32> to vector<1x4x1xf32>
    tpu.vector_store %arg7[%c3_85, %c4_86, %c0_87], %154 {strides = array<i32>} : memref<5x8x1xf32, #tpu.memory_space<vmem>>, vector<1x4x1xf32>,
    %c4_88 = arith.constant 4 : index
    %c0_89 = arith.constant 0 : index
    %c0_90 = arith.constant 0 : index
    %155 = vector.load %arg1[%c4_88, %c0_89, %c0_90] : memref<5x2048x196xf32, #tpu.memory_space<vmem>>, vector<1x2048x196xf32>
    %156 = vector.shape_cast %155 : vector<1x2048x196xf32> to vector<2048x196xf32>
    %cst_91 = arith.constant dense<0.000000e+00> : vector<12x196xf32>
    %157 = tpu.matmul %0, %156, %cst_91 {dimension_numbers = #tpu.dot_dimension_numbers<[1], [0], [0], [1], [0, 0, 1, 1], [], []>} : vector<12x2048xf32>, vector<2048x196xf32>, vector<12x196xf32> -> vector<12x196xf32>
    %158 = vector.extract_strided_slice %157 {offsets = [0, 0], sizes = [4, 196], strides = [1, 1]} : vector<12x196xf32> to vector<4x196xf32>
    %159 = vector.broadcast %1 : vector<4x1xf32> to vector<4x196xf32>
    %160 = arith.addf %158, %159 : vector<4x196xf32>
    %161 = vector.extract_strided_slice %157 {offsets = [4, 0], sizes = [4, 196], strides = [1, 1]} : vector<12x196xf32> to vector<4x196xf32>
    %162 = vector.extract_strided_slice %157 {offsets = [8, 0], sizes = [4, 196], strides = [1, 1]} : vector<12x196xf32> to vector<4x196xf32>
    %cst_92 = arith.constant dense<0.000000e+00> : vector<4xf32>
    %163 = vector.multi_reduction <add>, %160, %cst_92 [1] : vector<4x196xf32> to vector<4xf32>
    %164 = vector.shape_cast %163 : vector<4xf32> to vector<4x1xf32>
    %cst_93 = arith.constant 0.00510204071 : f32
    %165 = vector.broadcast %cst_93 : f32 to vector<4x1xf32>
    %166 = arith.mulf %164, %165 : vector<4x1xf32>
    %167 = vector.broadcast %166 : vector<4x1xf32> to vector<4x196xf32>
    %168 = arith.mulf %160, %167 : vector<4x196xf32>
    %cst_94 = arith.constant dense<0.000000e+00> : vector<196xf32>
    %169 = vector.multi_reduction <add>, %168, %cst_94 [0] : vector<4x196xf32> to vector<196xf32>
    %170 = vector.shape_cast %169 : vector<196xf32> to vector<1x196xf32>
    %cst_95 = arith.constant 2.500000e-01 : f32
    %171 = vector.broadcast %cst_95 : f32 to vector<1x196xf32>
    %172 = arith.mulf %170, %171 : vector<1x196xf32>
    %173 = vector.broadcast %172 : vector<1x196xf32> to vector<4x196xf32>
    %174 = arith.mulf %173, %162 : vector<4x196xf32>
    %175 = arith.addf %161, %174 : vector<4x196xf32>
    %cst_96 = arith.constant dense<0.000000e+00> : vector<4xf32>
    %176 = vector.multi_reduction <add>, %175, %cst_96 [1] : vector<4x196xf32> to vector<4xf32>
    %177 = vector.shape_cast %176 : vector<4xf32> to vector<4x1xf32>
    %cst_97 = arith.constant 0.00510204071 : f32
    %178 = vector.broadcast %cst_97 : f32 to vector<4x1xf32>
    %179 = arith.mulf %177, %178 : vector<4x1xf32>
    %180 = arith.addf %179, %2 : vector<4x1xf32>
    %c4_98 = arith.constant 4 : index
    %c0_99 = arith.constant 0 : index
    %c0_100 = arith.constant 0 : index
    %181 = vector.load %arg5[%c4_98, %c0_99, %c0_100] : memref<5x4x196xf32, #tpu.memory_space<vmem>>, vector<1x4x196xf32>
    %182 = vector.shape_cast %181 : vector<1x4x196xf32> to vector<4x196xf32>
    %183 = vector.shape_cast %160 : vector<4x196xf32> to vector<1x4x196xf32>
    tpu.vector_store %arg5[%c4_98, %c0_99, %c0_100], %183 {strides = array<i32>} : memref<5x4x196xf32, #tpu.memory_space<vmem>>, vector<1x4x196xf32>,
    %c4_101 = arith.constant 4 : index
    %c0_102 = arith.constant 0 : index
    %c0_103 = arith.constant 0 : index
    %184 = vector.load %arg6[%c4_101, %c0_102, %c0_103] : memref<5x1x196xf32, #tpu.memory_space<vmem>>, vector<1x1x196xf32>
    %185 = vector.shape_cast %184 : vector<1x1x196xf32> to vector<1x196xf32>
    %186 = vector.shape_cast %172 : vector<1x196xf32> to vector<1x1x196xf32>
    tpu.vector_store %arg6[%c4_101, %c0_102, %c0_103], %186 {strides = array<i32>} : memref<5x1x196xf32, #tpu.memory_space<vmem>>, vector<1x1x196xf32>,
    %c4_104 = arith.constant 4 : index
    %c0_105 = arith.constant 0 : index
    %c0_106 = arith.constant 0 : index
    %187 = vector.load %arg7[%c4_104, %c0_105, %c0_106] : memref<5x8x1xf32, #tpu.memory_space<vmem>>, vector<1x4x1xf32>
    %188 = vector.shape_cast %187 : vector<1x4x1xf32> to vector<4x1xf32>
    %189 = vector.shape_cast %166 : vector<4x1xf32> to vector<1x4x1xf32>
    tpu.vector_store %arg7[%c4_104, %c0_105, %c0_106], %189 {strides = array<i32>} : memref<5x8x1xf32, #tpu.memory_space<vmem>>, vector<1x4x1xf32>,
    %c4_107 = arith.constant 4 : index
    %c4_108 = arith.constant 4 : index
    %c0_109 = arith.constant 0 : index
    %190 = vector.load %arg7[%c4_107, %c4_108, %c0_109] : memref<5x8x1xf32, #tpu.memory_space<vmem>>, vector<1x4x1xf32>
    %191 = vector.shape_cast %190 : vector<1x4x1xf32> to vector<4x1xf32>
    %192 = vector.shape_cast %180 : vector<4x1xf32> to vector<1x4x1xf32>
    tpu.vector_store %arg7[%c4_107, %c4_108, %c0_109], %192 {strides = array<i32>} : memref<5x8x1xf32, #tpu.memory_space<vmem>>, vector<1x4x1xf32>,
    return
  }
  func.func @transform_0(%arg0: i32) -> (i32, i32, i32) {
    %c0_i32 = arith.constant 0 : i32
    %c0_i32_0 = arith.constant 0 : i32
    %c0_i32_1 = arith.constant 0 : i32
    return %arg0, %c0_i32, %c0_i32_0 : i32, i32, i32
  }
  func.func @transform_1(%arg0: i32) -> (i32, i32) {
    %c0_i32 = arith.constant 0 : i32
    %c0_i32_0 = arith.constant 0 : i32
    %c0_i32_1 = arith.constant 0 : i32
    return %c0_i32, %c0_i32_0 : i32, i32
  }
  func.func @transform_2(%arg0: i32) -> (i32, i32) {
    %c0_i32 = arith.constant 0 : i32
    %c0_i32_0 = arith.constant 0 : i32
    %c0_i32_1 = arith.constant 0 : i32
    return %c0_i32, %c0_i32_0 : i32, i32
  }
  func.func @transform_3(%arg0: i32) -> (i32, i32) {
    %c0_i32 = arith.constant 0 : i32
    %c0_i32_0 = arith.constant 0 : i32
    %c0_i32_1 = arith.constant 0 : i32
    return %c0_i32, %c0_i32_0 : i32, i32
  }
  func.func @transform_4(%arg0: i32) -> (i32, i32, i32) {
    %c0_i32 = arith.constant 0 : i32
    %c0_i32_0 = arith.constant 0 : i32
    %c0_i32_1 = arith.constant 0 : i32
    return %arg0, %c0_i32, %c0_i32_0 : i32, i32, i32
  }
  func.func @transform_5(%arg0: i32) -> (i32, i32, i32) {
    %c0_i32 = arith.constant 0 : i32
    %c0_i32_0 = arith.constant 0 : i32
    %c0_i32_1 = arith.constant 0 : i32
    return %arg0, %c0_i32, %c0_i32_0 : i32, i32, i32
  }
  func.func @transform_6(%arg0: i32) -> (i32, i32, i32) {
    %c0_i32 = arith.constant 0 : i32
    %c0_i32_0 = arith.constant 0 : i32
    %c0_i32_1 = arith.constant 0 : i32
    return %arg0, %c0_i32, %c0_i32_0 : i32, i32, i32
  }
}

</mosaic_0001>

<llo_original>
// kernel: _forward_impl.1
$region0: #{_forward_impl.1}
  #allocation0 [shape = 'u32[]', space=smem, size = 0x4, offset = 0x4, fixed_abs, tag = 'smem constant byte address 0x4 - core index']
  #allocation1 [shape = 'u32[144,128]{1,0:T(1,128)}', space=vmem, size = 0x12000, scoped, tag = 'internal scratch']
  %s0 = inlined_call_operand.vmem [shape: f32[10,2048,196], index: 0, kind: input, shape index: {}]
  %s1 = inlined_call_operand.vmem [shape: f32[12,2048], index: 1, kind: input, shape index: {}]
  %s2 = inlined_call_operand.vmem [shape: f32[4,1], index: 2, kind: input, shape index: {}]
  %s3 = inlined_call_operand.vmem [shape: f32[4,1], index: 3, kind: input, shape index: {}]
  %s4 = inlined_call_operand.vmem [shape: f32[10,4,196], index: 4, kind: output, shape index: {0}]
  %s5 = inlined_call_operand.vmem [shape: f32[10,1,196], index: 5, kind: output, shape index: {1}]
  %s6 = inlined_call_operand.vmem [shape: f32[10,8,1], index: 6, kind: output, shape index: {2}]
  %7 = xla_tuple %s4, %s5, %s6
  %s8 = sld [smem:[#allocation0]]
  $region65: #{_forward_impl.1} parent=0
    _
  %s10 = ssub.s32 1, %s8
  %s11 = scalar_select 0, %s10, %s8
  loop: start=0, step=1, limit=4
  $region2: #{_forward_impl.1} parent=0 // loop_pre_header
    _
  $region3: #{_forward_impl.1} parent=0 // loop_header
    %s13 = sphi 0, %s17
    %p14 = scmp.ge.s32.totalorder %s13, 4
    %s23 = sphi 0, %s25
    %s26 = sphi 0, %s23
    %s27 = sphi 0, %s26
    %s43 = sphi 0, %s27
    %s47 = sphi 0, %s47
    %s49 = sphi 0, %s47
    %s50 = sphi 0, %s49
    %s64 = sphi 0, %s50
    %s68 = sphi 0, %s68
    %s70 = sphi 0, %s68
    %s71 = sphi 0, %s70
    %s85 = sphi 0, %s71
    %s89 = sphi 0, %s89
    %s91 = sphi 0, %s89
    %s92 = sphi 0, %s91
    %s106 = sphi 0, %s92
    %s112 = sphi 0, %s114
    %s115 = sphi 0, %s112
    %s116 = sphi 0, %s115
    %s132 = sphi 0, %s116
    %s138 = sphi 0, %s140
    %s141 = sphi 0, %s138
    %s142 = sphi 0, %s141
    %s158 = sphi 0, %s142
    %s164 = sphi 0, %s166
    %s167 = sphi 0, %s164
    %s168 = sphi 0, %s167
    %s184 = sphi 0, %s168
  $region4: #{_forward_impl.1} parent=0 // loop_header_branch
    %16 = sbr.rel (%p14) target = $region8
  $region5: #{_forward_impl.1} parent=0 // loop_body
    %s18 = ssub.s32 %s13, 1
    %s19 = ssub.s32 %s13, 2
    %s20 = sadd.s32 %s13, 1
    %s21 = ssub.s32 %s13, %s20
    %p22 = scmp.eq.s32.totalorder %s21, 0
    %s24 = sadd.s32 %s23, 1
    %s25 = scalar_select %p22, %s23, %s24
    %p28 = pneg %p22
    %p29 = scmp.eq.s32.totalorder %s13, 1
    %p30 = por %p28, %p29
    %p31 = scmp.ne.s32.totalorder %s23, %s26
    %p32 = scmp.eq.s32.totalorder %s13, 0
    %p33 = por %p31, %p32
    %p34 = scmp.ne.s32.totalorder %s23, %s26
    %p35 = scmp.eq.s32.totalorder %s18, 1
    %p36 = por %p34, %p35
    %p37 = scmp.ne.s32.totalorder %s26, %s27
    %p38 = scmp.eq.s32.totalorder %s18, 0
    %p39 = por %p37, %p38
    %p40 = scmp.ne.s32.totalorder %s26, %s27
    %p41 = scmp.eq.s32.totalorder %s19, 1
    %p42 = por %p40, %p41
    %p44 = scmp.ne.s32.totalorder %s27, %s43
    %p45 = scmp.eq.s32.totalorder %s19, 0
    %p46 = por %p44, %p45
    %s48 = sadd.s32 %s47, 1
    %p51 = scmp.eq.s32.totalorder %s13, 1
    %p52 = scmp.ne.s32.totalorder %s47, %s49
    %p53 = scmp.eq.s32.totalorder %s13, 0
    %p54 = por %p52, %p53
    %p55 = scmp.ne.s32.totalorder %s47, %s49
    %p56 = scmp.eq.s32.totalorder %s18, 1
    %p57 = por %p55, %p56
    %p58 = scmp.ne.s32.totalorder %s49, %s50
    %p59 = scmp.eq.s32.totalorder %s18, 0
    %p60 = por %p58, %p59
    %p61 = scmp.ne.s32.totalorder %s49, %s50
    %p62 = scmp.eq.s32.totalorder %s19, 1
    %p63 = por %p61, %p62
    %p65 = scmp.ne.s32.totalorder %s50, %s64
    %p66 = scmp.eq.s32.totalorder %s19, 0
    %p67 = por %p65, %p66
    %s69 = sadd.s32 %s68, 1
    %p72 = scmp.eq.s32.totalorder %s13, 1
    %p73 = scmp.ne.s32.totalorder %s68, %s70
    %p74 = scmp.eq.s32.totalorder %s13, 0
    %p75 = por %p73, %p74
    %p76 = scmp.ne.s32.totalorder %s68, %s70
    %p77 = scmp.eq.s32.totalorder %s18, 1
    %p78 = por %p76, %p77
    %p79 = scmp.ne.s32.totalorder %s70, %s71
    %p80 = scmp.eq.s32.totalorder %s18, 0
    %p81 = por %p79, %p80
    %p82 = scmp.ne.s32.totalorder %s70, %s71
    %p83 = scmp.eq.s32.totalorder %s19, 1
    %p84 = por %p82, %p83
    %p86 = scmp.ne.s32.totalorder %s71, %s85
    %p87 = scmp.eq.s32.totalorder %s19, 0
    %p88 = por %p86, %p87
    %s90 = sadd.s32 %s89, 1
    %p93 = scmp.eq.s32.totalorder %s13, 1
    %p94 = scmp.ne.s32.totalorder %s89, %s91
    %p95 = scmp.eq.s32.totalorder %s13, 0
    %p96 = por %p94, %p95
    %p97 = scmp.ne.s32.totalorder %s89, %s91
    %p98 = scmp.eq.s32.totalorder %s18, 1
    %p99 = por %p97, %p98
    %p100 = scmp.ne.s32.totalorder %s91, %s92
    %p101 = scmp.eq.s32.totalorder %s18, 0
    %p102 = por %p100, %p101
    %p103 = scmp.ne.s32.totalorder %s91, %s92
    %p104 = scmp.eq.s32.totalorder %s19, 1
    %p105 = por %p103, %p104
    %p107 = scmp.ne.s32.totalorder %s92, %s106
    %p108 = scmp.eq.s32.totalorder %s19, 0
    %p109 = por %p107, %p108
    %s110 = ssub.s32 %s13, %s20
    %p111 = scmp.eq.s32.totalorder %s110, 0
    %s113 = sadd.s32 %s112, 1
    %s114 = scalar_select %p111, %s112, %s113
    %p117 = pneg %p111
    %p118 = scmp.eq.s32.totalorder %s13, 1
    %p119 = por %p117, %p118
    %p120 = scmp.ne.s32.totalorder %s112, %s115
    %p121 = scmp.eq.s32.totalorder %s13, 0
    %p122 = por %p120, %p121
    %p123 = scmp.ne.s32.totalorder %s112, %s115
    %p124 = scmp.eq.s32.totalorder %s18, 1
    %p125 = por %p123, %p124
    %p126 = scmp.ne.s32.totalorder %s115, %s116
    %p127 = scmp.eq.s32.totalorder %s18, 0
    %p128 = por %p126, %p127
    %p129 = scmp.ne.s32.totalorder %s115, %s116
    %p130 = scmp.eq.s32.totalorder %s19, 1
    %p131 = por %p129, %p130
    %p133 = scmp.ne.s32.totalorder %s116, %s132
    %p134 = scmp.eq.s32.totalorder %s19, 0
    %p135 = por %p133, %p134
    %s136 = ssub.s32 %s13, %s20
    %p137 = scmp.eq.s32.totalorder %s136, 0
    %s139 = sadd.s32 %s138, 1
    %s140 = scalar_select %p137, %s138, %s139
    %p143 = pneg %p137
    %p144 = scmp.eq.s32.totalorder %s13, 1
    %p145 = por %p143, %p144
    %p146 = scmp.ne.s32.totalorder %s138, %s141
    %p147 = scmp.eq.s32.totalorder %s13, 0
    %p148 = por %p146, %p147
    %p149 = scmp.ne.s32.totalorder %s138, %s141
    %p150 = scmp.eq.s32.totalorder %s18, 1
    %p151 = por %p149, %p150
    %p152 = scmp.ne.s32.totalorder %s141, %s142
    %p153 = scmp.eq.s32.totalorder %s18, 0
    %p154 = por %p152, %p153
    %p155 = scmp.ne.s32.totalorder %s141, %s142
    %p156 = scmp.eq.s32.totalorder %s19, 1
    %p157 = por %p155, %p156
    %p159 = scmp.ne.s32.totalorder %s142, %s158
    %p160 = scmp.eq.s32.totalorder %s19, 0
    %p161 = por %p159, %p160
    %s162 = ssub.s32 %s13, %s20
    %p163 = scmp.eq.s32.totalorder %s162, 0
    %s165 = sadd.s32 %s164, 1
    %s166 = scalar_select %p163, %s164, %s165
    %p169 = pneg %p163
    %p170 = scmp.eq.s32.totalorder %s13, 1
    %p171 = por %p169, %p170
    %p172 = scmp.ne.s32.totalorder %s164, %s167
    %p173 = scmp.eq.s32.totalorder %s13, 0
    %p174 = por %p172, %p173
    %p175 = scmp.ne.s32.totalorder %s164, %s167
    %p176 = scmp.eq.s32.totalorder %s18, 1
    %p177 = por %p175, %p176
    %p178 = scmp.ne.s32.totalorder %s167, %s168
    %p179 = scmp.eq.s32.totalorder %s18, 0
    %p180 = por %p178, %p179
    %p181 = scmp.ne.s32.totalorder %s167, %s168
    %p182 = scmp.eq.s32.totalorder %s19, 1
    %p183 = por %p181, %p182
    %p185 = scmp.ne.s32.totalorder %s168, %s184
    %p186 = scmp.eq.s32.totalorder %s19, 0
    %p187 = por %p185, %p186
    %p188 = scmp.le.s32.totalorder 1, %s13
    %p189 = scmp.lt.s32.totalorder %s13, 3
    %p190 = pnand %p188, %p189
    %p191 = pneg %p190
    // Predicated region
    $region9: #{_forward_impl.1} parent=5 // pred_check
      _
    $region10: #{_forward_impl.1} parent=5 // pred_check_branch
      %193 = sbr.rel (%p190) target = $region12
    $region11: #{_forward_impl.1} parent=5 // pred_region
      %s194 = ssub.s32 %s13, 1
      // Predicated region
      $region13: #{_forward_impl.1} parent=11 // pred_check
        %p195 = pneg %p60
      $region14: #{_forward_impl.1} parent=11 // pred_check_branch
        %197 = sbr.rel (%p195) target = $region16
      $region15: #{_forward_impl.1} parent=11 // pred_region
        _
      $region16: #{_forward_impl.1} parent=11 // pred_fallthru
        _
      // Predicated region
      $region17: #{_forward_impl.1} parent=11 // pred_check
        %p198 = pneg %p81
      $region18: #{_forward_impl.1} parent=11 // pred_check_branch
        %200 = sbr.rel (%p198) target = $region20
      $region19: #{_forward_impl.1} parent=11 // pred_region
        _
      $region20: #{_forward_impl.1} parent=11 // pred_fallthru
        _
      // Predicated region
      $region21: #{_forward_impl.1} parent=11 // pred_check
        %p201 = pneg %p102
      $region22: #{_forward_impl.1} parent=11 // pred_check_branch
        %203 = sbr.rel (%p201) target = $region24
      $region23: #{_forward_impl.1} parent=11 // pred_region
        _
      $region24: #{_forward_impl.1} parent=11 // pred_fallthru
        _
    $region12: #{_forward_impl.1} parent=5 // pred_fallthru
      _
    %p204 = scmp.lt.s32.totalorder %s13, 2
    // Predicated region
    $region25: #{_forward_impl.1} parent=5 // pred_check
      %p205 = pneg %p204
    $region26: #{_forward_impl.1} parent=5 // pred_check_branch
      %207 = sbr.rel (%p205) target = $region28
    $region27: #{_forward_impl.1} parent=5 // pred_region
      // Predicated region
      $region29: #{_forward_impl.1} parent=27 // pred_check
        %p208 = pneg %p33
      $region30: #{_forward_impl.1} parent=27 // pred_check_branch
        %210 = sbr.rel (%p208) target = $region32
      $region31: #{_forward_impl.1} parent=27 // pred_region
        %s211 = smul.u32 5, %s13
        %p212 = scmp.lt.s32.totalorder %s211, 9
        %s213 = scalar_select %p212, %s211, 9
        %s214 = smul.addr %s213, 512
        %s215 = smul.addr %s214, 8
        %s216 = scalar_lea.vmem %s0, %s215
        %s217 = smul.u32 5, %s13
      $region32: #{_forward_impl.1} parent=27 // pred_fallthru
        _
    $region28: #{_forward_impl.1} parent=5 // pred_fallthru
      _
    %p218 = scmp.le.s32.totalorder 1, %s13
    %p219 = scmp.lt.s32.totalorder %s13, 3
    %p220 = pnand %p218, %p219
    %p221 = pneg %p220
    // Predicated region
    $region33: #{_forward_impl.1} parent=5 // pred_check
      _
    $region34: #{_forward_impl.1} parent=5 // pred_check_branch
      %223 = sbr.rel (%p220) target = $region36
    $region35: #{_forward_impl.1} parent=5 // pred_region
      %s224 = ssub.s32 %s13, 1
      %s225 = smul.u32 5, %s18
      %p226 = scmp.lt.s32.totalorder %s225, 9
      %s227 = scalar_select %p226, %s225, 9
      %s228 = smul.addr %s227, 512
      %s229 = smul.addr %s228, 8
      %s230 = scalar_lea.vmem %s0, %s229
      %p231 = pneg %p39
      %p232 = pneg %p36
      %p233 = pneg %p60
      %p234 = pneg %p57
      %p235 = pneg %p81
      %p236 = pneg %p78
      %p237 = pneg %p102
      %p238 = pneg %p99
      %p239 = pneg %p128
      %p240 = pneg %p125
      %s241 = smul.u32 5, %s18
      %p242 = scmp.lt.s32.totalorder %s241, 9
      %s243 = scalar_select %p242, %s241, 9
      %s244 = smul.addr %s243, 2
      %s245 = smul.addr %s244, 4
      %s246 = scalar_lea.vmem %s4, %s245
      %p247 = pneg %p154
      %p248 = pneg %p151
      %s249 = smul.u32 5, %s18
      %p250 = scmp.lt.s32.totalorder %s249, 9
      %s251 = scalar_select %p250, %s249, 9
      %s252 = smul.addr %s251, 2
      %s253 = scalar_lea.vmem %s5, %s252
      %p254 = pneg %p180
      %p255 = pneg %p177
      %s256 = smul.u32 5, %s18
      %p257 = scmp.lt.s32.totalorder %s256, 9
      %s258 = scalar_select %p257, %s256, 9
      %s259 = smul.addr %s258, 8
      %s260 = scalar_lea.vmem %s6, %s259
      %s261 = smul.u32 5, %s18
      %p262 = scmp.lt.s32.totalorder %s261, 9
      %s263 = scalar_select %p262, %s261, 9
      %s264 = smul.addr %s263, 512
      %s265 = smul.addr %s264, 8
      %s266 = scalar_lea.vmem %s0, %s265
      %s267 = smul.u32 5, %s18
      %s268 = smul.u32 5, %s18
      %p269 = scmp.lt.s32.totalorder %s268, 9
      %s270 = scalar_select %p269, %s268, 9
      %s271 = smul.addr %s270, 2
      %s272 = smul.addr %s271, 4
      %s273 = scalar_lea.vmem %s4, %s272
      %s274 = smul.u32 5, %s18
      %s275 = smul.u32 5, %s18
      %p276 = scmp.lt.s32.totalorder %s275, 9
      %s277 = scalar_select %p276, %s275, 9
      %s278 = smul.addr %s277, 2
      %s279 = scalar_lea.vmem %s5, %s278
      %s280 = smul.u32 5, %s18
      %s281 = smul.u32 5, %s18
      %p282 = scmp.lt.s32.totalorder %s281, 9
      %s283 = scalar_select %p282, %s281, 9
      %s284 = smul.addr %s283, 8
      %s285 = scalar_lea.vmem %s6, %s284
      %s286 = smul.u32 5, %s18
      %v287 = vld [vmem:[%s1] sm:$0xff]
      %v288 = vld [vmem:[%s1 + $0x8] sm:$0xff]
      %v289 = vld [vmem:[%s1 + $0x10] sm:$0xff]
      %v290 = vld [vmem:[%s1 + $0x18] sm:$0xff]
      %v291 = vld [vmem:[%s1 + $0x20] sm:$0xff]
      %v292 = vld [vmem:[%s1 + $0x28] sm:$0xff]
      %v293 = vld [vmem:[%s1 + $0x30] sm:$0xff]
      %v294 = vld [vmem:[%s1 + $0x38] sm:$0xff]
      %v295 = vld [vmem:[%s1 + $0x40] sm:$0xff]
      %v296 = vld [vmem:[%s1 + $0x48] sm:$0xff]
      %v297 = vld [vmem:[%s1 + $0x50] sm:$0xff]
      %v298 = vld [vmem:[%s1 + $0x58] sm:$0xff]
      %v299 = vld [vmem:[%s1 + $0x60] sm:$0xff]
      %v300 = vld [vmem:[%s1 + $0x68] sm:$0xff]
      %v301 = vld [vmem:[%s1 + $0x70] sm:$0xff]
      %v302 = vld [vmem:[%s1 + $0x78] sm:$0xff]
      %v303 = vld [vmem:[%s1 + $0x80] sm:$0xf]
      %v304 = vld [vmem:[%s1 + $0x88] sm:$0xf]
      %v305 = vld [vmem:[%s1 + $0x90] sm:$0xf]
      %v306 = vld [vmem:[%s1 + $0x98] sm:$0xf]
      %v307 = vld [vmem:[%s1 + $0xa0] sm:$0xf]
      %v308 = vld [vmem:[%s1 + $0xa8] sm:$0xf]
      %v309 = vld [vmem:[%s1 + $0xb0] sm:$0xf]
      %v310 = vld [vmem:[%s1 + $0xb8] sm:$0xf]
      %v311 = vld [vmem:[%s1 + $0xc0] sm:$0xf]
      %v312 = vld [vmem:[%s1 + $0xc8] sm:$0xf]
      %v313 = vld [vmem:[%s1 + $0xd0] sm:$0xf]
      %v314 = vld [vmem:[%s1 + $0xd8] sm:$0xf]
      %v315 = vld [vmem:[%s1 + $0xe0] sm:$0xf]
      %v316 = vld [vmem:[%s1 + $0xe8] sm:$0xf]
      %v317 = vld [vmem:[%s1 + $0xf0] sm:$0xf]
      %v318 = vld [vmem:[%s1 + $0xf8] sm:$0xf]
      %v319 = vld [vmem:[%s2] sm:$0xf]
      %v320 = vld [vmem:[%s3] sm:$0xf]
      %v321 = vld [vmem:[%s266] sm:$0xff]
      %v322 = vld [vmem:[%s266 + $0x8] sm:$0xff]
      %v323 = vld [vmem:[%s266 + $0x10] sm:$0xff]
      %v324 = vld [vmem:[%s266 + $0x18] sm:$0xff]
      %v325 = vld [vmem:[%s266 + $0x20] sm:$0xff]
      %v326 = vld [vmem:[%s266 + $0x28] sm:$0xff]
      %v327 = vld [vmem:[%s266 + $0x30] sm:$0xff]
      %v328 = vld [vmem:[%s266 + $0x38] sm:$0xff]
      %v329 = vld [vmem:[%s266 + $0x40] sm:$0xff]
      %v330 = vld [vmem:[%s266 + $0x48] sm:$0xff]
      %v331 = vld [vmem:[%s266 + $0x50] sm:$0xff]
      %v332 = vld [vmem:[%s266 + $0x58] sm:$0xff]
      %v333 = vld [vmem:[%s266 + $0x60] sm:$0xff]
      %v334 = vld [vmem:[%s266 + $0x68] sm:$0xff]
      %v335 = vld [vmem:[%s266 + $0x70] sm:$0xff]
      %v336 = vld [vmem:[%s266 + $0x78] sm:$0xff]
      %v337 = vld [vmem:[%s266 + $0x80] sm:$0xff]
      %v338 = vld [vmem:[%s266 + $0x88] sm:$0xff]
      %v339 = vld [vmem:[%s266 + $0x90] sm:$0xff]
      %v340 = vld [vmem:[%s266 + $0x98] sm:$0xff]
      %v341 = vld [vmem:[%s266 + $0xa0] sm:$0xff]
      %v342 = vld [vmem:[%s266 + $0xa8] sm:$0xff]
      %v343 = vld [vmem:[%s266 + $0xb0] sm:$0xff]
      %v344 = vld [vmem:[%s266 + $0xb8] sm:$0xff]
      %v345 = vld [vmem:[%s266 + $0xc0] sm:$0xff]
      %v346 = vld [vmem:[%s266 + $0xc8] sm:$0xff]
      %v347 = vld [vmem:[%s266 + $0xd0] sm:$0xff]
      %v348 = vld [vmem:[%s266 + $0xd8] sm:$0xff]
      %v349 = vld [vmem:[%s266 + $0xe0] sm:$0xff]
      %v350 = vld [vmem:[%s266 + $0xe8] sm:$0xff]
      %v351 = vld [vmem:[%s266 + $0xf0] sm:$0xff]
      %v352 = vld [vmem:[%s266 + $0xf8] sm:$0xff]
      %v353 = vld [vmem:[%s266 + $0x100] sm:$0xff]
      %v354 = vld [vmem:[%s266 + $0x108] sm:$0xff]
      %v355 = vld [vmem:[%s266 + $0x110] sm:$0xff]
      %v356 = vld [vmem:[%s266 + $0x118] sm:$0xff]
      %v357 = vld [vmem:[%s266 + $0x120] sm:$0xff]
      %v358 = vld [vmem:[%s266 + $0x128] sm:$0xff]
      %v359 = vld [vmem:[%s266 + $0x130] sm:$0xff]
      %v360 = vld [vmem:[%s266 + $0x138] sm:$0xff]
      %v361 = vld [vmem:[%s266 + $0x140] sm:$0xff]
      %v362 = vld [vmem:[%s266 + $0x148] sm:$0xff]
      %v363 = vld [vmem:[%s266 + $0x150] sm:$0xff]
      %v364 = vld [vmem:[%s266 + $0x158] sm:$0xff]
      %v365 = vld [vmem:[%s266 + $0x160] sm:$0xff]
      %v366 = vld [vmem:[%s266 + $0x168] sm:$0xff]
      %v367 = vld [vmem:[%s266 + $0x170] sm:$0xff]
      %v368 = vld [vmem:[%s266 + $0x178] sm:$0xff]
      %v369 = vld [vmem:[%s266 + $0x180] sm:$0xff]
      %v370 = vld [vmem:[%s266 + $0x188] sm:$0xff]
      %v371 = vld [vmem:[%s266 + $0x190] sm:$0xff]
      %v372 = vld [vmem:[%s266 + $0x198] sm:$0xff]
      %v373 = vld [vmem:[%s266 + $0x1a0] sm:$0xff]
      %v374 = vld [vmem:[%s266 + $0x1a8] sm:$0xff]
      %v375 = vld [vmem:[%s266 + $0x1b0] sm:$0xff]
      %v376 = vld [vmem:[%s266 + $0x1b8] sm:$0xff]
      %v377 = vld [vmem:[%s266 + $0x1c0] sm:$0xff]
      %v378 = vld [vmem:[%s266 + $0x1c8] sm:$0xff]
      %v379 = vld [vmem:[%s266 + $0x1d0] sm:$0xff]
      %v380 = vld [vmem:[%s266 + $0x1d8] sm:$0xff]
      %v381 = vld [vmem:[%s266 + $0x1e0] sm:$0xff]
      %v382 = vld [vmem:[%s266 + $0x1e8] sm:$0xff]
      %v383 = vld [vmem:[%s266 + $0x1f0] sm:$0xff]
      %v384 = vld [vmem:[%s266 + $0x1f8] sm:$0xff]
      %v385 = vld [vmem:[%s266 + $0x200] sm:$0xff]
      %v386 = vld [vmem:[%s266 + $0x208] sm:$0xff]
      %v387 = vld [vmem:[%s266 + $0x210] sm:$0xff]
      %v388 = vld [vmem:[%s266 + $0x218] sm:$0xff]
      %v389 = vld [vmem:[%s266 + $0x220] sm:$0xff]
      %v390 = vld [vmem:[%s266 + $0x228] sm:$0xff]
      %v391 = vld [vmem:[%s266 + $0x230] sm:$0xff]
      %v392 = vld [vmem:[%s266 + $0x238] sm:$0xff]
      %v393 = vld [vmem:[%s266 + $0x240] sm:$0xff]
      %v394 = vld [vmem:[%s266 + $0x248] sm:$0xff]
      %v395 = vld [vmem:[%s266 + $0x250] sm:$0xff]
      %v396 = vld [vmem:[%s266 + $0x258] sm:$0xff]
      %v397 = vld [vmem:[%s266 + $0x260] sm:$0xff]
      %v398 = vld [vmem:[%s266 + $0x268] sm:$0xff]
      %v399 = vld [vmem:[%s266 + $0x270] sm:$0xff]
      %v400 = vld [vmem:[%s266 + $0x278] sm:$0xff]
      %v401 = vld [vmem:[%s266 + $0x280] sm:$0xff]
      %v402 = vld [vmem:[%s266 + $0x288] sm:$0xff]
      %v403 = vld [vmem:[%s266 + $0x290] sm:$0xff]
      %v404 = vld [vmem:[%s266 + $0x298] sm:$0xff]
      %v405 = vld [vmem:[%s266 + $0x2a0] sm:$0xff]
      %v406 = vld [vmem:[%s266 + $0x2a8] sm:$0xff]
      %v407 = vld [vmem:[%s266 + $0x2b0] sm:$0xff]
      %v408 = vld [vmem:[%s266 + $0x2b8] sm:$0xff]
      %v409 = vld [vmem:[%s266 + $0x2c0] sm:$0xff]
      %v410 = vld [vmem:[%s266 + $0x2c8] sm:$0xff]
      %v411 = vld [vmem:[%s266 + $0x2d0] sm:$0xff]
      %v412 = vld [vmem:[%s266 + $0x2d8] sm:$0xff]
      %v413 = vld [vmem:[%s266 + $0x2e0] sm:$0xff]
      %v414 = vld [vmem:[%s266 + $0x2e8] sm:$0xff]
      %v415 = vld [vmem:[%s266 + $0x2f0] sm:$0xff]
      %v416 = vld [vmem:[%s266 + $0x2f8] sm:$0xff]
      %v417 = vld [vmem:[%s266 + $0x300] sm:$0xff]
      %v418 = vld [vmem:[%s266 + $0x308] sm:$0xff]
      %v419 = vld [vmem:[%s266 + $0x310] sm:$0xff]
      %v420 = vld [vmem:[%s266 + $0x318] sm:$0xff]
      %v421 = vld [vmem:[%s266 + $0x320] sm:$0xff]
      %v422 = vld [vmem:[%s266 + $0x328] sm:$0xff]
      %v423 = vld [vmem:[%s266 + $0x330] sm:$0xff]
      %v424 = vld [vmem:[%s266 + $0x338] sm:$0xff]
      %v425 = vld [vmem:[%s266 + $0x340] sm:$0xff]
      %v426 = vld [vmem:[%s266 + $0x348] sm:$0xff]
      %v427 = vld [vmem:[%s266 + $0x350] sm:$0xff]
      %v428 = vld [vmem:[%s266 + $0x358] sm:$0xff]
      %v429 = vld [vmem:[%s266 + $0x360] sm:$0xff]
      %v430 = vld [vmem:[%s266 + $0x368] sm:$0xff]
      %v431 = vld [vmem:[%s266 + $0x370] sm:$0xff]
      %v432 = vld [vmem:[%s266 + $0x378] sm:$0xff]
      %v433 = vld [vmem:[%s266 + $0x380] sm:$0xff]
      %v434 = vld [vmem:[%s266 + $0x388] sm:$0xff]
      %v435 = vld [vmem:[%s266 + $0x390] sm:$0xff]
      %v436 = vld [vmem:[%s266 + $0x398] sm:$0xff]
      %v437 = vld [vmem:[%s266 + $0x3a0] sm:$0xff]
      %v438 = vld [vmem:[%s266 + $0x3a8] sm:$0xff]
      %v439 = vld [vmem:[%s266 + $0x3b0] sm:$0xff]
      %v440 = vld [vmem:[%s266 + $0x3b8] sm:$0xff]
      %v441 = vld [vmem:[%s266 + $0x3c0] sm:$0xff]
      %v442 = vld [vmem:[%s266 + $0x3c8] sm:$0xff]
      %v443 = vld [vmem:[%s266 + $0x3d0] sm:$0xff]
      %v444 = vld [vmem:[%s266 + $0x3d8] sm:$0xff]
      %v445 = vld [vmem:[%s266 + $0x3e0] sm:$0xff]
      %v446 = vld [vmem:[%s266 + $0x3e8] sm:$0xff]
      %v447 = vld [vmem:[%s266 + $0x3f0] sm:$0xff]
      %v448 = vld [vmem:[%s266 + $0x3f8] sm:$0xff]
      %v449 = vld [vmem:[%s266 + $0x400] sm:$0xff]
      %v450 = vld [vmem:[%s266 + $0x408] sm:$0xff]
      %v451 = vld [vmem:[%s266 + $0x410] sm:$0xff]
      %v452 = vld [vmem:[%s266 + $0x418] sm:$0xff]
      %v453 = vld [vmem:[%s266 + $0x420] sm:$0xff]
      %v454 = vld [vmem:[%s266 + $0x428] sm:$0xff]
      %v455 = vld [vmem:[%s266 + $0x430] sm:$0xff]
      %v456 = vld [vmem:[%s266 + $0x438] sm:$0xff]
      %v457 = vld [vmem:[%s266 + $0x440] sm:$0xff]
      %v458 = vld [vmem:[%s266 + $0x448] sm:$0xff]
      %v459 = vld [vmem:[%s266 + $0x450] sm:$0xff]
      %v460 = vld [vmem:[%s266 + $0x458] sm:$0xff]
      %v461 = vld [vmem:[%s266 + $0x460] sm:$0xff]
      %v462 = vld [vmem:[%s266 + $0x468] sm:$0xff]
      %v463 = vld [vmem:[%s266 + $0x470] sm:$0xff]
      %v464 = vld [vmem:[%s266 + $0x478] sm:$0xff]
      %v465 = vld [vmem:[%s266 + $0x480] sm:$0xff]
      %v466 = vld [vmem:[%s266 + $0x488] sm:$0xff]
      %v467 = vld [vmem:[%s266 + $0x490] sm:$0xff]
      %v468 = vld [vmem:[%s266 + $0x498] sm:$0xff]
      %v469 = vld [vmem:[%s266 + $0x4a0] sm:$0xff]
      %v470 = vld [vmem:[%s266 + $0x4a8] sm:$0xff]
      %v471 = vld [vmem:[%s266 + $0x4b0] sm:$0xff]
      %v472 = vld [vmem:[%s266 + $0x4b8] sm:$0xff]
      %v473 = vld [vmem:[%s266 + $0x4c0] sm:$0xff]
      %v474 = vld [vmem:[%s266 + $0x4c8] sm:$0xff]
      %v475 = vld [vmem:[%s266 + $0x4d0] sm:$0xff]
      %v476 = vld [vmem:[%s266 + $0x4d8] sm:$0xff]
      %v477 = vld [vmem:[%s266 + $0x4e0] sm:$0xff]
      %v478 = vld [vmem:[%s266 + $0x4e8] sm:$0xff]
      %v479 = vld [vmem:[%s266 + $0x4f0] sm:$0xff]
      %v480 = vld [vmem:[%s266 + $0x4f8] sm:$0xff]
      %v481 = vld [vmem:[%s266 + $0x500] sm:$0xff]
      %v482 = vld [vmem:[%s266 + $0x508] sm:$0xff]
      %v483 = vld [vmem:[%s266 + $0x510] sm:$0xff]
      %v484 = vld [vmem:[%s266 + $0x518] sm:$0xff]
      %v485 = vld [vmem:[%s266 + $0x520] sm:$0xff]
      %v486 = vld [vmem:[%s266 + $0x528] sm:$0xff]
      %v487 = vld [vmem:[%s266 + $0x530] sm:$0xff]
      %v488 = vld [vmem:[%s266 + $0x538] sm:$0xff]
      %v489 = vld [vmem:[%s266 + $0x540] sm:$0xff]
      %v490 = vld [vmem:[%s266 + $0x548] sm:$0xff]
      %v491 = vld [vmem:[%s266 + $0x550] sm:$0xff]
      %v492 = vld [vmem:[%s266 + $0x558] sm:$0xff]
      %v493 = vld [vmem:[%s266 + $0x560] sm:$0xff]
      %v494 = vld [vmem:[%s266 + $0x568] sm:$0xff]
      %v495 = vld [vmem:[%s266 + $0x570] sm:$0xff]
      %v496 = vld [vmem:[%s266 + $0x578] sm:$0xff]
      %v497 = vld [vmem:[%s266 + $0x580] sm:$0xff]
      %v498 = vld [vmem:[%s266 + $0x588] sm:$0xff]
      %v499 = vld [vmem:[%s266 + $0x590] sm:$0xff]
      %v500 = vld [vmem:[%s266 + $0x598] sm:$0xff]
      %v501 = vld [vmem:[%s266 + $0x5a0] sm:$0xff]
      %v502 = vld [vmem:[%s266 + $0x5a8] sm:$0xff]
      %v503 = vld [vmem:[%s266 + $0x5b0] sm:$0xff]
      %v504 = vld [vmem:[%s266 + $0x5b8] sm:$0xff]
      %v505 = vld [vmem:[%s266 + $0x5c0] sm:$0xff]
      %v506 = vld [vmem:[%s266 + $0x5c8] sm:$0xff]
      %v507 = vld [vmem:[%s266 + $0x5d0] sm:$0xff]
      %v508 = vld [vmem:[%s266 + $0x5d8] sm:$0xff]
      %v509 = vld [vmem:[%s266 + $0x5e0] sm:$0xff]
      %v510 = vld [vmem:[%s266 + $0x5e8] sm:$0xff]
      %v511 = vld [vmem:[%s266 + $0x5f0] sm:$0xff]
      %v512 = vld [vmem:[%s266 + $0x5f8] sm:$0xff]
      %v513 = vld [vmem:[%s266 + $0x600] sm:$0xff]
      %v514 = vld [vmem:[%s266 + $0x608] sm:$0xff]
      %v515 = vld [vmem:[%s266 + $0x610] sm:$0xff]
      %v516 = vld [vmem:[%s266 + $0x618] sm:$0xff]
      %v517 = vld [vmem:[%s266 + $0x620] sm:$0xff]
      %v518 = vld [vmem:[%s266 + $0x628] sm:$0xff]
      %v519 = vld [vmem:[%s266 + $0x630] sm:$0xff]
      %v520 = vld [vmem:[%s266 + $0x638] sm:$0xff]
      %v521 = vld [vmem:[%s266 + $0x640] sm:$0xff]
      %v522 = vld [vmem:[%s266 + $0x648] sm:$0xff]
      %v523 = vld [vmem:[%s266 + $0x650] sm:$0xff]
      %v524 = vld [vmem:[%s266 + $0x658] sm:$0xff]
      %v525 = vld [vmem:[%s266 + $0x660] sm:$0xff]
      %v526 = vld [vmem:[%s266 + $0x668] sm:$0xff]
      %v527 = vld [vmem:[%s266 + $0x670] sm:$0xff]
      %v528 = vld [vmem:[%s266 + $0x678] sm:$0xff]
      %v529 = vld [vmem:[%s266 + $0x680] sm:$0xff]
      %v530 = vld [vmem:[%s266 + $0x688] sm:$0xff]
      %v531 = vld [vmem:[%s266 + $0x690] sm:$0xff]
      %v532 = vld [vmem:[%s266 + $0x698] sm:$0xff]
      %v533 = vld [vmem:[%s266 + $0x6a0] sm:$0xff]
      %v534 = vld [vmem:[%s266 + $0x6a8] sm:$0xff]
      %v535 = vld [vmem:[%s266 + $0x6b0] sm:$0xff]
      %v536 = vld [vmem:[%s266 + $0x6b8] sm:$0xff]
      %v537 = vld [vmem:[%s266 + $0x6c0] sm:$0xff]
      %v538 = vld [vmem:[%s266 + $0x6c8] sm:$0xff]
      %v539 = vld [vmem:[%s266 + $0x6d0] sm:$0xff]
      %v540 = vld [vmem:[%s266 + $0x6d8] sm:$0xff]
      %v541 = vld [vmem:[%s266 + $0x6e0] sm:$0xff]
      %v542 = vld [vmem:[%s266 + $0x6e8] sm:$0xff]
      %v543 = vld [vmem:[%s266 + $0x6f0] sm:$0xff]
      %v544 = vld [vmem:[%s266 + $0x6f8] sm:$0xff]
      %v545 = vld [vmem:[%s266 + $0x700] sm:$0xff]
      %v546 = vld [vmem:[%s266 + $0x708] sm:$0xff]
      %v547 = vld [vmem:[%s266 + $0x710] sm:$0xff]
      %v548 = vld [vmem:[%s266 + $0x718] sm:$0xff]
      %v549 = vld [vmem:[%s266 + $0x720] sm:$0xff]
      %v550 = vld [vmem:[%s266 + $0x728] sm:$0xff]
      %v551 = vld [vmem:[%s266 + $0x730] sm:$0xff]
      %v552 = vld [vmem:[%s266 + $0x738] sm:$0xff]
      %v553 = vld [vmem:[%s266 + $0x740] sm:$0xff]
      %v554 = vld [vmem:[%s266 + $0x748] sm:$0xff]
      %v555 = vld [vmem:[%s266 + $0x750] sm:$0xff]
      %v556 = vld [vmem:[%s266 + $0x758] sm:$0xff]
      %v557 = vld [vmem:[%s266 + $0x760] sm:$0xff]
      %v558 = vld [vmem:[%s266 + $0x768] sm:$0xff]
      %v559 = vld [vmem:[%s266 + $0x770] sm:$0xff]
      %v560 = vld [vmem:[%s266 + $0x778] sm:$0xff]
      %v561 = vld [vmem:[%s266 + $0x780] sm:$0xff]
      %v562 = vld [vmem:[%s266 + $0x788] sm:$0xff]
      %v563 = vld [vmem:[%s266 + $0x790] sm:$0xff]
      %v564 = vld [vmem:[%s266 + $0x798] sm:$0xff]
      %v565 = vld [vmem:[%s266 + $0x7a0] sm:$0xff]
      %v566 = vld [vmem:[%s266 + $0x7a8] sm:$0xff]
      %v567 = vld [vmem:[%s266 + $0x7b0] sm:$0xff]
      %v568 = vld [vmem:[%s266 + $0x7b8] sm:$0xff]
      %v569 = vld [vmem:[%s266 + $0x7c0] sm:$0xff]
      %v570 = vld [vmem:[%s266 + $0x7c8] sm:$0xff]
      %v571 = vld [vmem:[%s266 + $0x7d0] sm:$0xff]
      %v572 = vld [vmem:[%s266 + $0x7d8] sm:$0xff]
      %v573 = vld [vmem:[%s266 + $0x7e0] sm:$0xff]
      %v574 = vld [vmem:[%s266 + $0x7e8] sm:$0xff]
      %v575 = vld [vmem:[%s266 + $0x7f0] sm:$0xff]
      %v576 = vld [vmem:[%s266 + $0x7f8] sm:$0xff]
      %v577 = vld [vmem:[%s266 + $0x800] sm:$0xff]
      %v578 = vld [vmem:[%s266 + $0x808] sm:$0xff]
      %v579 = vld [vmem:[%s266 + $0x810] sm:$0xff]
      %v580 = vld [vmem:[%s266 + $0x818] sm:$0xff]
      %v581 = vld [vmem:[%s266 + $0x820] sm:$0xff]
      %v582 = vld [vmem:[%s266 + $0x828] sm:$0xff]
      %v583 = vld [vmem:[%s266 + $0x830] sm:$0xff]
      %v584 = vld [vmem:[%s266 + $0x838] sm:$0xff]
      %v585 = vld [vmem:[%s266 + $0x840] sm:$0xff]
      %v586 = vld [vmem:[%s266 + $0x848] sm:$0xff]
      %v587 = vld [vmem:[%s266 + $0x850] sm:$0xff]
      %v588 = vld [vmem:[%s266 + $0x858] sm:$0xff]
      %v589 = vld [vmem:[%s266 + $0x860] sm:$0xff]
      %v590 = vld [vmem:[%s266 + $0x868] sm:$0xff]
      %v591 = vld [vmem:[%s266 + $0x870] sm:$0xff]
      %v592 = vld [vmem:[%s266 + $0x878] sm:$0xff]
      %v593 = vld [vmem:[%s266 + $0x880] sm:$0xff]
      %v594 = vld [vmem:[%s266 + $0x888] sm:$0xff]
      %v595 = vld [vmem:[%s266 + $0x890] sm:$0xff]
      %v596 = vld [vmem:[%s266 + $0x898] sm:$0xff]
      %v597 = vld [vmem:[%s266 + $0x8a0] sm:$0xff]
      %v598 = vld [vmem:[%s266 + $0x8a8] sm:$0xff]
      %v599 = vld [vmem:[%s266 + $0x8b0] sm:$0xff]
      %v600 = vld [vmem:[%s266 + $0x8b8] sm:$0xff]
      %v601 = vld [vmem:[%s266 + $0x8c0] sm:$0xff]
      %v602 = vld [vmem:[%s266 + $0x8c8] sm:$0xff]
      %v603 = vld [vmem:[%s266 + $0x8d0] sm:$0xff]
      %v604 = vld [vmem:[%s266 + $0x8d8] sm:$0xff]
      %v605 = vld [vmem:[%s266 + $0x8e0] sm:$0xff]
      %v606 = vld [vmem:[%s266 + $0x8e8] sm:$0xff]
      %v607 = vld [vmem:[%s266 + $0x8f0] sm:$0xff]
      %v608 = vld [vmem:[%s266 + $0x8f8] sm:$0xff]
      %v609 = vld [vmem:[%s266 + $0x900] sm:$0xff]
      %v610 = vld [vmem:[%s266 + $0x908] sm:$0xff]
      %v611 = vld [vmem:[%s266 + $0x910] sm:$0xff]
      %v612 = vld [vmem:[%s266 + $0x918] sm:$0xff]
      %v613 = vld [vmem:[%s266 + $0x920] sm:$0xff]
      %v614 = vld [vmem:[%s266 + $0x928] sm:$0xff]
      %v615 = vld [vmem:[%s266 + $0x930] sm:$0xff]
      %v616 = vld [vmem:[%s266 + $0x938] sm:$0xff]
      %v617 = vld [vmem:[%s266 + $0x940] sm:$0xff]
      %v618 = vld [vmem:[%s266 + $0x948] sm:$0xff]
      %v619 = vld [vmem:[%s266 + $0x950] sm:$0xff]
      %v620 = vld [vmem:[%s266 + $0x958] sm:$0xff]
      %v621 = vld [vmem:[%s266 + $0x960] sm:$0xff]
      %v622 = vld [vmem:[%s266 + $0x968] sm:$0xff]
      %v623 = vld [vmem:[%s266 + $0x970] sm:$0xff]
      %v624 = vld [vmem:[%s266 + $0x978] sm:$0xff]
      %v625 = vld [vmem:[%s266 + $0x980] sm:$0xff]
      %v626 = vld [vmem:[%s266 + $0x988] sm:$0xff]
      %v627 = vld [vmem:[%s266 + $0x990] sm:$0xff]
      %v628 = vld [vmem:[%s266 + $0x998] sm:$0xff]
      %v629 = vld [vmem:[%s266 + $0x9a0] sm:$0xff]
      %v630 = vld [vmem:[%s266 + $0x9a8] sm:$0xff]
      %v631 = vld [vmem:[%s266 + $0x9b0] sm:$0xff]
      %v632 = vld [vmem:[%s266 + $0x9b8] sm:$0xff]
      %v633 = vld [vmem:[%s266 + $0x9c0] sm:$0xff]
      %v634 = vld [vmem:[%s266 + $0x9c8] sm:$0xff]
      %v635 = vld [vmem:[%s266 + $0x9d0] sm:$0xff]
      %v636 = vld [vmem:[%s266 + $0x9d8] sm:$0xff]
      %v637 = vld [vmem:[%s266 + $0x9e0] sm:$0xff]
      %v638 = vld [vmem:[%s266 + $0x9e8] sm:$0xff]
      %v639 = vld [vmem:[%s266 + $0x9f0] sm:$0xff]
      %v640 = vld [vmem:[%s266 + $0x9f8] sm:$0xff]
      %v641 = vld [vmem:[%s266 + $0xa00] sm:$0xff]
      %v642 = vld [vmem:[%s266 + $0xa08] sm:$0xff]
      %v643 = vld [vmem:[%s266 + $0xa10] sm:$0xff]
      %v644 = vld [vmem:[%s266 + $0xa18] sm:$0xff]
      %v645 = vld [vmem:[%s266 + $0xa20] sm:$0xff]
      %v646 = vld [vmem:[%s266 + $0xa28] sm:$0xff]
      %v647 = vld [vmem:[%s266 + $0xa30] sm:$0xff]
      %v648 = vld [vmem:[%s266 + $0xa38] sm:$0xff]
      %v649 = vld [vmem:[%s266 + $0xa40] sm:$0xff]
      %v650 = vld [vmem:[%s266 + $0xa48] sm:$0xff]
      %v651 = vld [vmem:[%s266 + $0xa50] sm:$0xff]
      %v652 = vld [vmem:[%s266 + $0xa58] sm:$0xff]
      %v653 = vld [vmem:[%s266 + $0xa60] sm:$0xff]
      %v654 = vld [vmem:[%s266 + $0xa68] sm:$0xff]
      %v655 = vld [vmem:[%s266 + $0xa70] sm:$0xff]
      %v656 = vld [vmem:[%s266 + $0xa78] sm:$0xff]
      %v657 = vld [vmem:[%s266 + $0xa80] sm:$0xff]
      %v658 = vld [vmem:[%s266 + $0xa88] sm:$0xff]
      %v659 = vld [vmem:[%s266 + $0xa90] sm:$0xff]
      %v660 = vld [vmem:[%s266 + $0xa98] sm:$0xff]
      %v661 = vld [vmem:[%s266 + $0xaa0] sm:$0xff]
      %v662 = vld [vmem:[%s266 + $0xaa8] sm:$0xff]
      %v663 = vld [vmem:[%s266 + $0xab0] sm:$0xff]
      %v664 = vld [vmem:[%s266 + $0xab8] sm:$0xff]
      %v665 = vld [vmem:[%s266 + $0xac0] sm:$0xff]
      %v666 = vld [vmem:[%s266 + $0xac8] sm:$0xff]
      %v667 = vld [vmem:[%s266 + $0xad0] sm:$0xff]
      %v668 = vld [vmem:[%s266 + $0xad8] sm:$0xff]
      %v669 = vld [vmem:[%s266 + $0xae0] sm:$0xff]
      %v670 = vld [vmem:[%s266 + $0xae8] sm:$0xff]
      %v671 = vld [vmem:[%s266 + $0xaf0] sm:$0xff]
      %v672 = vld [vmem:[%s266 + $0xaf8] sm:$0xff]
      %v673 = vld [vmem:[%s266 + $0xb00] sm:$0xff]
      %v674 = vld [vmem:[%s266 + $0xb08] sm:$0xff]
      %v675 = vld [vmem:[%s266 + $0xb10] sm:$0xff]
      %v676 = vld [vmem:[%s266 + $0xb18] sm:$0xff]
      %v677 = vld [vmem:[%s266 + $0xb20] sm:$0xff]
      %v678 = vld [vmem:[%s266 + $0xb28] sm:$0xff]
      %v679 = vld [vmem:[%s266 + $0xb30] sm:$0xff]
      %v680 = vld [vmem:[%s266 + $0xb38] sm:$0xff]
      %v681 = vld [vmem:[%s266 + $0xb40] sm:$0xff]
      %v682 = vld [vmem:[%s266 + $0xb48] sm:$0xff]
      %v683 = vld [vmem:[%s266 + $0xb50] sm:$0xff]
      %v684 = vld [vmem:[%s266 + $0xb58] sm:$0xff]
      %v685 = vld [vmem:[%s266 + $0xb60] sm:$0xff]
      %v686 = vld [vmem:[%s266 + $0xb68] sm:$0xff]
      %v687 = vld [vmem:[%s266 + $0xb70] sm:$0xff]
      %v688 = vld [vmem:[%s266 + $0xb78] sm:$0xff]
      %v689 = vld [vmem:[%s266 + $0xb80] sm:$0xff]
      %v690 = vld [vmem:[%s266 + $0xb88] sm:$0xff]
      %v691 = vld [vmem:[%s266 + $0xb90] sm:$0xff]
      %v692 = vld [vmem:[%s266 + $0xb98] sm:$0xff]
      %v693 = vld [vmem:[%s266 + $0xba0] sm:$0xff]
      %v694 = vld [vmem:[%s266 + $0xba8] sm:$0xff]
      %v695 = vld [vmem:[%s266 + $0xbb0] sm:$0xff]
      %v696 = vld [vmem:[%s266 + $0xbb8] sm:$0xff]
      %v697 = vld [vmem:[%s266 + $0xbc0] sm:$0xff]
      %v698 = vld [vmem:[%s266 + $0xbc8] sm:$0xff]
      %v699 = vld [vmem:[%s266 + $0xbd0] sm:$0xff]
      %v700 = vld [vmem:[%s266 + $0xbd8] sm:$0xff]
      %v701 = vld [vmem:[%s266 + $0xbe0] sm:$0xff]
      %v702 = vld [vmem:[%s266 + $0xbe8] sm:$0xff]
      %v703 = vld [vmem:[%s266 + $0xbf0] sm:$0xff]
      %v704 = vld [vmem:[%s266 + $0xbf8] sm:$0xff]
      %v705 = vld [vmem:[%s266 + $0xc00] sm:$0xff]
      %v706 = vld [vmem:[%s266 + $0xc08] sm:$0xff]
      %v707 = vld [vmem:[%s266 + $0xc10] sm:$0xff]
      %v708 = vld [vmem:[%s266 + $0xc18] sm:$0xff]
      %v709 = vld [vmem:[%s266 + $0xc20] sm:$0xff]
      %v710 = vld [vmem:[%s266 + $0xc28] sm:$0xff]
      %v711 = vld [vmem:[%s266 + $0xc30] sm:$0xff]
      %v712 = vld [vmem:[%s266 + $0xc38] sm:$0xff]
      %v713 = vld [vmem:[%s266 + $0xc40] sm:$0xff]
      %v714 = vld [vmem:[%s266 + $0xc48] sm:$0xff]
      %v715 = vld [vmem:[%s266 + $0xc50] sm:$0xff]
      %v716 = vld [vmem:[%s266 + $0xc58] sm:$0xff]
      %v717 = vld [vmem:[%s266 + $0xc60] sm:$0xff]
      %v718 = vld [vmem:[%s266 + $0xc68] sm:$0xff]
      %v719 = vld [vmem:[%s266 + $0xc70] sm:$0xff]
      %v720 = vld [vmem:[%s266 + $0xc78] sm:$0xff]
      %v721 = vld [vmem:[%s266 + $0xc80] sm:$0xff]
      %v722 = vld [vmem:[%s266 + $0xc88] sm:$0xff]
      %v723 = vld [vmem:[%s266 + $0xc90] sm:$0xff]
      %v724 = vld [vmem:[%s266 + $0xc98] sm:$0xff]
      %v725 = vld [vmem:[%s266 + $0xca0] sm:$0xff]
      %v726 = vld [vmem:[%s266 + $0xca8] sm:$0xff]
      %v727 = vld [vmem:[%s266 + $0xcb0] sm:$0xff]
      %v728 = vld [vmem:[%s266 + $0xcb8] sm:$0xff]
      %v729 = vld [vmem:[%s266 + $0xcc0] sm:$0xff]
      %v730 = vld [vmem:[%s266 + $0xcc8] sm:$0xff]
      %v731 = vld [vmem:[%s266 + $0xcd0] sm:$0xff]
      %v732 = vld [vmem:[%s266 + $0xcd8] sm:$0xff]
      %v733 = vld [vmem:[%s266 + $0xce0] sm:$0xff]
      %v734 = vld [vmem:[%s266 + $0xce8] sm:$0xff]
      %v735 = vld [vmem:[%s266 + $0xcf0] sm:$0xff]
      %v736 = vld [vmem:[%s266 + $0xcf8] sm:$0xff]
      %v737 = vld [vmem:[%s266 + $0xd00] sm:$0xff]
      %v738 = vld [vmem:[%s266 + $0xd08] sm:$0xff]
      %v739 = vld [vmem:[%s266 + $0xd10] sm:$0xff]
      %v740 = vld [vmem:[%s266 + $0xd18] sm:$0xff]
      %v741 = vld [vmem:[%s266 + $0xd20] sm:$0xff]
      %v742 = vld [vmem:[%s266 + $0xd28] sm:$0xff]
      %v743 = vld [vmem:[%s266 + $0xd30] sm:$0xff]
      %v744 = vld [vmem:[%s266 + $0xd38] sm:$0xff]
      %v745 = vld [vmem:[%s266 + $0xd40] sm:$0xff]
      %v746 = vld [vmem:[%s266 + $0xd48] sm:$0xff]
      %v747 = vld [vmem:[%s266 + $0xd50] sm:$0xff]
      %v748 = vld [vmem:[%s266 + $0xd58] sm:$0xff]
      %v749 = vld [vmem:[%s266 + $0xd60] sm:$0xff]
      %v750 = vld [vmem:[%s266 + $0xd68] sm:$0xff]
      %v751 = vld [vmem:[%s266 + $0xd70] sm:$0xff]
      %v752 = vld [vmem:[%s266 + $0xd78] sm:$0xff]
      %v753 = vld [vmem:[%s266 + $0xd80] sm:$0xff]
      %v754 = vld [vmem:[%s266 + $0xd88] sm:$0xff]
      %v755 = vld [vmem:[%s266 + $0xd90] sm:$0xff]
      %v756 = vld [vmem:[%s266 + $0xd98] sm:$0xff]
      %v757 = vld [vmem:[%s266 + $0xda0] sm:$0xff]
      %v758 = vld [vmem:[%s266 + $0xda8] sm:$0xff]
      %v759 = vld [vmem:[%s266 + $0xdb0] sm:$0xff]
      %v760 = vld [vmem:[%s266 + $0xdb8] sm:$0xff]
      %v761 = vld [vmem:[%s266 + $0xdc0] sm:$0xff]
      %v762 = vld [vmem:[%s266 + $0xdc8] sm:$0xff]
      %v763 = vld [vmem:[%s266 + $0xdd0] sm:$0xff]
      %v764 = vld [vmem:[%s266 + $0xdd8] sm:$0xff]
      %v765 = vld [vmem:[%s266 + $0xde0] sm:$0xff]
      %v766 = vld [vmem:[%s266 + $0xde8] sm:$0xff]
      %v767 = vld [vmem:[%s266 + $0xdf0] sm:$0xff]
      %v768 = vld [vmem:[%s266 + $0xdf8] sm:$0xff]
      %v769 = vld [vmem:[%s266 + $0xe00] sm:$0xff]
      %v770 = vld [vmem:[%s266 + $0xe08] sm:$0xff]
      %v771 = vld [vmem:[%s266 + $0xe10] sm:$0xff]
      %v772 = vld [vmem:[%s266 + $0xe18] sm:$0xff]
      %v773 = vld [vmem:[%s266 + $0xe20] sm:$0xff]
      %v774 = vld [vmem:[%s266 + $0xe28] sm:$0xff]
      %v775 = vld [vmem:[%s266 + $0xe30] sm:$0xff]
      %v776 = vld [vmem:[%s266 + $0xe38] sm:$0xff]
      %v777 = vld [vmem:[%s266 + $0xe40] sm:$0xff]
      %v778 = vld [vmem:[%s266 + $0xe48] sm:$0xff]
      %v779 = vld [vmem:[%s266 + $0xe50] sm:$0xff]
      %v780 = vld [vmem:[%s266 + $0xe58] sm:$0xff]
      %v781 = vld [vmem:[%s266 + $0xe60] sm:$0xff]
      %v782 = vld [vmem:[%s266 + $0xe68] sm:$0xff]
      %v783 = vld [vmem:[%s266 + $0xe70] sm:$0xff]
      %v784 = vld [vmem:[%s266 + $0xe78] sm:$0xff]
      %v785 = vld [vmem:[%s266 + $0xe80] sm:$0xff]
      %v786 = vld [vmem:[%s266 + $0xe88] sm:$0xff]
      %v787 = vld [vmem:[%s266 + $0xe90] sm:$0xff]
      %v788 = vld [vmem:[%s266 + $0xe98] sm:$0xff]
      %v789 = vld [vmem:[%s266 + $0xea0] sm:$0xff]
      %v790 = vld [vmem:[%s266 + $0xea8] sm:$0xff]
      %v791 = vld [vmem:[%s266 + $0xeb0] sm:$0xff]
      %v792 = vld [vmem:[%s266 + $0xeb8] sm:$0xff]
      %v793 = vld [vmem:[%s266 + $0xec0] sm:$0xff]
      %v794 = vld [vmem:[%s266 + $0xec8] sm:$0xff]
      %v795 = vld [vmem:[%s266 + $0xed0] sm:$0xff]
      %v796 = vld [vmem:[%s266 + $0xed8] sm:$0xff]
      %v797 = vld [vmem:[%s266 + $0xee0] sm:$0xff]
      %v798 = vld [vmem:[%s266 + $0xee8] sm:$0xff]
      %v799 = vld [vmem:[%s266 + $0xef0] sm:$0xff]
      %v800 = vld [vmem:[%s266 + $0xef8] sm:$0xff]
      %v801 = vld [vmem:[%s266 + $0xf00] sm:$0xff]
      %v802 = vld [vmem:[%s266 + $0xf08] sm:$0xff]
      %v803 = vld [vmem:[%s266 + $0xf10] sm:$0xff]
      %v804 = vld [vmem:[%s266 + $0xf18] sm:$0xff]
      %v805 = vld [vmem:[%s266 + $0xf20] sm:$0xff]
      %v806 = vld [vmem:[%s266 + $0xf28] sm:$0xff]
      %v807 = vld [vmem:[%s266 + $0xf30] sm:$0xff]
      %v808 = vld [vmem:[%s266 + $0xf38] sm:$0xff]
      %v809 = vld [vmem:[%s266 + $0xf40] sm:$0xff]
      %v810 = vld [vmem:[%s266 + $0xf48] sm:$0xff]
      %v811 = vld [vmem:[%s266 + $0xf50] sm:$0xff]
      %v812 = vld [vmem:[%s266 + $0xf58] sm:$0xff]
      %v813 = vld [vmem:[%s266 + $0xf60] sm:$0xff]
      %v814 = vld [vmem:[%s266 + $0xf68] sm:$0xff]
      %v815 = vld [vmem:[%s266 + $0xf70] sm:$0xff]
      %v816 = vld [vmem:[%s266 + $0xf78] sm:$0xff]
      %v817 = vld [vmem:[%s266 + $0xf80] sm:$0xff]
      %v818 = vld [vmem:[%s266 + $0xf88] sm:$0xff]
      %v819 = vld [vmem:[%s266 + $0xf90] sm:$0xff]
      %v820 = vld [vmem:[%s266 + $0xf98] sm:$0xff]
      %v821 = vld [vmem:[%s266 + $0xfa0] sm:$0xff]
      %v822 = vld [vmem:[%s266 + $0xfa8] sm:$0xff]
      %v823 = vld [vmem:[%s266 + $0xfb0] sm:$0xff]
      %v824 = vld [vmem:[%s266 + $0xfb8] sm:$0xff]
      %v825 = vld [vmem:[%s266 + $0xfc0] sm:$0xff]
      %v826 = vld [vmem:[%s266 + $0xfc8] sm:$0xff]
      %v827 = vld [vmem:[%s266 + $0xfd0] sm:$0xff]
      %v828 = vld [vmem:[%s266 + $0xfd8] sm:$0xff]
      %v829 = vld [vmem:[%s266 + $0xfe0] sm:$0xff]
      %v830 = vld [vmem:[%s266 + $0xfe8] sm:$0xff]
      %v831 = vld [vmem:[%s266 + $0xff0] sm:$0xff]
      %v832 = vld [vmem:[%s266 + $0xff8] sm:$0xff]
      %833 = vmatprep.subr.mxu0 %v322
      %834 = vmatpush1.msra.mxu0 %v321
      %835 = vmatprep.subr.mxu0 %v324
      %836 = vmatpush1.msra.mxu0 %v323
      %837 = vmatprep.subr.mxu0 %v326
      %838 = vmatpush1.msra.mxu0 %v325
      %839 = vmatprep.subr.mxu0 %v328
      %840 = vmatpush1.msra.mxu0 %v327
      %841 = vmatprep.subr.mxu0 %v330
      %842 = vmatpush1.msra.mxu0 %v329
      %843 = vmatprep.subr.mxu0 %v332
      %844 = vmatpush1.msra.mxu0 %v331
      %845 = vmatprep.subr.mxu0 %v334
      %846 = vmatpush1.msra.mxu0 %v333
      %847 = vmatprep.subr.mxu0 %v336
      %848 = vmatpush1.msra.mxu0 %v335
      %849 = vmatprep.subr.mxu0 %v338
      %850 = vmatpush1.msra.mxu0 %v337
      %851 = vmatprep.subr.mxu0 %v340
      %852 = vmatpush1.msra.mxu0 %v339
      %853 = vmatprep.subr.mxu0 %v342
      %854 = vmatpush1.msra.mxu0 %v341
      %855 = vmatprep.subr.mxu0 %v344
      %856 = vmatpush1.msra.mxu0 %v343
      %857 = vmatprep.subr.mxu0 %v346
      %858 = vmatpush1.msra.mxu0 %v345
      %859 = vmatprep.subr.mxu0 %v348
      %860 = vmatpush1.msra.mxu0 %v347
      %861 = vmatprep.subr.mxu0 %v350
      %862 = vmatpush1.msra.mxu0 %v349
      %863 = vmatprep.subr.mxu0 %v352
      %864 = vmatpush1.msra.mxu0 %v351
      %865 = vmatprep.subr.mxu0 %v354
      %866 = vmatpush1.msra.mxu0 %v353
      %867 = vmatprep.subr.mxu0 %v356
      %868 = vmatpush1.msra.mxu0 %v355
      %869 = vmatprep.subr.mxu0 %v358
      %870 = vmatpush1.msra.mxu0 %v357
      %871 = vmatprep.subr.mxu0 %v360
      %872 = vmatpush1.msra.mxu0 %v359
      %873 = vmatprep.subr.mxu0 %v362
      %874 = vmatpush1.msra.mxu0 %v361
      %875 = vmatprep.subr.mxu0 %v364
      %876 = vmatpush1.msra.mxu0 %v363
      %877 = vmatprep.subr.mxu0 %v366
      %878 = vmatpush1.msra.mxu0 %v365
      %879 = vmatprep.subr.mxu0 %v368
      %880 = vmatpush1.msra.mxu0 %v367
      %881 = vmatprep.subr.mxu0 %v370
      %882 = vmatpush1.msra.mxu0 %v369
      %883 = vmatprep.subr.mxu0 %v372
      %884 = vmatpush1.msra.mxu0 %v371
      %885 = vmatprep.subr.mxu0 %v374
      %886 = vmatpush1.msra.mxu0 %v373
      %887 = vmatprep.subr.mxu0 %v376
      %888 = vmatpush1.msra.mxu0 %v375
      %889 = vmatprep.subr.mxu0 %v378
      %890 = vmatpush1.msra.mxu0 %v377
      %891 = vmatprep.subr.mxu0 %v380
      %892 = vmatpush1.msra.mxu0 %v379
      %893 = vmatprep.subr.mxu0 %v382
      %894 = vmatpush1.msra.mxu0 %v381
      %895 = vmatprep.subr.mxu0 %v384
      %896 = vmatpush1.msra.mxu0 %v383
      %897 = vmatprep.mubr.f32.mxu0 %v288
      %898 = vmatmul.mubr.f32.gmra.mrb[0].mxu0 %v287
      %v899 = vpop.f32.mrb[0].mxu0
      %v900 = vadd.f32 0.0, %v899
      %v901 = vpop.f32.mrb[0].mxu0
      %v902 = vadd.f32 0.0, %v901
      %903 = vmatprep.mubr.f32.mxu0 %v304
      %904 = vmatmul.mubr.f32.gmra.mrb[0].mxu0 %v303
      %v905 = vpop.f32.mrb[0].mxu0
      %v906 = vadd.f32 0.0, %v905
      %v907 = vpop.f32.mrb[0].mxu0
      %v908 = vadd.f32 0.0, %v907
      %909 = vdwg.mxu0
      %910 = vmatprep.subr.mxu0 %v386
      %911 = vmatpush1.msra.mxu0 %v385
      %912 = vmatprep.subr.mxu0 %v388
      %913 = vmatpush1.msra.mxu0 %v387
      %914 = vmatprep.subr.mxu0 %v390
      %915 = vmatpush1.msra.mxu0 %v389
      %916 = vmatprep.subr.mxu0 %v392
      %917 = vmatpush1.msra.mxu0 %v391
      %918 = vmatprep.subr.mxu0 %v394
      %919 = vmatpush1.msra.mxu0 %v393
      %920 = vmatprep.subr.mxu0 %v396
      %921 = vmatpush1.msra.mxu0 %v395
      %922 = vmatprep.subr.mxu0 %v398
      %923 = vmatpush1.msra.mxu0 %v397
      %924 = vmatprep.subr.mxu0 %v400
      %925 = vmatpush1.msra.mxu0 %v399
      %926 = vmatprep.subr.mxu0 %v402
      %927 = vmatpush1.msra.mxu0 %v401
      %928 = vmatprep.subr.mxu0 %v404
      %929 = vmatpush1.msra.mxu0 %v403
      %930 = vmatprep.subr.mxu0 %v406
      %931 = vmatpush1.msra.mxu0 %v405
      %932 = vmatprep.subr.mxu0 %v408
      %933 = vmatpush1.msra.mxu0 %v407
      %934 = vmatprep.subr.mxu0 %v410
      %935 = vmatpush1.msra.mxu0 %v409
      %936 = vmatprep.subr.mxu0 %v412
      %937 = vmatpush1.msra.mxu0 %v411
      %938 = vmatprep.subr.mxu0 %v414
      %939 = vmatpush1.msra.mxu0 %v413
      %940 = vmatprep.subr.mxu0 %v416
      %941 = vmatpush1.msra.mxu0 %v415
      %942 = vmatprep.subr.mxu0 %v418
      %943 = vmatpush1.msra.mxu0 %v417
      %944 = vmatprep.subr.mxu0 %v420
      %945 = vmatpush1.msra.mxu0 %v419
      %946 = vmatprep.subr.mxu0 %v422
      %947 = vmatpush1.msra.mxu0 %v421
      %948 = vmatprep.subr.mxu0 %v424
      %949 = vmatpush1.msra.mxu0 %v423
      %950 = vmatprep.subr.mxu0 %v426
      %951 = vmatpush1.msra.mxu0 %v425
      %952 = vmatprep.subr.mxu0 %v428
      %953 = vmatpush1.msra.mxu0 %v427
      %954 = vmatprep.subr.mxu0 %v430
      %955 = vmatpush1.msra.mxu0 %v429
      %956 = vmatprep.subr.mxu0 %v432
      %957 = vmatpush1.msra.mxu0 %v431
      %958 = vmatprep.subr.mxu0 %v434
      %959 = vmatpush1.msra.mxu0 %v433
      %960 = vmatprep.subr.mxu0 %v436
      %961 = vmatpush1.msra.mxu0 %v435
      %962 = vmatprep.subr.mxu0 %v438
      %963 = vmatpush1.msra.mxu0 %v437
      %964 = vmatprep.subr.mxu0 %v440
      %965 = vmatpush1.msra.mxu0 %v439
      %966 = vmatprep.subr.mxu0 %v442
      %967 = vmatpush1.msra.mxu0 %v441
      %968 = vmatprep.subr.mxu0 %v444
      %969 = vmatpush1.msra.mxu0 %v443
      %970 = vmatprep.subr.mxu0 %v446
      %971 = vmatpush1.msra.mxu0 %v445
      %972 = vmatprep.subr.mxu0 %v448
      %973 = vmatpush1.msra.mxu0 %v447
      %974 = vmatprep.mubr.f32.mxu0 %v290
      %975 = vmatmul.mubr.f32.gmra.mrb[0].mxu0 %v289
      %v976 = vpop.f32.mrb[0].mxu0
      %v977 = vadd.f32 %v900, %v976
      %v978 = vpop.f32.mrb[0].mxu0
      %v979 = vadd.f32 %v902, %v978
      %980 = vmatprep.mubr.f32.mxu0 %v306
      %981 = vmatmul.mubr.f32.gmra.mrb[0].mxu0 %v305
      %v982 = vpop.f32.mrb[0].mxu0
      %v983 = vadd.f32 %v906, %v982
      %v984 = vpop.f32.mrb[0].mxu0
      %v985 = vadd.f32 %v908, %v984
      %986 = vdwg.mxu0
      %987 = vmatprep.subr.mxu0 %v450
      %988 = vmatpush1.msra.mxu0 %v449
      %989 = vmatprep.subr.mxu0 %v452
      %990 = vmatpush1.msra.mxu0 %v451
      %991 = vmatprep.subr.mxu0 %v454
      %992 = vmatpush1.msra.mxu0 %v453
      %993 = vmatprep.subr.mxu0 %v456
      %994 = vmatpush1.msra.mxu0 %v455
      %995 = vmatprep.subr.mxu0 %v458
      %996 = vmatpush1.msra.mxu0 %v457
      %997 = vmatprep.subr.mxu0 %v460
      %998 = vmatpush1.msra.mxu0 %v459
      %999 = vmatprep.subr.mxu0 %v462
      %1000 = vmatpush1.msra.mxu0 %v461
      %1001 = vmatprep.subr.mxu0 %v464
      %1002 = vmatpush1.msra.mxu0 %v463
      %1003 = vmatprep.subr.mxu0 %v466
      %1004 = vmatpush1.msra.mxu0 %v465
      %1005 = vmatprep.subr.mxu0 %v468
      %1006 = vmatpush1.msra.mxu0 %v467
      %1007 = vmatprep.subr.mxu0 %v470
      %1008 = vmatpush1.msra.mxu0 %v469
      %1009 = vmatprep.subr.mxu0 %v472
      %1010 = vmatpush1.msra.mxu0 %v471
      %1011 = vmatprep.subr.mxu0 %v474
      %1012 = vmatpush1.msra.mxu0 %v473
      %1013 = vmatprep.subr.mxu0 %v476
      %1014 = vmatpush1.msra.mxu0 %v475
      %1015 = vmatprep.subr.mxu0 %v478
      %1016 = vmatpush1.msra.mxu0 %v477
      %1017 = vmatprep.subr.mxu0 %v480
      %1018 = vmatpush1.msra.mxu0 %v479
      %1019 = vmatprep.subr.mxu0 %v482
      %1020 = vmatpush1.msra.mxu0 %v481
      %1021 = vmatprep.subr.mxu0 %v484
      %1022 = vmatpush1.msra.mxu0 %v483
      %1023 = vmatprep.subr.mxu0 %v486
      %1024 = vmatpush1.msra.mxu0 %v485
      %1025 = vmatprep.subr.mxu0 %v488
      %1026 = vmatpush1.msra.mxu0 %v487
      %1027 = vmatprep.subr.mxu0 %v490
      %1028 = vmatpush1.msra.mxu0 %v489
      %1029 = vmatprep.subr.mxu0 %v492
      %1030 = vmatpush1.msra.mxu0 %v491
      %1031 = vmatprep.subr.mxu0 %v494
      %1032 = vmatpush1.msra.mxu0 %v493
      %1033 = vmatprep.subr.mxu0 %v496
      %1034 = vmatpush1.msra.mxu0 %v495
      %1035 = vmatprep.subr.mxu0 %v498
      %1036 = vmatpush1.msra.mxu0 %v497
      %1037 = vmatprep.subr.mxu0 %v500
      %1038 = vmatpush1.msra.mxu0 %v499
      %1039 = vmatprep.subr.mxu0 %v502
      %1040 = vmatpush1.msra.mxu0 %v501
      %1041 = vmatprep.subr.mxu0 %v504
      %1042 = vmatpush1.msra.mxu0 %v503
      %1043 = vmatprep.subr.mxu0 %v506
      %1044 = vmatpush1.msra.mxu0 %v505
      %1045 = vmatprep.subr.mxu0 %v508
      %1046 = vmatpush1.msra.mxu0 %v507
      %1047 = vmatprep.subr.mxu0 %v510
      %1048 = vmatpush1.msra.mxu0 %v509
      %1049 = vmatprep.subr.mxu0 %v512
      %1050 = vmatpush1.msra.mxu0 %v511
      %1051 = vmatprep.mubr.f32.mxu0 %v292
      %1052 = vmatmul.mubr.f32.gmra.mrb[0].mxu0 %v291
      %v1053 = vpop.f32.mrb[0].mxu0
      %v1054 = vadd.f32 %v977, %v1053
      %v1055 = vpop.f32.mrb[0].mxu0
      %v1056 = vadd.f32 %v979, %v1055
      %1057 = vmatprep.mubr.f32.mxu0 %v308
      %1058 = vmatmul.mubr.f32.gmra.mrb[0].mxu0 %v307
      %v1059 = vpop.f32.mrb[0].mxu0
      %v1060 = vadd.f32 %v983, %v1059
      %v1061 = vpop.f32.mrb[0].mxu0
      %v1062 = vadd.f32 %v985, %v1061
      %1063 = vdwg.mxu0
      %1064 = vmatprep.subr.mxu0 %v514
      %1065 = vmatpush1.msra.mxu0 %v513
      %1066 = vmatprep.subr.mxu0 %v516
      %1067 = vmatpush1.msra.mxu0 %v515
      %1068 = vmatprep.subr.mxu0 %v518
      %1069 = vmatpush1.msra.mxu0 %v517
      %1070 = vmatprep.subr.mxu0 %v520
      %1071 = vmatpush1.msra.mxu0 %v519
      %1072 = vmatprep.subr.mxu0 %v522
      %1073 = vmatpush1.msra.mxu0 %v521
      %1074 = vmatprep.subr.mxu0 %v524
      %1075 = vmatpush1.msra.mxu0 %v523
      %1076 = vmatprep.subr.mxu0 %v526
      %1077 = vmatpush1.msra.mxu0 %v525
      %1078 = vmatprep.subr.mxu0 %v528
      %1079 = vmatpush1.msra.mxu0 %v527
      %1080 = vmatprep.subr.mxu0 %v530
      %1081 = vmatpush1.msra.mxu0 %v529
      %1082 = vmatprep.subr.mxu0 %v532
      %1083 = vmatpush1.msra.mxu0 %v531
      %1084 = vmatprep.subr.mxu0 %v534
      %1085 = vmatpush1.msra.mxu0 %v533
      %1086 = vmatprep.subr.mxu0 %v536
      %1087 = vmatpush1.msra.mxu0 %v535
      %1088 = vmatprep.subr.mxu0 %v538
      %1089 = vmatpush1.msra.mxu0 %v537
      %1090 = vmatprep.subr.mxu0 %v540
      %1091 = vmatpush1.msra.mxu0 %v539
      %1092 = vmatprep.subr.mxu0 %v542
      %1093 = vmatpush1.msra.mxu0 %v541
      %1094 = vmatprep.subr.mxu0 %v544
      %1095 = vmatpush1.msra.mxu0 %v543
      %1096 = vmatprep.subr.mxu0 %v546
      %1097 = vmatpush1.msra.mxu0 %v545
      %1098 = vmatprep.subr.mxu0 %v548
      %1099 = vmatpush1.msra.mxu0 %v547
      %1100 = vmatprep.subr.mxu0 %v550
      %1101 = vmatpush1.msra.mxu0 %v549
      %1102 = vmatprep.subr.mxu0 %v552
      %1103 = vmatpush1.msra.mxu0 %v551
      %1104 = vmatprep.subr.mxu0 %v554
      %1105 = vmatpush1.msra.mxu0 %v553
      %1106 = vmatprep.subr.mxu0 %v556
      %1107 = vmatpush1.msra.mxu0 %v555
      %1108 = vmatprep.subr.mxu0 %v558
      %1109 = vmatpush1.msra.mxu0 %v557
      %1110 = vmatprep.subr.mxu0 %v560
      %1111 = vmatpush1.msra.mxu0 %v559
      %1112 = vmatprep.subr.mxu0 %v562
      %1113 = vmatpush1.msra.mxu0 %v561
      %1114 = vmatprep.subr.mxu0 %v564
      %1115 = vmatpush1.msra.mxu0 %v563
      %1116 = vmatprep.subr.mxu0 %v566
      %1117 = vmatpush1.msra.mxu0 %v565
      %1118 = vmatprep.subr.mxu0 %v568
      %1119 = vmatpush1.msra.mxu0 %v567
      %1120 = vmatprep.subr.mxu0 %v570
      %1121 = vmatpush1.msra.mxu0 %v569
      %1122 = vmatprep.subr.mxu0 %v572
      %1123 = vmatpush1.msra.mxu0 %v571
      %1124 = vmatprep.subr.mxu0 %v574
      %1125 = vmatpush1.msra.mxu0 %v573
      %1126 = vmatprep.subr.mxu0 %v576
      %1127 = vmatpush1.msra.mxu0 %v575
      %1128 = vmatprep.mubr.f32.mxu0 %v294
      %1129 = vmatmul.mubr.f32.gmra.mrb[0].mxu0 %v293
      %v1130 = vpop.f32.mrb[0].mxu0
      %v1131 = vadd.f32 %v1054, %v1130
      %v1132 = vpop.f32.mrb[0].mxu0
      %v1133 = vadd.f32 %v1056, %v1132
      %1134 = vmatprep.mubr.f32.mxu0 %v310
      %1135 = vmatmul.mubr.f32.gmra.mrb[0].mxu0 %v309
      %v1136 = vpop.f32.mrb[0].mxu0
      %v1137 = vadd.f32 %v1060, %v1136
      %v1138 = vpop.f32.mrb[0].mxu0
      %v1139 = vadd.f32 %v1062, %v1138
      %1140 = vdwg.mxu0
      %1141 = vmatprep.subr.mxu0 %v578
      %1142 = vmatpush1.msra.mxu0 %v577
      %1143 = vmatprep.subr.mxu0 %v580
      %1144 = vmatpush1.msra.mxu0 %v579
      %1145 = vmatprep.subr.mxu0 %v582
      %1146 = vmatpush1.msra.mxu0 %v581
      %1147 = vmatprep.subr.mxu0 %v584
      %1148 = vmatpush1.msra.mxu0 %v583
      %1149 = vmatprep.subr.mxu0 %v586
      %1150 = vmatpush1.msra.mxu0 %v585
      %1151 = vmatprep.subr.mxu0 %v588
      %1152 = vmatpush1.msra.mxu0 %v587
      %1153 = vmatprep.subr.mxu0 %v590
      %1154 = vmatpush1.msra.mxu0 %v589
      %1155 = vmatprep.subr.mxu0 %v592
      %1156 = vmatpush1.msra.mxu0 %v591
      %1157 = vmatprep.subr.mxu0 %v594
      %1158 = vmatpush1.msra.mxu0 %v593
      %1159 = vmatprep.subr.mxu0 %v596
      %1160 = vmatpush1.msra.mxu0 %v595
      %1161 = vmatprep.subr.mxu0 %v598
      %1162 = vmatpush1.msra.mxu0 %v597
      %1163 = vmatprep.subr.mxu0 %v600
      %1164 = vmatpush1.msra.mxu0 %v599
      %1165 = vmatprep.subr.mxu0 %v602
      %1166 = vmatpush1.msra.mxu0 %v601
      %1167 = vmatprep.subr.mxu0 %v604
      %1168 = vmatpush1.msra.mxu0 %v603
      %1169 = vmatprep.subr.mxu0 %v606
      %1170 = vmatpush1.msra.mxu0 %v605
      %1171 = vmatprep.subr.mxu0 %v608
      %1172 = vmatpush1.msra.mxu0 %v607
      %1173 = vmatprep.subr.mxu0 %v610
      %1174 = vmatpush1.msra.mxu0 %v609
      %1175 = vmatprep.subr.mxu0 %v612
      %1176 = vmatpush1.msra.mxu0 %v611
      %1177 = vmatprep.subr.mxu0 %v614
      %1178 = vmatpush1.msra.mxu0 %v613
      %1179 = vmatprep.subr.mxu0 %v616
      %1180 = vmatpush1.msra.mxu0 %v615
      %1181 = vmatprep.subr.mxu0 %v618
      %1182 = vmatpush1.msra.mxu0 %v617
      %1183 = vmatprep.subr.mxu0 %v620
      %1184 = vmatpush1.msra.mxu0 %v619
      %1185 = vmatprep.subr.mxu0 %v622
      %1186 = vmatpush1.msra.mxu0 %v621
      %1187 = vmatprep.subr.mxu0 %v624
      %1188 = vmatpush1.msra.mxu0 %v623
      %1189 = vmatprep.subr.mxu0 %v626
      %1190 = vmatpush1.msra.mxu0 %v625
      %1191 = vmatprep.subr.mxu0 %v628
      %1192 = vmatpush1.msra.mxu0 %v627
      %1193 = vmatprep.subr.mxu0 %v630
      %1194 = vmatpush1.msra.mxu0 %v629
      %1195 = vmatprep.subr.mxu0 %v632
      %1196 = vmatpush1.msra.mxu0 %v631
      %1197 = vmatprep.subr.mxu0 %v634
      %1198 = vmatpush1.msra.mxu0 %v633
      %1199 = vmatprep.subr.mxu0 %v636
      %1200 = vmatpush1.msra.mxu0 %v635
      %1201 = vmatprep.subr.mxu0 %v638
      %1202 = vmatpush1.msra.mxu0 %v637
      %1203 = vmatprep.subr.mxu0 %v640
      %1204 = vmatpush1.msra.mxu0 %v639
      %1205 = vmatprep.mubr.f32.mxu0 %v296
      %1206 = vmatmul.mubr.f32.gmra.mrb[0].mxu0 %v295
      %v1207 = vpop.f32.mrb[0].mxu0
      %v1208 = vadd.f32 %v1131, %v1207
      %v1209 = vpop.f32.mrb[0].mxu0
      %v1210 = vadd.f32 %v1133, %v1209
      %1211 = vmatprep.mubr.f32.mxu0 %v312
      %1212 = vmatmul.mubr.f32.gmra.mrb[0].mxu0 %v311
      %v1213 = vpop.f32.mrb[0].mxu0
      %v1214 = vadd.f32 %v1137, %v1213
      %v1215 = vpop.f32.mrb[0].mxu0
      %v1216 = vadd.f32 %v1139, %v1215
      %1217 = vdwg.mxu0
      %1218 = vmatprep.subr.mxu0 %v642
      %1219 = vmatpush1.msra.mxu0 %v641
      %1220 = vmatprep.subr.mxu0 %v644
      %1221 = vmatpush1.msra.mxu0 %v643
      %1222 = vmatprep.subr.mxu0 %v646
      %1223 = vmatpush1.msra.mxu0 %v645
      %1224 = vmatprep.subr.mxu0 %v648
      %1225 = vmatpush1.msra.mxu0 %v647
      %1226 = vmatprep.subr.mxu0 %v650
      %1227 = vmatpush1.msra.mxu0 %v649
      %1228 = vmatprep.subr.mxu0 %v652
      %1229 = vmatpush1.msra.mxu0 %v651
      %1230 = vmatprep.subr.mxu0 %v654
      %1231 = vmatpush1.msra.mxu0 %v653
      %1232 = vmatprep.subr.mxu0 %v656
      %1233 = vmatpush1.msra.mxu0 %v655
      %1234 = vmatprep.subr.mxu0 %v658
      %1235 = vmatpush1.msra.mxu0 %v657
      %1236 = vmatprep.subr.mxu0 %v660
      %1237 = vmatpush1.msra.mxu0 %v659
      %1238 = vmatprep.subr.mxu0 %v662
      %1239 = vmatpush1.msra.mxu0 %v661
      %1240 = vmatprep.subr.mxu0 %v664
      %1241 = vmatpush1.msra.mxu0 %v663
      %1242 = vmatprep.subr.mxu0 %v666
      %1243 = vmatpush1.msra.mxu0 %v665
      %1244 = vmatprep.subr.mxu0 %v668
      %1245 = vmatpush1.msra.mxu0 %v667
      %1246 = vmatprep.subr.mxu0 %v670
      %1247 = vmatpush1.msra.mxu0 %v669
      %1248 = vmatprep.subr.mxu0 %v672
      %1249 = vmatpush1.msra.mxu0 %v671
      %1250 = vmatprep.subr.mxu0 %v674
      %1251 = vmatpush1.msra.mxu0 %v673
      %1252 = vmatprep.subr.mxu0 %v676
      %1253 = vmatpush1.msra.mxu0 %v675
      %1254 = vmatprep.subr.mxu0 %v678
      %1255 = vmatpush1.msra.mxu0 %v677
      %1256 = vmatprep.subr.mxu0 %v680
      %1257 = vmatpush1.msra.mxu0 %v679
      %1258 = vmatprep.subr.mxu0 %v682
      %1259 = vmatpush1.msra.mxu0 %v681
      %1260 = vmatprep.subr.mxu0 %v684
      %1261 = vmatpush1.msra.mxu0 %v683
      %1262 = vmatprep.subr.mxu0 %v686
      %1263 = vmatpush1.msra.mxu0 %v685
      %1264 = vmatprep.subr.mxu0 %v688
      %1265 = vmatpush1.msra.mxu0 %v687
      %1266 = vmatprep.subr.mxu0 %v690
      %1267 = vmatpush1.msra.mxu0 %v689
      %1268 = vmatprep.subr.mxu0 %v692
      %1269 = vmatpush1.msra.mxu0 %v691
      %1270 = vmatprep.subr.mxu0 %v694
      %1271 = vmatpush1.msra.mxu0 %v693
      %1272 = vmatprep.subr.mxu0 %v696
      %1273 = vmatpush1.msra.mxu0 %v695
      %1274 = vmatprep.subr.mxu0 %v698
      %1275 = vmatpush1.msra.mxu0 %v697
      %1276 = vmatprep.subr.mxu0 %v700
      %1277 = vmatpush1.msra.mxu0 %v699
      %1278 = vmatprep.subr.mxu0 %v702
      %1279 = vmatpush1.msra.mxu0 %v701
      %1280 = vmatprep.subr.mxu0 %v704
      %1281 = vmatpush1.msra.mxu0 %v703
      %1282 = vmatprep.mubr.f32.mxu0 %v298
      %1283 = vmatmul.mubr.f32.gmra.mrb[0].mxu0 %v297
      %v1284 = vpop.f32.mrb[0].mxu0
      %v1285 = vadd.f32 %v1208, %v1284
      %v1286 = vpop.f32.mrb[0].mxu0
      %v1287 = vadd.f32 %v1210, %v1286
      %1288 = vmatprep.mubr.f32.mxu0 %v314
      %1289 = vmatmul.mubr.f32.gmra.mrb[0].mxu0 %v313
      %v1290 = vpop.f32.mrb[0].mxu0
      %v1291 = vadd.f32 %v1214, %v1290
      %v1292 = vpop.f32.mrb[0].mxu0
      %v1293 = vadd.f32 %v1216, %v1292
      %1294 = vdwg.mxu0
      %1295 = vmatprep.subr.mxu0 %v706
      %1296 = vmatpush1.msra.mxu0 %v705
      %1297 = vmatprep.subr.mxu0 %v708
      %1298 = vmatpush1.msra.mxu0 %v707
      %1299 = vmatprep.subr.mxu0 %v710
      %1300 = vmatpush1.msra.mxu0 %v709
      %1301 = vmatprep.subr.mxu0 %v712
      %1302 = vmatpush1.msra.mxu0 %v711
      %1303 = vmatprep.subr.mxu0 %v714
      %1304 = vmatpush1.msra.mxu0 %v713
      %1305 = vmatprep.subr.mxu0 %v716
      %1306 = vmatpush1.msra.mxu0 %v715
      %1307 = vmatprep.subr.mxu0 %v718
      %1308 = vmatpush1.msra.mxu0 %v717
      %1309 = vmatprep.subr.mxu0 %v720
      %1310 = vmatpush1.msra.mxu0 %v719
      %1311 = vmatprep.subr.mxu0 %v722
      %1312 = vmatpush1.msra.mxu0 %v721
      %1313 = vmatprep.subr.mxu0 %v724
      %1314 = vmatpush1.msra.mxu0 %v723
      %1315 = vmatprep.subr.mxu0 %v726
      %1316 = vmatpush1.msra.mxu0 %v725
      %1317 = vmatprep.subr.mxu0 %v728
      %1318 = vmatpush1.msra.mxu0 %v727
      %1319 = vmatprep.subr.mxu0 %v730
      %1320 = vmatpush1.msra.mxu0 %v729
      %1321 = vmatprep.subr.mxu0 %v732
      %1322 = vmatpush1.msra.mxu0 %v731
      %1323 = vmatprep.subr.mxu0 %v734
      %1324 = vmatpush1.msra.mxu0 %v733
      %1325 = vmatprep.subr.mxu0 %v736
      %1326 = vmatpush1.msra.mxu0 %v735
      %1327 = vmatprep.subr.mxu0 %v738
      %1328 = vmatpush1.msra.mxu0 %v737
      %1329 = vmatprep.subr.mxu0 %v740
      %1330 = vmatpush1.msra.mxu0 %v739
      %1331 = vmatprep.subr.mxu0 %v742
      %1332 = vmatpush1.msra.mxu0 %v741
      %1333 = vmatprep.subr.mxu0 %v744
      %1334 = vmatpush1.msra.mxu0 %v743
      %1335 = vmatprep.subr.mxu0 %v746
      %1336 = vmatpush1.msra.mxu0 %v745
      %1337 = vmatprep.subr.mxu0 %v748
      %1338 = vmatpush1.msra.mxu0 %v747
      %1339 = vmatprep.subr.mxu0 %v750
      %1340 = vmatpush1.msra.mxu0 %v749
      %1341 = vmatprep.subr.mxu0 %v752
      %1342 = vmatpush1.msra.mxu0 %v751
      %1343 = vmatprep.subr.mxu0 %v754
      %1344 = vmatpush1.msra.mxu0 %v753
      %1345 = vmatprep.subr.mxu0 %v756
      %1346 = vmatpush1.msra.mxu0 %v755
      %1347 = vmatprep.subr.mxu0 %v758
      %1348 = vmatpush1.msra.mxu0 %v757
      %1349 = vmatprep.subr.mxu0 %v760
      %1350 = vmatpush1.msra.mxu0 %v759
      %1351 = vmatprep.subr.mxu0 %v762
      %1352 = vmatpush1.msra.mxu0 %v761
      %1353 = vmatprep.subr.mxu0 %v764
      %1354 = vmatpush1.msra.mxu0 %v763
      %1355 = vmatprep.subr.mxu0 %v766
      %1356 = vmatpush1.msra.mxu0 %v765
      %1357 = vmatprep.subr.mxu0 %v768
      %1358 = vmatpush1.msra.mxu0 %v767
      %1359 = vmatprep.mubr.f32.mxu0 %v300
      %1360 = vmatmul.mubr.f32.gmra.mrb[0].mxu0 %v299
      %v1361 = vpop.f32.mrb[0].mxu0
      %v1362 = vadd.f32 %v1285, %v1361
      %v1363 = vpop.f32.mrb[0].mxu0
      %v1364 = vadd.f32 %v1287, %v1363
      %1365 = vmatprep.mubr.f32.mxu0 %v316
      %1366 = vmatmul.mubr.f32.gmra.mrb[0].mxu0 %v315
      %v1367 = vpop.f32.mrb[0].mxu0
      %v1368 = vadd.f32 %v1291, %v1367
      %v1369 = vpop.f32.mrb[0].mxu0
      %v1370 = vadd.f32 %v1293, %v1369
      %1371 = vdwg.mxu0
      %1372 = vmatprep.subr.mxu0 %v770
      %1373 = vmatpush1.msra.mxu0 %v769
      %1374 = vmatprep.subr.mxu0 %v772
      %1375 = vmatpush1.msra.mxu0 %v771
      %1376 = vmatprep.subr.mxu0 %v774
      %1377 = vmatpush1.msra.mxu0 %v773
      %1378 = vmatprep.subr.mxu0 %v776
      %1379 = vmatpush1.msra.mxu0 %v775
      %1380 = vmatprep.subr.mxu0 %v778
      %1381 = vmatpush1.msra.mxu0 %v777
      %1382 = vmatprep.subr.mxu0 %v780
      %1383 = vmatpush1.msra.mxu0 %v779
      %1384 = vmatprep.subr.mxu0 %v782
      %1385 = vmatpush1.msra.mxu0 %v781
      %1386 = vmatprep.subr.mxu0 %v784
      %1387 = vmatpush1.msra.mxu0 %v783
      %1388 = vmatprep.subr.mxu0 %v786
      %1389 = vmatpush1.msra.mxu0 %v785
      %1390 = vmatprep.subr.mxu0 %v788
      %1391 = vmatpush1.msra.mxu0 %v787
      %1392 = vmatprep.subr.mxu0 %v790
      %1393 = vmatpush1.msra.mxu0 %v789
      %1394 = vmatprep.subr.mxu0 %v792
      %1395 = vmatpush1.msra.mxu0 %v791
      %1396 = vmatprep.subr.mxu0 %v794
      %1397 = vmatpush1.msra.mxu0 %v793
      %1398 = vmatprep.subr.mxu0 %v796
      %1399 = vmatpush1.msra.mxu0 %v795
      %1400 = vmatprep.subr.mxu0 %v798
      %1401 = vmatpush1.msra.mxu0 %v797
      %1402 = vmatprep.subr.mxu0 %v800
      %1403 = vmatpush1.msra.mxu0 %v799
      %1404 = vmatprep.subr.mxu0 %v802
      %1405 = vmatpush1.msra.mxu0 %v801
      %1406 = vmatprep.subr.mxu0 %v804
      %1407 = vmatpush1.msra.mxu0 %v803
      %1408 = vmatprep.subr.mxu0 %v806
      %1409 = vmatpush1.msra.mxu0 %v805
      %1410 = vmatprep.subr.mxu0 %v808
      %1411 = vmatpush1.msra.mxu0 %v807
      %1412 = vmatprep.subr.mxu0 %v810
      %1413 = vmatpush1.msra.mxu0 %v809
      %1414 = vmatprep.subr.mxu0 %v812
      %1415 = vmatpush1.msra.mxu0 %v811
      %1416 = vmatprep.subr.mxu0 %v814
      %1417 = vmatpush1.msra.mxu0 %v813
      %1418 = vmatprep.subr.mxu0 %v816
      %1419 = vmatpush1.msra.mxu0 %v815
      %1420 = vmatprep.subr.mxu0 %v818
      %1421 = vmatpush1.msra.mxu0 %v817
      %1422 = vmatprep.subr.mxu0 %v820
      %1423 = vmatpush1.msra.mxu0 %v819
      %1424 = vmatprep.subr.mxu0 %v822
      %1425 = vmatpush1.msra.mxu0 %v821
      %1426 = vmatprep.subr.mxu0 %v824
      %1427 = vmatpush1.msra.mxu0 %v823
      %1428 = vmatprep.subr.mxu0 %v826
      %1429 = vmatpush1.msra.mxu0 %v825
      %1430 = vmatprep.subr.mxu0 %v828
      %1431 = vmatpush1.msra.mxu0 %v827
      %1432 = vmatprep.subr.mxu0 %v830
      %1433 = vmatpush1.msra.mxu0 %v829
      %1434 = vmatprep.subr.mxu0 %v832
      %1435 = vmatpush1.msra.mxu0 %v831
      %1436 = vmatprep.mubr.f32.mxu0 %v302
      %1437 = vmatmul.mubr.f32.gmra.mrb[0].mxu0 %v301
      %v1438 = vpop.f32.mrb[0].mxu0
      %v1439 = vadd.f32 %v1362, %v1438
      %v1440 = vpop.f32.mrb[0].mxu0
      %v1441 = vadd.f32 %v1364, %v1440
      %1442 = vmatprep.mubr.f32.mxu0 %v318
      %1443 = vmatmul.mubr.f32.gmra.mrb[0].mxu0 %v317
      %v1444 = vpop.f32.mrb[0].mxu0
      %v1445 = vadd.f32 %v1368, %v1444
      %v1446 = vpop.f32.mrb[0].mxu0
      %v1447 = vadd.f32 %v1370, %v1446
      %1448 = vdwg.mxu0
      %1450 = vset.pattern.permute.xlu0 0
      %1451 = vperm.xlu0 %1450, %v319
      %v1452 = vpop.permute.xlu0 %1451
      %v1454 = vadd.f32 %v1439, %v1452
      %v1455 = vadd.f32 %v1441, %v1452
      %vm1456 = vcmask 1043456
      %v1457 = vsel %vm1456, %v1454, 0.0
      %vm1458 = vcmask 551936
      %v1459 = vsel %vm1458, %v1455, 0.0
      %v1460 = vadd.f32 %v1457, %v1459
      %1461 = vadd.xlane.f32.xlu0 %v1460
      %v1462 = vpop.xlane.xlu0 %1461
      %v1463 = vmul.f32 %v1462, 0.0051020407
      %v1464 = vmul.f32 %v1454, %v1463
      %v1465 = vmul.f32 %v1455, %v1463
      %v1466 = vsel %vm1456, %v1464, 0.0
      %v1467 = vrot.slane %v1466, 4
      %v1468 = vadd.f32 %v1466, %v1467
      %v1469 = vrot.slane %v1468, 2
      %v1470 = vadd.f32 %v1468, %v1469
      %v1471 = vrot.slane %v1470, 1
      %v1472 = vadd.f32 %v1470, %v1471
      %v1473 = vsel %vm1458, %v1465, 0.0
      %v1474 = vrot.slane %v1473, 4
      %v1475 = vadd.f32 %v1473, %v1474
      %v1476 = vrot.slane %v1475, 2
      %v1477 = vadd.f32 %v1475, %v1476
      %v1478 = vrot.slane %v1477, 1
      %v1479 = vadd.f32 %v1477, %v1478
      %v1480 = vmul.f32 %v1472, 0.25
      %v1481 = vmul.f32 %v1479, 0.25
      %v1482 = vmul.f32 %v1480, %v1445
      %v1483 = vmul.f32 %v1481, %v1447
      %v1486 = vrot.slane %v1482, 4
      %v1487 = vrot.slane %v1483, 4
      %v1490 = vadd.f32 %v1439, %v1486
      %v1491 = vadd.f32 %v1441, %v1487
      %vm1492 = vcmask 1047556
      %v1493 = vsel %vm1492, %v1490, 0.0
      %vm1494 = vcmask 556036
      %v1495 = vsel %vm1494, %v1491, 0.0
      %v1496 = vadd.f32 %v1493, %v1495
      %1497 = vadd.xlane.f32.xlu0 %v1496
      %v1498 = vpop.xlane.xlu0 %1497
      %v1499 = vmul.f32 %v1498, 0.0051020407
      %v1501 = vrot.slane %v320, 4
      %v1503 = vadd.f32 %v1499, %v1501
      %v1506 = vcombine.low %v1454, %v1455
      %vm1508 = vmor %vm1494, %vm1456
      %1509 = vst.msk [vmem:[%s273] sm:$0xff] %vm1508, %v1506
      %v1512 = vcombine.low %v1480, %v1481
      %v1514 = vunpack.c.l.s4 1966171168
      %v1515 = vunpack.c.0.s8 %v1514
      %v1516 = vlaneseq
      %v1517 = vshrl.u32 %v1516, 7
      %v1518 = vsub.s32 %v1515, %v1517
      %v1519 = vrot.slane %v1512, %v1518
      %v1521 = vunpack.c.l.s4 1966171168
      %v1522 = vunpack.c.0.s8 %v1521
      %v1523 = vlaneseq
      %v1524 = vshrl.u32 %v1523, 7
      %v1525 = vsub.s32 %v1522, %v1524
      %v1526 = vrot.slane %v1519, %v1525
      %v1528 = vlaneseq
      %vm1529 = vcmp.ge.s32.totalorder %v1528, 0
      %vm1530 = vcmp.lt.s32.totalorder %v1528, 196
      %vm1531 = vmand %vm1529, %vm1530
      %1532 = vst.msk [vmem:[%s279] sm:$0x3] %vm1531, %v1526
      %vm1533 = vcmask 3072
      %1534 = vst.msk [vmem:[%s285] sm:$0xf] %vm1533, %v1463
      %vm1535 = vcmask 7172
      %1536 = vst.msk [vmem:[%s285] sm:$0xf0] %vm1535, %v1503
      %s1537 = scalar_lea.vmem %s266, 4096
      %v1538 = vld [vmem:[%s1537] sm:$0xff]
      %v1539 = vld [vmem:[%s1537 + $0x8] sm:$0xff]
      %v1540 = vld [vmem:[%s1537 + $0x10] sm:$0xff]
      %v1541 = vld [vmem:[%s1537 + $0x18] sm:$0xff]
      %v1542 = vld [vmem:[%s1537 + $0x20] sm:$0xff]
      %v1543 = vld [vmem:[%s1537 + $0x28] sm:$0xff]
      %v1544 = vld [vmem:[%s1537 + $0x30] sm:$0xff]
      %v1545 = vld [vmem:[%s1537 + $0x38] sm:$0xff]
      %v1546 = vld [vmem:[%s1537 + $0x40] sm:$0xff]
      %v1547 = vld [vmem:[%s1537 + $0x48] sm:$0xff]
      %v1548 = vld [vmem:[%s1537 + $0x50] sm:$0xff]
      %v1549 = vld [vmem:[%s1537 + $0x58] sm:$0xff]
      %v1550 = vld [vmem:[%s1537 + $0x60] sm:$0xff]
      %v1551 = vld [vmem:[%s1537 + $0x68] sm:$0xff]
      %v1552 = vld [vmem:[%s1537 + $0x70] sm:$0xff]
      %v1553 = vld [vmem:[%s1537 + $0x78] sm:$0xff]
      %v1554 = vld [vmem:[%s1537 + $0x80] sm:$0xff]
      %v1555 = vld [vmem:[%s1537 + $0x88] sm:$0xff]
      %v1556 = vld [vmem:[%s1537 + $0x90] sm:$0xff]
      %v1557 = vld [vmem:[%s1537 + $0x98] sm:$0xff]
      %v1558 = vld [vmem:[%s1537 + $0xa0] sm:$0xff]
      %v1559 = vld [vmem:[%s1537 + $0xa8] sm:$0xff]
      %v1560 = vld [vmem:[%s1537 + $0xb0] sm:$0xff]
      %v1561 = vld [vmem:[%s1537 + $0xb8] sm:$0xff]
      %v1562 = vld [vmem:[%s1537 + $0xc0] sm:$0xff]
      %v1563 = vld [vmem:[%s1537 + $0xc8] sm:$0xff]
      %v1564 = vld [vmem:[%s1537 + $0xd0] sm:$0xff]
      %v1565 = vld [vmem:[%s1537 + $0xd8] sm:$0xff]
      %v1566 = vld [vmem:[%s1537 + $0xe0] sm:$0xff]
      %v1567 = vld [vmem:[%s1537 + $0xe8] sm:$0xff]
      %v1568 = vld [vmem:[%s1537 + $0xf0] sm:$0xff]
      %v1569 = vld [vmem:[%s1537 + $0xf8] sm:$0xff]
      %v1570 = vld [vmem:[%s1537 + $0x100] sm:$0xff]
      %v1571 = vld [vmem:[%s1537 + $0x108] sm:$0xff]
      %v1572 = vld [vmem:[%s1537 + $0x110] sm:$0xff]
      %v1573 = vld [vmem:[%s1537 + $0x118] sm:$0xff]
      %v1574 = vld [vmem:[%s1537 + $0x120] sm:$0xff]
      %v1575 = vld [vmem:[%s1537 + $0x128] sm:$0xff]
      %v1576 = vld [vmem:[%s1537 + $0x130] sm:$0xff]
      %v1577 = vld [vmem:[%s1537 + $0x138] sm:$0xff]
      %v1578 = vld [vmem:[%s1537 + $0x140] sm:$0xff]
      %v1579 = vld [vmem:[%s1537 + $0x148] sm:$0xff]
      %v1580 = vld [vmem:[%s1537 + $0x150] sm:$0xff]
      %v1581 = vld [vmem:[%s1537 + $0x158] sm:$0xff]
      %v1582 = vld [vmem:[%s1537 + $0x160] sm:$0xff]
      %v1583 = vld [vmem:[%s1537 + $0x168] sm:$0xff]
      %v1584 = vld [vmem:[%s1537 + $0x170] sm:$0xff]
      %v1585 = vld [vmem:[%s1537 + $0x178] sm:$0xff]
      %v1586 = vld [vmem:[%s1537 + $0x180] sm:$0xff]
      %v1587 = vld [vmem:[%s1537 + $0x188] sm:$0xff]
      %v1588 = vld [vmem:[%s1537 + $0x190] sm:$0xff]
      %v1589 = vld [vmem:[%s1537 + $0x198] sm:$0xff]
      %v1590 = vld [vmem:[%s1537 + $0x1a0] sm:$0xff]
      %v1591 = vld [vmem:[%s1537 + $0x1a8] sm:$0xff]
      %v1592 = vld [vmem:[%s1537 + $0x1b0] sm:$0xff]
      %v1593 = vld [vmem:[%s1537 + $0x1b8] sm:$0xff]
      %v1594 = vld [vmem:[%s1537 + $0x1c0] sm:$0xff]
      %v1595 = vld [vmem:[%s1537 + $0x1c8] sm:$0xff]
      %v1596 = vld [vmem:[%s1537 + $0x1d0] sm:$0xff]
      %v1597 = vld [vmem:[%s1537 + $0x1d8] sm:$0xff]
      %v1598 = vld [vmem:[%s1537 + $0x1e0] sm:$0xff]
      %v1599 = vld [vmem:[%s1537 + $0x1e8] sm:$0xff]
      %v1600 = vld [vmem:[%s1537 + $0x1f0] sm:$0xff]
      %v1601 = vld [vmem:[%s1537 + $0x1f8] sm:$0xff]
      %v1602 = vld [vmem:[%s1537 + $0x200] sm:$0xff]
      %v1603 = vld [vmem:[%s1537 + $0x208] sm:$0xff]
      %v1604 = vld [vmem:[%s1537 + $0x210] sm:$0xff]
      %v1605 = vld [vmem:[%s1537 + $0x218] sm:$0xff]
      %v1606 = vld [vmem:[%s1537 + $0x220] sm:$0xff]
      %v1607 = vld [vmem:[%s1537 + $0x228] sm:$0xff]
      %v1608 = vld [vmem:[%s1537 + $0x230] sm:$0xff]
      %v1609 = vld [vmem:[%s1537 + $0x238] sm:$0xff]
      %v1610 = vld [vmem:[%s1537 + $0x240] sm:$0xff]
      %v1611 = vld [vmem:[%s1537 + $0x248] sm:$0xff]
      %v1612 = vld [vmem:[%s1537 + $0x250] sm:$0xff]
      %v1613 = vld [vmem:[%s1537 + $0x258] sm:$0xff]
      %v1614 = vld [vmem:[%s1537 + $0x260] sm:$0xff]
      %v1615 = vld [vmem:[%s1537 + $0x268] sm:$0xff]
      %v1616 = vld [vmem:[%s1537 + $0x270] sm:$0xff]
      %v1617 = vld [vmem:[%s1537 + $0x278] sm:$0xff]
      %v1618 = vld [vmem:[%s1537 + $0x280] sm:$0xff]
      %v1619 = vld [vmem:[%s1537 + $0x288] sm:$0xff]
      %v1620 = vld [vmem:[%s1537 + $0x290] sm:$0xff]
      %v1621 = vld [vmem:[%s1537 + $0x298] sm:$0xff]
      %v1622 = vld [vmem:[%s1537 + $0x2a0] sm:$0xff]
      %v1623 = vld [vmem:[%s1537 + $0x2a8] sm:$0xff]
      %v1624 = vld [vmem:[%s1537 + $0x2b0] sm:$0xff]
      %v1625 = vld [vmem:[%s1537 + $0x2b8] sm:$0xff]
      %v1626 = vld [vmem:[%s1537 + $0x2c0] sm:$0xff]
      %v1627 = vld [vmem:[%s1537 + $0x2c8] sm:$0xff]
      %v1628 = vld [vmem:[%s1537 + $0x2d0] sm:$0xff]
      %v1629 = vld [vmem:[%s1537 + $0x2d8] sm:$0xff]
      %v1630 = vld [vmem:[%s1537 + $0x2e0] sm:$0xff]
      %v1631 = vld [vmem:[%s1537 + $0x2e8] sm:$0xff]
      %v1632 = vld [vmem:[%s1537 + $0x2f0] sm:$0xff]
      %v1633 = vld [vmem:[%s1537 + $0x2f8] sm:$0xff]
      %v1634 = vld [vmem:[%s1537 + $0x300] sm:$0xff]
      %v1635 = vld [vmem:[%s1537 + $0x308] sm:$0xff]
      %v1636 = vld [vmem:[%s1537 + $0x310] sm:$0xff]
      %v1637 = vld [vmem:[%s1537 + $0x318] sm:$0xff]
      %v1638 = vld [vmem:[%s1537 + $0x320] sm:$0xff]
      %v1639 = vld [vmem:[%s1537 + $0x328] sm:$0xff]
      %v1640 = vld [vmem:[%s1537 + $0x330] sm:$0xff]
      %v1641 = vld [vmem:[%s1537 + $0x338] sm:$0xff]
      %v1642 = vld [vmem:[%s1537 + $0x340] sm:$0xff]
      %v1643 = vld [vmem:[%s1537 + $0x348] sm:$0xff]
      %v1644 = vld [vmem:[%s1537 + $0x350] sm:$0xff]
      %v1645 = vld [vmem:[%s1537 + $0x358] sm:$0xff]
      %v1646 = vld [vmem:[%s1537 + $0x360] sm:$0xff]
      %v1647 = vld [vmem:[%s1537 + $0x368] sm:$0xff]
      %v1648 = vld [vmem:[%s1537 + $0x370] sm:$0xff]
      %v1649 = vld [vmem:[%s1537 + $0x378] sm:$0xff]
      %v1650 = vld [vmem:[%s1537 + $0x380] sm:$0xff]
      %v1651 = vld [vmem:[%s1537 + $0x388] sm:$0xff]
      %v1652 = vld [vmem:[%s1537 + $0x390] sm:$0xff]
      %v1653 = vld [vmem:[%s1537 + $0x398] sm:$0xff]
      %v1654 = vld [vmem:[%s1537 + $0x3a0] sm:$0xff]
      %v1655 = vld [vmem:[%s1537 + $0x3a8] sm:$0xff]
      %v1656 = vld [vmem:[%s1537 + $0x3b0] sm:$0xff]
      %v1657 = vld [vmem:[%s1537 + $0x3b8] sm:$0xff]
      %v1658 = vld [vmem:[%s1537 + $0x3c0] sm:$0xff]
      %v1659 = vld [vmem:[%s1537 + $0x3c8] sm:$0xff]
      %v1660 = vld [vmem:[%s1537 + $0x3d0] sm:$0xff]
      %v1661 = vld [vmem:[%s1537 + $0x3d8] sm:$0xff]
      %v1662 = vld [vmem:[%s1537 + $0x3e0] sm:$0xff]
      %v1663 = vld [vmem:[%s1537 + $0x3e8] sm:$0xff]
      %v1664 = vld [vmem:[%s1537 + $0x3f0] sm:$0xff]
      %v1665 = vld [vmem:[%s1537 + $0x3f8] sm:$0xff]
      %v1666 = vld [vmem:[%s1537 + $0x400] sm:$0xff]
      %v1667 = vld [vmem:[%s1537 + $0x408] sm:$0xff]
      %v1668 = vld [vmem:[%s1537 + $0x410] sm:$0xff]
      %v1669 = vld [vmem:[%s1537 + $0x418] sm:$0xff]
      %v1670 = vld [vmem:[%s1537 + $0x420] sm:$0xff]
      %v1671 = vld [vmem:[%s1537 + $0x428] sm:$0xff]
      %v1672 = vld [vmem:[%s1537 + $0x430] sm:$0xff]
      %v1673 = vld [vmem:[%s1537 + $0x438] sm:$0xff]
      %v1674 = vld [vmem:[%s1537 + $0x440] sm:$0xff]
      %v1675 = vld [vmem:[%s1537 + $0x448] sm:$0xff]
      %v1676 = vld [vmem:[%s1537 + $0x450] sm:$0xff]
      %v1677 = vld [vmem:[%s1537 + $0x458] sm:$0xff]
      %v1678 = vld [vmem:[%s1537 + $0x460] sm:$0xff]
      %v1679 = vld [vmem:[%s1537 + $0x468] sm:$0xff]
      %v1680 = vld [vmem:[%s1537 + $0x470] sm:$0xff]
      %v1681 = vld [vmem:[%s1537 + $0x478] sm:$0xff]
      %v1682 = vld [vmem:[%s1537 + $0x480] sm:$0xff]
      %v1683 = vld [vmem:[%s1537 + $0x488] sm:$0xff]
      %v1684 = vld [vmem:[%s1537 + $0x490] sm:$0xff]
      %v1685 = vld [vmem:[%s1537 + $0x498] sm:$0xff]
      %v1686 = vld [vmem:[%s1537 + $0x4a0] sm:$0xff]
      %v1687 = vld [vmem:[%s1537 + $0x4a8] sm:$0xff]
      %v1688 = vld [vmem:[%s1537 + $0x4b0] sm:$0xff]
      %v1689 = vld [vmem:[%s1537 + $0x4b8] sm:$0xff]
      %v1690 = vld [vmem:[%s1537 + $0x4c0] sm:$0xff]
      %v1691 = vld [vmem:[%s1537 + $0x4c8] sm:$0xff]
      %v1692 = vld [vmem:[%s1537 + $0x4d0] sm:$0xff]
      %v1693 = vld [vmem:[%s1537 + $0x4d8] sm:$0xff]
      %v1694 = vld [vmem:[%s1537 + $0x4e0] sm:$0xff]
      %v1695 = vld [vmem:[%s1537 + $0x4e8] sm:$0xff]
      %v1696 = vld [vmem:[%s1537 + $0x4f0] sm:$0xff]
      %v1697 = vld [vmem:[%s1537 + $0x4f8] sm:$0xff]
      %v1698 = vld [vmem:[%s1537 + $0x500] sm:$0xff]
      %v1699 = vld [vmem:[%s1537 + $0x508] sm:$0xff]
      %v1700 = vld [vmem:[%s1537 + $0x510] sm:$0xff]
      %v1701 = vld [vmem:[%s1537 + $0x518] sm:$0xff]
      %v1702 = vld [vmem:[%s1537 + $0x520] sm:$0xff]
      %v1703 = vld [vmem:[%s1537 + $0x528] sm:$0xff]
      %v1704 = vld [vmem:[%s1537 + $0x530] sm:$0xff]
      %v1705 = vld [vmem:[%s1537 + $0x538] sm:$0xff]
      %v1706 = vld [vmem:[%s1537 + $0x540] sm:$0xff]
      %v1707 = vld [vmem:[%s1537 + $0x548] sm:$0xff]
      %v1708 = vld [vmem:[%s1537 + $0x550] sm:$0xff]
      %v1709 = vld [vmem:[%s1537 + $0x558] sm:$0xff]
      %v1710 = vld [vmem:[%s1537 + $0x560] sm:$0xff]
      %v1711 = vld [vmem:[%s1537 + $0x568] sm:$0xff]
      %v1712 = vld [vmem:[%s1537 + $0x570] sm:$0xff]
      %v1713 = vld [vmem:[%s1537 + $0x578] sm:$0xff]
      %v1714 = vld [vmem:[%s1537 + $0x580] sm:$0xff]
      %v1715 = vld [vmem:[%s1537 + $0x588] sm:$0xff]
      %v1716 = vld [vmem:[%s1537 + $0x590] sm:$0xff]
      %v1717 = vld [vmem:[%s1537 + $0x598] sm:$0xff]
      %v1718 = vld [vmem:[%s1537 + $0x5a0] sm:$0xff]
      %v1719 = vld [vmem:[%s1537 + $0x5a8] sm:$0xff]
      %v1720 = vld [vmem:[%s1537 + $0x5b0] sm:$0xff]
      %v1721 = vld [vmem:[%s1537 + $0x5b8] sm:$0xff]
      %v1722 = vld [vmem:[%s1537 + $0x5c0] sm:$0xff]
      %v1723 = vld [vmem:[%s1537 + $0x5c8] sm:$0xff]
      %v1724 = vld [vmem:[%s1537 + $0x5d0] sm:$0xff]
      %v1725 = vld [vmem:[%s1537 + $0x5d8] sm:$0xff]
      %v1726 = vld [vmem:[%s1537 + $0x5e0] sm:$0xff]
      %v1727 = vld [vmem:[%s1537 + $0x5e8] sm:$0xff]
      %v1728 = vld [vmem:[%s1537 + $0x5f0] sm:$0xff]
      %v1729 = vld [vmem:[%s1537 + $0x5f8] sm:$0xff]
      %v1730 = vld [vmem:[%s1537 + $0x600] sm:$0xff]
      %v1731 = vld [vmem:[%s1537 + $0x608] sm:$0xff]
      %v1732 = vld [vmem:[%s1537 + $0x610] sm:$0xff]
      %v1733 = vld [vmem:[%s1537 + $0x618] sm:$0xff]
      %v1734 = vld [vmem:[%s1537 + $0x620] sm:$0xff]
      %v1735 = vld [vmem:[%s1537 + $0x628] sm:$0xff]
      %v1736 = vld [vmem:[%s1537 + $0x630] sm:$0xff]
      %v1737 = vld [vmem:[%s1537 + $0x638] sm:$0xff]
      %v1738 = vld [vmem:[%s1537 + $0x640] sm:$0xff]
      %v1739 = vld [vmem:[%s1537 + $0x648] sm:$0xff]
      %v1740 = vld [vmem:[%s1537 + $0x650] sm:$0xff]
      %v1741 = vld [vmem:[%s1537 + $0x658] sm:$0xff]
      %v1742 = vld [vmem:[%s1537 + $0x660] sm:$0xff]
      %v1743 = vld [vmem:[%s1537 + $0x668] sm:$0xff]
      %v1744 = vld [vmem:[%s1537 + $0x670] sm:$0xff]
      %v1745 = vld [vmem:[%s1537 + $0x678] sm:$0xff]
      %v1746 = vld [vmem:[%s1537 + $0x680] sm:$0xff]
      %v1747 = vld [vmem:[%s1537 + $0x688] sm:$0xff]
      %v1748 = vld [vmem:[%s1537 + $0x690] sm:$0xff]
      %v1749 = vld [vmem:[%s1537 + $0x698] sm:$0xff]
      %v1750 = vld [vmem:[%s1537 + $0x6a0] sm:$0xff]
      %v1751 = vld [vmem:[%s1537 + $0x6a8] sm:$0xff]
      %v1752 = vld [vmem:[%s1537 + $0x6b0] sm:$0xff]
      %v1753 = vld [vmem:[%s1537 + $0x6b8] sm:$0xff]
      %v1754 = vld [vmem:[%s1537 + $0x6c0] sm:$0xff]
      %v1755 = vld [vmem:[%s1537 + $0x6c8] sm:$0xff]
      %v1756 = vld [vmem:[%s1537 + $0x6d0] sm:$0xff]
      %v1757 = vld [vmem:[%s1537 + $0x6d8] sm:$0xff]
      %v1758 = vld [vmem:[%s1537 + $0x6e0] sm:$0xff]
      %v1759 = vld [vmem:[%s1537 + $0x6e8] sm:$0xff]
      %v1760 = vld [vmem:[%s1537 + $0x6f0] sm:$0xff]
      %v1761 = vld [vmem:[%s1537 + $0x6f8] sm:$0xff]
      %v1762 = vld [vmem:[%s1537 + $0x700] sm:$0xff]
      %v1763 = vld [vmem:[%s1537 + $0x708] sm:$0xff]
      %v1764 = vld [vmem:[%s1537 + $0x710] sm:$0xff]
      %v1765 = vld [vmem:[%s1537 + $0x718] sm:$0xff]
      %v1766 = vld [vmem:[%s1537 + $0x720] sm:$0xff]
      %v1767 = vld [vmem:[%s1537 + $0x728] sm:$0xff]
      %v1768 = vld [vmem:[%s1537 + $0x730] sm:$0xff]
      %v1769 = vld [vmem:[%s1537 + $0x738] sm:$0xff]
      %v1770 = vld [vmem:[%s1537 + $0x740] sm:$0xff]
      %v1771 = vld [vmem:[%s1537 + $0x748] sm:$0xff]
      %v1772 = vld [vmem:[%s1537 + $0x750] sm:$0xff]
      %v1773 = vld [vmem:[%s1537 + $0x758] sm:$0xff]
      %v1774 = vld [vmem:[%s1537 + $0x760] sm:$0xff]
      %v1775 = vld [vmem:[%s1537 + $0x768] sm:$0xff]
      %v1776 = vld [vmem:[%s1537 + $0x770] sm:$0xff]
      %v1777 = vld [vmem:[%s1537 + $0x778] sm:$0xff]
      %v1778 = vld [vmem:[%s1537 + $0x780] sm:$0xff]
      %v1779 = vld [vmem:[%s1537 + $0x788] sm:$0xff]
      %v1780 = vld [vmem:[%s1537 + $0x790] sm:$0xff]
      %v1781 = vld [vmem:[%s1537 + $0x798] sm:$0xff]
      %v1782 = vld [vmem:[%s1537 + $0x7a0] sm:$0xff]
      %v1783 = vld [vmem:[%s1537 + $0x7a8] sm:$0xff]
      %v1784 = vld [vmem:[%s1537 + $0x7b0] sm:$0xff]
      %v1785 = vld [vmem:[%s1537 + $0x7b8] sm:$0xff]
      %v1786 = vld [vmem:[%s1537 + $0x7c0] sm:$0xff]
      %v1787 = vld [vmem:[%s1537 + $0x7c8] sm:$0xff]
      %v1788 = vld [vmem:[%s1537 + $0x7d0] sm:$0xff]
      %v1789 = vld [vmem:[%s1537 + $0x7d8] sm:$0xff]
      %v1790 = vld [vmem:[%s1537 + $0x7e0] sm:$0xff]
      %v1791 = vld [vmem:[%s1537 + $0x7e8] sm:$0xff]
      %v1792 = vld [vmem:[%s1537 + $0x7f0] sm:$0xff]
      %v1793 = vld [vmem:[%s1537 + $0x7f8] sm:$0xff]
      %v1794 = vld [vmem:[%s1537 + $0x800] sm:$0xff]
      %v1795 = vld [vmem:[%s1537 + $0x808] sm:$0xff]
      %v1796 = vld [vmem:[%s1537 + $0x810] sm:$0xff]
      %v1797 = vld [vmem:[%s1537 + $0x818] sm:$0xff]
      %v1798 = vld [vmem:[%s1537 + $0x820] sm:$0xff]
      %v1799 = vld [vmem:[%s1537 + $0x828] sm:$0xff]
      %v1800 = vld [vmem:[%s1537 + $0x830] sm:$0xff]
      %v1801 = vld [vmem:[%s1537 + $0x838] sm:$0xff]
      %v1802 = vld [vmem:[%s1537 + $0x840] sm:$0xff]
      %v1803 = vld [vmem:[%s1537 + $0x848] sm:$0xff]
      %v1804 = vld [vmem:[%s1537 + $0x850] sm:$0xff]
      %v1805 = vld [vmem:[%s1537 + $0x858] sm:$0xff]
      %v1806 = vld [vmem:[%s1537 + $0x860] sm:$0xff]
      %v1807 = vld [vmem:[%s1537 + $0x868] sm:$0xff]
      %v1808 = vld [vmem:[%s1537 + $0x870] sm:$0xff]
      %v1809 = vld [vmem:[%s1537 + $0x878] sm:$0xff]
      %v1810 = vld [vmem:[%s1537 + $0x880] sm:$0xff]
      %v1811 = vld [vmem:[%s1537 + $0x888] sm:$0xff]
      %v1812 = vld [vmem:[%s1537 + $0x890] sm:$0xff]
      %v1813 = vld [vmem:[%s1537 + $0x898] sm:$0xff]
      %v1814 = vld [vmem:[%s1537 + $0x8a0] sm:$0xff]
      %v1815 = vld [vmem:[%s1537 + $0x8a8] sm:$0xff]
      %v1816 = vld [vmem:[%s1537 + $0x8b0] sm:$0xff]
      %v1817 = vld [vmem:[%s1537 + $0x8b8] sm:$0xff]
      %v1818 = vld [vmem:[%s1537 + $0x8c0] sm:$0xff]
      %v1819 = vld [vmem:[%s1537 + $0x8c8] sm:$0xff]
      %v1820 = vld [vmem:[%s1537 + $0x8d0] sm:$0xff]
      %v1821 = vld [vmem:[%s1537 + $0x8d8] sm:$0xff]
      %v1822 = vld [vmem:[%s1537 + $0x8e0] sm:$0xff]
      %v1823 = vld [vmem:[%s1537 + $0x8e8] sm:$0xff]
      %v1824 = vld [vmem:[%s1537 + $0x8f0] sm:$0xff]
      %v1825 = vld [vmem:[%s1537 + $0x8f8] sm:$0xff]
      %v1826 = vld [vmem:[%s1537 + $0x900] sm:$0xff]
      %v1827 = vld [vmem:[%s1537 + $0x908] sm:$0xff]
      %v1828 = vld [vmem:[%s1537 + $0x910] sm:$0xff]
      %v1829 = vld [vmem:[%s1537 + $0x918] sm:$0xff]
      %v1830 = vld [vmem:[%s1537 + $0x920] sm:$0xff]
      %v1831 = vld [vmem:[%s1537 + $0x928] sm:$0xff]
      %v1832 = vld [vmem:[%s1537 + $0x930] sm:$0xff]
      %v1833 = vld [vmem:[%s1537 + $0x938] sm:$0xff]
      %v1834 = vld [vmem:[%s1537 + $0x940] sm:$0xff]
      %v1835 = vld [vmem:[%s1537 + $0x948] sm:$0xff]
      %v1836 = vld [vmem:[%s1537 + $0x950] sm:$0xff]
      %v1837 = vld [vmem:[%s1537 + $0x958] sm:$0xff]
      %v1838 = vld [vmem:[%s1537 + $0x960] sm:$0xff]
      %v1839 = vld [vmem:[%s1537 + $0x968] sm:$0xff]
      %v1840 = vld [vmem:[%s1537 + $0x970] sm:$0xff]
      %v1841 = vld [vmem:[%s1537 + $0x978] sm:$0xff]
      %v1842 = vld [vmem:[%s1537 + $0x980] sm:$0xff]
      %v1843 = vld [vmem:[%s1537 + $0x988] sm:$0xff]
      %v1844 = vld [vmem:[%s1537 + $0x990] sm:$0xff]
      %v1845 = vld [vmem:[%s1537 + $0x998] sm:$0xff]
      %v1846 = vld [vmem:[%s1537 + $0x9a0] sm:$0xff]
      %v1847 = vld [vmem:[%s1537 + $0x9a8] sm:$0xff]
      %v1848 = vld [vmem:[%s1537 + $0x9b0] sm:$0xff]
      %v1849 = vld [vmem:[%s1537 + $0x9b8] sm:$0xff]
      %v1850 = vld [vmem:[%s1537 + $0x9c0] sm:$0xff]
      %v1851 = vld [vmem:[%s1537 + $0x9c8] sm:$0xff]
      %v1852 = vld [vmem:[%s1537 + $0x9d0] sm:$0xff]
      %v1853 = vld [vmem:[%s1537 + $0x9d8] sm:$0xff]
      %v1854 = vld [vmem:[%s1537 + $0x9e0] sm:$0xff]
      %v1855 = vld [vmem:[%s1537 + $0x9e8] sm:$0xff]
      %v1856 = vld [vmem:[%s1537 + $0x9f0] sm:$0xff]
      %v1857 = vld [vmem:[%s1537 + $0x9f8] sm:$0xff]
      %v1858 = vld [vmem:[%s1537 + $0xa00] sm:$0xff]
      %v1859 = vld [vmem:[%s1537 + $0xa08] sm:$0xff]
      %v1860 = vld [vmem:[%s1537 + $0xa10] sm:$0xff]
      %v1861 = vld [vmem:[%s1537 + $0xa18] sm:$0xff]
      %v1862 = vld [vmem:[%s1537 + $0xa20] sm:$0xff]
      %v1863 = vld [vmem:[%s1537 + $0xa28] sm:$0xff]
      %v1864 = vld [vmem:[%s1537 + $0xa30] sm:$0xff]
      %v1865 = vld [vmem:[%s1537 + $0xa38] sm:$0xff]
      %v1866 = vld [vmem:[%s1537 + $0xa40] sm:$0xff]
      %v1867 = vld [vmem:[%s1537 + $0xa48] sm:$0xff]
      %v1868 = vld [vmem:[%s1537 + $0xa50] sm:$0xff]
      %v1869 = vld [vmem:[%s1537 + $0xa58] sm:$0xff]
      %v1870 = vld [vmem:[%s1537 + $0xa60] sm:$0xff]
      %v1871 = vld [vmem:[%s1537 + $0xa68] sm:$0xff]
      %v1872 = vld [vmem:[%s1537 + $0xa70] sm:$0xff]
      %v1873 = vld [vmem:[%s1537 + $0xa78] sm:$0xff]
      %v1874 = vld [vmem:[%s1537 + $0xa80] sm:$0xff]
      %v1875 = vld [vmem:[%s1537 + $0xa88] sm:$0xff]
      %v1876 = vld [vmem:[%s1537 + $0xa90] sm:$0xff]
      %v1877 = vld [vmem:[%s1537 + $0xa98] sm:$0xff]
      %v1878 = vld [vmem:[%s1537 + $0xaa0] sm:$0xff]
      %v1879 = vld [vmem:[%s1537 + $0xaa8] sm:$0xff]
      %v1880 = vld [vmem:[%s1537 + $0xab0] sm:$0xff]
      %v1881 = vld [vmem:[%s1537 + $0xab8] sm:$0xff]
      %v1882 = vld [vmem:[%s1537 + $0xac0] sm:$0xff]
      %v1883 = vld [vmem:[%s1537 + $0xac8] sm:$0xff]
      %v1884 = vld [vmem:[%s1537 + $0xad0] sm:$0xff]
      %v1885 = vld [vmem:[%s1537 + $0xad8] sm:$0xff]
      %v1886 = vld [vmem:[%s1537 + $0xae0] sm:$0xff]
      %v1887 = vld [vmem:[%s1537 + $0xae8] sm:$0xff]
      %v1888 = vld [vmem:[%s1537 + $0xaf0] sm:$0xff]
      %v1889 = vld [vmem:[%s1537 + $0xaf8] sm:$0xff]
      %v1890 = vld [vmem:[%s1537 + $0xb00] sm:$0xff]
      %v1891 = vld [vmem:[%s1537 + $0xb08] sm:$0xff]
      %v1892 = vld [vmem:[%s1537 + $0xb10] sm:$0xff]
      %v1893 = vld [vmem:[%s1537 + $0xb18] sm:$0xff]
      %v1894 = vld [vmem:[%s1537 + $0xb20] sm:$0xff]
      %v1895 = vld [vmem:[%s1537 + $0xb28] sm:$0xff]
      %v1896 = vld [vmem:[%s1537 + $0xb30] sm:$0xff]
      %v1897 = vld [vmem:[%s1537 + $0xb38] sm:$0xff]
      %v1898 = vld [vmem:[%s1537 + $0xb40] sm:$0xff]
      %v1899 = vld [vmem:[%s1537 + $0xb48] sm:$0xff]
      %v1900 = vld [vmem:[%s1537 + $0xb50] sm:$0xff]
      %v1901 = vld [vmem:[%s1537 + $0xb58] sm:$0xff]
      %v1902 = vld [vmem:[%s1537 + $0xb60] sm:$0xff]
      %v1903 = vld [vmem:[%s1537 + $0xb68] sm:$0xff]
      %v1904 = vld [vmem:[%s1537 + $0xb70] sm:$0xff]
      %v1905 = vld [vmem:[%s1537 + $0xb78] sm:$0xff]
      %v1906 = vld [vmem:[%s1537 + $0xb80] sm:$0xff]
      %v1907 = vld [vmem:[%s1537 + $0xb88] sm:$0xff]
      %v1908 = vld [vmem:[%s1537 + $0xb90] sm:$0xff]
      %v1909 = vld [vmem:[%s1537 + $0xb98] sm:$0xff]
      %v1910 = vld [vmem:[%s1537 + $0xba0] sm:$0xff]
      %v1911 = vld [vmem:[%s1537 + $0xba8] sm:$0xff]
      %v1912 = vld [vmem:[%s1537 + $0xbb0] sm:$0xff]
      %v1913 = vld [vmem:[%s1537 + $0xbb8] sm:$0xff]
      %v1914 = vld [vmem:[%s1537 + $0xbc0] sm:$0xff]
      %v1915 = vld [vmem:[%s1537 + $0xbc8] sm:$0xff]
      %v1916 = vld [vmem:[%s1537 + $0xbd0] sm:$0xff]
      %v1917 = vld [vmem:[%s1537 + $0xbd8] sm:$0xff]
      %v1918 = vld [vmem:[%s1537 + $0xbe0] sm:$0xff]
      %v1919 = vld [vmem:[%s1537 + $0xbe8] sm:$0xff]
      %v1920 = vld [vmem:[%s1537 + $0xbf0] sm:$0xff]
      %v1921 = vld [vmem:[%s1537 + $0xbf8] sm:$0xff]
      %v1922 = vld [vmem:[%s1537 + $0xc00] sm:$0xff]
      %v1923 = vld [vmem:[%s1537 + $0xc08] sm:$0xff]
      %v1924 = vld [vmem:[%s1537 + $0xc10] sm:$0xff]
      %v1925 = vld [vmem:[%s1537 + $0xc18] sm:$0xff]
      %v1926 = vld [vmem:[%s1537 + $0xc20] sm:$0xff]
      %v1927 = vld [vmem:[%s1537 + $0xc28] sm:$0xff]
      %v1928 = vld [vmem:[%s1537 + $0xc30] sm:$0xff]
      %v1929 = vld [vmem:[%s1537 + $0xc38] sm:$0xff]
      %v1930 = vld [vmem:[%s1537 + $0xc40] sm:$0xff]
      %v1931 = vld [vmem:[%s1537 + $0xc48] sm:$0xff]
      %v1932 = vld [vmem:[%s1537 + $0xc50] sm:$0xff]
      %v1933 = vld [vmem:[%s1537 + $0xc58] sm:$0xff]
      %v1934 = vld [vmem:[%s1537 + $0xc60] sm:$0xff]
      %v1935 = vld [vmem:[%s1537 + $0xc68] sm:$0xff]
      %v1936 = vld [vmem:[%s1537 + $0xc70] sm:$0xff]
      %v1937 = vld [vmem:[%s1537 + $0xc78] sm:$0xff]
      %v1938 = vld [vmem:[%s1537 + $0xc80] sm:$0xff]
      %v1939 = vld [vmem:[%s1537 + $0xc88] sm:$0xff]
      %v1940 = vld [vmem:[%s1537 + $0xc90] sm:$0xff]
      %v1941 = vld [vmem:[%s1537 + $0xc98] sm:$0xff]
      %v1942 = vld [vmem:[%s1537 + $0xca0] sm:$0xff]
      %v1943 = vld [vmem:[%s1537 + $0xca8] sm:$0xff]
      %v1944 = vld [vmem:[%s1537 + $0xcb0] sm:$0xff]
      %v1945 = vld [vmem:[%s1537 + $0xcb8] sm:$0xff]
      %v1946 = vld [vmem:[%s1537 + $0xcc0] sm:$0xff]
      %v1947 = vld [vmem:[%s1537 + $0xcc8] sm:$0xff]
      %v1948 = vld [vmem:[%s1537 + $0xcd0] sm:$0xff]
      %v1949 = vld [vmem:[%s1537 + $0xcd8] sm:$0xff]
      %v1950 = vld [vmem:[%s1537 + $0xce0] sm:$0xff]
      %v1951 = vld [vmem:[%s1537 + $0xce8] sm:$0xff]
      %v1952 = vld [vmem:[%s1537 + $0xcf0] sm:$0xff]
      %v1953 = vld [vmem:[%s1537 + $0xcf8] sm:$0xff]
      %v1954 = vld [vmem:[%s1537 + $0xd00] sm:$0xff]
      %v1955 = vld [vmem:[%s1537 + $0xd08] sm:$0xff]
      %v1956 = vld [vmem:[%s1537 + $0xd10] sm:$0xff]
      %v1957 = vld [vmem:[%s1537 + $0xd18] sm:$0xff]
      %v1958 = vld [vmem:[%s1537 + $0xd20] sm:$0xff]
      %v1959 = vld [vmem:[%s1537 + $0xd28] sm:$0xff]
      %v1960 = vld [vmem:[%s1537 + $0xd30] sm:$0xff]
      %v1961 = vld [vmem:[%s1537 + $0xd38] sm:$0xff]
      %v1962 = vld [vmem:[%s1537 + $0xd40] sm:$0xff]
      %v1963 = vld [vmem:[%s1537 + $0xd48] sm:$0xff]
      %v1964 = vld [vmem:[%s1537 + $0xd50] sm:$0xff]
      %v1965 = vld [vmem:[%s1537 + $0xd58] sm:$0xff]
      %v1966 = vld [vmem:[%s1537 + $0xd60] sm:$0xff]
      %v1967 = vld [vmem:[%s1537 + $0xd68] sm:$0xff]
      %v1968 = vld [vmem:[%s1537 + $0xd70] sm:$0xff]
      %v1969 = vld [vmem:[%s1537 + $0xd78] sm:$0xff]
      %v1970 = vld [vmem:[%s1537 + $0xd80] sm:$0xff]
      %v1971 = vld [vmem:[%s1537 + $0xd88] sm:$0xff]
      %v1972 = vld [vmem:[%s1537 + $0xd90] sm:$0xff]
      %v1973 = vld [vmem:[%s1537 + $0xd98] sm:$0xff]
      %v1974 = vld [vmem:[%s1537 + $0xda0] sm:$0xff]
      %v1975 = vld [vmem:[%s1537 + $0xda8] sm:$0xff]
      %v1976 = vld [vmem:[%s1537 + $0xdb0] sm:$0xff]
      %v1977 = vld [vmem:[%s1537 + $0xdb8] sm:$0xff]
      %v1978 = vld [vmem:[%s1537 + $0xdc0] sm:$0xff]
      %v1979 = vld [vmem:[%s1537 + $0xdc8] sm:$0xff]
      %v1980 = vld [vmem:[%s1537 + $0xdd0] sm:$0xff]
      %v1981 = vld [vmem:[%s1537 + $0xdd8] sm:$0xff]
      %v1982 = vld [vmem:[%s1537 + $0xde0] sm:$0xff]
      %v1983 = vld [vmem:[%s1537 + $0xde8] sm:$0xff]
      %v1984 = vld [vmem:[%s1537 + $0xdf0] sm:$0xff]
      %v1985 = vld [vmem:[%s1537 + $0xdf8] sm:$0xff]
      %v1986 = vld [vmem:[%s1537 + $0xe00] sm:$0xff]
      %v1987 = vld [vmem:[%s1537 + $0xe08] sm:$0xff]
      %v1988 = vld [vmem:[%s1537 + $0xe10] sm:$0xff]
      %v1989 = vld [vmem:[%s1537 + $0xe18] sm:$0xff]
      %v1990 = vld [vmem:[%s1537 + $0xe20] sm:$0xff]
      %v1991 = vld [vmem:[%s1537 + $0xe28] sm:$0xff]
      %v1992 = vld [vmem:[%s1537 + $0xe30] sm:$0xff]
      %v1993 = vld [vmem:[%s1537 + $0xe38] sm:$0xff]
      %v1994 = vld [vmem:[%s1537 + $0xe40] sm:$0xff]
      %v1995 = vld [vmem:[%s1537 + $0xe48] sm:$0xff]
      %v1996 = vld [vmem:[%s1537 + $0xe50] sm:$0xff]
      %v1997 = vld [vmem:[%s1537 + $0xe58] sm:$0xff]
      %v1998 = vld [vmem:[%s1537 + $0xe60] sm:$0xff]
      %v1999 = vld [vmem:[%s1537 + $0xe68] sm:$0xff]
      %v2000 = vld [vmem:[%s1537 + $0xe70] sm:$0xff]
      %v2001 = vld [vmem:[%s1537 + $0xe78] sm:$0xff]
      %v2002 = vld [vmem:[%s1537 + $0xe80] sm:$0xff]
      %v2003 = vld [vmem:[%s1537 + $0xe88] sm:$0xff]
      %v2004 = vld [vmem:[%s1537 + $0xe90] sm:$0xff]
      %v2005 = vld [vmem:[%s1537 + $0xe98] sm:$0xff]
      %v2006 = vld [vmem:[%s1537 + $0xea0] sm:$0xff]
      %v2007 = vld [vmem:[%s1537 + $0xea8] sm:$0xff]
      %v2008 = vld [vmem:[%s1537 + $0xeb0] sm:$0xff]
      %v2009 = vld [vmem:[%s1537 + $0xeb8] sm:$0xff]
      %v2010 = vld [vmem:[%s1537 + $0xec0] sm:$0xff]
      %v2011 = vld [vmem:[%s1537 + $0xec8] sm:$0xff]
      %v2012 = vld [vmem:[%s1537 + $0xed0] sm:$0xff]
      %v2013 = vld [vmem:[%s1537 + $0xed8] sm:$0xff]
      %v2014 = vld [vmem:[%s1537 + $0xee0] sm:$0xff]
      %v2015 = vld [vmem:[%s1537 + $0xee8] sm:$0xff]
      %v2016 = vld [vmem:[%s1537 + $0xef0] sm:$0xff]
      %v2017 = vld [vmem:[%s1537 + $0xef8] sm:$0xff]
      %v2018 = vld [vmem:[%s1537 + $0xf00] sm:$0xff]
      %v2019 = vld [vmem:[%s1537 + $0xf08] sm:$0xff]
      %v2020 = vld [vmem:[%s1537 + $0xf10] sm:$0xff]
      %v2021 = vld [vmem:[%s1537 + $0xf18] sm:$0xff]
      %v2022 = vld [vmem:[%s1537 + $0xf20] sm:$0xff]
      %v2023 = vld [vmem:[%s1537 + $0xf28] sm:$0xff]
      %v2024 = vld [vmem:[%s1537 + $0xf30] sm:$0xff]
      %v2025 = vld [vmem:[%s1537 + $0xf38] sm:$0xff]
      %v2026 = vld [vmem:[%s1537 + $0xf40] sm:$0xff]
      %v2027 = vld [vmem:[%s1537 + $0xf48] sm:$0xff]
      %v2028 = vld [vmem:[%s1537 + $0xf50] sm:$0xff]
      %v2029 = vld [vmem:[%s1537 + $0xf58] sm:$0xff]
      %v2030 = vld [vmem:[%s1537 + $0xf60] sm:$0xff]
      %v2031 = vld [vmem:[%s1537 + $0xf68] sm:$0xff]
      %v2032 = vld [vmem:[%s1537 + $0xf70] sm:$0xff]
      %v2033 = vld [vmem:[%s1537 + $0xf78] sm:$0xff]
      %v2034 = vld [vmem:[%s1537 + $0xf80] sm:$0xff]
      %v2035 = vld [vmem:[%s1537 + $0xf88] sm:$0xff]
      %v2036 = vld [vmem:[%s1537 + $0xf90] sm:$0xff]
      %v2037 = vld [vmem:[%s1537 + $0xf98] sm:$0xff]
      %v2038 = vld [vmem:[%s1537 + $0xfa0] sm:$0xff]
      %v2039 = vld [vmem:[%s1537 + $0xfa8] sm:$0xff]
      %v2040 = vld [vmem:[%s1537 + $0xfb0] sm:$0xff]
      %v2041 = vld [vmem:[%s1537 + $0xfb8] sm:$0xff]
      %v2042 = vld [vmem:[%s1537 + $0xfc0] sm:$0xff]
      %v2043 = vld [vmem:[%s1537 + $0xfc8] sm:$0xff]
      %v2044 = vld [vmem:[%s1537 + $0xfd0] sm:$0xff]
      %v2045 = vld [vmem:[%s1537 + $0xfd8] sm:$0xff]
      %v2046 = vld [vmem:[%s1537 + $0xfe0] sm:$0xff]
      %v2047 = vld [vmem:[%s1537 + $0xfe8] sm:$0xff]
      %v2048 = vld [vmem:[%s1537 + $0xff0] sm:$0xff]
      %v2049 = vld [vmem:[%s1537 + $0xff8] sm:$0xff]
      %2050 = vmatprep.subr.mxu0 %v1539
      %2051 = vmatpush1.msra.mxu0 %v1538
      %2052 = vmatprep.subr.mxu0 %v1541
      %2053 = vmatpush1.msra.mxu0 %v1540
      %2054 = vmatprep.subr.mxu0 %v1543
      %2055 = vmatpush1.msra.mxu0 %v1542
      %2056 = vmatprep.subr.mxu0 %v1545
      %2057 = vmatpush1.msra.mxu0 %v1544
      %2058 = vmatprep.subr.mxu0 %v1547
      %2059 = vmatpush1.msra.mxu0 %v1546
      %2060 = vmatprep.subr.mxu0 %v1549
      %2061 = vmatpush1.msra.mxu0 %v1548
      %2062 = vmatprep.subr.mxu0 %v1551
      %2063 = vmatpush1.msra.mxu0 %v1550
      %2064 = vmatprep.subr.mxu0 %v1553
      %2065 = vmatpush1.msra.mxu0 %v1552
      %2066 = vmatprep.subr.mxu0 %v1555
      %2067 = vmatpush1.msra.mxu0 %v1554
      %2068 = vmatprep.subr.mxu0 %v1557
      %2069 = vmatpush1.msra.mxu0 %v1556
      %2070 = vmatprep.subr.mxu0 %v1559
      %2071 = vmatpush1.msra.mxu0 %v1558
      %2072 = vmatprep.subr.mxu0 %v1561
      %2073 = vmatpush1.msra.mxu0 %v1560
      %2074 = vmatprep.subr.mxu0 %v1563
      %2075 = vmatpush1.msra.mxu0 %v1562
      %2076 = vmatprep.subr.mxu0 %v1565
      %2077 = vmatpush1.msra.mxu0 %v1564
      %2078 = vmatprep.subr.mxu0 %v1567
      %2079 = vmatpush1.msra.mxu0 %v1566
      %2080 = vmatprep.subr.mxu0 %v1569
      %2081 = vmatpush1.msra.mxu0 %v1568
      %2082 = vmatprep.subr.mxu0 %v1571
      %2083 = vmatpush1.msra.mxu0 %v1570
      %2084 = vmatprep.subr.mxu0 %v1573
      %2085 = vmatpush1.msra.mxu0 %v1572
      %2086 = vmatprep.subr.mxu0 %v1575
      %2087 = vmatpush1.msra.mxu0 %v1574
      %2088 = vmatprep.subr.mxu0 %v1577
      %2089 = vmatpush1.msra.mxu0 %v1576
      %2090 = vmatprep.subr.mxu0 %v1579
      %2091 = vmatpush1.msra.mxu0 %v1578
      %2092 = vmatprep.subr.mxu0 %v1581
      %2093 = vmatpush1.msra.mxu0 %v1580
      %2094 = vmatprep.subr.mxu0 %v1583
      %2095 = vmatpush1.msra.mxu0 %v1582
      %2096 = vmatprep.subr.mxu0 %v1585
      %2097 = vmatpush1.msra.mxu0 %v1584
      %2098 = vmatprep.subr.mxu0 %v1587
      %2099 = vmatpush1.msra.mxu0 %v1586
      %2100 = vmatprep.subr.mxu0 %v1589
      %2101 = vmatpush1.msra.mxu0 %v1588
      %2102 = vmatprep.subr.mxu0 %v1591
      %2103 = vmatpush1.msra.mxu0 %v1590
      %2104 = vmatprep.subr.mxu0 %v1593
      %2105 = vmatpush1.msra.mxu0 %v1592
      %2106 = vmatprep.subr.mxu0 %v1595
      %2107 = vmatpush1.msra.mxu0 %v1594
      %2108 = vmatprep.subr.mxu0 %v1597
      %2109 = vmatpush1.msra.mxu0 %v1596
      %2110 = vmatprep.subr.mxu0 %v1599
      %2111 = vmatpush1.msra.mxu0 %v1598
      %2112 = vmatprep.subr.mxu0 %v1601
      %2113 = vmatpush1.msra.mxu0 %v1600
      %2114 = vmatprep.mubr.f32.mxu0 %v288
      %2115 = vmatmul.mubr.f32.gmra.mrb[0].mxu0 %v287
      %v2116 = vpop.f32.mrb[0].mxu0
      %v2117 = vadd.f32 0.0, %v2116
      %v2118 = vpop.f32.mrb[0].mxu0
      %v2119 = vadd.f32 0.0, %v2118
      %2120 = vmatprep.mubr.f32.mxu0 %v304
      %2121 = vmatmul.mubr.f32.gmra.mrb[0].mxu0 %v303
      %v2122 = vpop.f32.mrb[0].mxu0
      %v2123 = vadd.f32 0.0, %v2122
      %v2124 = vpop.f32.mrb[0].mxu0
      %v2125 = vadd.f32 0.0, %v2124
      %2126 = vdwg.mxu0
      %2127 = vmatprep.subr.mxu0 %v1603
      %2128 = vmatpush1.msra.mxu0 %v1602
      %2129 = vmatprep.subr.mxu0 %v1605
      %2130 = vmatpush1.msra.mxu0 %v1604
      %2131 = vmatprep.subr.mxu0 %v1607
      %2132 = vmatpush1.msra.mxu0 %v1606
      %2133 = vmatprep.subr.mxu0 %v1609
      %2134 = vmatpush1.msra.mxu0 %v1608
      %2135 = vmatprep.subr.mxu0 %v1611
      %2136 = vmatpush1.msra.mxu0 %v1610
      %2137 = vmatprep.subr.mxu0 %v1613
      %2138 = vmatpush1.msra.mxu0 %v1612
      %2139 = vmatprep.subr.mxu0 %v1615
      %2140 = vmatpush1.msra.mxu0 %v1614
      %2141 = vmatprep.subr.mxu0 %v1617
      %2142 = vmatpush1.msra.mxu0 %v1616
      %2143 = vmatprep.subr.mxu0 %v1619
      %2144 = vmatpush1.msra.mxu0 %v1618
      %2145 = vmatprep.subr.mxu0 %v1621
      %2146 = vmatpush1.msra.mxu0 %v1620
      %2147 = vmatprep.subr.mxu0 %v1623
      %2148 = vmatpush1.msra.mxu0 %v1622
      %2149 = vmatprep.subr.mxu0 %v1625
      %2150 = vmatpush1.msra.mxu0 %v1624
      %2151 = vmatprep.subr.mxu0 %v1627
      %2152 = vmatpush1.msra.mxu0 %v1626
      %2153 = vmatprep.subr.mxu0 %v1629
      %2154 = vmatpush1.msra.mxu0 %v1628
      %2155 = vmatprep.subr.mxu0 %v1631
      %2156 = vmatpush1.msra.mxu0 %v1630
      %2157 = vmatprep.subr.mxu0 %v1633
      %2158 = vmatpush1.msra.mxu0 %v1632
      %2159 = vmatprep.subr.mxu0 %v1635
      %2160 = vmatpush1.msra.mxu0 %v1634
      %2161 = vmatprep.subr.mxu0 %v1637
      %2162 = vmatpush1.msra.mxu0 %v1636
      %2163 = vmatprep.subr.mxu0 %v1639
      %2164 = vmatpush1.msra.mxu0 %v1638
      %2165 = vmatprep.subr.mxu0 %v1641
      %2166 = vmatpush1.msra.mxu0 %v1640
      %2167 = vmatprep.subr.mxu0 %v1643
      %2168 = vmatpush1.msra.mxu0 %v1642
      %2169 = vmatprep.subr.mxu0 %v1645
      %2170 = vmatpush1.msra.mxu0 %v1644
      %2171 = vmatprep.subr.mxu0 %v1647
      %2172 = vmatpush1.msra.mxu0 %v1646
      %2173 = vmatprep.subr.mxu0 %v1649
      %2174 = vmatpush1.msra.mxu0 %v1648
      %2175 = vmatprep.subr.mxu0 %v1651
      %2176 = vmatpush1.msra.mxu0 %v1650
      %2177 = vmatprep.subr.mxu0 %v1653
      %2178 = vmatpush1.msra.mxu0 %v1652
      %2179 = vmatprep.subr.mxu0 %v1655
      %2180 = vmatpush1.msra.mxu0 %v1654
      %2181 = vmatprep.subr.mxu0 %v1657
      %2182 = vmatpush1.msra.mxu0 %v1656
      %2183 = vmatprep.subr.mxu0 %v1659
      %2184 = vmatpush1.msra.mxu0 %v1658
      %2185 = vmatprep.subr.mxu0 %v1661
      %2186 = vmatpush1.msra.mxu0 %v1660
      %2187 = vmatprep.subr.mxu0 %v1663
      %2188 = vmatpush1.msra.mxu0 %v1662
      %2189 = vmatprep.subr.mxu0 %v1665
      %2190 = vmatpush1.msra.mxu0 %v1664
      %2191 = vmatprep.mubr.f32.mxu0 %v290
      %2192 = vmatmul.mubr.f32.gmra.mrb[0].mxu0 %v289
      %v2193 = vpop.f32.mrb[0].mxu0
      %v2194 = vadd.f32 %v2117, %v2193
      %v2195 = vpop.f32.mrb[0].mxu0
      %v2196 = vadd.f32 %v2119, %v2195
      %2197 = vmatprep.mubr.f32.mxu0 %v306
      %2198 = vmatmul.mubr.f32.gmra.mrb[0].mxu0 %v305
      %v2199 = vpop.f32.mrb[0].mxu0
      %v2200 = vadd.f32 %v2123, %v2199
      %v2201 = vpop.f32.mrb[0].mxu0
      %v2202 = vadd.f32 %v2125, %v2201
      %2203 = vdwg.mxu0
      %2204 = vmatprep.subr.mxu0 %v1667
      %2205 = vmatpush1.msra.mxu0 %v1666
      %2206 = vmatprep.subr.mxu0 %v1669
      %2207 = vmatpush1.msra.mxu0 %v1668
      %2208 = vmatprep.subr.mxu0 %v1671
      %2209 = vmatpush1.msra.mxu0 %v1670
      %2210 = vmatprep.subr.mxu0 %v1673
      %2211 = vmatpush1.msra.mxu0 %v1672
      %2212 = vmatprep.subr.mxu0 %v1675
      %2213 = vmatpush1.msra.mxu0 %v1674
      %2214 = vmatprep.subr.mxu0 %v1677
      %2215 = vmatpush1.msra.mxu0 %v1676
      %2216 = vmatprep.subr.mxu0 %v1679
      %2217 = vmatpush1.msra.mxu0 %v1678
      %2218 = vmatprep.subr.mxu0 %v1681
      %2219 = vmatpush1.msra.mxu0 %v1680
      %2220 = vmatprep.subr.mxu0 %v1683
      %2221 = vmatpush1.msra.mxu0 %v1682
      %2222 = vmatprep.subr.mxu0 %v1685
      %2223 = vmatpush1.msra.mxu0 %v1684
      %2224 = vmatprep.subr.mxu0 %v1687
      %2225 = vmatpush1.msra.mxu0 %v1686
      %2226 = vmatprep.subr.mxu0 %v1689
      %2227 = vmatpush1.msra.mxu0 %v1688
      %2228 = vmatprep.subr.mxu0 %v1691
      %2229 = vmatpush1.msra.mxu0 %v1690
      %2230 = vmatprep.subr.mxu0 %v1693
      %2231 = vmatpush1.msra.mxu0 %v1692
      %2232 = vmatprep.subr.mxu0 %v1695
      %2233 = vmatpush1.msra.mxu0 %v1694
      %2234 = vmatprep.subr.mxu0 %v1697
      %2235 = vmatpush1.msra.mxu0 %v1696
      %2236 = vmatprep.subr.mxu0 %v1699
      %2237 = vmatpush1.msra.mxu0 %v1698
      %2238 = vmatprep.subr.mxu0 %v1701
      %2239 = vmatpush1.msra.mxu0 %v1700
      %2240 = vmatprep.subr.mxu0 %v1703
      %2241 = vmatpush1.msra.mxu0 %v1702
      %2242 = vmatprep.subr.mxu0 %v1705
      %2243 = vmatpush1.msra.mxu0 %v1704
      %2244 = vmatprep.subr.mxu0 %v1707
      %2245 = vmatpush1.msra.mxu0 %v1706
      %2246 = vmatprep.subr.mxu0 %v1709
      %2247 = vmatpush1.msra.mxu0 %v1708
      %2248 = vmatprep.subr.mxu0 %v1711
      %2249 = vmatpush1.msra.mxu0 %v1710
      %2250 = vmatprep.subr.mxu0 %v1713
      %2251 = vmatpush1.msra.mxu0 %v1712
      %2252 = vmatprep.subr.mxu0 %v1715
      %2253 = vmatpush1.msra.mxu0 %v1714
      %2254 = vmatprep.subr.mxu0 %v1717
      %2255 = vmatpush1.msra.mxu0 %v1716
      %2256 = vmatprep.subr.mxu0 %v1719
      %2257 = vmatpush1.msra.mxu0 %v1718
      %2258 = vmatprep.subr.mxu0 %v1721
      %2259 = vmatpush1.msra.mxu0 %v1720
      %2260 = vmatprep.subr.mxu0 %v1723
      %2261 = vmatpush1.msra.mxu0 %v1722
      %2262 = vmatprep.subr.mxu0 %v1725
      %2263 = vmatpush1.msra.mxu0 %v1724
      %2264 = vmatprep.subr.mxu0 %v1727
      %2265 = vmatpush1.msra.mxu0 %v1726
      %2266 = vmatprep.subr.mxu0 %v1729
      %2267 = vmatpush1.msra.mxu0 %v1728
      %2268 = vmatprep.mubr.f32.mxu0 %v292
      %2269 = vmatmul.mubr.f32.gmra.mrb[0].mxu0 %v291
      %v2270 = vpop.f32.mrb[0].mxu0
      %v2271 = vadd.f32 %v2194, %v2270
      %v2272 = vpop.f32.mrb[0].mxu0
      %v2273 = vadd.f32 %v2196, %v2272
      %2274 = vmatprep.mubr.f32.mxu0 %v308
      %2275 = vmatmul.mubr.f32.gmra.mrb[0].mxu0 %v307
      %v2276 = vpop.f32.mrb[0].mxu0
      %v2277 = vadd.f32 %v2200, %v2276
      %v2278 = vpop.f32.mrb[0].mxu0
      %v2279 = vadd.f32 %v2202, %v2278
      %2280 = vdwg.mxu0
      %2281 = vmatprep.subr.mxu0 %v1731
      %2282 = vmatpush1.msra.mxu0 %v1730
      %2283 = vmatprep.subr.mxu0 %v1733
      %2284 = vmatpush1.msra.mxu0 %v1732
      %2285 = vmatprep.subr.mxu0 %v1735
      %2286 = vmatpush1.msra.mxu0 %v1734
      %2287 = vmatprep.subr.mxu0 %v1737
      %2288 = vmatpush1.msra.mxu0 %v1736
      %2289 = vmatprep.subr.mxu0 %v1739
      %2290 = vmatpush1.msra.mxu0 %v1738
      %2291 = vmatprep.subr.mxu0 %v1741
      %2292 = vmatpush1.msra.mxu0 %v1740
      %2293 = vmatprep.subr.mxu0 %v1743
      %2294 = vmatpush1.msra.mxu0 %v1742
      %2295 = vmatprep.subr.mxu0 %v1745
      %2296 = vmatpush1.msra.mxu0 %v1744
      %2297 = vmatprep.subr.mxu0 %v1747
      %2298 = vmatpush1.msra.mxu0 %v1746
      %2299 = vmatprep.subr.mxu0 %v1749
      %2300 = vmatpush1.msra.mxu0 %v1748
      %2301 = vmatprep.subr.mxu0 %v1751
      %2302 = vmatpush1.msra.mxu0 %v1750
      %2303 = vmatprep.subr.mxu0 %v1753
      %2304 = vmatpush1.msra.mxu0 %v1752
      %2305 = vmatprep.subr.mxu0 %v1755
      %2306 = vmatpush1.msra.mxu0 %v1754
      %2307 = vmatprep.subr.mxu0 %v1757
      %2308 = vmatpush1.msra.mxu0 %v1756
      %2309 = vmatprep.subr.mxu0 %v1759
      %2310 = vmatpush1.msra.mxu0 %v1758
      %2311 = vmatprep.subr.mxu0 %v1761
      %2312 = vmatpush1.msra.mxu0 %v1760
      %2313 = vmatprep.subr.mxu0 %v1763
      %2314 = vmatpush1.msra.mxu0 %v1762
      %2315 = vmatprep.subr.mxu0 %v1765
      %2316 = vmatpush1.msra.mxu0 %v1764
      %2317 = vmatprep.subr.mxu0 %v1767
      %2318 = vmatpush1.msra.mxu0 %v1766
      %2319 = vmatprep.subr.mxu0 %v1769
      %2320 = vmatpush1.msra.mxu0 %v1768
      %2321 = vmatprep.subr.mxu0 %v1771
      %2322 = vmatpush1.msra.mxu0 %v1770
      %2323 = vmatprep.subr.mxu0 %v1773
      %2324 = vmatpush1.msra.mxu0 %v1772
      %2325 = vmatprep.subr.mxu0 %v1775
      %2326 = vmatpush1.msra.mxu0 %v1774
      %2327 = vmatprep.subr.mxu0 %v1777
      %2328 = vmatpush1.msra.mxu0 %v1776
      %2329 = vmatprep.subr.mxu0 %v1779
      %2330 = vmatpush1.msra.mxu0 %v1778
      %2331 = vmatprep.subr.mxu0 %v1781
      %2332 = vmatpush1.msra.mxu0 %v1780
      %2333 = vmatprep.subr.mxu0 %v1783
      %2334 = vmatpush1.msra.mxu0 %v1782
      %2335 = vmatprep.subr.mxu0 %v1785
      %2336 = vmatpush1.msra.mxu0 %v1784
      %2337 = vmatprep.subr.mxu0 %v1787
      %2338 = vmatpush1.msra.mxu0 %v1786
      %2339 = vmatprep.subr.mxu0 %v1789
      %2340 = vmatpush1.msra.mxu0 %v1788
      %2341 = vmatprep.subr.mxu0 %v1791
      %2342 = vmatpush1.msra.mxu0 %v1790
      %2343 = vmatprep.subr.mxu0 %v1793
      %2344 = vmatpush1.msra.mxu0 %v1792
      %2345 = vmatprep.mubr.f32.mxu0 %v294
      %2346 = vmatmul.mubr.f32.gmra.mrb[0].mxu0 %v293
      %v2347 = vpop.f32.mrb[0].mxu0
      %v2348 = vadd.f32 %v2271, %v2347
      %v2349 = vpop.f32.mrb[0].mxu0
      %v2350 = vadd.f32 %v2273, %v2349
      %2351 = vmatprep.mubr.f32.mxu0 %v310
      %2352 = vmatmul.mubr.f32.gmra.mrb[0].mxu0 %v309
      %v2353 = vpop.f32.mrb[0].mxu0
      %v2354 = vadd.f32 %v2277, %v2353
      %v2355 = vpop.f32.mrb[0].mxu0
      %v2356 = vadd.f32 %v2279, %v2355
      %2357 = vdwg.mxu0
      %2358 = vmatprep.subr.mxu0 %v1795
      %2359 = vmatpush1.msra.mxu0 %v1794
      %2360 = vmatprep.subr.mxu0 %v1797
      %2361 = vmatpush1.msra.mxu0 %v1796
      %2362 = vmatprep.subr.mxu0 %v1799
      %2363 = vmatpush1.msra.mxu0 %v1798
      %2364 = vmatprep.subr.mxu0 %v1801
      %2365 = vmatpush1.msra.mxu0 %v1800
      %2366 = vmatprep.subr.mxu0 %v1803
      %2367 = vmatpush1.msra.mxu0 %v1802
      %2368 = vmatprep.subr.mxu0 %v1805
      %2369 = vmatpush1.msra.mxu0 %v1804
      %2370 = vmatprep.subr.mxu0 %v1807
      %2371 = vmatpush1.msra.mxu0 %v1806
      %2372 = vmatprep.subr.mxu0 %v1809
      %2373 = vmatpush1.msra.mxu0 %v1808
      %2374 = vmatprep.subr.mxu0 %v1811
      %2375 = vmatpush1.msra.mxu0 %v1810
      %2376 = vmatprep.subr.mxu0 %v1813
      %2377 = vmatpush1.msra.mxu0 %v1812
      %2378 = vmatprep.subr.mxu0 %v1815
      %2379 = vmatpush1.msra.mxu0 %v1814
      %2380 = vmatprep.subr.mxu0 %v1817
      %2381 = vmatpush1.msra.mxu0 %v1816
      %2382 = vmatprep.subr.mxu0 %v1819
      %2383 = vmatpush1.msra.mxu0 %v1818
      %2384 = vmatprep.subr.mxu0 %v1821
      %2385 = vmatpush1.msra.mxu0 %v1820
      %2386 = vmatprep.subr.mxu0 %v1823
      %2387 = vmatpush1.msra.mxu0 %v1822
      %2388 = vmatprep.subr.mxu0 %v1825
      %2389 = vmatpush1.msra.mxu0 %v1824
      %2390 = vmatprep.subr.mxu0 %v1827
      %2391 = vmatpush1.msra.mxu0 %v1826
      %2392 = vmatprep.subr.mxu0 %v1829
      %2393 = vmatpush1.msra.mxu0 %v1828
      %2394 = vmatprep.subr.mxu0 %v1831
      %2395 = vmatpush1.msra.mxu0 %v1830
      %2396 = vmatprep.subr.mxu0 %v1833
      %2397 = vmatpush1.msra.mxu0 %v1832
      %2398 = vmatprep.subr.mxu0 %v1835
      %2399 = vmatpush1.msra.mxu0 %v1834
      %2400 = vmatprep.subr.mxu0 %v1837
      %2401 = vmatpush1.msra.mxu0 %v1836
      %2402 = vmatprep.subr.mxu0 %v1839
      %2403 = vmatpush1.msra.mxu0 %v1838
      %2404 = vmatprep.subr.mxu0 %v1841
      %2405 = vmatpush1.msra.mxu0 %v1840
      %2406 = vmatprep.subr.mxu0 %v1843
      %2407 = vmatpush1.msra.mxu0 %v1842
      %2408 = vmatprep.subr.mxu0 %v1845
      %2409 = vmatpush1.msra.mxu0 %v1844
      %2410 = vmatprep.subr.mxu0 %v1847
      %2411 = vmatpush1.msra.mxu0 %v1846
      %2412 = vmatprep.subr.mxu0 %v1849
      %2413 = vmatpush1.msra.mxu0 %v1848
      %2414 = vmatprep.subr.mxu0 %v1851
      %2415 = vmatpush1.msra.mxu0 %v1850
      %2416 = vmatprep.subr.mxu0 %v1853
      %2417 = vmatpush1.msra.mxu0 %v1852
      %2418 = vmatprep.subr.mxu0 %v1855
      %2419 = vmatpush1.msra.mxu0 %v1854
      %2420 = vmatprep.subr.mxu0 %v1857
      %2421 = vmatpush1.msra.mxu0 %v1856
      %2422 = vmatprep.mubr.f32.mxu0 %v296
      %2423 = vmatmul.mubr.f32.gmra.mrb[0].mxu0 %v295
      %v2424 = vpop.f32.mrb[0].mxu0
      %v2425 = vadd.f32 %v2348, %v2424
      %v2426 = vpop.f32.mrb[0].mxu0
      %v2427 = vadd.f32 %v2350, %v2426
      %2428 = vmatprep.mubr.f32.mxu0 %v312
      %2429 = vmatmul.mubr.f32.gmra.mrb[0].mxu0 %v311
      %v2430 = vpop.f32.mrb[0].mxu0
      %v2431 = vadd.f32 %v2354, %v2430
      %v2432 = vpop.f32.mrb[0].mxu0
      %v2433 = vadd.f32 %v2356, %v2432
      %2434 = vdwg.mxu0
      %2435 = vmatprep.subr.mxu0 %v1859
      %2436 = vmatpush1.msra.mxu0 %v1858
      %2437 = vmatprep.subr.mxu0 %v1861
      %2438 = vmatpush1.msra.mxu0 %v1860
      %2439 = vmatprep.subr.mxu0 %v1863
      %2440 = vmatpush1.msra.mxu0 %v1862
      %2441 = vmatprep.subr.mxu0 %v1865
      %2442 = vmatpush1.msra.mxu0 %v1864
      %2443 = vmatprep.subr.mxu0 %v1867
      %2444 = vmatpush1.msra.mxu0 %v1866
      %2445 = vmatprep.subr.mxu0 %v1869
      %2446 = vmatpush1.msra.mxu0 %v1868
      %2447 = vmatprep.subr.mxu0 %v1871
      %2448 = vmatpush1.msra.mxu0 %v1870
      %2449 = vmatprep.subr.mxu0 %v1873
      %2450 = vmatpush1.msra.mxu0 %v1872
      %2451 = vmatprep.subr.mxu0 %v1875
      %2452 = vmatpush1.msra.mxu0 %v1874
      %2453 = vmatprep.subr.mxu0 %v1877
      %2454 = vmatpush1.msra.mxu0 %v1876
      %2455 = vmatprep.subr.mxu0 %v1879
      %2456 = vmatpush1.msra.mxu0 %v1878
      %2457 = vmatprep.subr.mxu0 %v1881
      %2458 = vmatpush1.msra.mxu0 %v1880
      %2459 = vmatprep.subr.mxu0 %v1883
      %2460 = vmatpush1.msra.mxu0 %v1882
      %2461 = vmatprep.subr.mxu0 %v1885
      %2462 = vmatpush1.msra.mxu0 %v1884
      %2463 = vmatprep.subr.mxu0 %v1887
      %2464 = vmatpush1.msra.mxu0 %v1886
      %2465 = vmatprep.subr.mxu0 %v1889
      %2466 = vmatpush1.msra.mxu0 %v1888
      %2467 = vmatprep.subr.mxu0 %v1891
      %2468 = vmatpush1.msra.mxu0 %v1890
      %2469 = vmatprep.subr.mxu0 %v1893
      %2470 = vmatpush1.msra.mxu0 %v1892
      %2471 = vmatprep.subr.mxu0 %v1895
      %2472 = vmatpush1.msra.mxu0 %v1894
      %2473 = vmatprep.subr.mxu0 %v1897
      %2474 = vmatpush1.msra.mxu0 %v1896
      %2475 = vmatprep.subr.mxu0 %v1899
      %2476 = vmatpush1.msra.mxu0 %v1898
      %2477 = vmatprep.subr.mxu0 %v1901
      %2478 = vmatpush1.msra.mxu0 %v1900
      %2479 = vmatprep.subr.mxu0 %v1903
      %2480 = vmatpush1.msra.mxu0 %v1902
      %2481 = vmatprep.subr.mxu0 %v1905
      %2482 = vmatpush1.msra.mxu0 %v1904
      %2483 = vmatprep.subr.mxu0 %v1907
      %2484 = vmatpush1.msra.mxu0 %v1906
      %2485 = vmatprep.subr.mxu0 %v1909
      %2486 = vmatpush1.msra.mxu0 %v1908
      %2487 = vmatprep.subr.mxu0 %v1911
      %2488 = vmatpush1.msra.mxu0 %v1910
      %2489 = vmatprep.subr.mxu0 %v1913
      %2490 = vmatpush1.msra.mxu0 %v1912
      %2491 = vmatprep.subr.mxu0 %v1915
      %2492 = vmatpush1.msra.mxu0 %v1914
      %2493 = vmatprep.subr.mxu0 %v1917
      %2494 = vmatpush1.msra.mxu0 %v1916
      %2495 = vmatprep.subr.mxu0 %v1919
      %2496 = vmatpush1.msra.mxu0 %v1918
      %2497 = vmatprep.subr.mxu0 %v1921
      %2498 = vmatpush1.msra.mxu0 %v1920
      %2499 = vmatprep.mubr.f32.mxu0 %v298
      %2500 = vmatmul.mubr.f32.gmra.mrb[0].mxu0 %v297
      %v2501 = vpop.f32.mrb[0].mxu0
      %v2502 = vadd.f32 %v2425, %v2501
      %v2503 = vpop.f32.mrb[0].mxu0
      %v2504 = vadd.f32 %v2427, %v2503
      %2505 = vmatprep.mubr.f32.mxu0 %v314
      %2506 = vmatmul.mubr.f32.gmra.mrb[0].mxu0 %v313
      %v2507 = vpop.f32.mrb[0].mxu0
      %v2508 = vadd.f32 %v2431, %v2507
      %v2509 = vpop.f32.mrb[0].mxu0
      %v2510 = vadd.f32 %v2433, %v2509
      %2511 = vdwg.mxu0
      %2512 = vmatprep.subr.mxu0 %v1923
      %2513 = vmatpush1.msra.mxu0 %v1922
      %2514 = vmatprep.subr.mxu0 %v1925
      %2515 = vmatpush1.msra.mxu0 %v1924
      %2516 = vmatprep.subr.mxu0 %v1927
      %2517 = vmatpush1.msra.mxu0 %v1926
      %2518 = vmatprep.subr.mxu0 %v1929
      %2519 = vmatpush1.msra.mxu0 %v1928
      %2520 = vmatprep.subr.mxu0 %v1931
      %2521 = vmatpush1.msra.mxu0 %v1930
      %2522 = vmatprep.subr.mxu0 %v1933
      %2523 = vmatpush1.msra.mxu0 %v1932
      %2524 = vmatprep.subr.mxu0 %v1935
      %2525 = vmatpush1.msra.mxu0 %v1934
      %2526 = vmatprep.subr.mxu0 %v1937
      %2527 = vmatpush1.msra.mxu0 %v1936
      %2528 = vmatprep.subr.mxu0 %v1939
      %2529 = vmatpush1.msra.mxu0 %v1938
      %2530 = vmatprep.subr.mxu0 %v1941
      %2531 = vmatpush1.msra.mxu0 %v1940
      %2532 = vmatprep.subr.mxu0 %v1943
      %2533 = vmatpush1.msra.mxu0 %v1942
      %2534 = vmatprep.subr.mxu0 %v1945
      %2535 = vmatpush1.msra.mxu0 %v1944
      %2536 = vmatprep.subr.mxu0 %v1947
      %2537 = vmatpush1.msra.mxu0 %v1946
      %2538 = vmatprep.subr.mxu0 %v1949
      %2539 = vmatpush1.msra.mxu0 %v1948
      %2540 = vmatprep.subr.mxu0 %v1951
      %2541 = vmatpush1.msra.mxu0 %v1950
      %2542 = vmatprep.subr.mxu0 %v1953
      %2543 = vmatpush1.msra.mxu0 %v1952
      %2544 = vmatprep.subr.mxu0 %v1955
      %2545 = vmatpush1.msra.mxu0 %v1954
      %2546 = vmatprep.subr.mxu0 %v1957
      %2547 = vmatpush1.msra.mxu0 %v1956
      %2548 = vmatprep.subr.mxu0 %v1959
      %2549 = vmatpush1.msra.mxu0 %v1958
      %2550 = vmatprep.subr.mxu0 %v1961
      %2551 = vmatpush1.msra.mxu0 %v1960
      %2552 = vmatprep.subr.mxu0 %v1963
      %2553 = vmatpush1.msra.mxu0 %v1962
      %2554 = vmatprep.subr.mxu0 %v1965
      %2555 = vmatpush1.msra.mxu0 %v1964
      %2556 = vmatprep.subr.mxu0 %v1967
      %2557 = vmatpush1.msra.mxu0 %v1966
      %2558 = vmatprep.subr.mxu0 %v1969
      %2559 = vmatpush1.msra.mxu0 %v1968
      %2560 = vmatprep.subr.mxu0 %v1971
      %2561 = vmatpush1.msra.mxu0 %v1970
      %2562 = vmatprep.subr.mxu0 %v1973
      %2563 = vmatpush1.msra.mxu0 %v1972
      %2564 = vmatprep.subr.mxu0 %v1975
      %2565 = vmatpush1.msra.mxu0 %v1974
      %2566 = vmatprep.subr.mxu0 %v1977
      %2567 = vmatpush1.msra.mxu0 %v1976
      %2568 = vmatprep.subr.mxu0 %v1979
      %2569 = vmatpush1.msra.mxu0 %v1978
      %2570 = vmatprep.subr.mxu0 %v1981
      %2571 = vmatpush1.msra.mxu0 %v1980
      %2572 = vmatprep.subr.mxu0 %v1983
      %2573 = vmatpush1.msra.mxu0 %v1982
      %2574 = vmatprep.subr.mxu0 %v1985
      %2575 = vmatpush1.msra.mxu0 %v1984
      %2576 = vmatprep.mubr.f32.mxu0 %v300
      %2577 = vmatmul.mubr.f32.gmra.mrb[0].mxu0 %v299
      %v2578 = vpop.f32.mrb[0].mxu0
      %v2579 = vadd.f32 %v2502, %v2578
      %v2580 = vpop.f32.mrb[0].mxu0
      %v2581 = vadd.f32 %v2504, %v2580
      %2582 = vmatprep.mubr.f32.mxu0 %v316
      %2583 = vmatmul.mubr.f32.gmra.mrb[0].mxu0 %v315
      %v2584 = vpop.f32.mrb[0].mxu0
      %v2585 = vadd.f32 %v2508, %v2584
      %v2586 = vpop.f32.mrb[0].mxu0
      %v2587 = vadd.f32 %v2510, %v2586
      %2588 = vdwg.mxu0
      %2589 = vmatprep.subr.mxu0 %v1987
      %2590 = vmatpush1.msra.mxu0 %v1986
      %2591 = vmatprep.subr.mxu0 %v1989
      %2592 = vmatpush1.msra.mxu0 %v1988
      %2593 = vmatprep.subr.mxu0 %v1991
      %2594 = vmatpush1.msra.mxu0 %v1990
      %2595 = vmatprep.subr.mxu0 %v1993
      %2596 = vmatpush1.msra.mxu0 %v1992
      %2597 = vmatprep.subr.mxu0 %v1995
      %2598 = vmatpush1.msra.mxu0 %v1994
      %2599 = vmatprep.subr.mxu0 %v1997
      %2600 = vmatpush1.msra.mxu0 %v1996
      %2601 = vmatprep.subr.mxu0 %v1999
      %2602 = vmatpush1.msra.mxu0 %v1998
      %2603 = vmatprep.subr.mxu0 %v2001
      %2604 = vmatpush1.msra.mxu0 %v2000
      %2605 = vmatprep.subr.mxu0 %v2003
      %2606 = vmatpush1.msra.mxu0 %v2002
      %2607 = vmatprep.subr.mxu0 %v2005
      %2608 = vmatpush1.msra.mxu0 %v2004
      %2609 = vmatprep.subr.mxu0 %v2007
      %2610 = vmatpush1.msra.mxu0 %v2006
      %2611 = vmatprep.subr.mxu0 %v2009
      %2612 = vmatpush1.msra.mxu0 %v2008
      %2613 = vmatprep.subr.mxu0 %v2011
      %2614 = vmatpush1.msra.mxu0 %v2010
      %2615 = vmatprep.subr.mxu0 %v2013
      %2616 = vmatpush1.msra.mxu0 %v2012
      %2617 = vmatprep.subr.mxu0 %v2015
      %2618 = vmatpush1.msra.mxu0 %v2014
      %2619 = vmatprep.subr.mxu0 %v2017
      %2620 = vmatpush1.msra.mxu0 %v2016
      %2621 = vmatprep.subr.mxu0 %v2019
      %2622 = vmatpush1.msra.mxu0 %v2018
      %2623 = vmatprep.subr.mxu0 %v2021
      %2624 = vmatpush1.msra.mxu0 %v2020
      %2625 = vmatprep.subr.mxu0 %v2023
      %2626 = vmatpush1.msra.mxu0 %v2022
      %2627 = vmatprep.subr.mxu0 %v2025
      %2628 = vmatpush1.msra.mxu0 %v2024
      %2629 = vmatprep.subr.mxu0 %v2027
      %2630 = vmatpush1.msra.mxu0 %v2026
      %2631 = vmatprep.subr.mxu0 %v2029
      %2632 = vmatpush1.msra.mxu0 %v2028
      %2633 = vmatprep.subr.mxu0 %v2031
      %2634 = vmatpush1.msra.mxu0 %v2030
      %2635 = vmatprep.subr.mxu0 %v2033
      %2636 = vmatpush1.msra.mxu0 %v2032
      %2637 = vmatprep.subr.mxu0 %v2035
      %2638 = vmatpush1.msra.mxu0 %v2034
      %2639 = vmatprep.subr.mxu0 %v2037
      %2640 = vmatpush1.msra.mxu0 %v2036
      %2641 = vmatprep.subr.mxu0 %v2039
      %2642 = vmatpush1.msra.mxu0 %v2038
      %2643 = vmatprep.subr.mxu0 %v2041
      %2644 = vmatpush1.msra.mxu0 %v2040
      %2645 = vmatprep.subr.mxu0 %v2043
      %2646 = vmatpush1.msra.mxu0 %v2042
      %2647 = vmatprep.subr.mxu0 %v2045
      %2648 = vmatpush1.msra.mxu0 %v2044
      %2649 = vmatprep.subr.mxu0 %v2047
      %2650 = vmatpush1.msra.mxu0 %v2046
      %2651 = vmatprep.subr.mxu0 %v2049
      %2652 = vmatpush1.msra.mxu0 %v2048
      %2653 = vmatprep.mubr.f32.mxu0 %v302
      %2654 = vmatmul.mubr.f32.gmra.mrb[0].mxu0 %v301
      %v2655 = vpop.f32.mrb[0].mxu0
      %v2656 = vadd.f32 %v2579, %v2655
      %v2657 = vpop.f32.mrb[0].mxu0
      %v2658 = vadd.f32 %v2581, %v2657
      %2659 = vmatprep.mubr.f32.mxu0 %v318
      %2660 = vmatmul.mubr.f32.gmra.mrb[0].mxu0 %v317
      %v2661 = vpop.f32.mrb[0].mxu0
      %v2662 = vadd.f32 %v2585, %v2661
      %v2663 = vpop.f32.mrb[0].mxu0
      %v2664 = vadd.f32 %v2587, %v2663
      %2665 = vdwg.mxu0
      %v2666 = vadd.f32 %v2656, %v1452
      %v2667 = vadd.f32 %v2658, %v1452
      %v2668 = vsel %vm1456, %v2666, 0.0
      %v2669 = vsel %vm1458, %v2667, 0.0
      %v2670 = vadd.f32 %v2668, %v2669
      %2671 = vadd.xlane.f32.xlu0 %v2670
      %v2672 = vpop.xlane.xlu0 %2671
      %v2673 = vmul.f32 %v2672, 0.0051020407
      %v2674 = vmul.f32 %v2666, %v2673
      %v2675 = vmul.f32 %v2667, %v2673
      %v2676 = vsel %vm1456, %v2674, 0.0
      %v2677 = vrot.slane %v2676, 4
      %v2678 = vadd.f32 %v2676, %v2677
      %v2679 = vrot.slane %v2678, 2
      %v2680 = vadd.f32 %v2678, %v2679
      %v2681 = vrot.slane %v2680, 1
      %v2682 = vadd.f32 %v2680, %v2681
      %v2683 = vsel %vm1458, %v2675, 0.0
      %v2684 = vrot.slane %v2683, 4
      %v2685 = vadd.f32 %v2683, %v2684
      %v2686 = vrot.slane %v2685, 2
      %v2687 = vadd.f32 %v2685, %v2686
      %v2688 = vrot.slane %v2687, 1
      %v2689 = vadd.f32 %v2687, %v2688
      %v2690 = vmul.f32 %v2682, 0.25
      %v2691 = vmul.f32 %v2689, 0.25
      %v2692 = vmul.f32 %v2690, %v2662
      %v2693 = vmul.f32 %v2691, %v2664
      %v2696 = vrot.slane %v2692, 4
      %v2697 = vrot.slane %v2693, 4
      %v2700 = vadd.f32 %v2656, %v2696
      %v2701 = vadd.f32 %v2658, %v2697
      %v2702 = vsel %vm1492, %v2700, 0.0
      %v2703 = vsel %vm1494, %v2701, 0.0
      %v2704 = vadd.f32 %v2702, %v2703
      %2705 = vadd.xlane.f32.xlu0 %v2704
      %v2706 = vpop.xlane.xlu0 %2705
      %v2707 = vmul.f32 %v2706, 0.0051020407
      %v2708 = vadd.f32 %v2707, %v1501
      %v2711 = vcombine.low %v2666, %v2667
      %s2713 = scalar_lea.vmem %s273, 8
      %2714 = vst.msk [vmem:[%s2713] sm:$0xff] %vm1508, %v2711
      %v2717 = vcombine.low %v2690, %v2691
      %v2719 = vunpack.c.l.s4 1966171168
      %v2720 = vunpack.c.0.s8 %v2719
      %v2721 = vlaneseq
      %v2722 = vshrl.u32 %v2721, 7
      %v2723 = vsub.s32 %v2720, %v2722
      %v2724 = vrot.slane %v2717, %v2723
      %v2726 = vunpack.c.l.s4 1966171168
      %v2727 = vunpack.c.0.s8 %v2726
      %v2728 = vlaneseq
      %v2729 = vshrl.u32 %v2728, 7
      %v2730 = vsub.s32 %v2727, %v2729
      %v2731 = vrot.slane %v2724, %v2730
      %s2733 = scalar_lea.vmem %s279, 2
      %2734 = vst.msk [vmem:[%s2733] sm:$0x3] %vm1531, %v2731
      %s2735 = scalar_lea.vmem %s285, 8
      %2736 = vst.msk [vmem:[%s2735] sm:$0xf] %vm1533, %v2673
      %2737 = vst.msk [vmem:[%s2735] sm:$0xf0] %vm1535, %v2708
      %s2738 = scalar_lea.vmem %s266, 8192
      %v2739 = vld [vmem:[%s2738] sm:$0xff]
      %v2740 = vld [vmem:[%s2738 + $0x8] sm:$0xff]
      %v2741 = vld [vmem:[%s2738 + $0x10] sm:$0xff]
      %v2742 = vld [vmem:[%s2738 + $0x18] sm:$0xff]
      %v2743 = vld [vmem:[%s2738 + $0x20] sm:$0xff]
      %v2744 = vld [vmem:[%s2738 + $0x28] sm:$0xff]
      %v2745 = vld [vmem:[%s2738 + $0x30] sm:$0xff]
      %v2746 = vld [vmem:[%s2738 + $0x38] sm:$0xff]
      %v2747 = vld [vmem:[%s2738 + $0x40] sm:$0xff]
      %v2748 = vld [vmem:[%s2738 + $0x48] sm:$0xff]
      %v2749 = vld [vmem:[%s2738 + $0x50] sm:$0xff]
      %v2750 = vld [vmem:[%s2738 + $0x58] sm:$0xff]
      %v2751 = vld [vmem:[%s2738 + $0x60] sm:$0xff]
      %v2752 = vld [vmem:[%s2738 + $0x68] sm:$0xff]
      %v2753 = vld [vmem:[%s2738 + $0x70] sm:$0xff]
      %v2754 = vld [vmem:[%s2738 + $0x78] sm:$0xff]
      %v2755 = vld [vmem:[%s2738 + $0x80] sm:$0xff]
      %v2756 = vld [vmem:[%s2738 + $0x88] sm:$0xff]
      %v2757 = vld [vmem:[%s2738 + $0x90] sm:$0xff]
      %v2758 = vld [vmem:[%s2738 + $0x98] sm:$0xff]
      %v2759 = vld [vmem:[%s2738 + $0xa0] sm:$0xff]
      %v2760 = vld [vmem:[%s2738 + $0xa8] sm:$0xff]
      %v2761 = vld [vmem:[%s2738 + $0xb0] sm:$0xff]
      %v2762 = vld [vmem:[%s2738 + $0xb8] sm:$0xff]
      %v2763 = vld [vmem:[%s2738 + $0xc0] sm:$0xff]
      %v2764 = vld [vmem:[%s2738 + $0xc8] sm:$0xff]
      %v2765 = vld [vmem:[%s2738 + $0xd0] sm:$0xff]
      %v2766 = vld [vmem:[%s2738 + $0xd8] sm:$0xff]
      %v2767 = vld [vmem:[%s2738 + $0xe0] sm:$0xff]
      %v2768 = vld [vmem:[%s2738 + $0xe8] sm:$0xff]
      %v2769 = vld [vmem:[%s2738 + $0xf0] sm:$0xff]
      %v2770 = vld [vmem:[%s2738 + $0xf8] sm:$0xff]
      %v2771 = vld [vmem:[%s2738 + $0x100] sm:$0xff]
      %v2772 = vld [vmem:[%s2738 + $0x108] sm:$0xff]
      %v2773 = vld [vmem:[%s2738 + $0x110] sm:$0xff]
      %v2774 = vld [vmem:[%s2738 + $0x118] sm:$0xff]
      %v2775 = vld [vmem:[%s2738 + $0x120] sm:$0xff]
      %v2776 = vld [vmem:[%s2738 + $0x128] sm:$0xff]
      %v2777 = vld [vmem:[%s2738 + $0x130] sm:$0xff]
      %v2778 = vld [vmem:[%s2738 + $0x138] sm:$0xff]
      %v2779 = vld [vmem:[%s2738 + $0x140] sm:$0xff]
      %v2780 = vld [vmem:[%s2738 + $0x148] sm:$0xff]
      %v2781 = vld [vmem:[%s2738 + $0x150] sm:$0xff]
      %v2782 = vld [vmem:[%s2738 + $0x158] sm:$0xff]
      %v2783 = vld [vmem:[%s2738 + $0x160] sm:$0xff]
      %v2784 = vld [vmem:[%s2738 + $0x168] sm:$0xff]
      %v2785 = vld [vmem:[%s2738 + $0x170] sm:$0xff]
      %v2786 = vld [vmem:[%s2738 + $0x178] sm:$0xff]
      %v2787 = vld [vmem:[%s2738 + $0x180] sm:$0xff]
      %v2788 = vld [vmem:[%s2738 + $0x188] sm:$0xff]
      %v2789 = vld [vmem:[%s2738 + $0x190] sm:$0xff]
      %v2790 = vld [vmem:[%s2738 + $0x198] sm:$0xff]
      %v2791 = vld [vmem:[%s2738 + $0x1a0] sm:$0xff]
      %v2792 = vld [vmem:[%s2738 + $0x1a8] sm:$0xff]
      %v2793 = vld [vmem:[%s2738 + $0x1b0] sm:$0xff]
      %v2794 = vld [vmem:[%s2738 + $0x1b8] sm:$0xff]
      %v2795 = vld [vmem:[%s2738 + $0x1c0] sm:$0xff]
      %v2796 = vld [vmem:[%s2738 + $0x1c8] sm:$0xff]
      %v2797 = vld [vmem:[%s2738 + $0x1d0] sm:$0xff]
      %v2798 = vld [vmem:[%s2738 + $0x1d8] sm:$0xff]
      %v2799 = vld [vmem:[%s2738 + $0x1e0] sm:$0xff]
      %v2800 = vld [vmem:[%s2738 + $0x1e8] sm:$0xff]
      %v2801 = vld [vmem:[%s2738 + $0x1f0] sm:$0xff]
      %v2802 = vld [vmem:[%s2738 + $0x1f8] sm:$0xff]
      %v2803 = vld [vmem:[%s2738 + $0x200] sm:$0xff]
      %v2804 = vld [vmem:[%s2738 + $0x208] sm:$0xff]
      %v2805 = vld [vmem:[%s2738 + $0x210] sm:$0xff]
      %v2806 = vld [vmem:[%s2738 + $0x218] sm:$0xff]
      %v2807 = vld [vmem:[%s2738 + $0x220] sm:$0xff]
      %v2808 = vld [vmem:[%s2738 + $0x228] sm:$0xff]
      %v2809 = vld [vmem:[%s2738 + $0x230] sm:$0xff]
      %v2810 = vld [vmem:[%s2738 + $0x238] sm:$0xff]
      %v2811 = vld [vmem:[%s2738 + $0x240] sm:$0xff]
      %v2812 = vld [vmem:[%s2738 + $0x248] sm:$0xff]
      %v2813 = vld [vmem:[%s2738 + $0x250] sm:$0xff]
      %v2814 = vld [vmem:[%s2738 + $0x258] sm:$0xff]
      %v2815 = vld [vmem:[%s2738 + $0x260] sm:$0xff]
      %v2816 = vld [vmem:[%s2738 + $0x268] sm:$0xff]
      %v2817 = vld [vmem:[%s2738 + $0x270] sm:$0xff]
      %v2818 = vld [vmem:[%s2738 + $0x278] sm:$0xff]
      %v2819 = vld [vmem:[%s2738 + $0x280] sm:$0xff]
      %v2820 = vld [vmem:[%s2738 + $0x288] sm:$0xff]
      %v2821 = vld [vmem:[%s2738 + $0x290] sm:$0xff]
      %v2822 = vld [vmem:[%s2738 + $0x298] sm:$0xff]
      %v2823 = vld [vmem:[%s2738 + $0x2a0] sm:$0xff]
      %v2824 = vld [vmem:[%s2738 + $0x2a8] sm:$0xff]
      %v2825 = vld [vmem:[%s2738 + $0x2b0] sm:$0xff]
      %v2826 = vld [vmem:[%s2738 + $0x2b8] sm:$0xff]
      %v2827 = vld [vmem:[%s2738 + $0x2c0] sm:$0xff]
      %v2828 = vld [vmem:[%s2738 + $0x2c8] sm:$0xff]
      %v2829 = vld [vmem:[%s2738 + $0x2d0] sm:$0xff]
      %v2830 = vld [vmem:[%s2738 + $0x2d8] sm:$0xff]
      %v2831 = vld [vmem:[%s2738 + $0x2e0] sm:$0xff]
      %v2832 = vld [vmem:[%s2738 + $0x2e8] sm:$0xff]
      %v2833 = vld [vmem:[%s2738 + $0x2f0] sm:$0xff]
      %v2834 = vld [vmem:[%s2738 + $0x2f8] sm:$0xff]
      %v2835 = vld [vmem:[%s2738 + $0x300] sm:$0xff]
      %v2836 = vld [vmem:[%s2738 + $0x308] sm:$0xff]
      %v2837 = vld [vmem:[%s2738 + $0x310] sm:$0xff]
      %v2838 = vld [vmem:[%s2738 + $0x318] sm:$0xff]
      %v2839 = vld [vmem:[%s2738 + $0x320] sm:$0xff]
      %v2840 = vld [vmem:[%s2738 + $0x328] sm:$0xff]
      %v2841 = vld [vmem:[%s2738 + $0x330] sm:$0xff]
      %v2842 = vld [vmem:[%s2738 + $0x338] sm:$0xff]
      %v2843 = vld [vmem:[%s2738 + $0x340] sm:$0xff]
      %v2844 = vld [vmem:[%s2738 + $0x348] sm:$0xff]
      %v2845 = vld [vmem:[%s2738 + $0x350] sm:$0xff]
      %v2846 = vld [vmem:[%s2738 + $0x358] sm:$0xff]
      %v2847 = vld [vmem:[%s2738 + $0x360] sm:$0xff]
      %v2848 = vld [vmem:[%s2738 + $0x368] sm:$0xff]
      %v2849 = vld [vmem:[%s2738 + $0x370] sm:$0xff]
      %v2850 = vld [vmem:[%s2738 + $0x378] sm:$0xff]
      %v2851 = vld [vmem:[%s2738 + $0x380] sm:$0xff]
      %v2852 = vld [vmem:[%s2738 + $0x388] sm:$0xff]
      %v2853 = vld [vmem:[%s2738 + $0x390] sm:$0xff]
      %v2854 = vld [vmem:[%s2738 + $0x398] sm:$0xff]
      %v2855 = vld [vmem:[%s2738 + $0x3a0] sm:$0xff]
      %v2856 = vld [vmem:[%s2738 + $0x3a8] sm:$0xff]
      %v2857 = vld [vmem:[%s2738 + $0x3b0] sm:$0xff]
      %v2858 = vld [vmem:[%s2738 + $0x3b8] sm:$0xff]
      %v2859 = vld [vmem:[%s2738 + $0x3c0] sm:$0xff]
      %v2860 = vld [vmem:[%s2738 + $0x3c8] sm:$0xff]
      %v2861 = vld [vmem:[%s2738 + $0x3d0] sm:$0xff]
      %v2862 = vld [vmem:[%s2738 + $0x3d8] sm:$0xff]
      %v2863 = vld [vmem:[%s2738 + $0x3e0] sm:$0xff]
      %v2864 = vld [vmem:[%s2738 + $0x3e8] sm:$0xff]
      %v2865 = vld [vmem:[%s2738 + $0x3f0] sm:$0xff]
      %v2866 = vld [vmem:[%s2738 + $0x3f8] sm:$0xff]
      %v2867 = vld [vmem:[%s2738 + $0x400] sm:$0xff]
      %v2868 = vld [vmem:[%s2738 + $0x408] sm:$0xff]
      %v2869 = vld [vmem:[%s2738 + $0x410] sm:$0xff]
      %v2870 = vld [vmem:[%s2738 + $0x418] sm:$0xff]
      %v2871 = vld [vmem:[%s2738 + $0x420] sm:$0xff]
      %v2872 = vld [vmem:[%s2738 + $0x428] sm:$0xff]
      %v2873 = vld [vmem:[%s2738 + $0x430] sm:$0xff]
      %v2874 = vld [vmem:[%s2738 + $0x438] sm:$0xff]
      %v2875 = vld [vmem:[%s2738 + $0x440] sm:$0xff]
      %v2876 = vld [vmem:[%s2738 + $0x448] sm:$0xff]
      %v2877 = vld [vmem:[%s2738 + $0x450] sm:$0xff]
      %v2878 = vld [vmem:[%s2738 + $0x458] sm:$0xff]
      %v2879 = vld [vmem:[%s2738 + $0x460] sm:$0xff]
      %v2880 = vld [vmem:[%s2738 + $0x468] sm:$0xff]
      %v2881 = vld [vmem:[%s2738 + $0x470] sm:$0xff]
      %v2882 = vld [vmem:[%s2738 + $0x478] sm:$0xff]
      %v2883 = vld [vmem:[%s2738 + $0x480] sm:$0xff]
      %v2884 = vld [vmem:[%s2738 + $0x488] sm:$0xff]
      %v2885 = vld [vmem:[%s2738 + $0x490] sm:$0xff]
      %v2886 = vld [vmem:[%s2738 + $0x498] sm:$0xff]
      %v2887 = vld [vmem:[%s2738 + $0x4a0] sm:$0xff]
      %v2888 = vld [vmem:[%s2738 + $0x4a8] sm:$0xff]
      %v2889 = vld [vmem:[%s2738 + $0x4b0] sm:$0xff]
      %v2890 = vld [vmem:[%s2738 + $0x4b8] sm:$0xff]
      %v2891 = vld [vmem:[%s2738 + $0x4c0] sm:$0xff]
      %v2892 = vld [vmem:[%s2738 + $0x4c8] sm:$0xff]
      %v2893 = vld [vmem:[%s2738 + $0x4d0] sm:$0xff]
      %v2894 = vld [vmem:[%s2738 + $0x4d8] sm:$0xff]
      %v2895 = vld [vmem:[%s2738 + $0x4e0] sm:$0xff]
      %v2896 = vld [vmem:[%s2738 + $0x4e8] sm:$0xff]
      %v2897 = vld [vmem:[%s2738 + $0x4f0] sm:$0xff]
      %v2898 = vld [vmem:[%s2738 + $0x4f8] sm:$0xff]
      %v2899 = vld [vmem:[%s2738 + $0x500] sm:$0xff]
      %v2900 = vld [vmem:[%s2738 + $0x508] sm:$0xff]
      %v2901 = vld [vmem:[%s2738 + $0x510] sm:$0xff]
      %v2902 = vld [vmem:[%s2738 + $0x518] sm:$0xff]
      %v2903 = vld [vmem:[%s2738 + $0x520] sm:$0xff]
      %v2904 = vld [vmem:[%s2738 + $0x528] sm:$0xff]
      %v2905 = vld [vmem:[%s2738 + $0x530] sm:$0xff]
      %v2906 = vld [vmem:[%s2738 + $0x538] sm:$0xff]
      %v2907 = vld [vmem:[%s2738 + $0x540] sm:$0xff]
      %v2908 = vld [vmem:[%s2738 + $0x548] sm:$0xff]
      %v2909 = vld [vmem:[%s2738 + $0x550] sm:$0xff]
      %v2910 = vld [vmem:[%s2738 + $0x558] sm:$0xff]
      %v2911 = vld [vmem:[%s2738 + $0x560] sm:$0xff]
      %v2912 = vld [vmem:[%s2738 + $0x568] sm:$0xff]
      %v2913 = vld [vmem:[%s2738 + $0x570] sm:$0xff]
      %v2914 = vld [vmem:[%s2738 + $0x578] sm:$0xff]
      %v2915 = vld [vmem:[%s2738 + $0x580] sm:$0xff]
      %v2916 = vld [vmem:[%s2738 + $0x588] sm:$0xff]
      %v2917 = vld [vmem:[%s2738 + $0x590] sm:$0xff]
      %v2918 = vld [vmem:[%s2738 + $0x598] sm:$0xff]
      %v2919 = vld [vmem:[%s2738 + $0x5a0] sm:$0xff]
      %v2920 = vld [vmem:[%s2738 + $0x5a8] sm:$0xff]
      %v2921 = vld [vmem:[%s2738 + $0x5b0] sm:$0xff]
      %v2922 = vld [vmem:[%s2738 + $0x5b8] sm:$0xff]
      %v2923 = vld [vmem:[%s2738 + $0x5c0] sm:$0xff]
      %v2924 = vld [vmem:[%s2738 + $0x5c8] sm:$0xff]
      %v2925 = vld [vmem:[%s2738 + $0x5d0] sm:$0xff]
      %v2926 = vld [vmem:[%s2738 + $0x5d8] sm:$0xff]
      %v2927 = vld [vmem:[%s2738 + $0x5e0] sm:$0xff]
      %v2928 = vld [vmem:[%s2738 + $0x5e8] sm:$0xff]
      %v2929 = vld [vmem:[%s2738 + $0x5f0] sm:$0xff]
      %v2930 = vld [vmem:[%s2738 + $0x5f8] sm:$0xff]
      %v2931 = vld [vmem:[%s2738 + $0x600] sm:$0xff]
      %v2932 = vld [vmem:[%s2738 + $0x608] sm:$0xff]
      %v2933 = vld [vmem:[%s2738 + $0x610] sm:$0xff]
      %v2934 = vld [vmem:[%s2738 + $0x618] sm:$0xff]
      %v2935 = vld [vmem:[%s2738 + $0x620] sm:$0xff]
      %v2936 = vld [vmem:[%s2738 + $0x628] sm:$0xff]
      %v2937 = vld [vmem:[%s2738 + $0x630] sm:$0xff]
      %v2938 = vld [vmem:[%s2738 + $0x638] sm:$0xff]
      %v2939 = vld [vmem:[%s2738 + $0x640] sm:$0xff]
      %v2940 = vld [vmem:[%s2738 + $0x648] sm:$0xff]
      %v2941 = vld [vmem:[%s2738 + $0x650] sm:$0xff]
      %v2942 = vld [vmem:[%s2738 + $0x658] sm:$0xff]
      %v2943 = vld [vmem:[%s2738 + $0x660] sm:$0xff]
      %v2944 = vld [vmem:[%s2738 + $0x668] sm:$0xff]
      %v2945 = vld [vmem:[%s2738 + $0x670] sm:$0xff]
      %v2946 = vld [vmem:[%s2738 + $0x678] sm:$0xff]
      %v2947 = vld [vmem:[%s2738 + $0x680] sm:$0xff]
      %v2948 = vld [vmem:[%s2738 + $0x688] sm:$0xff]
      %v2949 = vld [vmem:[%s2738 + $0x690] sm:$0xff]
      %v2950 = vld [vmem:[%s2738 + $0x698] sm:$0xff]
      %v2951 = vld [vmem:[%s2738 + $0x6a0] sm:$0xff]
      %v2952 = vld [vmem:[%s2738 + $0x6a8] sm:$0xff]
      %v2953 = vld [vmem:[%s2738 + $0x6b0] sm:$0xff]
      %v2954 = vld [vmem:[%s2738 + $0x6b8] sm:$0xff]
      %v2955 = vld [vmem:[%s2738 + $0x6c0] sm:$0xff]
      %v2956 = vld [vmem:[%s2738 + $0x6c8] sm:$0xff]
      %v2957 = vld [vmem:[%s2738 + $0x6d0] sm:$0xff]
      %v2958 = vld [vmem:[%s2738 + $0x6d8] sm:$0xff]
      %v2959 = vld [vmem:[%s2738 + $0x6e0] sm:$0xff]
      %v2960 = vld [vmem:[%s2738 + $0x6e8] sm:$0xff]
      %v2961 = vld [vmem:[%s2738 + $0x6f0] sm:$0xff]
      %v2962 = vld [vmem:[%s2738 + $0x6f8] sm:$0xff]
      %v2963 = vld [vmem:[%s2738 + $0x700] sm:$0xff]
      %v2964 = vld [vmem:[%s2738 + $0x708] sm:$0xff]
      %v2965 = vld [vmem:[%s2738 + $0x710] sm:$0xff]
      %v2966 = vld [vmem:[%s2738 + $0x718] sm:$0xff]
      %v2967 = vld [vmem:[%s2738 + $0x720] sm:$0xff]
      %v2968 = vld [vmem:[%s2738 + $0x728] sm:$0xff]
      %v2969 = vld [vmem:[%s2738 + $0x730] sm:$0xff]
      %v2970 = vld [vmem:[%s2738 + $0x738] sm:$0xff]
      %v2971 = vld [vmem:[%s2738 + $0x740] sm:$0xff]
      %v2972 = vld [vmem:[%s2738 + $0x748] sm:$0xff]
      %v2973 = vld [vmem:[%s2738 + $0x750] sm:$0xff]
      %v2974 = vld [vmem:[%s2738 + $0x758] sm:$0xff]
      %v2975 = vld [vmem:[%s2738 + $0x760] sm:$0xff]
      %v2976 = vld [vmem:[%s2738 + $0x768] sm:$0xff]
      %v2977 = vld [vmem:[%s2738 + $0x770] sm:$0xff]
      %v2978 = vld [vmem:[%s2738 + $0x778] sm:$0xff]
      %v2979 = vld [vmem:[%s2738 + $0x780] sm:$0xff]
      %v2980 = vld [vmem:[%s2738 + $0x788] sm:$0xff]
      %v2981 = vld [vmem:[%s2738 + $0x790] sm:$0xff]
      %v2982 = vld [vmem:[%s2738 + $0x798] sm:$0xff]
      %v2983 = vld [vmem:[%s2738 + $0x7a0] sm:$0xff]
      %v2984 = vld [vmem:[%s2738 + $0x7a8] sm:$0xff]
      %v2985 = vld [vmem:[%s2738 + $0x7b0] sm:$0xff]
      %v2986 = vld [vmem:[%s2738 + $0x7b8] sm:$0xff]
      %v2987 = vld [vmem:[%s2738 + $0x7c0] sm:$0xff]
      %v2988 = vld [vmem:[%s2738 + $0x7c8] sm:$0xff]
      %v2989 = vld [vmem:[%s2738 + $0x7d0] sm:$0xff]
      %v2990 = vld [vmem:[%s2738 + $0x7d8] sm:$0xff]
      %v2991 = vld [vmem:[%s2738 + $0x7e0] sm:$0xff]
      %v2992 = vld [vmem:[%s2738 + $0x7e8] sm:$0xff]
      %v2993 = vld [vmem:[%s2738 + $0x7f0] sm:$0xff]
      %v2994 = vld [vmem:[%s2738 + $0x7f8] sm:$0xff]
      %v2995 = vld [vmem:[%s2738 + $0x800] sm:$0xff]
      %v2996 = vld [vmem:[%s2738 + $0x808] sm:$0xff]
      %v2997 = vld [vmem:[%s2738 + $0x810] sm:$0xff]
      %v2998 = vld [vmem:[%s2738 + $0x818] sm:$0xff]
      %v2999 = vld [vmem:[%s2738 + $0x820] sm:$0xff]
      %v3000 = vld [vmem:[%s2738 + $0x828] sm:$0xff]
      %v3001 = vld [vmem:[%s2738 + $0x830] sm:$0xff]
      %v3002 = vld [vmem:[%s2738 + $0x838] sm:$0xff]
      %v3003 = vld [vmem:[%s2738 + $0x840] sm:$0xff]
      %v3004 = vld [vmem:[%s2738 + $0x848] sm:$0xff]
      %v3005 = vld [vmem:[%s2738 + $0x850] sm:$0xff]
      %v3006 = vld [vmem:[%s2738 + $0x858] sm:$0xff]
      %v3007 = vld [vmem:[%s2738 + $0x860] sm:$0xff]
      %v3008 = vld [vmem:[%s2738 + $0x868] sm:$0xff]
      %v3009 = vld [vmem:[%s2738 + $0x870] sm:$0xff]
      %v3010 = vld [vmem:[%s2738 + $0x878] sm:$0xff]
      %v3011 = vld [vmem:[%s2738 + $0x880] sm:$0xff]
      %v3012 = vld [vmem:[%s2738 + $0x888] sm:$0xff]
      %v3013 = vld [vmem:[%s2738 + $0x890] sm:$0xff]
      %v3014 = vld [vmem:[%s2738 + $0x898] sm:$0xff]
      %v3015 = vld [vmem:[%s2738 + $0x8a0] sm:$0xff]
      %v3016 = vld [vmem:[%s2738 + $0x8a8] sm:$0xff]
      %v3017 = vld [vmem:[%s2738 + $0x8b0] sm:$0xff]
      %v3018 = vld [vmem:[%s2738 + $0x8b8] sm:$0xff]
      %v3019 = vld [vmem:[%s2738 + $0x8c0] sm:$0xff]
      %v3020 = vld [vmem:[%s2738 + $0x8c8] sm:$0xff]
      %v3021 = vld [vmem:[%s2738 + $0x8d0] sm:$0xff]
      %v3022 = vld [vmem:[%s2738 + $0x8d8] sm:$0xff]
      %v3023 = vld [vmem:[%s2738 + $0x8e0] sm:$0xff]
      %v3024 = vld [vmem:[%s2738 + $0x8e8] sm:$0xff]
      %v3025 = vld [vmem:[%s2738 + $0x8f0] sm:$0xff]
      %v3026 = vld [vmem:[%s2738 + $0x8f8] sm:$0xff]
      %v3027 = vld [vmem:[%s2738 + $0x900] sm:$0xff]
      %v3028 = vld [vmem:[%s2738 + $0x908] sm:$0xff]
      %v3029 = vld [vmem:[%s2738 + $0x910] sm:$0xff]
      %v3030 = vld [vmem:[%s2738 + $0x918] sm:$0xff]
      %v3031 = vld [vmem:[%s2738 + $0x920] sm:$0xff]
      %v3032 = vld [vmem:[%s2738 + $0x928] sm:$0xff]
      %v3033 = vld [vmem:[%s2738 + $0x930] sm:$0xff]
      %v3034 = vld [vmem:[%s2738 + $0x938] sm:$0xff]
      %v3035 = vld [vmem:[%s2738 + $0x940] sm:$0xff]
      %v3036 = vld [vmem:[%s2738 + $0x948] sm:$0xff]
      %v3037 = vld [vmem:[%s2738 + $0x950] sm:$0xff]
      %v3038 = vld [vmem:[%s2738 + $0x958] sm:$0xff]
      %v3039 = vld [vmem:[%s2738 + $0x960] sm:$0xff]
      %v3040 = vld [vmem:[%s2738 + $0x968] sm:$0xff]
      %v3041 = vld [vmem:[%s2738 + $0x970] sm:$0xff]
      %v3042 = vld [vmem:[%s2738 + $0x978] sm:$0xff]
      %v3043 = vld [vmem:[%s2738 + $0x980] sm:$0xff]
      %v3044 = vld [vmem:[%s2738 + $0x988] sm:$0xff]
      %v3045 = vld [vmem:[%s2738 + $0x990] sm:$0xff]
      %v3046 = vld [vmem:[%s2738 + $0x998] sm:$0xff]
      %v3047 = vld [vmem:[%s2738 + $0x9a0] sm:$0xff]
      %v3048 = vld [vmem:[%s2738 + $0x9a8] sm:$0xff]
      %v3049 = vld [vmem:[%s2738 + $0x9b0] sm:$0xff]
      %v3050 = vld [vmem:[%s2738 + $0x9b8] sm:$0xff]
      %v3051 = vld [vmem:[%s2738 + $0x9c0] sm:$0xff]
      %v3052 = vld [vmem:[%s2738 + $0x9c8] sm:$0xff]
      %v3053 = vld [vmem:[%s2738 + $0x9d0] sm:$0xff]
      %v3054 = vld [vmem:[%s2738 + $0x9d8] sm:$0xff]
      %v3055 = vld [vmem:[%s2738 + $0x9e0] sm:$0xff]
      %v3056 = vld [vmem:[%s2738 + $0x9e8] sm:$0xff]
      %v3057 = vld [vmem:[%s2738 + $0x9f0] sm:$0xff]
      %v3058 = vld [vmem:[%s2738 + $0x9f8] sm:$0xff]
      %v3059 = vld [vmem:[%s2738 + $0xa00] sm:$0xff]
      %v3060 = vld [vmem:[%s2738 + $0xa08] sm:$0xff]
      %v3061 = vld [vmem:[%s2738 + $0xa10] sm:$0xff]
      %v3062 = vld [vmem:[%s2738 + $0xa18] sm:$0xff]
      %v3063 = vld [vmem:[%s2738 + $0xa20] sm:$0xff]
      %v3064 = vld [vmem:[%s2738 + $0xa28] sm:$0xff]
      %v3065 = vld [vmem:[%s2738 + $0xa30] sm:$0xff]
      %v3066 = vld [vmem:[%s2738 + $0xa38] sm:$0xff]
      %v3067 = vld [vmem:[%s2738 + $0xa40] sm:$0xff]
      %v3068 = vld [vmem:[%s2738 + $0xa48] sm:$0xff]
      %v3069 = vld [vmem:[%s2738 + $0xa50] sm:$0xff]
      %v3070 = vld [vmem:[%s2738 + $0xa58] sm:$0xff]
      %v3071 = vld [vmem:[%s2738 + $0xa60] sm:$0xff]
      %v3072 = vld [vmem:[%s2738 + $0xa68] sm:$0xff]
      %v3073 = vld [vmem:[%s2738 + $0xa70] sm:$0xff]
      %v3074 = vld [vmem:[%s2738 + $0xa78] sm:$0xff]
      %v3075 = vld [vmem:[%s2738 + $0xa80] sm:$0xff]
      %v3076 = vld [vmem:[%s2738 + $0xa88] sm:$0xff]
      %v3077 = vld [vmem:[%s2738 + $0xa90] sm:$0xff]
      %v3078 = vld [vmem:[%s2738 + $0xa98] sm:$0xff]
      %v3079 = vld [vmem:[%s2738 + $0xaa0] sm:$0xff]
      %v3080 = vld [vmem:[%s2738 + $0xaa8] sm:$0xff]
      %v3081 = vld [vmem:[%s2738 + $0xab0] sm:$0xff]
      %v3082 = vld [vmem:[%s2738 + $0xab8] sm:$0xff]
      %v3083 = vld [vmem:[%s2738 + $0xac0] sm:$0xff]
      %v3084 = vld [vmem:[%s2738 + $0xac8] sm:$0xff]
      %v3085 = vld [vmem:[%s2738 + $0xad0] sm:$0xff]
      %v3086 = vld [vmem:[%s2738 + $0xad8] sm:$0xff]
      %v3087 = vld [vmem:[%s2738 + $0xae0] sm:$0xff]
      %v3088 = vld [vmem:[%s2738 + $0xae8] sm:$0xff]
      %v3089 = vld [vmem:[%s2738 + $0xaf0] sm:$0xff]
      %v3090 = vld [vmem:[%s2738 + $0xaf8] sm:$0xff]
      %v3091 = vld [vmem:[%s2738 + $0xb00] sm:$0xff]
      %v3092 = vld [vmem:[%s2738 + $0xb08] sm:$0xff]
      %v3093 = vld [vmem:[%s2738 + $0xb10] sm:$0xff]
      %v3094 = vld [vmem:[%s2738 + $0xb18] sm:$0xff]
      %v3095 = vld [vmem:[%s2738 + $0xb20] sm:$0xff]
      %v3096 = vld [vmem:[%s2738 + $0xb28] sm:$0xff]
      %v3097 = vld [vmem:[%s2738 + $0xb30] sm:$0xff]
      %v3098 = vld [vmem:[%s2738 + $0xb38] sm:$0xff]
      %v3099 = vld [vmem:[%s2738 + $0xb40] sm:$0xff]
      %v3100 = vld [vmem:[%s2738 + $0xb48] sm:$0xff]
      %v3101 = vld [vmem:[%s2738 + $0xb50] sm:$0xff]
      %v3102 = vld [vmem:[%s2738 + $0xb58] sm:$0xff]
      %v3103 = vld [vmem:[%s2738 + $0xb60] sm:$0xff]
      %v3104 = vld [vmem:[%s2738 + $0xb68] sm:$0xff]
      %v3105 = vld [vmem:[%s2738 + $0xb70] sm:$0xff]
      %v3106 = vld [vmem:[%s2738 + $0xb78] sm:$0xff]
      %v3107 = vld [vmem:[%s2738 + $0xb80] sm:$0xff]
      %v3108 = vld [vmem:[%s2738 + $0xb88] sm:$0xff]
      %v3109 = vld [vmem:[%s2738 + $0xb90] sm:$0xff]
      %v3110 = vld [vmem:[%s2738 + $0xb98] sm:$0xff]
      %v3111 = vld [vmem:[%s2738 + $0xba0] sm:$0xff]
      %v3112 = vld [vmem:[%s2738 + $0xba8] sm:$0xff]
      %v3113 = vld [vmem:[%s2738 + $0xbb0] sm:$0xff]
      %v3114 = vld [vmem:[%s2738 + $0xbb8] sm:$0xff]
      %v3115 = vld [vmem:[%s2738 + $0xbc0] sm:$0xff]
      %v3116 = vld [vmem:[%s2738 + $0xbc8] sm:$0xff]
      %v3117 = vld [vmem:[%s2738 + $0xbd0] sm:$0xff]
      %v3118 = vld [vmem:[%s2738 + $0xbd8] sm:$0xff]
      %v3119 = vld [vmem:[%s2738 + $0xbe0] sm:$0xff]
      %v3120 = vld [vmem:[%s2738 + $0xbe8] sm:$0xff]
      %v3121 = vld [vmem:[%s2738 + $0xbf0] sm:$0xff]
      %v3122 = vld [vmem:[%s2738 + $0xbf8] sm:$0xff]
      %v3123 = vld [vmem:[%s2738 + $0xc00] sm:$0xff]
      %v3124 = vld [vmem:[%s2738 + $0xc08] sm:$0xff]
      %v3125 = vld [vmem:[%s2738 + $0xc10] sm:$0xff]
      %v3126 = vld [vmem:[%s2738 + $0xc18] sm:$0xff]
      %v3127 = vld [vmem:[%s2738 + $0xc20] sm:$0xff]
      %v3128 = vld [vmem:[%s2738 + $0xc28] sm:$0xff]
      %v3129 = vld [vmem:[%s2738 + $0xc30] sm:$0xff]
      %v3130 = vld [vmem:[%s2738 + $0xc38] sm:$0xff]
      %v3131 = vld [vmem:[%s2738 + $0xc40] sm:$0xff]
      %v3132 = vld [vmem:[%s2738 + $0xc48] sm:$0xff]
      %v3133 = vld [vmem:[%s2738 + $0xc50] sm:$0xff]
      %v3134 = vld [vmem:[%s2738 + $0xc58] sm:$0xff]
      %v3135 = vld [vmem:[%s2738 + $0xc60] sm:$0xff]
      %v3136 = vld [vmem:[%s2738 + $0xc68] sm:$0xff]
      %v3137 = vld [vmem:[%s2738 + $0xc70] sm:$0xff]
      %v3138 = vld [vmem:[%s2738 + $0xc78] sm:$0xff]
      %v3139 = vld [vmem:[%s2738 + $0xc80] sm:$0xff]
      %v3140 = vld [vmem:[%s2738 + $0xc88] sm:$0xff]
      %v3141 = vld [vmem:[%s2738 + $0xc90] sm:$0xff]
      %v3142 = vld [vmem:[%s2738 + $0xc98] sm:$0xff]
      %v3143 = vld [vmem:[%s2738 + $0xca0] sm:$0xff]
      %v3144 = vld [vmem:[%s2738 + $0xca8] sm:$0xff]
      %v3145 = vld [vmem:[%s2738 + $0xcb0] sm:$0xff]
      %v3146 = vld [vmem:[%s2738 + $0xcb8] sm:$0xff]
      %v3147 = vld [vmem:[%s2738 + $0xcc0] sm:$0xff]
      %v3148 = vld [vmem:[%s2738 + $0xcc8] sm:$0xff]
      %v3149 = vld [vmem:[%s2738 + $0xcd0] sm:$0xff]
      %v3150 = vld [vmem:[%s2738 + $0xcd8] sm:$0xff]
      %v3151 = vld [vmem:[%s2738 + $0xce0] sm:$0xff]
      %v3152 = vld [vmem:[%s2738 + $0xce8] sm:$0xff]
      %v3153 = vld [vmem:[%s2738 + $0xcf0] sm:$0xff]
      %v3154 = vld [vmem:[%s2738 + $0xcf8] sm:$0xff]
      %v3155 = vld [vmem:[%s2738 + $0xd00] sm:$0xff]
      %v3156 = vld [vmem:[%s2738 + $0xd08] sm:$0xff]
      %v3157 = vld [vmem:[%s2738 + $0xd10] sm:$0xff]
      %v3158 = vld [vmem:[%s2738 + $0xd18] sm:$0xff]
      %v3159 = vld [vmem:[%s2738 + $0xd20] sm:$0xff]
      %v3160 = vld [vmem:[%s2738 + $0xd28] sm:$0xff]
      %v3161 = vld [vmem:[%s2738 + $0xd30] sm:$0xff]
      %v3162 = vld [vmem:[%s2738 + $0xd38] sm:$0xff]
      %v3163 = vld [vmem:[%s2738 + $0xd40] sm:$0xff]
      %v3164 = vld [vmem:[%s2738 + $0xd48] sm:$0xff]
      %v3165 = vld [vmem:[%s2738 + $0xd50] sm:$0xff]
      %v3166 = vld [vmem:[%s2738 + $0xd58] sm:$0xff]
      %v3167 = vld [vmem:[%s2738 + $0xd60] sm:$0xff]
      %v3168 = vld [vmem:[%s2738 + $0xd68] sm:$0xff]
      %v3169 = vld [vmem:[%s2738 + $0xd70] sm:$0xff]
      %v3170 = vld [vmem:[%s2738 + $0xd78] sm:$0xff]
      %v3171 = vld [vmem:[%s2738 + $0xd80] sm:$0xff]
      %v3172 = vld [vmem:[%s2738 + $0xd88] sm:$0xff]
      %v3173 = vld [vmem:[%s2738 + $0xd90] sm:$0xff]
      %v3174 = vld [vmem:[%s2738 + $0xd98] sm:$0xff]
      %v3175 = vld [vmem:[%s2738 + $0xda0] sm:$0xff]
      %v3176 = vld [vmem:[%s2738 + $0xda8] sm:$0xff]
      %v3177 = vld [vmem:[%s2738 + $0xdb0] sm:$0xff]
      %v3178 = vld [vmem:[%s2738 + $0xdb8] sm:$0xff]
      %v3179 = vld [vmem:[%s2738 + $0xdc0] sm:$0xff]
      %v3180 = vld [vmem:[%s2738 + $0xdc8] sm:$0xff]
      %v3181 = vld [vmem:[%s2738 + $0xdd0] sm:$0xff]
      %v3182 = vld [vmem:[%s2738 + $0xdd8] sm:$0xff]
      %v3183 = vld [vmem:[%s2738 + $0xde0] sm:$0xff]
      %v3184 = vld [vmem:[%s2738 + $0xde8] sm:$0xff]
      %v3185 = vld [vmem:[%s2738 + $0xdf0] sm:$0xff]
      %v3186 = vld [vmem:[%s2738 + $0xdf8] sm:$0xff]
      %v3187 = vld [vmem:[%s2738 + $0xe00] sm:$0xff]
      %v3188 = vld [vmem:[%s2738 + $0xe08] sm:$0xff]
      %v3189 = vld [vmem:[%s2738 + $0xe10] sm:$0xff]
      %v3190 = vld [vmem:[%s2738 + $0xe18] sm:$0xff]
      %v3191 = vld [vmem:[%s2738 + $0xe20] sm:$0xff]
      %v3192 = vld [vmem:[%s2738 + $0xe28] sm:$0xff]
      %v3193 = vld [vmem:[%s2738 + $0xe30] sm:$0xff]
      %v3194 = vld [vmem:[%s2738 + $0xe38] sm:$0xff]
      %v3195 = vld [vmem:[%s2738 + $0xe40] sm:$0xff]
      %v3196 = vld [vmem:[%s2738 + $0xe48] sm:$0xff]
      %v3197 = vld [vmem:[%s2738 + $0xe50] sm:$0xff]
      %v3198 = vld [vmem:[%s2738 + $0xe58] sm:$0xff]
      %v3199 = vld [vmem:[%s2738 + $0xe60] sm:$0xff]
      %v3200 = vld [vmem:[%s2738 + $0xe68] sm:$0xff]
      %v3201 = vld [vmem:[%s2738 + $0xe70] sm:$0xff]
      %v3202 = vld [vmem:[%s2738 + $0xe78] sm:$0xff]
      %v3203 = vld [vmem:[%s2738 + $0xe80] sm:$0xff]
      %v3204 = vld [vmem:[%s2738 + $0xe88] sm:$0xff]
      %v3205 = vld [vmem:[%s2738 + $0xe90] sm:$0xff]
      %v3206 = vld [vmem:[%s2738 + $0xe98] sm:$0xff]
      %v3207 = vld [vmem:[%s2738 + $0xea0] sm:$0xff]
      %v3208 = vld [vmem:[%s2738 + $0xea8] sm:$0xff]
      %v3209 = vld [vmem:[%s2738 + $0xeb0] sm:$0xff]
      %v3210 = vld [vmem:[%s2738 + $0xeb8] sm:$0xff]
      %v3211 = vld [vmem:[%s2738 + $0xec0] sm:$0xff]
      %v3212 = vld [vmem:[%s2738 + $0xec8] sm:$0xff]
      %v3213 = vld [vmem:[%s2738 + $0xed0] sm:$0xff]
      %v3214 = vld [vmem:[%s2738 + $0xed8] sm:$0xff]
      %v3215 = vld [vmem:[%s2738 + $0xee0] sm:$0xff]
      %v3216 = vld [vmem:[%s2738 + $0xee8] sm:$0xff]
      %v3217 = vld [vmem:[%s2738 + $0xef0] sm:$0xff]
      %v3218 = vld [vmem:[%s2738 + $0xef8] sm:$0xff]
      %v3219 = vld [vmem:[%s2738 + $0xf00] sm:$0xff]
      %v3220 = vld [vmem:[%s2738 + $0xf08] sm:$0xff]
      %v3221 = vld [vmem:[%s2738 + $0xf10] sm:$0xff]
      %v3222 = vld [vmem:[%s2738 + $0xf18] sm:$0xff]
      %v3223 = vld [vmem:[%s2738 + $0xf20] sm:$0xff]
      %v3224 = vld [vmem:[%s2738 + $0xf28] sm:$0xff]
      %v3225 = vld [vmem:[%s2738 + $0xf30] sm:$0xff]
      %v3226 = vld [vmem:[%s2738 + $0xf38] sm:$0xff]
      %v3227 = vld [vmem:[%s2738 + $0xf40] sm:$0xff]
      %v3228 = vld [vmem:[%s2738 + $0xf48] sm:$0xff]
      %v3229 = vld [vmem:[%s2738 + $0xf50] sm:$0xff]
      %v3230 = vld [vmem:[%s2738 + $0xf58] sm:$0xff]
      %v3231 = vld [vmem:[%s2738 + $0xf60] sm:$0xff]
      %v3232 = vld [vmem:[%s2738 + $0xf68] sm:$0xff]
      %v3233 = vld [vmem:[%s2738 + $0xf70] sm:$0xff]
      %v3234 = vld [vmem:[%s2738 + $0xf78] sm:$0xff]
      %v3235 = vld [vmem:[%s2738 + $0xf80] sm:$0xff]
      %v3236 = vld [vmem:[%s2738 + $0xf88] sm:$0xff]
      %v3237 = vld [vmem:[%s2738 + $0xf90] sm:$0xff]
      %v3238 = vld [vmem:[%s2738 + $0xf98] sm:$0xff]
      %v3239 = vld [vmem:[%s2738 + $0xfa0] sm:$0xff]
      %v3240 = vld [vmem:[%s2738 + $0xfa8] sm:$0xff]
      %v3241 = vld [vmem:[%s2738 + $0xfb0] sm:$0xff]
      %v3242 = vld [vmem:[%s2738 + $0xfb8] sm:$0xff]
      %v3243 = vld [vmem:[%s2738 + $0xfc0] sm:$0xff]
      %v3244 = vld [vmem:[%s2738 + $0xfc8] sm:$0xff]
      %v3245 = vld [vmem:[%s2738 + $0xfd0] sm:$0xff]
      %v3246 = vld [vmem:[%s2738 + $0xfd8] sm:$0xff]
      %v3247 = vld [vmem:[%s2738 + $0xfe0] sm:$0xff]
      %v3248 = vld [vmem:[%s2738 + $0xfe8] sm:$0xff]
      %v3249 = vld [vmem:[%s2738 + $0xff0] sm:$0xff]
      %v3250 = vld [vmem:[%s2738 + $0xff8] sm:$0xff]
      %3251 = vmatprep.subr.mxu0 %v2740
      %3252 = vmatpush1.msra.mxu0 %v2739
      %3253 = vmatprep.subr.mxu0 %v2742
      %3254 = vmatpush1.msra.mxu0 %v2741
      %3255 = vmatprep.subr.mxu0 %v2744
      %3256 = vmatpush1.msra.mxu0 %v2743
      %3257 = vmatprep.subr.mxu0 %v2746
      %3258 = vmatpush1.msra.mxu0 %v2745
      %3259 = vmatprep.subr.mxu0 %v2748
      %3260 = vmatpush1.msra.mxu0 %v2747
      %3261 = vmatprep.subr.mxu0 %v2750
      %3262 = vmatpush1.msra.mxu0 %v2749
      %3263 = vmatprep.subr.mxu0 %v2752
      %3264 = vmatpush1.msra.mxu0 %v2751
      %3265 = vmatprep.subr.mxu0 %v2754
      %3266 = vmatpush1.msra.mxu0 %v2753
      %3267 = vmatprep.subr.mxu0 %v2756
      %3268 = vmatpush1.msra.mxu0 %v2755
      %3269 = vmatprep.subr.mxu0 %v2758
      %3270 = vmatpush1.msra.mxu0 %v2757
      %3271 = vmatprep.subr.mxu0 %v2760
      %3272 = vmatpush1.msra.mxu0 %v2759
      %3273 = vmatprep.subr.mxu0 %v2762
      %3274 = vmatpush1.msra.mxu0 %v2761
      %3275 = vmatprep.subr.mxu0 %v2764
      %3276 = vmatpush1.msra.mxu0 %v2763
      %3277 = vmatprep.subr.mxu0 %v2766
      %3278 = vmatpush1.msra.mxu0 %v2765
      %3279 = vmatprep.subr.mxu0 %v2768
      %3280 = vmatpush1.msra.mxu0 %v2767
      %3281 = vmatprep.subr.mxu0 %v2770
      %3282 = vmatpush1.msra.mxu0 %v2769
      %3283 = vmatprep.subr.mxu0 %v2772
      %3284 = vmatpush1.msra.mxu0 %v2771
      %3285 = vmatprep.subr.mxu0 %v2774
      %3286 = vmatpush1.msra.mxu0 %v2773
      %3287 = vmatprep.subr.mxu0 %v2776
      %3288 = vmatpush1.msra.mxu0 %v2775
      %3289 = vmatprep.subr.mxu0 %v2778
      %3290 = vmatpush1.msra.mxu0 %v2777
      %3291 = vmatprep.subr.mxu0 %v2780
      %3292 = vmatpush1.msra.mxu0 %v2779
      %3293 = vmatprep.subr.mxu0 %v2782
      %3294 = vmatpush1.msra.mxu0 %v2781
      %3295 = vmatprep.subr.mxu0 %v2784
      %3296 = vmatpush1.msra.mxu0 %v2783
      %3297 = vmatprep.subr.mxu0 %v2786
      %3298 = vmatpush1.msra.mxu0 %v2785
      %3299 = vmatprep.subr.mxu0 %v2788
      %3300 = vmatpush1.msra.mxu0 %v2787
      %3301 = vmatprep.subr.mxu0 %v2790
      %3302 = vmatpush1.msra.mxu0 %v2789
      %3303 = vmatprep.subr.mxu0 %v2792
      %3304 = vmatpush1.msra.mxu0 %v2791
      %3305 = vmatprep.subr.mxu0 %v2794
      %3306 = vmatpush1.msra.mxu0 %v2793
      %3307 = vmatprep.subr.mxu0 %v2796
      %3308 = vmatpush1.msra.mxu0 %v2795
      %3309 = vmatprep.subr.mxu0 %v2798
      %3310 = vmatpush1.msra.mxu0 %v2797
      %3311 = vmatprep.subr.mxu0 %v2800
      %3312 = vmatpush1.msra.mxu0 %v2799
      %3313 = vmatprep.subr.mxu0 %v2802
      %3314 = vmatpush1.msra.mxu0 %v2801
      %3315 = vmatprep.mubr.f32.mxu0 %v288
      %3316 = vmatmul.mubr.f32.gmra.mrb[0].mxu0 %v287
      %v3317 = vpop.f32.mrb[0].mxu0
      %v3318 = vadd.f32 0.0, %v3317
      %v3319 = vpop.f32.mrb[0].mxu0
      %v3320 = vadd.f32 0.0, %v3319
      %3321 = vmatprep.mubr.f32.mxu0 %v304
      %3322 = vmatmul.mubr.f32.gmra.mrb[0].mxu0 %v303
      %v3323 = vpop.f32.mrb[0].mxu0
      %v3324 = vadd.f32 0.0, %v3323
      %v3325 = vpop.f32.mrb[0].mxu0
      %v3326 = vadd.f32 0.0, %v3325
      %3327 = vdwg.mxu0
      %3328 = vmatprep.subr.mxu0 %v2804
      %3329 = vmatpush1.msra.mxu0 %v2803
      %3330 = vmatprep.subr.mxu0 %v2806
      %3331 = vmatpush1.msra.mxu0 %v2805
      %3332 = vmatprep.subr.mxu0 %v2808
      %3333 = vmatpush1.msra.mxu0 %v2807
      %3334 = vmatprep.subr.mxu0 %v2810
      %3335 = vmatpush1.msra.mxu0 %v2809
      %3336 = vmatprep.subr.mxu0 %v2812
      %3337 = vmatpush1.msra.mxu0 %v2811
      %3338 = vmatprep.subr.mxu0 %v2814
      %3339 = vmatpush1.msra.mxu0 %v2813
      %3340 = vmatprep.subr.mxu0 %v2816
      %3341 = vmatpush1.msra.mxu0 %v2815
      %3342 = vmatprep.subr.mxu0 %v2818
      %3343 = vmatpush1.msra.mxu0 %v2817
      %3344 = vmatprep.subr.mxu0 %v2820
      %3345 = vmatpush1.msra.mxu0 %v2819
      %3346 = vmatprep.subr.mxu0 %v2822
      %3347 = vmatpush1.msra.mxu0 %v2821
      %3348 = vmatprep.subr.mxu0 %v2824
      %3349 = vmatpush1.msra.mxu0 %v2823
      %3350 = vmatprep.subr.mxu0 %v2826
      %3351 = vmatpush1.msra.mxu0 %v2825
      %3352 = vmatprep.subr.mxu0 %v2828
      %3353 = vmatpush1.msra.mxu0 %v2827
      %3354 = vmatprep.subr.mxu0 %v2830
      %3355 = vmatpush1.msra.mxu0 %v2829
      %3356 = vmatprep.subr.mxu0 %v2832
      %3357 = vmatpush1.msra.mxu0 %v2831
      %3358 = vmatprep.subr.mxu0 %v2834
      %3359 = vmatpush1.msra.mxu0 %v2833
      %3360 = vmatprep.subr.mxu0 %v2836
      %3361 = vmatpush1.msra.mxu0 %v2835
      %3362 = vmatprep.subr.mxu0 %v2838
      %3363 = vmatpush1.msra.mxu0 %v2837
      %3364 = vmatprep.subr.mxu0 %v2840
      %3365 = vmatpush1.msra.mxu0 %v2839
      %3366 = vmatprep.subr.mxu0 %v2842
      %3367 = vmatpush1.msra.mxu0 %v2841
      %3368 = vmatprep.subr.mxu0 %v2844
      %3369 = vmatpush1.msra.mxu0 %v2843
      %3370 = vmatprep.subr.mxu0 %v2846
      %3371 = vmatpush1.msra.mxu0 %v2845
      %3372 = vmatprep.subr.mxu0 %v2848
      %3373 = vmatpush1.msra.mxu0 %v2847
      %3374 = vmatprep.subr.mxu0 %v2850
      %3375 = vmatpush1.msra.mxu0 %v2849
      %3376 = vmatprep.subr.mxu0 %v2852
      %3377 = vmatpush1.msra.mxu0 %v2851
      %3378 = vmatprep.subr.mxu0 %v2854
      %3379 = vmatpush1.msra.mxu0 %v2853
      %3380 = vmatprep.subr.mxu0 %v2856
      %3381 = vmatpush1.msra.mxu0 %v2855
      %3382 = vmatprep.subr.mxu0 %v2858
      %3383 = vmatpush1.msra.mxu0 %v2857
      %3384 = vmatprep.subr.mxu0 %v2860
      %3385 = vmatpush1.msra.mxu0 %v2859
      %3386 = vmatprep.subr.mxu0 %v2862
      %3387 = vmatpush1.msra.mxu0 %v2861
      %3388 = vmatprep.subr.mxu0 %v2864
      %3389 = vmatpush1.msra.mxu0 %v2863
      %3390 = vmatprep.subr.mxu0 %v2866
      %3391 = vmatpush1.msra.mxu0 %v2865
      %3392 = vmatprep.mubr.f32.mxu0 %v290
      %3393 = vmatmul.mubr.f32.gmra.mrb[0].mxu0 %v289
      %v3394 = vpop.f32.mrb[0].mxu0
      %v3395 = vadd.f32 %v3318, %v3394
      %v3396 = vpop.f32.mrb[0].mxu0
      %v3397 = vadd.f32 %v3320, %v3396
      %3398 = vmatprep.mubr.f32.mxu0 %v306
      %3399 = vmatmul.mubr.f32.gmra.mrb[0].mxu0 %v305
      %v3400 = vpop.f32.mrb[0].mxu0
      %v3401 = vadd.f32 %v3324, %v3400
      %v3402 = vpop.f32.mrb[0].mxu0
      %v3403 = vadd.f32 %v3326, %v3402
      %3404 = vdwg.mxu0
      %3405 = vmatprep.subr.mxu0 %v2868
      %3406 = vmatpush1.msra.mxu0 %v2867
      %3407 = vmatprep.subr.mxu0 %v2870
      %3408 = vmatpush1.msra.mxu0 %v2869
      %3409 = vmatprep.subr.mxu0 %v2872
      %3410 = vmatpush1.msra.mxu0 %v2871
      %3411 = vmatprep.subr.mxu0 %v2874
      %3412 = vmatpush1.msra.mxu0 %v2873
      %3413 = vmatprep.subr.mxu0 %v2876
      %3414 = vmatpush1.msra.mxu0 %v2875
      %3415 = vmatprep.subr.mxu0 %v2878
      %3416 = vmatpush1.msra.mxu0 %v2877
      %3417 = vmatprep.subr.mxu0 %v2880
      %3418 = vmatpush1.msra.mxu0 %v2879
      %3419 = vmatprep.subr.mxu0 %v2882
      %3420 = vmatpush1.msra.mxu0 %v2881
      %3421 = vmatprep.subr.mxu0 %v2884
      %3422 = vmatpush1.msra.mxu0 %v2883
      %3423 = vmatprep.subr.mxu0 %v2886
      %3424 = vmatpush1.msra.mxu0 %v2885
      %3425 = vmatprep.subr.mxu0 %v2888
      %3426 = vmatpush1.msra.mxu0 %v2887
      %3427 = vmatprep.subr.mxu0 %v2890
      %3428 = vmatpush1.msra.mxu0 %v2889
      %3429 = vmatprep.subr.mxu0 %v2892
      %3430 = vmatpush1.msra.mxu0 %v2891
      %3431 = vmatprep.subr.mxu0 %v2894
      %3432 = vmatpush1.msra.mxu0 %v2893
      %3433 = vmatprep.subr.mxu0 %v2896
      %3434 = vmatpush1.msra.mxu0 %v2895
      %3435 = vmatprep.subr.mxu0 %v2898
      %3436 = vmatpush1.msra.mxu0 %v2897
      %3437 = vmatprep.subr.mxu0 %v2900
      %3438 = vmatpush1.msra.mxu0 %v2899
      %3439 = vmatprep.subr.mxu0 %v2902
      %3440 = vmatpush1.msra.mxu0 %v2901
      %3441 = vmatprep.subr.mxu0 %v2904
      %3442 = vmatpush1.msra.mxu0 %v2903
      %3443 = vmatprep.subr.mxu0 %v2906
      %3444 = vmatpush1.msra.mxu0 %v2905
      %3445 = vmatprep.subr.mxu0 %v2908
      %3446 = vmatpush1.msra.mxu0 %v2907
      %3447 = vmatprep.subr.mxu0 %v2910
      %3448 = vmatpush1.msra.mxu0 %v2909
      %3449 = vmatprep.subr.mxu0 %v2912
      %3450 = vmatpush1.msra.mxu0 %v2911
      %3451 = vmatprep.subr.mxu0 %v2914
      %3452 = vmatpush1.msra.mxu0 %v2913
      %3453 = vmatprep.subr.mxu0 %v2916
      %3454 = vmatpush1.msra.mxu0 %v2915
      %3455 = vmatprep.subr.mxu0 %v2918
      %3456 = vmatpush1.msra.mxu0 %v2917
      %3457 = vmatprep.subr.mxu0 %v2920
      %3458 = vmatpush1.msra.mxu0 %v2919
      %3459 = vmatprep.subr.mxu0 %v2922
      %3460 = vmatpush1.msra.mxu0 %v2921
      %3461 = vmatprep.subr.mxu0 %v2924
      %3462 = vmatpush1.msra.mxu0 %v2923
      %3463 = vmatprep.subr.mxu0 %v2926
      %3464 = vmatpush1.msra.mxu0 %v2925
      %3465 = vmatprep.subr.mxu0 %v2928
      %3466 = vmatpush1.msra.mxu0 %v2927
      %3467 = vmatprep.subr.mxu0 %v2930
      %3468 = vmatpush1.msra.mxu0 %v2929
      %3469 = vmatprep.mubr.f32.mxu0 %v292
      %3470 = vmatmul.mubr.f32.gmra.mrb[0].mxu0 %v291
      %v3471 = vpop.f32.mrb[0].mxu0
      %v3472 = vadd.f32 %v3395, %v3471
      %v3473 = vpop.f32.mrb[0].mxu0
      %v3474 = vadd.f32 %v3397, %v3473
      %3475 = vmatprep.mubr.f32.mxu0 %v308
      %3476 = vmatmul.mubr.f32.gmra.mrb[0].mxu0 %v307
      %v3477 = vpop.f32.mrb[0].mxu0
      %v3478 = vadd.f32 %v3401, %v3477
      %v3479 = vpop.f32.mrb[0].mxu0
      %v3480 = vadd.f32 %v3403, %v3479
      %3481 = vdwg.mxu0
      %3482 = vmatprep.subr.mxu0 %v2932
      %3483 = vmatpush1.msra.mxu0 %v2931
      %3484 = vmatprep.subr.mxu0 %v2934
      %3485 = vmatpush1.msra.mxu0 %v2933
      %3486 = vmatprep.subr.mxu0 %v2936
      %3487 = vmatpush1.msra.mxu0 %v2935
      %3488 = vmatprep.subr.mxu0 %v2938
      %3489 = vmatpush1.msra.mxu0 %v2937
      %3490 = vmatprep.subr.mxu0 %v2940
      %3491 = vmatpush1.msra.mxu0 %v2939
      %3492 = vmatprep.subr.mxu0 %v2942
      %3493 = vmatpush1.msra.mxu0 %v2941
      %3494 = vmatprep.subr.mxu0 %v2944
      %3495 = vmatpush1.msra.mxu0 %v2943
      %3496 = vmatprep.subr.mxu0 %v2946
      %3497 = vmatpush1.msra.mxu0 %v2945
      %3498 = vmatprep.subr.mxu0 %v2948
      %3499 = vmatpush1.msra.mxu0 %v2947
      %3500 = vmatprep.subr.mxu0 %v2950
      %3501 = vmatpush1.msra.mxu0 %v2949
      %3502 = vmatprep.subr.mxu0 %v2952
      %3503 = vmatpush1.msra.mxu0 %v2951
      %3504 = vmatprep.subr.mxu0 %v2954
      %3505 = vmatpush1.msra.mxu0 %v2953
      %3506 = vmatprep.subr.mxu0 %v2956
      %3507 = vmatpush1.msra.mxu0 %v2955
      %3508 = vmatprep.subr.mxu0 %v2958
      %3509 = vmatpush1.msra.mxu0 %v2957
      %3510 = vmatprep.subr.mxu0 %v2960
      %3511 = vmatpush1.msra.mxu0 %v2959
      %3512 = vmatprep.subr.mxu0 %v2962
      %3513 = vmatpush1.msra.mxu0 %v2961
      %3514 = vmatprep.subr.mxu0 %v2964
      %3515 = vmatpush1.msra.mxu0 %v2963
      %3516 = vmatprep.subr.mxu0 %v2966
      %3517 = vmatpush1.msra.mxu0 %v2965
      %3518 = vmatprep.subr.mxu0 %v2968
      %3519 = vmatpush1.msra.mxu0 %v2967
      %3520 = vmatprep.subr.mxu0 %v2970
      %3521 = vmatpush1.msra.mxu0 %v2969
      %3522 = vmatprep.subr.mxu0 %v2972
      %3523 = vmatpush1.msra.mxu0 %v2971
      %3524 = vmatprep.subr.mxu0 %v2974
      %3525 = vmatpush1.msra.mxu0 %v2973
      %3526 = vmatprep.subr.mxu0 %v2976
      %3527 = vmatpush1.msra.mxu0 %v2975
      %3528 = vmatprep.subr.mxu0 %v2978
      %3529 = vmatpush1.msra.mxu0 %v2977
      %3530 = vmatprep.subr.mxu0 %v2980
      %3531 = vmatpush1.msra.mxu0 %v2979
      %3532 = vmatprep.subr.mxu0 %v2982
      %3533 = vmatpush1.msra.mxu0 %v2981
      %3534 = vmatprep.subr.mxu0 %v2984
      %3535 = vmatpush1.msra.mxu0 %v2983
      %3536 = vmatprep.subr.mxu0 %v2986
      %3537 = vmatpush1.msra.mxu0 %v2985
      %3538 = vmatprep.subr.mxu0 %v2988
      %3539 = vmatpush1.msra.mxu0 %v2987
      %3540 = vmatprep.subr.mxu0 %v2990
      %3541 = vmatpush1.msra.mxu0 %v2989
      %3542 = vmatprep.subr.mxu0 %v2992
      %3543 = vmatpush1.msra.mxu0 %v2991
      %3544 = vmatprep.subr.mxu0 %v2994
      %3545 = vmatpush1.msra.mxu0 %v2993
      %3546 = vmatprep.mubr.f32.mxu0 %v294
      %3547 = vmatmul.mubr.f32.gmra.mrb[0].mxu0 %v293
      %v3548 = vpop.f32.mrb[0].mxu0
      %v3549 = vadd.f32 %v3472, %v3548
      %v3550 = vpop.f32.mrb[0].mxu0
      %v3551 = vadd.f32 %v3474, %v3550
      %3552 = vmatprep.mubr.f32.mxu0 %v310
      %3553 = vmatmul.mubr.f32.gmra.mrb[0].mxu0 %v309
      %v3554 = vpop.f32.mrb[0].mxu0
      %v3555 = vadd.f32 %v3478, %v3554
      %v3556 = vpop.f32.mrb[0].mxu0
      %v3557 = vadd.f32 %v3480, %v3556
      %3558 = vdwg.mxu0
      %3559 = vmatprep.subr.mxu0 %v2996
      %3560 = vmatpush1.msra.mxu0 %v2995
      %3561 = vmatprep.subr.mxu0 %v2998
      %3562 = vmatpush1.msra.mxu0 %v2997
      %3563 = vmatprep.subr.mxu0 %v3000
      %3564 = vmatpush1.msra.mxu0 %v2999
      %3565 = vmatprep.subr.mxu0 %v3002
      %3566 = vmatpush1.msra.mxu0 %v3001
      %3567 = vmatprep.subr.mxu0 %v3004
      %3568 = vmatpush1.msra.mxu0 %v3003
      %3569 = vmatprep.subr.mxu0 %v3006
      %3570 = vmatpush1.msra.mxu0 %v3005
      %3571 = vmatprep.subr.mxu0 %v3008
      %3572 = vmatpush1.msra.mxu0 %v3007
      %3573 = vmatprep.subr.mxu0 %v3010
      %3574 = vmatpush1.msra.mxu0 %v3009
      %3575 = vmatprep.subr.mxu0 %v3012
      %3576 = vmatpush1.msra.mxu0 %v3011
      %3577 = vmatprep.subr.mxu0 %v3014
      %3578 = vmatpush1.msra.mxu0 %v3013
      %3579 = vmatprep.subr.mxu0 %v3016
      %3580 = vmatpush1.msra.mxu0 %v3015
      %3581 = vmatprep.subr.mxu0 %v3018
      %3582 = vmatpush1.msra.mxu0 %v3017
      %3583 = vmatprep.subr.mxu0 %v3020
      %3584 = vmatpush1.msra.mxu0 %v3019
      %3585 = vmatprep.subr.mxu0 %v3022
      %3586 = vmatpush1.msra.mxu0 %v3021
      %3587 = vmatprep.subr.mxu0 %v3024
      %3588 = vmatpush1.msra.mxu0 %v3023
      %3589 = vmatprep.subr.mxu0 %v3026
      %3590 = vmatpush1.msra.mxu0 %v3025
      %3591 = vmatprep.subr.mxu0 %v3028
      %3592 = vmatpush1.msra.mxu0 %v3027
      %3593 = vmatprep.subr.mxu0 %v3030
      %3594 = vmatpush1.msra.mxu0 %v3029
      %3595 = vmatprep.subr.mxu0 %v3032
      %3596 = vmatpush1.msra.mxu0 %v3031
      %3597 = vmatprep.subr.mxu0 %v3034
      %3598 = vmatpush1.msra.mxu0 %v3033
      %3599 = vmatprep.subr.mxu0 %v3036
      %3600 = vmatpush1.msra.mxu0 %v3035
      %3601 = vmatprep.subr.mxu0 %v3038
      %3602 = vmatpush1.msra.mxu0 %v3037
      %3603 = vmatprep.subr.mxu0 %v3040
      %3604 = vmatpush1.msra.mxu0 %v3039
      %3605 = vmatprep.subr.mxu0 %v3042
      %3606 = vmatpush1.msra.mxu0 %v3041
      %3607 = vmatprep.subr.mxu0 %v3044
      %3608 = vmatpush1.msra.mxu0 %v3043
      %3609 = vmatprep.subr.mxu0 %v3046
      %3610 = vmatpush1.msra.mxu0 %v3045
      %3611 = vmatprep.subr.mxu0 %v3048
      %3612 = vmatpush1.msra.mxu0 %v3047
      %3613 = vmatprep.subr.mxu0 %v3050
      %3614 = vmatpush1.msra.mxu0 %v3049
      %3615 = vmatprep.subr.mxu0 %v3052
      %3616 = vmatpush1.msra.mxu0 %v3051
      %3617 = vmatprep.subr.mxu0 %v3054
      %3618 = vmatpush1.msra.mxu0 %v3053
      %3619 = vmatprep.subr.mxu0 %v3056
      %3620 = vmatpush1.msra.mxu0 %v3055
      %3621 = vmatprep.subr.mxu0 %v3058
      %3622 = vmatpush1.msra.mxu0 %v3057
      %3623 = vmatprep.mubr.f32.mxu0 %v296
      %3624 = vmatmul.mubr.f32.gmra.mrb[0].mxu0 %v295
      %v3625 = vpop.f32.mrb[0].mxu0
      %v3626 = vadd.f32 %v3549, %v3625
      %v3627 = vpop.f32.mrb[0].mxu0
      %v3628 = vadd.f32 %v3551, %v3627
      %3629 = vmatprep.mubr.f32.mxu0 %v312
      %3630 = vmatmul.mubr.f32.gmra.mrb[0].mxu0 %v311
      %v3631 = vpop.f32.mrb[0].mxu0
      %v3632 = vadd.f32 %v3555, %v3631
      %v3633 = vpop.f32.mrb[0].mxu0
      %v3634 = vadd.f32 %v3557, %v3633
      %3635 = vdwg.mxu0
      %3636 = vmatprep.subr.mxu0 %v3060
      %3637 = vmatpush1.msra.mxu0 %v3059
      %3638 = vmatprep.subr.mxu0 %v3062
      %3639 = vmatpush1.msra.mxu0 %v3061
      %3640 = vmatprep.subr.mxu0 %v3064
      %3641 = vmatpush1.msra.mxu0 %v3063
      %3642 = vmatprep.subr.mxu0 %v3066
      %3643 = vmatpush1.msra.mxu0 %v3065
      %3644 = vmatprep.subr.mxu0 %v3068
      %3645 = vmatpush1.msra.mxu0 %v3067
      %3646 = vmatprep.subr.mxu0 %v3070
      %3647 = vmatpush1.msra.mxu0 %v3069
      %3648 = vmatprep.subr.mxu0 %v3072
      %3649 = vmatpush1.msra.mxu0 %v3071
      %3650 = vmatprep.subr.mxu0 %v3074
      %3651 = vmatpush1.msra.mxu0 %v3073
      %3652 = vmatprep.subr.mxu0 %v3076
      %3653 = vmatpush1.msra.mxu0 %v3075
      %3654 = vmatprep.subr.mxu0 %v3078
      %3655 = vmatpush1.msra.mxu0 %v3077
      %3656 = vmatprep.subr.mxu0 %v3080
      %3657 = vmatpush1.msra.mxu0 %v3079
      %3658 = vmatprep.subr.mxu0 %v3082
      %3659 = vmatpush1.msra.mxu0 %v3081
      %3660 = vmatprep.subr.mxu0 %v3084
      %3661 = vmatpush1.msra.mxu0 %v3083
      %3662 = vmatprep.subr.mxu0 %v3086
      %3663 = vmatpush1.msra.mxu0 %v3085
      %3664 = vmatprep.subr.mxu0 %v3088
      %3665 = vmatpush1.msra.mxu0 %v3087
      %3666 = vmatprep.subr.mxu0 %v3090
      %3667 = vmatpush1.msra.mxu0 %v3089
      %3668 = vmatprep.subr.mxu0 %v3092
      %3669 = vmatpush1.msra.mxu0 %v3091
      %3670 = vmatprep.subr.mxu0 %v3094
      %3671 = vmatpush1.msra.mxu0 %v3093
      %3672 = vmatprep.subr.mxu0 %v3096
      %3673 = vmatpush1.msra.mxu0 %v3095
      %3674 = vmatprep.subr.mxu0 %v3098
      %3675 = vmatpush1.msra.mxu0 %v3097
      %3676 = vmatprep.subr.mxu0 %v3100
      %3677 = vmatpush1.msra.mxu0 %v3099
      %3678 = vmatprep.subr.mxu0 %v3102
      %3679 = vmatpush1.msra.mxu0 %v3101
      %3680 = vmatprep.subr.mxu0 %v3104
      %3681 = vmatpush1.msra.mxu0 %v3103
      %3682 = vmatprep.subr.mxu0 %v3106
      %3683 = vmatpush1.msra.mxu0 %v3105
      %3684 = vmatprep.subr.mxu0 %v3108
      %3685 = vmatpush1.msra.mxu0 %v3107
      %3686 = vmatprep.subr.mxu0 %v3110
      %3687 = vmatpush1.msra.mxu0 %v3109
      %3688 = vmatprep.subr.mxu0 %v3112
      %3689 = vmatpush1.msra.mxu0 %v3111
      %3690 = vmatprep.subr.mxu0 %v3114
      %3691 = vmatpush1.msra.mxu0 %v3113
      %3692 = vmatprep.subr.mxu0 %v3116
      %3693 = vmatpush1.msra.mxu0 %v3115
      %3694 = vmatprep.subr.mxu0 %v3118
      %3695 = vmatpush1.msra.mxu0 %v3117
      %3696 = vmatprep.subr.mxu0 %v3120
      %3697 = vmatpush1.msra.mxu0 %v3119
      %3698 = vmatprep.subr.mxu0 %v3122
      %3699 = vmatpush1.msra.mxu0 %v3121
      %3700 = vmatprep.mubr.f32.mxu0 %v298
      %3701 = vmatmul.mubr.f32.gmra.mrb[0].mxu0 %v297
      %v3702 = vpop.f32.mrb[0].mxu0
      %v3703 = vadd.f32 %v3626, %v3702
      %v3704 = vpop.f32.mrb[0].mxu0
      %v3705 = vadd.f32 %v3628, %v3704
      %3706 = vmatprep.mubr.f32.mxu0 %v314
      %3707 = vmatmul.mubr.f32.gmra.mrb[0].mxu0 %v313
      %v3708 = vpop.f32.mrb[0].mxu0
      %v3709 = vadd.f32 %v3632, %v3708
      %v3710 = vpop.f32.mrb[0].mxu0
      %v3711 = vadd.f32 %v3634, %v3710
      %3712 = vdwg.mxu0
      %3713 = vmatprep.subr.mxu0 %v3124
      %3714 = vmatpush1.msra.mxu0 %v3123
      %3715 = vmatprep.subr.mxu0 %v3126
      %3716 = vmatpush1.msra.mxu0 %v3125
      %3717 = vmatprep.subr.mxu0 %v3128
      %3718 = vmatpush1.msra.mxu0 %v3127
      %3719 = vmatprep.subr.mxu0 %v3130
      %3720 = vmatpush1.msra.mxu0 %v3129
      %3721 = vmatprep.subr.mxu0 %v3132
      %3722 = vmatpush1.msra.mxu0 %v3131
      %3723 = vmatprep.subr.mxu0 %v3134
      %3724 = vmatpush1.msra.mxu0 %v3133
      %3725 = vmatprep.subr.mxu0 %v3136
      %3726 = vmatpush1.msra.mxu0 %v3135
      %3727 = vmatprep.subr.mxu0 %v3138
      %3728 = vmatpush1.msra.mxu0 %v3137
      %3729 = vmatprep.subr.mxu0 %v3140
      %3730 = vmatpush1.msra.mxu0 %v3139
      %3731 = vmatprep.subr.mxu0 %v3142
      %3732 = vmatpush1.msra.mxu0 %v3141
      %3733 = vmatprep.subr.mxu0 %v3144
      %3734 = vmatpush1.msra.mxu0 %v3143
      %3735 = vmatprep.subr.mxu0 %v3146
      %3736 = vmatpush1.msra.mxu0 %v3145
      %3737 = vmatprep.subr.mxu0 %v3148
      %3738 = vmatpush1.msra.mxu0 %v3147
      %3739 = vmatprep.subr.mxu0 %v3150
      %3740 = vmatpush1.msra.mxu0 %v3149
      %3741 = vmatprep.subr.mxu0 %v3152
      %3742 = vmatpush1.msra.mxu0 %v3151
      %3743 = vmatprep.subr.mxu0 %v3154
      %3744 = vmatpush1.msra.mxu0 %v3153
      %3745 = vmatprep.subr.mxu0 %v3156
      %3746 = vmatpush1.msra.mxu0 %v3155
      %3747 = vmatprep.subr.mxu0 %v3158
      %3748 = vmatpush1.msra.mxu0 %v3157
      %3749 = vmatprep.subr.mxu0 %v3160
      %3750 = vmatpush1.msra.mxu0 %v3159
      %3751 = vmatprep.subr.mxu0 %v3162
      %3752 = vmatpush1.msra.mxu0 %v3161
      %3753 = vmatprep.subr.mxu0 %v3164
      %3754 = vmatpush1.msra.mxu0 %v3163
      %3755 = vmatprep.subr.mxu0 %v3166
      %3756 = vmatpush1.msra.mxu0 %v3165
      %3757 = vmatprep.subr.mxu0 %v3168
      %3758 = vmatpush1.msra.mxu0 %v3167
      %3759 = vmatprep.subr.mxu0 %v3170
      %3760 = vmatpush1.msra.mxu0 %v3169
      %3761 = vmatprep.subr.mxu0 %v3172
      %3762 = vmatpush1.msra.mxu0 %v3171
      %3763 = vmatprep.subr.mxu0 %v3174
      %3764 = vmatpush1.msra.mxu0 %v3173
      %3765 = vmatprep.subr.mxu0 %v3176
      %3766 = vmatpush1.msra.mxu0 %v3175
      %3767 = vmatprep.subr.mxu0 %v3178
      %3768 = vmatpush1.msra.mxu0 %v3177
      %3769 = vmatprep.subr.mxu0 %v3180
      %3770 = vmatpush1.msra.mxu0 %v3179
      %3771 = vmatprep.subr.mxu0 %v3182
      %3772 = vmatpush1.msra.mxu0 %v3181
      %3773 = vmatprep.subr.mxu0 %v3184
      %3774 = vmatpush1.msra.mxu0 %v3183
      %3775 = vmatprep.subr.mxu0 %v3186
      %3776 = vmatpush1.msra.mxu0 %v3185
      %3777 = vmatprep.mubr.f32.mxu0 %v300
      %3778 = vmatmul.mubr.f32.gmra.mrb[0].mxu0 %v299
      %v3779 = vpop.f32.mrb[0].mxu0
      %v3780 = vadd.f32 %v3703, %v3779
      %v3781 = vpop.f32.mrb[0].mxu0
      %v3782 = vadd.f32 %v3705, %v3781
      %3783 = vmatprep.mubr.f32.mxu0 %v316
      %3784 = vmatmul.mubr.f32.gmra.mrb[0].mxu0 %v315
      %v3785 = vpop.f32.mrb[0].mxu0
      %v3786 = vadd.f32 %v3709, %v3785
      %v3787 = vpop.f32.mrb[0].mxu0
      %v3788 = vadd.f32 %v3711, %v3787
      %3789 = vdwg.mxu0
      %3790 = vmatprep.subr.mxu0 %v3188
      %3791 = vmatpush1.msra.mxu0 %v3187
      %3792 = vmatprep.subr.mxu0 %v3190
      %3793 = vmatpush1.msra.mxu0 %v3189
      %3794 = vmatprep.subr.mxu0 %v3192
      %3795 = vmatpush1.msra.mxu0 %v3191
      %3796 = vmatprep.subr.mxu0 %v3194
      %3797 = vmatpush1.msra.mxu0 %v3193
      %3798 = vmatprep.subr.mxu0 %v3196
      %3799 = vmatpush1.msra.mxu0 %v3195
      %3800 = vmatprep.subr.mxu0 %v3198
      %3801 = vmatpush1.msra.mxu0 %v3197
      %3802 = vmatprep.subr.mxu0 %v3200
      %3803 = vmatpush1.msra.mxu0 %v3199
      %3804 = vmatprep.subr.mxu0 %v3202
      %3805 = vmatpush1.msra.mxu0 %v3201
      %3806 = vmatprep.subr.mxu0 %v3204
      %3807 = vmatpush1.msra.mxu0 %v3203
      %3808 = vmatprep.subr.mxu0 %v3206
      %3809 = vmatpush1.msra.mxu0 %v3205
      %3810 = vmatprep.subr.mxu0 %v3208
      %3811 = vmatpush1.msra.mxu0 %v3207
      %3812 = vmatprep.subr.mxu0 %v3210
      %3813 = vmatpush1.msra.mxu0 %v3209
      %3814 = vmatprep.subr.mxu0 %v3212
      %3815 = vmatpush1.msra.mxu0 %v3211
      %3816 = vmatprep.subr.mxu0 %v3214
      %3817 = vmatpush1.msra.mxu0 %v3213
      %3818 = vmatprep.subr.mxu0 %v3216
      %3819 = vmatpush1.msra.mxu0 %v3215
      %3820 = vmatprep.subr.mxu0 %v3218
      %3821 = vmatpush1.msra.mxu0 %v3217
      %3822 = vmatprep.subr.mxu0 %v3220
      %3823 = vmatpush1.msra.mxu0 %v3219
      %3824 = vmatprep.subr.mxu0 %v3222
      %3825 = vmatpush1.msra.mxu0 %v3221
      %3826 = vmatprep.subr.mxu0 %v3224
      %3827 = vmatpush1.msra.mxu0 %v3223
      %3828 = vmatprep.subr.mxu0 %v3226
      %3829 = vmatpush1.msra.mxu0 %v3225
      %3830 = vmatprep.subr.mxu0 %v3228
      %3831 = vmatpush1.msra.mxu0 %v3227
      %3832 = vmatprep.subr.mxu0 %v3230
      %3833 = vmatpush1.msra.mxu0 %v3229
      %3834 = vmatprep.subr.mxu0 %v3232
      %3835 = vmatpush1.msra.mxu0 %v3231
      %3836 = vmatprep.subr.mxu0 %v3234
      %3837 = vmatpush1.msra.mxu0 %v3233
      %3838 = vmatprep.subr.mxu0 %v3236
      %3839 = vmatpush1.msra.mxu0 %v3235
      %3840 = vmatprep.subr.mxu0 %v3238
      %3841 = vmatpush1.msra.mxu0 %v3237
      %3842 = vmatprep.subr.mxu0 %v3240
      %3843 = vmatpush1.msra.mxu0 %v3239
      %3844 = vmatprep.subr.mxu0 %v3242
      %3845 = vmatpush1.msra.mxu0 %v3241
      %3846 = vmatprep.subr.mxu0 %v3244
      %3847 = vmatpush1.msra.mxu0 %v3243
      %3848 = vmatprep.subr.mxu0 %v3246
      %3849 = vmatpush1.msra.mxu0 %v3245
      %3850 = vmatprep.subr.mxu0 %v3248
      %3851 = vmatpush1.msra.mxu0 %v3247
      %3852 = vmatprep.subr.mxu0 %v3250
      %3853 = vmatpush1.msra.mxu0 %v3249
      %3854 = vmatprep.mubr.f32.mxu0 %v302
      %3855 = vmatmul.mubr.f32.gmra.mrb[0].mxu0 %v301
      %v3856 = vpop.f32.mrb[0].mxu0
      %v3857 = vadd.f32 %v3780, %v3856
      %v3858 = vpop.f32.mrb[0].mxu0
      %v3859 = vadd.f32 %v3782, %v3858
      %3860 = vmatprep.mubr.f32.mxu0 %v318
      %3861 = vmatmul.mubr.f32.gmra.mrb[0].mxu0 %v317
      %v3862 = vpop.f32.mrb[0].mxu0
      %v3863 = vadd.f32 %v3786, %v3862
      %v3864 = vpop.f32.mrb[0].mxu0
      %v3865 = vadd.f32 %v3788, %v3864
      %3866 = vdwg.mxu0
      %v3867 = vadd.f32 %v3857, %v1452
      %v3868 = vadd.f32 %v3859, %v1452
      %v3869 = vsel %vm1456, %v3867, 0.0
      %v3870 = vsel %vm1458, %v3868, 0.0
      %v3871 = vadd.f32 %v3869, %v3870
      %3872 = vadd.xlane.f32.xlu0 %v3871
      %v3873 = vpop.xlane.xlu0 %3872
      %v3874 = vmul.f32 %v3873, 0.0051020407
      %v3875 = vmul.f32 %v3867, %v3874
      %v3876 = vmul.f32 %v3868, %v3874
      %v3877 = vsel %vm1456, %v3875, 0.0
      %v3878 = vrot.slane %v3877, 4
      %v3879 = vadd.f32 %v3877, %v3878
      %v3880 = vrot.slane %v3879, 2
      %v3881 = vadd.f32 %v3879, %v3880
      %v3882 = vrot.slane %v3881, 1
      %v3883 = vadd.f32 %v3881, %v3882
      %v3884 = vsel %vm1458, %v3876, 0.0
      %v3885 = vrot.slane %v3884, 4
      %v3886 = vadd.f32 %v3884, %v3885
      %v3887 = vrot.slane %v3886, 2
      %v3888 = vadd.f32 %v3886, %v3887
      %v3889 = vrot.slane %v3888, 1
      %v3890 = vadd.f32 %v3888, %v3889
      %v3891 = vmul.f32 %v3883, 0.25
      %v3892 = vmul.f32 %v3890, 0.25
      %v3893 = vmul.f32 %v3891, %v3863
      %v3894 = vmul.f32 %v3892, %v3865
      %v3897 = vrot.slane %v3893, 4
      %v3898 = vrot.slane %v3894, 4
      %v3901 = vadd.f32 %v3857, %v3897
      %v3902 = vadd.f32 %v3859, %v3898
      %v3903 = vsel %vm1492, %v3901, 0.0
      %v3904 = vsel %vm1494, %v3902, 0.0
      %v3905 = vadd.f32 %v3903, %v3904
      %3906 = vadd.xlane.f32.xlu0 %v3905
      %v3907 = vpop.xlane.xlu0 %3906
      %v3908 = vmul.f32 %v3907, 0.0051020407
      %v3909 = vadd.f32 %v3908, %v1501
      %v3912 = vcombine.low %v3867, %v3868
      %s3914 = scalar_lea.vmem %s273, 16
      %3915 = vst.msk [vmem:[%s3914] sm:$0xff] %vm1508, %v3912
      %v3918 = vcombine.low %v3891, %v3892
      %v3920 = vunpack.c.l.s4 1966171168
      %v3921 = vunpack.c.0.s8 %v3920
      %v3922 = vlaneseq
      %v3923 = vshrl.u32 %v3922, 7
      %v3924 = vsub.s32 %v3921, %v3923
      %v3925 = vrot.slane %v3918, %v3924
      %v3927 = vunpack.c.l.s4 1966171168
      %v3928 = vunpack.c.0.s8 %v3927
      %v3929 = vlaneseq
      %v3930 = vshrl.u32 %v3929, 7
      %v3931 = vsub.s32 %v3928, %v3930
      %v3932 = vrot.slane %v3925, %v3931
      %s3934 = scalar_lea.vmem %s279, 4
      %3935 = vst.msk [vmem:[%s3934] sm:$0x3] %vm1531, %v3932
      %s3936 = scalar_lea.vmem %s285, 16
      %3937 = vst.msk [vmem:[%s3936] sm:$0xf] %vm1533, %v3874
      %3938 = vst.msk [vmem:[%s3936] sm:$0xf0] %vm1535, %v3909
      %s3939 = scalar_lea.vmem %s266, 12288
      %v3940 = vld [vmem:[%s3939] sm:$0xff]
      %v3941 = vld [vmem:[%s3939 + $0x8] sm:$0xff]
      %v3942 = vld [vmem:[%s3939 + $0x10] sm:$0xff]
      %v3943 = vld [vmem:[%s3939 + $0x18] sm:$0xff]
      %v3944 = vld [vmem:[%s3939 + $0x20] sm:$0xff]
      %v3945 = vld [vmem:[%s3939 + $0x28] sm:$0xff]
      %v3946 = vld [vmem:[%s3939 + $0x30] sm:$0xff]
      %v3947 = vld [vmem:[%s3939 + $0x38] sm:$0xff]
      %v3948 = vld [vmem:[%s3939 + $0x40] sm:$0xff]
      %v3949 = vld [vmem:[%s3939 + $0x48] sm:$0xff]
      %v3950 = vld [vmem:[%s3939 + $0x50] sm:$0xff]
      %v3951 = vld [vmem:[%s3939 + $0x58] sm:$0xff]
      %v3952 = vld [vmem:[%s3939 + $0x60] sm:$0xff]
      %v3953 = vld [vmem:[%s3939 + $0x68] sm:$0xff]
      %v3954 = vld [vmem:[%s3939 + $0x70] sm:$0xff]
      %v3955 = vld [vmem:[%s3939 + $0x78] sm:$0xff]
      %v3956 = vld [vmem:[%s3939 + $0x80] sm:$0xff]
      %v3957 = vld [vmem:[%s3939 + $0x88] sm:$0xff]
      %v3958 = vld [vmem:[%s3939 + $0x90] sm:$0xff]
      %v3959 = vld [vmem:[%s3939 + $0x98] sm:$0xff]
      %v3960 = vld [vmem:[%s3939 + $0xa0] sm:$0xff]
      %v3961 = vld [vmem:[%s3939 + $0xa8] sm:$0xff]
      %v3962 = vld [vmem:[%s3939 + $0xb0] sm:$0xff]
      %v3963 = vld [vmem:[%s3939 + $0xb8] sm:$0xff]
      %v3964 = vld [vmem:[%s3939 + $0xc0] sm:$0xff]
      %v3965 = vld [vmem:[%s3939 + $0xc8] sm:$0xff]
      %v3966 = vld [vmem:[%s3939 + $0xd0] sm:$0xff]
      %v3967 = vld [vmem:[%s3939 + $0xd8] sm:$0xff]
      %v3968 = vld [vmem:[%s3939 + $0xe0] sm:$0xff]
      %v3969 = vld [vmem:[%s3939 + $0xe8] sm:$0xff]
      %v3970 = vld [vmem:[%s3939 + $0xf0] sm:$0xff]
      %v3971 = vld [vmem:[%s3939 + $0xf8] sm:$0xff]
      %v3972 = vld [vmem:[%s3939 + $0x100] sm:$0xff]
      %v3973 = vld [vmem:[%s3939 + $0x108] sm:$0xff]
      %v3974 = vld [vmem:[%s3939 + $0x110] sm:$0xff]
      %v3975 = vld [vmem:[%s3939 + $0x118] sm:$0xff]
      %v3976 = vld [vmem:[%s3939 + $0x120] sm:$0xff]
      %v3977 = vld [vmem:[%s3939 + $0x128] sm:$0xff]
      %v3978 = vld [vmem:[%s3939 + $0x130] sm:$0xff]
      %v3979 = vld [vmem:[%s3939 + $0x138] sm:$0xff]
      %v3980 = vld [vmem:[%s3939 + $0x140] sm:$0xff]
      %v3981 = vld [vmem:[%s3939 + $0x148] sm:$0xff]
      %v3982 = vld [vmem:[%s3939 + $0x150] sm:$0xff]
      %v3983 = vld [vmem:[%s3939 + $0x158] sm:$0xff]
      %v3984 = vld [vmem:[%s3939 + $0x160] sm:$0xff]
      %v3985 = vld [vmem:[%s3939 + $0x168] sm:$0xff]
      %v3986 = vld [vmem:[%s3939 + $0x170] sm:$0xff]
      %v3987 = vld [vmem:[%s3939 + $0x178] sm:$0xff]
      %v3988 = vld [vmem:[%s3939 + $0x180] sm:$0xff]
      %v3989 = vld [vmem:[%s3939 + $0x188] sm:$0xff]
      %v3990 = vld [vmem:[%s3939 + $0x190] sm:$0xff]
      %v3991 = vld [vmem:[%s3939 + $0x198] sm:$0xff]
      %v3992 = vld [vmem:[%s3939 + $0x1a0] sm:$0xff]
      %v3993 = vld [vmem:[%s3939 + $0x1a8] sm:$0xff]
      %v3994 = vld [vmem:[%s3939 + $0x1b0] sm:$0xff]
      %v3995 = vld [vmem:[%s3939 + $0x1b8] sm:$0xff]
      %v3996 = vld [vmem:[%s3939 + $0x1c0] sm:$0xff]
      %v3997 = vld [vmem:[%s3939 + $0x1c8] sm:$0xff]
      %v3998 = vld [vmem:[%s3939 + $0x1d0] sm:$0xff]
      %v3999 = vld [vmem:[%s3939 + $0x1d8] sm:$0xff]
      %v4000 = vld [vmem:[%s3939 + $0x1e0] sm:$0xff]
      %v4001 = vld [vmem:[%s3939 + $0x1e8] sm:$0xff]
      %v4002 = vld [vmem:[%s3939 + $0x1f0] sm:$0xff]
      %v4003 = vld [vmem:[%s3939 + $0x1f8] sm:$0xff]
      %v4004 = vld [vmem:[%s3939 + $0x200] sm:$0xff]
      %v4005 = vld [vmem:[%s3939 + $0x208] sm:$0xff]
      %v4006 = vld [vmem:[%s3939 + $0x210] sm:$0xff]
      %v4007 = vld [vmem:[%s3939 + $0x218] sm:$0xff]
      %v4008 = vld [vmem:[%s3939 + $0x220] sm:$0xff]
      %v4009 = vld [vmem:[%s3939 + $0x228] sm:$0xff]
      %v4010 = vld [vmem:[%s3939 + $0x230] sm:$0xff]
      %v4011 = vld [vmem:[%s3939 + $0x238] sm:$0xff]
      %v4012 = vld [vmem:[%s3939 + $0x240] sm:$0xff]
      %v4013 = vld [vmem:[%s3939 + $0x248] sm:$0xff]
      %v4014 = vld [vmem:[%s3939 + $0x250] sm:$0xff]
      %v4015 = vld [vmem:[%s3939 + $0x258] sm:$0xff]
      %v4016 = vld [vmem:[%s3939 + $0x260] sm:$0xff]
      %v4017 = vld [vmem:[%s3939 + $0x268] sm:$0xff]
      %v4018 = vld [vmem:[%s3939 + $0x270] sm:$0xff]
      %v4019 = vld [vmem:[%s3939 + $0x278] sm:$0xff]
      %v4020 = vld [vmem:[%s3939 + $0x280] sm:$0xff]
      %v4021 = vld [vmem:[%s3939 + $0x288] sm:$0xff]
      %v4022 = vld [vmem:[%s3939 + $0x290] sm:$0xff]
      %v4023 = vld [vmem:[%s3939 + $0x298] sm:$0xff]
      %v4024 = vld [vmem:[%s3939 + $0x2a0] sm:$0xff]
      %v4025 = vld [vmem:[%s3939 + $0x2a8] sm:$0xff]
      %v4026 = vld [vmem:[%s3939 + $0x2b0] sm:$0xff]
      %v4027 = vld [vmem:[%s3939 + $0x2b8] sm:$0xff]
      %v4028 = vld [vmem:[%s3939 + $0x2c0] sm:$0xff]
      %v4029 = vld [vmem:[%s3939 + $0x2c8] sm:$0xff]
      %v4030 = vld [vmem:[%s3939 + $0x2d0] sm:$0xff]
      %v4031 = vld [vmem:[%s3939 + $0x2d8] sm:$0xff]
      %v4032 = vld [vmem:[%s3939 + $0x2e0] sm:$0xff]
      %v4033 = vld [vmem:[%s3939 + $0x2e8] sm:$0xff]
      %v4034 = vld [vmem:[%s3939 + $0x2f0] sm:$0xff]
      %v4035 = vld [vmem:[%s3939 + $0x2f8] sm:$0xff]
      %v4036 = vld [vmem:[%s3939 + $0x300] sm:$0xff]
      %v4037 = vld [vmem:[%s3939 + $0x308] sm:$0xff]
      %v4038 = vld [vmem:[%s3939 + $0x310] sm:$0xff]
      %v4039 = vld [vmem:[%s3939 + $0x318] sm:$0xff]
      %v4040 = vld [vmem:[%s3939 + $0x320] sm:$0xff]
      %v4041 = vld [vmem:[%s3939 + $0x328] sm:$0xff]
      %v4042 = vld [vmem:[%s3939 + $0x330] sm:$0xff]
      %v4043 = vld [vmem:[%s3939 + $0x338] sm:$0xff]
      %v4044 = vld [vmem:[%s3939 + $0x340] sm:$0xff]
      %v4045 = vld [vmem:[%s3939 + $0x348] sm:$0xff]
      %v4046 = vld [vmem:[%s3939 + $0x350] sm:$0xff]
      %v4047 = vld [vmem:[%s3939 + $0x358] sm:$0xff]
      %v4048 = vld [vmem:[%s3939 + $0x360] sm:$0xff]
      %v4049 = vld [vmem:[%s3939 + $0x368] sm:$0xff]
      %v4050 = vld [vmem:[%s3939 + $0x370] sm:$0xff]
      %v4051 = vld [vmem:[%s3939 + $0x378] sm:$0xff]
      %v4052 = vld [vmem:[%s3939 + $0x380] sm:$0xff]
      %v4053 = vld [vmem:[%s3939 + $0x388] sm:$0xff]
      %v4054 = vld [vmem:[%s3939 + $0x390] sm:$0xff]
      %v4055 = vld [vmem:[%s3939 + $0x398] sm:$0xff]
      %v4056 = vld [vmem:[%s3939 + $0x3a0] sm:$0xff]
      %v4057 = vld [vmem:[%s3939 + $0x3a8] sm:$0xff]
      %v4058 = vld [vmem:[%s3939 + $0x3b0] sm:$0xff]
      %v4059 = vld [vmem:[%s3939 + $0x3b8] sm:$0xff]
      %v4060 = vld [vmem:[%s3939 + $0x3c0] sm:$0xff]
      %v4061 = vld [vmem:[%s3939 + $0x3c8] sm:$0xff]
      %v4062 = vld [vmem:[%s3939 + $0x3d0] sm:$0xff]
      %v4063 = vld [vmem:[%s3939 + $0x3d8] sm:$0xff]
      %v4064 = vld [vmem:[%s3939 + $0x3e0] sm:$0xff]
      %v4065 = vld [vmem:[%s3939 + $0x3e8] sm:$0xff]
      %v4066 = vld [vmem:[%s3939 + $0x3f0] sm:$0xff]
      %v4067 = vld [vmem:[%s3939 + $0x3f8] sm:$0xff]
      %v4068 = vld [vmem:[%s3939 + $0x400] sm:$0xff]
      %v4069 = vld [vmem:[%s3939 + $0x408] sm:$0xff]
      %v4070 = vld [vmem:[%s3939 + $0x410] sm:$0xff]
      %v4071 = vld [vmem:[%s3939 + $0x418] sm:$0xff]
      %v4072 = vld [vmem:[%s3939 + $0x420] sm:$0xff]
      %v4073 = vld [vmem:[%s3939 + $0x428] sm:$0xff]
      %v4074 = vld [vmem:[%s3939 + $0x430] sm:$0xff]
      %v4075 = vld [vmem:[%s3939 + $0x438] sm:$0xff]
      %v4076 = vld [vmem:[%s3939 + $0x440] sm:$0xff]
      %v4077 = vld [vmem:[%s3939 + $0x448] sm:$0xff]
      %v4078 = vld [vmem:[%s3939 + $0x450] sm:$0xff]
      %v4079 = vld [vmem:[%s3939 + $0x458] sm:$0xff]
      %v4080 = vld [vmem:[%s3939 + $0x460] sm:$0xff]
      %v4081 = vld [vmem:[%s3939 + $0x468] sm:$0xff]
      %v4082 = vld [vmem:[%s3939 + $0x470] sm:$0xff]
      %v4083 = vld [vmem:[%s3939 + $0x478] sm:$0xff]
      %v4084 = vld [vmem:[%s3939 + $0x480] sm:$0xff]
      %v4085 = vld [vmem:[%s3939 + $0x488] sm:$0xff]
      %v4086 = vld [vmem:[%s3939 + $0x490] sm:$0xff]
      %v4087 = vld [vmem:[%s3939 + $0x498] sm:$0xff]
      %v4088 = vld [vmem:[%s3939 + $0x4a0] sm:$0xff]
      %v4089 = vld [vmem:[%s3939 + $0x4a8] sm:$0xff]
      %v4090 = vld [vmem:[%s3939 + $0x4b0] sm:$0xff]
      %v4091 = vld [vmem:[%s3939 + $0x4b8] sm:$0xff]
      %v4092 = vld [vmem:[%s3939 + $0x4c0] sm:$0xff]
      %v4093 = vld [vmem:[%s3939 + $0x4c8] sm:$0xff]
      %v4094 = vld [vmem:[%s3939 + $0x4d0] sm:$0xff]
      %v4095 = vld [vmem:[%s3939 + $0x4d8] sm:$0xff]
      %v4096 = vld [vmem:[%s3939 + $0x4e0] sm:$0xff]
      %v4097 = vld [vmem:[%s3939 + $0x4e8] sm:$0xff]
      %v4098 = vld [vmem:[%s3939 + $0x4f0] sm:$0xff]
      %v4099 = vld [vmem:[%s3939 + $0x4f8] sm:$0xff]
      %v4100 = vld [vmem:[%s3939 + $0x500] sm:$0xff]
      %v4101 = vld [vmem:[%s3939 + $0x508] sm:$0xff]
      %v4102 = vld [vmem:[%s3939 + $0x510] sm:$0xff]
      %v4103 = vld [vmem:[%s3939 + $0x518] sm:$0xff]
      %v4104 = vld [vmem:[%s3939 + $0x520] sm:$0xff]
      %v4105 = vld [vmem:[%s3939 + $0x528] sm:$0xff]
      %v4106 = vld [vmem:[%s3939 + $0x530] sm:$0xff]
      %v4107 = vld [vmem:[%s3939 + $0x538] sm:$0xff]
      %v4108 = vld [vmem:[%s3939 + $0x540] sm:$0xff]
      %v4109 = vld [vmem:[%s3939 + $0x548] sm:$0xff]
      %v4110 = vld [vmem:[%s3939 + $0x550] sm:$0xff]
      %v4111 = vld [vmem:[%s3939 + $0x558] sm:$0xff]
      %v4112 = vld [vmem:[%s3939 + $0x560] sm:$0xff]
      %v4113 = vld [vmem:[%s3939 + $0x568] sm:$0xff]
      %v4114 = vld [vmem:[%s3939 + $0x570] sm:$0xff]
      %v4115 = vld [vmem:[%s3939 + $0x578] sm:$0xff]
      %v4116 = vld [vmem:[%s3939 + $0x580] sm:$0xff]
      %v4117 = vld [vmem:[%s3939 + $0x588] sm:$0xff]
      %v4118 = vld [vmem:[%s3939 + $0x590] sm:$0xff]
      %v4119 = vld [vmem:[%s3939 + $0x598] sm:$0xff]
      %v4120 = vld [vmem:[%s3939 + $0x5a0] sm:$0xff]
      %v4121 = vld [vmem:[%s3939 + $0x5a8] sm:$0xff]
      %v4122 = vld [vmem:[%s3939 + $0x5b0] sm:$0xff]
      %v4123 = vld [vmem:[%s3939 + $0x5b8] sm:$0xff]
      %v4124 = vld [vmem:[%s3939 + $0x5c0] sm:$0xff]
      %v4125 = vld [vmem:[%s3939 + $0x5c8] sm:$0xff]
      %v4126 = vld [vmem:[%s3939 + $0x5d0] sm:$0xff]
      %v4127 = vld [vmem:[%s3939 + $0x5d8] sm:$0xff]
      %v4128 = vld [vmem:[%s3939 + $0x5e0] sm:$0xff]
      %v4129 = vld [vmem:[%s3939 + $0x5e8] sm:$0xff]
      %v4130 = vld [vmem:[%s3939 + $0x5f0] sm:$0xff]
      %v4131 = vld [vmem:[%s3939 + $0x5f8] sm:$0xff]
      %v4132 = vld [vmem:[%s3939 + $0x600] sm:$0xff]
      %v4133 = vld [vmem:[%s3939 + $0x608] sm:$0xff]
      %v4134 = vld [vmem:[%s3939 + $0x610] sm:$0xff]
      %v4135 = vld [vmem:[%s3939 + $0x618] sm:$0xff]
      %v4136 = vld [vmem:[%s3939 + $0x620] sm:$0xff]
      %v4137 = vld [vmem:[%s3939 + $0x628] sm:$0xff]
      %v4138 = vld [vmem:[%s3939 + $0x630] sm:$0xff]
      %v4139 = vld [vmem:[%s3939 + $0x638] sm:$0xff]
      %v4140 = vld [vmem:[%s3939 + $0x640] sm:$0xff]
      %v4141 = vld [vmem:[%s3939 + $0x648] sm:$0xff]
      %v4142 = vld [vmem:[%s3939 + $0x650] sm:$0xff]
      %v4143 = vld [vmem:[%s3939 + $0x658] sm:$0xff]
      %v4144 = vld [vmem:[%s3939 + $0x660] sm:$0xff]
      %v4145 = vld [vmem:[%s3939 + $0x668] sm:$0xff]
      %v4146 = vld [vmem:[%s3939 + $0x670] sm:$0xff]
      %v4147 = vld [vmem:[%s3939 + $0x678] sm:$0xff]
      %v4148 = vld [vmem:[%s3939 + $0x680] sm:$0xff]
      %v4149 = vld [vmem:[%s3939 + $0x688] sm:$0xff]
      %v4150 = vld [vmem:[%s3939 + $0x690] sm:$0xff]
      %v4151 = vld [vmem:[%s3939 + $0x698] sm:$0xff]
      %v4152 = vld [vmem:[%s3939 + $0x6a0] sm:$0xff]
      %v4153 = vld [vmem:[%s3939 + $0x6a8] sm:$0xff]
      %v4154 = vld [vmem:[%s3939 + $0x6b0] sm:$0xff]
      %v4155 = vld [vmem:[%s3939 + $0x6b8] sm:$0xff]
      %v4156 = vld [vmem:[%s3939 + $0x6c0] sm:$0xff]
      %v4157 = vld [vmem:[%s3939 + $0x6c8] sm:$0xff]
      %v4158 = vld [vmem:[%s3939 + $0x6d0] sm:$0xff]
      %v4159 = vld [vmem:[%s3939 + $0x6d8] sm:$0xff]
      %v4160 = vld [vmem:[%s3939 + $0x6e0] sm:$0xff]
      %v4161 = vld [vmem:[%s3939 + $0x6e8] sm:$0xff]
      %v4162 = vld [vmem:[%s3939 + $0x6f0] sm:$0xff]
      %v4163 = vld [vmem:[%s3939 + $0x6f8] sm:$0xff]
      %v4164 = vld [vmem:[%s3939 + $0x700] sm:$0xff]
      %v4165 = vld [vmem:[%s3939 + $0x708] sm:$0xff]
      %v4166 = vld [vmem:[%s3939 + $0x710] sm:$0xff]
      %v4167 = vld [vmem:[%s3939 + $0x718] sm:$0xff]
      %v4168 = vld [vmem:[%s3939 + $0x720] sm:$0xff]
      %v4169 = vld [vmem:[%s3939 + $0x728] sm:$0xff]
      %v4170 = vld [vmem:[%s3939 + $0x730] sm:$0xff]
      %v4171 = vld [vmem:[%s3939 + $0x738] sm:$0xff]
      %v4172 = vld [vmem:[%s3939 + $0x740] sm:$0xff]
      %v4173 = vld [vmem:[%s3939 + $0x748] sm:$0xff]
      %v4174 = vld [vmem:[%s3939 + $0x750] sm:$0xff]
      %v4175 = vld [vmem:[%s3939 + $0x758] sm:$0xff]
      %v4176 = vld [vmem:[%s3939 + $0x760] sm:$0xff]
      %v4177 = vld [vmem:[%s3939 + $0x768] sm:$0xff]
      %v4178 = vld [vmem:[%s3939 + $0x770] sm:$0xff]
      %v4179 = vld [vmem:[%s3939 + $0x778] sm:$0xff]
      %v4180 = vld [vmem:[%s3939 + $0x780] sm:$0xff]
      %v4181 = vld [vmem:[%s3939 + $0x788] sm:$0xff]
      %v4182 = vld [vmem:[%s3939 + $0x790] sm:$0xff]
      %v4183 = vld [vmem:[%s3939 + $0x798] sm:$0xff]
      %v4184 = vld [vmem:[%s3939 + $0x7a0] sm:$0xff]
      %v4185 = vld [vmem:[%s3939 + $0x7a8] sm:$0xff]
      %v4186 = vld [vmem:[%s3939 + $0x7b0] sm:$0xff]
      %v4187 = vld [vmem:[%s3939 + $0x7b8] sm:$0xff]
      %v4188 = vld [vmem:[%s3939 + $0x7c0] sm:$0xff]
      %v4189 = vld [vmem:[%s3939 + $0x7c8] sm:$0xff]
      %v4190 = vld [vmem:[%s3939 + $0x7d0] sm:$0xff]
      %v4191 = vld [vmem:[%s3939 + $0x7d8] sm:$0xff]
      %v4192 = vld [vmem:[%s3939 + $0x7e0] sm:$0xff]
      %v4193 = vld [vmem:[%s3939 + $0x7e8] sm:$0xff]
      %v4194 = vld [vmem:[%s3939 + $0x7f0] sm:$0xff]
      %v4195 = vld [vmem:[%s3939 + $0x7f8] sm:$0xff]
      %v4196 = vld [vmem:[%s3939 + $0x800] sm:$0xff]
      %v4197 = vld [vmem:[%s3939 + $0x808] sm:$0xff]
      %v4198 = vld [vmem:[%s3939 + $0x810] sm:$0xff]
      %v4199 = vld [vmem:[%s3939 + $0x818] sm:$0xff]
      %v4200 = vld [vmem:[%s3939 + $0x820] sm:$0xff]
      %v4201 = vld [vmem:[%s3939 + $0x828] sm:$0xff]
      %v4202 = vld [vmem:[%s3939 + $0x830] sm:$0xff]
      %v4203 = vld [vmem:[%s3939 + $0x838] sm:$0xff]
      %v4204 = vld [vmem:[%s3939 + $0x840] sm:$0xff]
      %v4205 = vld [vmem:[%s3939 + $0x848] sm:$0xff]
      %v4206 = vld [vmem:[%s3939 + $0x850] sm:$0xff]
      %v4207 = vld [vmem:[%s3939 + $0x858] sm:$0xff]
      %v4208 = vld [vmem:[%s3939 + $0x860] sm:$0xff]
      %v4209 = vld [vmem:[%s3939 + $0x868] sm:$0xff]
      %v4210 = vld [vmem:[%s3939 + $0x870] sm:$0xff]
      %v4211 = vld [vmem:[%s3939 + $0x878] sm:$0xff]
      %v4212 = vld [vmem:[%s3939 + $0x880] sm:$0xff]
      %v4213 = vld [vmem:[%s3939 + $0x888] sm:$0xff]
      %v4214 = vld [vmem:[%s3939 + $0x890] sm:$0xff]
      %v4215 = vld [vmem:[%s3939 + $0x898] sm:$0xff]
      %v4216 = vld [vmem:[%s3939 + $0x8a0] sm:$0xff]
      %v4217 = vld [vmem:[%s3939 + $0x8a8] sm:$0xff]
      %v4218 = vld [vmem:[%s3939 + $0x8b0] sm:$0xff]
      %v4219 = vld [vmem:[%s3939 + $0x8b8] sm:$0xff]
      %v4220 = vld [vmem:[%s3939 + $0x8c0] sm:$0xff]
      %v4221 = vld [vmem:[%s3939 + $0x8c8] sm:$0xff]
      %v4222 = vld [vmem:[%s3939 + $0x8d0] sm:$0xff]
      %v4223 = vld [vmem:[%s3939 + $0x8d8] sm:$0xff]
      %v4224 = vld [vmem:[%s3939 + $0x8e0] sm:$0xff]
      %v4225 = vld [vmem:[%s3939 + $0x8e8] sm:$0xff]
      %v4226 = vld [vmem:[%s3939 + $0x8f0] sm:$0xff]
      %v4227 = vld [vmem:[%s3939 + $0x8f8] sm:$0xff]
      %v4228 = vld [vmem:[%s3939 + $0x900] sm:$0xff]
      %v4229 = vld [vmem:[%s3939 + $0x908] sm:$0xff]
      %v4230 = vld [vmem:[%s3939 + $0x910] sm:$0xff]
      %v4231 = vld [vmem:[%s3939 + $0x918] sm:$0xff]
      %v4232 = vld [vmem:[%s3939 + $0x920] sm:$0xff]
      %v4233 = vld [vmem:[%s3939 + $0x928] sm:$0xff]
      %v4234 = vld [vmem:[%s3939 + $0x930] sm:$0xff]
      %v4235 = vld [vmem:[%s3939 + $0x938] sm:$0xff]
      %v4236 = vld [vmem:[%s3939 + $0x940] sm:$0xff]
      %v4237 = vld [vmem:[%s3939 + $0x948] sm:$0xff]
      %v4238 = vld [vmem:[%s3939 + $0x950] sm:$0xff]
      %v4239 = vld [vmem:[%s3939 + $0x958] sm:$0xff]
      %v4240 = vld [vmem:[%s3939 + $0x960] sm:$0xff]
      %v4241 = vld [vmem:[%s3939 + $0x968] sm:$0xff]
      %v4242 = vld [vmem:[%s3939 + $0x970] sm:$0xff]
      %v4243 = vld [vmem:[%s3939 + $0x978] sm:$0xff]
      %v4244 = vld [vmem:[%s3939 + $0x980] sm:$0xff]
      %v4245 = vld [vmem:[%s3939 + $0x988] sm:$0xff]
      %v4246 = vld [vmem:[%s3939 + $0x990] sm:$0xff]
      %v4247 = vld [vmem:[%s3939 + $0x998] sm:$0xff]
      %v4248 = vld [vmem:[%s3939 + $0x9a0] sm:$0xff]
      %v4249 = vld [vmem:[%s3939 + $0x9a8] sm:$0xff]
      %v4250 = vld [vmem:[%s3939 + $0x9b0] sm:$0xff]
      %v4251 = vld [vmem:[%s3939 + $0x9b8] sm:$0xff]
      %v4252 = vld [vmem:[%s3939 + $0x9c0] sm:$0xff]
      %v4253 = vld [vmem:[%s3939 + $0x9c8] sm:$0xff]
      %v4254 = vld [vmem:[%s3939 + $0x9d0] sm:$0xff]
      %v4255 = vld [vmem:[%s3939 + $0x9d8] sm:$0xff]
      %v4256 = vld [vmem:[%s3939 + $0x9e0] sm:$0xff]
      %v4257 = vld [vmem:[%s3939 + $0x9e8] sm:$0xff]
      %v4258 = vld [vmem:[%s3939 + $0x9f0] sm:$0xff]
      %v4259 = vld [vmem:[%s3939 + $0x9f8] sm:$0xff]
      %v4260 = vld [vmem:[%s3939 + $0xa00] sm:$0xff]
      %v4261 = vld [vmem:[%s3939 + $0xa08] sm:$0xff]
      %v4262 = vld [vmem:[%s3939 + $0xa10] sm:$0xff]
      %v4263 = vld [vmem:[%s3939 + $0xa18] sm:$0xff]
      %v4264 = vld [vmem:[%s3939 + $0xa20] sm:$0xff]
      %v4265 = vld [vmem:[%s3939 + $0xa28] sm:$0xff]
      %v4266 = vld [vmem:[%s3939 + $0xa30] sm:$0xff]
      %v4267 = vld [vmem:[%s3939 + $0xa38] sm:$0xff]
      %v4268 = vld [vmem:[%s3939 + $0xa40] sm:$0xff]
      %v4269 = vld [vmem:[%s3939 + $0xa48] sm:$0xff]
      %v4270 = vld [vmem:[%s3939 + $0xa50] sm:$0xff]
      %v4271 = vld [vmem:[%s3939 + $0xa58] sm:$0xff]
      %v4272 = vld [vmem:[%s3939 + $0xa60] sm:$0xff]
      %v4273 = vld [vmem:[%s3939 + $0xa68] sm:$0xff]
      %v4274 = vld [vmem:[%s3939 + $0xa70] sm:$0xff]
      %v4275 = vld [vmem:[%s3939 + $0xa78] sm:$0xff]
      %v4276 = vld [vmem:[%s3939 + $0xa80] sm:$0xff]
      %v4277 = vld [vmem:[%s3939 + $0xa88] sm:$0xff]
      %v4278 = vld [vmem:[%s3939 + $0xa90] sm:$0xff]
      %v4279 = vld [vmem:[%s3939 + $0xa98] sm:$0xff]
      %v4280 = vld [vmem:[%s3939 + $0xaa0] sm:$0xff]
      %v4281 = vld [vmem:[%s3939 + $0xaa8] sm:$0xff]
      %v4282 = vld [vmem:[%s3939 + $0xab0] sm:$0xff]
      %v4283 = vld [vmem:[%s3939 + $0xab8] sm:$0xff]
      %v4284 = vld [vmem:[%s3939 + $0xac0] sm:$0xff]
      %v4285 = vld [vmem:[%s3939 + $0xac8] sm:$0xff]
      %v4286 = vld [vmem:[%s3939 + $0xad0] sm:$0xff]
      %v4287 = vld [vmem:[%s3939 + $0xad8] sm:$0xff]
      %v4288 = vld [vmem:[%s3939 + $0xae0] sm:$0xff]
      %v4289 = vld [vmem:[%s3939 + $0xae8] sm:$0xff]
      %v4290 = vld [vmem:[%s3939 + $0xaf0] sm:$0xff]
      %v4291 = vld [vmem:[%s3939 + $0xaf8] sm:$0xff]
      %v4292 = vld [vmem:[%s3939 + $0xb00] sm:$0xff]
      %v4293 = vld [vmem:[%s3939 + $0xb08] sm:$0xff]
      %v4294 = vld [vmem:[%s3939 + $0xb10] sm:$0xff]
      %v4295 = vld [vmem:[%s3939 + $0xb18] sm:$0xff]
      %v4296 = vld [vmem:[%s3939 + $0xb20] sm:$0xff]
      %v4297 = vld [vmem:[%s3939 + $0xb28] sm:$0xff]
      %v4298 = vld [vmem:[%s3939 + $0xb30] sm:$0xff]
      %v4299 = vld [vmem:[%s3939 + $0xb38] sm:$0xff]
      %v4300 = vld [vmem:[%s3939 + $0xb40] sm:$0xff]
      %v4301 = vld [vmem:[%s3939 + $0xb48] sm:$0xff]
      %v4302 = vld [vmem:[%s3939 + $0xb50] sm:$0xff]
      %v4303 = vld [vmem:[%s3939 + $0xb58] sm:$0xff]
      %v4304 = vld [vmem:[%s3939 + $0xb60] sm:$0xff]
      %v4305 = vld [vmem:[%s3939 + $0xb68] sm:$0xff]
      %v4306 = vld [vmem:[%s3939 + $0xb70] sm:$0xff]
      %v4307 = vld [vmem:[%s3939 + $0xb78] sm:$0xff]
      %v4308 = vld [vmem:[%s3939 + $0xb80] sm:$0xff]
      %v4309 = vld [vmem:[%s3939 + $0xb88] sm:$0xff]
      %v4310 = vld [vmem:[%s3939 + $0xb90] sm:$0xff]
      %v4311 = vld [vmem:[%s3939 + $0xb98] sm:$0xff]
      %v4312 = vld [vmem:[%s3939 + $0xba0] sm:$0xff]
      %v4313 = vld [vmem:[%s3939 + $0xba8] sm:$0xff]
      %v4314 = vld [vmem:[%s3939 + $0xbb0] sm:$0xff]
      %v4315 = vld [vmem:[%s3939 + $0xbb8] sm:$0xff]
      %v4316 = vld [vmem:[%s3939 + $0xbc0] sm:$0xff]
      %v4317 = vld [vmem:[%s3939 + $0xbc8] sm:$0xff]
      %v4318 = vld [vmem:[%s3939 + $0xbd0] sm:$0xff]
      %v4319 = vld [vmem:[%s3939 + $0xbd8] sm:$0xff]
      %v4320 = vld [vmem:[%s3939 + $0xbe0] sm:$0xff]
      %v4321 = vld [vmem:[%s3939 + $0xbe8] sm:$0xff]
      %v4322 = vld [vmem:[%s3939 + $0xbf0] sm:$0xff]
      %v4323 = vld [vmem:[%s3939 + $0xbf8] sm:$0xff]
      %v4324 = vld [vmem:[%s3939 + $0xc00] sm:$0xff]
      %v4325 = vld [vmem:[%s3939 + $0xc08] sm:$0xff]
      %v4326 = vld [vmem:[%s3939 + $0xc10] sm:$0xff]
      %v4327 = vld [vmem:[%s3939 + $0xc18] sm:$0xff]
      %v4328 = vld [vmem:[%s3939 + $0xc20] sm:$0xff]
      %v4329 = vld [vmem:[%s3939 + $0xc28] sm:$0xff]
      %v4330 = vld [vmem:[%s3939 + $0xc30] sm:$0xff]
      %v4331 = vld [vmem:[%s3939 + $0xc38] sm:$0xff]
      %v4332 = vld [vmem:[%s3939 + $0xc40] sm:$0xff]
      %v4333 = vld [vmem:[%s3939 + $0xc48] sm:$0xff]
      %v4334 = vld [vmem:[%s3939 + $0xc50] sm:$0xff]
      %v4335 = vld [vmem:[%s3939 + $0xc58] sm:$0xff]
      %v4336 = vld [vmem:[%s3939 + $0xc60] sm:$0xff]
      %v4337 = vld [vmem:[%s3939 + $0xc68] sm:$0xff]
      %v4338 = vld [vmem:[%s3939 + $0xc70] sm:$0xff]
      %v4339 = vld [vmem:[%s3939 + $0xc78] sm:$0xff]
      %v4340 = vld [vmem:[%s3939 + $0xc80] sm:$0xff]
      %v4341 = vld [vmem:[%s3939 + $0xc88] sm:$0xff]
      %v4342 = vld [vmem:[%s3939 + $0xc90] sm:$0xff]
      %v4343 = vld [vmem:[%s3939 + $0xc98] sm:$0xff]
      %v4344 = vld [vmem:[%s3939 + $0xca0] sm:$0xff]
      %v4345 = vld [vmem:[%s3939 + $0xca8] sm:$0xff]
      %v4346 = vld [vmem:[%s3939 + $0xcb0] sm:$0xff]
      %v4347 = vld [vmem:[%s3939 + $0xcb8] sm:$0xff]
      %v4348 = vld [vmem:[%s3939 + $0xcc0] sm:$0xff]
      %v4349 = vld [vmem:[%s3939 + $0xcc8] sm:$0xff]
      %v4350 = vld [vmem:[%s3939 + $0xcd0] sm:$0xff]
      %v4351 = vld [vmem:[%s3939 + $0xcd8] sm:$0xff]
      %v4352 = vld [vmem:[%s3939 + $0xce0] sm:$0xff]
      %v4353 = vld [vmem:[%s3939 + $0xce8] sm:$0xff]
      %v4354 = vld [vmem:[%s3939 + $0xcf0] sm:$0xff]
      %v4355 = vld [vmem:[%s3939 + $0xcf8] sm:$0xff]
      %v4356 = vld [vmem:[%s3939 + $0xd00] sm:$0xff]
      %v4357 = vld [vmem:[%s3939 + $0xd08] sm:$0xff]
      %v4358 = vld [vmem:[%s3939 + $0xd10] sm:$0xff]
      %v4359 = vld [vmem:[%s3939 + $0xd18] sm:$0xff]
      %v4360 = vld [vmem:[%s3939 + $0xd20] sm:$0xff]
      %v4361 = vld [vmem:[%s3939 + $0xd28] sm:$0xff]
      %v4362 = vld [vmem:[%s3939 + $0xd30] sm:$0xff]
      %v4363 = vld [vmem:[%s3939 + $0xd38] sm:$0xff]
      %v4364 = vld [vmem:[%s3939 + $0xd40] sm:$0xff]
      %v4365 = vld [vmem:[%s3939 + $0xd48] sm:$0xff]
      %v4366 = vld [vmem:[%s3939 + $0xd50] sm:$0xff]
      %v4367 = vld [vmem:[%s3939 + $0xd58] sm:$0xff]
      %v4368 = vld [vmem:[%s3939 + $0xd60] sm:$0xff]
      %v4369 = vld [vmem:[%s3939 + $0xd68] sm:$0xff]
      %v4370 = vld [vmem:[%s3939 + $0xd70] sm:$0xff]
      %v4371 = vld [vmem:[%s3939 + $0xd78] sm:$0xff]
      %v4372 = vld [vmem:[%s3939 + $0xd80] sm:$0xff]
      %v4373 = vld [vmem:[%s3939 + $0xd88] sm:$0xff]
      %v4374 = vld [vmem:[%s3939 + $0xd90] sm:$0xff]
      %v4375 = vld [vmem:[%s3939 + $0xd98] sm:$0xff]
      %v4376 = vld [vmem:[%s3939 + $0xda0] sm:$0xff]
      %v4377 = vld [vmem:[%s3939 + $0xda8] sm:$0xff]
      %v4378 = vld [vmem:[%s3939 + $0xdb0] sm:$0xff]
      %v4379 = vld [vmem:[%s3939 + $0xdb8] sm:$0xff]
      %v4380 = vld [vmem:[%s3939 + $0xdc0] sm:$0xff]
      %v4381 = vld [vmem:[%s3939 + $0xdc8] sm:$0xff]
      %v4382 = vld [vmem:[%s3939 + $0xdd0] sm:$0xff]
      %v4383 = vld [vmem:[%s3939 + $0xdd8] sm:$0xff]
      %v4384 = vld [vmem:[%s3939 + $0xde0] sm:$0xff]
      %v4385 = vld [vmem:[%s3939 + $0xde8] sm:$0xff]
      %v4386 = vld [vmem:[%s3939 + $0xdf0] sm:$0xff]
      %v4387 = vld [vmem:[%s3939 + $0xdf8] sm:$0xff]
      %v4388 = vld [vmem:[%s3939 + $0xe00] sm:$0xff]
      %v4389 = vld [vmem:[%s3939 + $0xe08] sm:$0xff]
      %v4390 = vld [vmem:[%s3939 + $0xe10] sm:$0xff]
      %v4391 = vld [vmem:[%s3939 + $0xe18] sm:$0xff]
      %v4392 = vld [vmem:[%s3939 + $0xe20] sm:$0xff]
      %v4393 = vld [vmem:[%s3939 + $0xe28] sm:$0xff]
      %v4394 = vld [vmem:[%s3939 + $0xe30] sm:$0xff]
      %v4395 = vld [vmem:[%s3939 + $0xe38] sm:$0xff]
      %v4396 = vld [vmem:[%s3939 + $0xe40] sm:$0xff]
      %v4397 = vld [vmem:[%s3939 + $0xe48] sm:$0xff]
      %v4398 = vld [vmem:[%s3939 + $0xe50] sm:$0xff]
      %v4399 = vld [vmem:[%s3939 + $0xe58] sm:$0xff]
      %v4400 = vld [vmem:[%s3939 + $0xe60] sm:$0xff]
      %v4401 = vld [vmem:[%s3939 + $0xe68] sm:$0xff]
      %v4402 = vld [vmem:[%s3939 + $0xe70] sm:$0xff]
      %v4403 = vld [vmem:[%s3939 + $0xe78] sm:$0xff]
      %v4404 = vld [vmem:[%s3939 + $0xe80] sm:$0xff]
      %v4405 = vld [vmem:[%s3939 + $0xe88] sm:$0xff]
      %v4406 = vld [vmem:[%s3939 + $0xe90] sm:$0xff]
      %v4407 = vld [vmem:[%s3939 + $0xe98] sm:$0xff]
      %v4408 = vld [vmem:[%s3939 + $0xea0] sm:$0xff]
      %v4409 = vld [vmem:[%s3939 + $0xea8] sm:$0xff]
      %v4410 = vld [vmem:[%s3939 + $0xeb0] sm:$0xff]
      %v4411 = vld [vmem:[%s3939 + $0xeb8] sm:$0xff]
      %v4412 = vld [vmem:[%s3939 + $0xec0] sm:$0xff]
      %v4413 = vld [vmem:[%s3939 + $0xec8] sm:$0xff]
      %v4414 = vld [vmem:[%s3939 + $0xed0] sm:$0xff]
      %v4415 = vld [vmem:[%s3939 + $0xed8] sm:$0xff]
      %v4416 = vld [vmem:[%s3939 + $0xee0] sm:$0xff]
      %v4417 = vld [vmem:[%s3939 + $0xee8] sm:$0xff]
      %v4418 = vld [vmem:[%s3939 + $0xef0] sm:$0xff]
      %v4419 = vld [vmem:[%s3939 + $0xef8] sm:$0xff]
      %v4420 = vld [vmem:[%s3939 + $0xf00] sm:$0xff]
      %v4421 = vld [vmem:[%s3939 + $0xf08] sm:$0xff]
      %v4422 = vld [vmem:[%s3939 + $0xf10] sm:$0xff]
      %v4423 = vld [vmem:[%s3939 + $0xf18] sm:$0xff]
      %v4424 = vld [vmem:[%s3939 + $0xf20] sm:$0xff]
      %v4425 = vld [vmem:[%s3939 + $0xf28] sm:$0xff]
      %v4426 = vld [vmem:[%s3939 + $0xf30] sm:$0xff]
      %v4427 = vld [vmem:[%s3939 + $0xf38] sm:$0xff]
      %v4428 = vld [vmem:[%s3939 + $0xf40] sm:$0xff]
      %v4429 = vld [vmem:[%s3939 + $0xf48] sm:$0xff]
      %v4430 = vld [vmem:[%s3939 + $0xf50] sm:$0xff]
      %v4431 = vld [vmem:[%s3939 + $0xf58] sm:$0xff]
      %v4432 = vld [vmem:[%s3939 + $0xf60] sm:$0xff]
      %v4433 = vld [vmem:[%s3939 + $0xf68] sm:$0xff]
      %v4434 = vld [vmem:[%s3939 + $0xf70] sm:$0xff]
      %v4435 = vld [vmem:[%s3939 + $0xf78] sm:$0xff]
      %v4436 = vld [vmem:[%s3939 + $0xf80] sm:$0xff]
      %v4437 = vld [vmem:[%s3939 + $0xf88] sm:$0xff]
      %v4438 = vld [vmem:[%s3939 + $0xf90] sm:$0xff]
      %v4439 = vld [vmem:[%s3939 + $0xf98] sm:$0xff]
      %v4440 = vld [vmem:[%s3939 + $0xfa0] sm:$0xff]
      %v4441 = vld [vmem:[%s3939 + $0xfa8] sm:$0xff]
      %v4442 = vld [vmem:[%s3939 + $0xfb0] sm:$0xff]
      %v4443 = vld [vmem:[%s3939 + $0xfb8] sm:$0xff]
      %v4444 = vld [vmem:[%s3939 + $0xfc0] sm:$0xff]
      %v4445 = vld [vmem:[%s3939 + $0xfc8] sm:$0xff]
      %v4446 = vld [vmem:[%s3939 + $0xfd0] sm:$0xff]
      %v4447 = vld [vmem:[%s3939 + $0xfd8] sm:$0xff]
      %v4448 = vld [vmem:[%s3939 + $0xfe0] sm:$0xff]
      %v4449 = vld [vmem:[%s3939 + $0xfe8] sm:$0xff]
      %v4450 = vld [vmem:[%s3939 + $0xff0] sm:$0xff]
      %v4451 = vld [vmem:[%s3939 + $0xff8] sm:$0xff]
      %4452 = vmatprep.subr.mxu0 %v3941
      %4453 = vmatpush1.msra.mxu0 %v3940
      %4454 = vmatprep.subr.mxu0 %v3943
      %4455 = vmatpush1.msra.mxu0 %v3942
      %4456 = vmatprep.subr.mxu0 %v3945
      %4457 = vmatpush1.msra.mxu0 %v3944
      %4458 = vmatprep.subr.mxu0 %v3947
      %4459 = vmatpush1.msra.mxu0 %v3946
      %4460 = vmatprep.subr.mxu0 %v3949
      %4461 = vmatpush1.msra.mxu0 %v3948
      %4462 = vmatprep.subr.mxu0 %v3951
      %4463 = vmatpush1.msra.mxu0 %v3950
      %4464 = vmatprep.subr.mxu0 %v3953
      %4465 = vmatpush1.msra.mxu0 %v3952
      %4466 = vmatprep.subr.mxu0 %v3955
      %4467 = vmatpush1.msra.mxu0 %v3954
      %4468 = vmatprep.subr.mxu0 %v3957
      %4469 = vmatpush1.msra.mxu0 %v3956
      %4470 = vmatprep.subr.mxu0 %v3959
      %4471 = vmatpush1.msra.mxu0 %v3958
      %4472 = vmatprep.subr.mxu0 %v3961
      %4473 = vmatpush1.msra.mxu0 %v3960
      %4474 = vmatprep.subr.mxu0 %v3963
      %4475 = vmatpush1.msra.mxu0 %v3962
      %4476 = vmatprep.subr.mxu0 %v3965
      %4477 = vmatpush1.msra.mxu0 %v3964
      %4478 = vmatprep.subr.mxu0 %v3967
      %4479 = vmatpush1.msra.mxu0 %v3966
      %4480 = vmatprep.subr.mxu0 %v3969
      %4481 = vmatpush1.msra.mxu0 %v3968
      %4482 = vmatprep.subr.mxu0 %v3971
      %4483 = vmatpush1.msra.mxu0 %v3970
      %4484 = vmatprep.subr.mxu0 %v3973
      %4485 = vmatpush1.msra.mxu0 %v3972
      %4486 = vmatprep.subr.mxu0 %v3975
      %4487 = vmatpush1.msra.mxu0 %v3974
      %4488 = vmatprep.subr.mxu0 %v3977
      %4489 = vmatpush1.msra.mxu0 %v3976
      %4490 = vmatprep.subr.mxu0 %v3979
      %4491 = vmatpush1.msra.mxu0 %v3978
      %4492 = vmatprep.subr.mxu0 %v3981
      %4493 = vmatpush1.msra.mxu0 %v3980
      %4494 = vmatprep.subr.mxu0 %v3983
      %4495 = vmatpush1.msra.mxu0 %v3982
      %4496 = vmatprep.subr.mxu0 %v3985
      %4497 = vmatpush1.msra.mxu0 %v3984
      %4498 = vmatprep.subr.mxu0 %v3987
      %4499 = vmatpush1.msra.mxu0 %v3986
      %4500 = vmatprep.subr.mxu0 %v3989
      %4501 = vmatpush1.msra.mxu0 %v3988
      %4502 = vmatprep.subr.mxu0 %v3991
      %4503 = vmatpush1.msra.mxu0 %v3990
      %4504 = vmatprep.subr.mxu0 %v3993
      %4505 = vmatpush1.msra.mxu0 %v3992
      %4506 = vmatprep.subr.mxu0 %v3995
      %4507 = vmatpush1.msra.mxu0 %v3994
      %4508 = vmatprep.subr.mxu0 %v3997
      %4509 = vmatpush1.msra.mxu0 %v3996
      %4510 = vmatprep.subr.mxu0 %v3999
      %4511 = vmatpush1.msra.mxu0 %v3998
      %4512 = vmatprep.subr.mxu0 %v4001
      %4513 = vmatpush1.msra.mxu0 %v4000
      %4514 = vmatprep.subr.mxu0 %v4003
      %4515 = vmatpush1.msra.mxu0 %v4002
      %4516 = vmatprep.mubr.f32.mxu0 %v288
      %4517 = vmatmul.mubr.f32.gmra.mrb[0].mxu0 %v287
      %v4518 = vpop.f32.mrb[0].mxu0
      %v4519 = vadd.f32 0.0, %v4518
      %v4520 = vpop.f32.mrb[0].mxu0
      %v4521 = vadd.f32 0.0, %v4520
      %4522 = vmatprep.mubr.f32.mxu0 %v304
      %4523 = vmatmul.mubr.f32.gmra.mrb[0].mxu0 %v303
      %v4524 = vpop.f32.mrb[0].mxu0
      %v4525 = vadd.f32 0.0, %v4524
      %v4526 = vpop.f32.mrb[0].mxu0
      %v4527 = vadd.f32 0.0, %v4526
      %4528 = vdwg.mxu0
      %4529 = vmatprep.subr.mxu0 %v4005
      %4530 = vmatpush1.msra.mxu0 %v4004
      %4531 = vmatprep.subr.mxu0 %v4007
      %4532 = vmatpush1.msra.mxu0 %v4006
      %4533 = vmatprep.subr.mxu0 %v4009
      %4534 = vmatpush1.msra.mxu0 %v4008
      %4535 = vmatprep.subr.mxu0 %v4011
      %4536 = vmatpush1.msra.mxu0 %v4010
      %4537 = vmatprep.subr.mxu0 %v4013
      %4538 = vmatpush1.msra.mxu0 %v4012
      %4539 = vmatprep.subr.mxu0 %v4015
      %4540 = vmatpush1.msra.mxu0 %v4014
      %4541 = vmatprep.subr.mxu0 %v4017
      %4542 = vmatpush1.msra.mxu0 %v4016
      %4543 = vmatprep.subr.mxu0 %v4019
      %4544 = vmatpush1.msra.mxu0 %v4018
      %4545 = vmatprep.subr.mxu0 %v4021
      %4546 = vmatpush1.msra.mxu0 %v4020
      %4547 = vmatprep.subr.mxu0 %v4023
      %4548 = vmatpush1.msra.mxu0 %v4022
      %4549 = vmatprep.subr.mxu0 %v4025
      %4550 = vmatpush1.msra.mxu0 %v4024
      %4551 = vmatprep.subr.mxu0 %v4027
      %4552 = vmatpush1.msra.mxu0 %v4026
      %4553 = vmatprep.subr.mxu0 %v4029
      %4554 = vmatpush1.msra.mxu0 %v4028
      %4555 = vmatprep.subr.mxu0 %v4031
      %4556 = vmatpush1.msra.mxu0 %v4030
      %4557 = vmatprep.subr.mxu0 %v4033
      %4558 = vmatpush1.msra.mxu0 %v4032
      %4559 = vmatprep.subr.mxu0 %v4035
      %4560 = vmatpush1.msra.mxu0 %v4034
      %4561 = vmatprep.subr.mxu0 %v4037
      %4562 = vmatpush1.msra.mxu0 %v4036
      %4563 = vmatprep.subr.mxu0 %v4039
      %4564 = vmatpush1.msra.mxu0 %v4038
      %4565 = vmatprep.subr.mxu0 %v4041
      %4566 = vmatpush1.msra.mxu0 %v4040
      %4567 = vmatprep.subr.mxu0 %v4043
      %4568 = vmatpush1.msra.mxu0 %v4042
      %4569 = vmatprep.subr.mxu0 %v4045
      %4570 = vmatpush1.msra.mxu0 %v4044
      %4571 = vmatprep.subr.mxu0 %v4047
      %4572 = vmatpush1.msra.mxu0 %v4046
      %4573 = vmatprep.subr.mxu0 %v4049
      %4574 = vmatpush1.msra.mxu0 %v4048
      %4575 = vmatprep.subr.mxu0 %v4051
      %4576 = vmatpush1.msra.mxu0 %v4050
      %4577 = vmatprep.subr.mxu0 %v4053
      %4578 = vmatpush1.msra.mxu0 %v4052
      %4579 = vmatprep.subr.mxu0 %v4055
      %4580 = vmatpush1.msra.mxu0 %v4054
      %4581 = vmatprep.subr.mxu0 %v4057
      %4582 = vmatpush1.msra.mxu0 %v4056
      %4583 = vmatprep.subr.mxu0 %v4059
      %4584 = vmatpush1.msra.mxu0 %v4058
      %4585 = vmatprep.subr.mxu0 %v4061
      %4586 = vmatpush1.msra.mxu0 %v4060
      %4587 = vmatprep.subr.mxu0 %v4063
      %4588 = vmatpush1.msra.mxu0 %v4062
      %4589 = vmatprep.subr.mxu0 %v4065
      %4590 = vmatpush1.msra.mxu0 %v4064
      %4591 = vmatprep.subr.mxu0 %v4067
      %4592 = vmatpush1.msra.mxu0 %v4066
      %4593 = vmatprep.mubr.f32.mxu0 %v290
      %4594 = vmatmul.mubr.f32.gmra.mrb[0].mxu0 %v289
      %v4595 = vpop.f32.mrb[0].mxu0
      %v4596 = vadd.f32 %v4519, %v4595
      %v4597 = vpop.f32.mrb[0].mxu0
      %v4598 = vadd.f32 %v4521, %v4597
      %4599 = vmatprep.mubr.f32.mxu0 %v306
      %4600 = vmatmul.mubr.f32.gmra.mrb[0].mxu0 %v305
      %v4601 = vpop.f32.mrb[0].mxu0
      %v4602 = vadd.f32 %v4525, %v4601
      %v4603 = vpop.f32.mrb[0].mxu0
      %v4604 = vadd.f32 %v4527, %v4603
      %4605 = vdwg.mxu0
      %4606 = vmatprep.subr.mxu0 %v4069
      %4607 = vmatpush1.msra.mxu0 %v4068
      %4608 = vmatprep.subr.mxu0 %v4071
      %4609 = vmatpush1.msra.mxu0 %v4070
      %4610 = vmatprep.subr.mxu0 %v4073
      %4611 = vmatpush1.msra.mxu0 %v4072
      %4612 = vmatprep.subr.mxu0 %v4075
      %4613 = vmatpush1.msra.mxu0 %v4074
      %4614 = vmatprep.subr.mxu0 %v4077
      %4615 = vmatpush1.msra.mxu0 %v4076
      %4616 = vmatprep.subr.mxu0 %v4079
      %4617 = vmatpush1.msra.mxu0 %v4078
      %4618 = vmatprep.subr.mxu0 %v4081
      %4619 = vmatpush1.msra.mxu0 %v4080
      %4620 = vmatprep.subr.mxu0 %v4083
      %4621 = vmatpush1.msra.mxu0 %v4082
      %4622 = vmatprep.subr.mxu0 %v4085
      %4623 = vmatpush1.msra.mxu0 %v4084
      %4624 = vmatprep.subr.mxu0 %v4087
      %4625 = vmatpush1.msra.mxu0 %v4086
      %4626 = vmatprep.subr.mxu0 %v4089
      %4627 = vmatpush1.msra.mxu0 %v4088
      %4628 = vmatprep.subr.mxu0 %v4091
      %4629 = vmatpush1.msra.mxu0 %v4090
      %4630 = vmatprep.subr.mxu0 %v4093
      %4631 = vmatpush1.msra.mxu0 %v4092
      %4632 = vmatprep.subr.mxu0 %v4095
      %4633 = vmatpush1.msra.mxu0 %v4094
      %4634 = vmatprep.subr.mxu0 %v4097
      %4635 = vmatpush1.msra.mxu0 %v4096
      %4636 = vmatprep.subr.mxu0 %v4099
      %4637 = vmatpush1.msra.mxu0 %v4098
      %4638 = vmatprep.subr.mxu0 %v4101
      %4639 = vmatpush1.msra.mxu0 %v4100
      %4640 = vmatprep.subr.mxu0 %v4103
      %4641 = vmatpush1.msra.mxu0 %v4102
      %4642 = vmatprep.subr.mxu0 %v4105
      %4643 = vmatpush1.msra.mxu0 %v4104
      %4644 = vmatprep.subr.mxu0 %v4107
      %4645 = vmatpush1.msra.mxu0 %v4106
      %4646 = vmatprep.subr.mxu0 %v4109
      %4647 = vmatpush1.msra.mxu0 %v4108
      %4648 = vmatprep.subr.mxu0 %v4111
      %4649 = vmatpush1.msra.mxu0 %v4110
      %4650 = vmatprep.subr.mxu0 %v4113
      %4651 = vmatpush1.msra.mxu0 %v4112
      %4652 = vmatprep.subr.mxu0 %v4115
      %4653 = vmatpush1.msra.mxu0 %v4114
      %4654 = vmatprep.subr.mxu0 %v4117
      %4655 = vmatpush1.msra.mxu0 %v4116
      %4656 = vmatprep.subr.mxu0 %v4119
      %4657 = vmatpush1.msra.mxu0 %v4118
      %4658 = vmatprep.subr.mxu0 %v4121
      %4659 = vmatpush1.msra.mxu0 %v4120
      %4660 = vmatprep.subr.mxu0 %v4123
      %4661 = vmatpush1.msra.mxu0 %v4122
      %4662 = vmatprep.subr.mxu0 %v4125
      %4663 = vmatpush1.msra.mxu0 %v4124
      %4664 = vmatprep.subr.mxu0 %v4127
      %4665 = vmatpush1.msra.mxu0 %v4126
      %4666 = vmatprep.subr.mxu0 %v4129
      %4667 = vmatpush1.msra.mxu0 %v4128
      %4668 = vmatprep.subr.mxu0 %v4131
      %4669 = vmatpush1.msra.mxu0 %v4130
      %4670 = vmatprep.mubr.f32.mxu0 %v292
      %4671 = vmatmul.mubr.f32.gmra.mrb[0].mxu0 %v291
      %v4672 = vpop.f32.mrb[0].mxu0
      %v4673 = vadd.f32 %v4596, %v4672
      %v4674 = vpop.f32.mrb[0].mxu0
      %v4675 = vadd.f32 %v4598, %v4674
      %4676 = vmatprep.mubr.f32.mxu0 %v308
      %4677 = vmatmul.mubr.f32.gmra.mrb[0].mxu0 %v307
      %v4678 = vpop.f32.mrb[0].mxu0
      %v4679 = vadd.f32 %v4602, %v4678
      %v4680 = vpop.f32.mrb[0].mxu0
      %v4681 = vadd.f32 %v4604, %v4680
      %4682 = vdwg.mxu0
      %4683 = vmatprep.subr.mxu0 %v4133
      %4684 = vmatpush1.msra.mxu0 %v4132
      %4685 = vmatprep.subr.mxu0 %v4135
      %4686 = vmatpush1.msra.mxu0 %v4134
      %4687 = vmatprep.subr.mxu0 %v4137
      %4688 = vmatpush1.msra.mxu0 %v4136
      %4689 = vmatprep.subr.mxu0 %v4139
      %4690 = vmatpush1.msra.mxu0 %v4138
      %4691 = vmatprep.subr.mxu0 %v4141
      %4692 = vmatpush1.msra.mxu0 %v4140
      %4693 = vmatprep.subr.mxu0 %v4143
      %4694 = vmatpush1.msra.mxu0 %v4142
      %4695 = vmatprep.subr.mxu0 %v4145
      %4696 = vmatpush1.msra.mxu0 %v4144
      %4697 = vmatprep.subr.mxu0 %v4147
      %4698 = vmatpush1.msra.mxu0 %v4146
      %4699 = vmatprep.subr.mxu0 %v4149
      %4700 = vmatpush1.msra.mxu0 %v4148
      %4701 = vmatprep.subr.mxu0 %v4151
      %4702 = vmatpush1.msra.mxu0 %v4150
      %4703 = vmatprep.subr.mxu0 %v4153
      %4704 = vmatpush1.msra.mxu0 %v4152
      %4705 = vmatprep.subr.mxu0 %v4155
      %4706 = vmatpush1.msra.mxu0 %v4154
      %4707 = vmatprep.subr.mxu0 %v4157
      %4708 = vmatpush1.msra.mxu0 %v4156
      %4709 = vmatprep.subr.mxu0 %v4159
      %4710 = vmatpush1.msra.mxu0 %v4158
      %4711 = vmatprep.subr.mxu0 %v4161
      %4712 = vmatpush1.msra.mxu0 %v4160
      %4713 = vmatprep.subr.mxu0 %v4163
      %4714 = vmatpush1.msra.mxu0 %v4162
      %4715 = vmatprep.subr.mxu0 %v4165
      %4716 = vmatpush1.msra.mxu0 %v4164
      %4717 = vmatprep.subr.mxu0 %v4167
      %4718 = vmatpush1.msra.mxu0 %v4166
      %4719 = vmatprep.subr.mxu0 %v4169
      %4720 = vmatpush1.msra.mxu0 %v4168
      %4721 = vmatprep.subr.mxu0 %v4171
      %4722 = vmatpush1.msra.mxu0 %v4170
      %4723 = vmatprep.subr.mxu0 %v4173
      %4724 = vmatpush1.msra.mxu0 %v4172
      %4725 = vmatprep.subr.mxu0 %v4175
      %4726 = vmatpush1.msra.mxu0 %v4174
      %4727 = vmatprep.subr.mxu0 %v4177
      %4728 = vmatpush1.msra.mxu0 %v4176
      %4729 = vmatprep.subr.mxu0 %v4179
      %4730 = vmatpush1.msra.mxu0 %v4178
      %4731 = vmatprep.subr.mxu0 %v4181
      %4732 = vmatpush1.msra.mxu0 %v4180
      %4733 = vmatprep.subr.mxu0 %v4183
      %4734 = vmatpush1.msra.mxu0 %v4182
      %4735 = vmatprep.subr.mxu0 %v4185
      %4736 = vmatpush1.msra.mxu0 %v4184
      %4737 = vmatprep.subr.mxu0 %v4187
      %4738 = vmatpush1.msra.mxu0 %v4186
      %4739 = vmatprep.subr.mxu0 %v4189
      %4740 = vmatpush1.msra.mxu0 %v4188
      %4741 = vmatprep.subr.mxu0 %v4191
      %4742 = vmatpush1.msra.mxu0 %v4190
      %4743 = vmatprep.subr.mxu0 %v4193
      %4744 = vmatpush1.msra.mxu0 %v4192
      %4745 = vmatprep.subr.mxu0 %v4195
      %4746 = vmatpush1.msra.mxu0 %v4194
      %4747 = vmatprep.mubr.f32.mxu0 %v294
      %4748 = vmatmul.mubr.f32.gmra.mrb[0].mxu0 %v293
      %v4749 = vpop.f32.mrb[0].mxu0
      %v4750 = vadd.f32 %v4673, %v4749
      %v4751 = vpop.f32.mrb[0].mxu0
      %v4752 = vadd.f32 %v4675, %v4751
      %4753 = vmatprep.mubr.f32.mxu0 %v310
      %4754 = vmatmul.mubr.f32.gmra.mrb[0].mxu0 %v309
      %v4755 = vpop.f32.mrb[0].mxu0
      %v4756 = vadd.f32 %v4679, %v4755
      %v4757 = vpop.f32.mrb[0].mxu0
      %v4758 = vadd.f32 %v4681, %v4757
      %4759 = vdwg.mxu0
      %4760 = vmatprep.subr.mxu0 %v4197
      %4761 = vmatpush1.msra.mxu0 %v4196
      %4762 = vmatprep.subr.mxu0 %v4199
      %4763 = vmatpush1.msra.mxu0 %v4198
      %4764 = vmatprep.subr.mxu0 %v4201
      %4765 = vmatpush1.msra.mxu0 %v4200
      %4766 = vmatprep.subr.mxu0 %v4203
      %4767 = vmatpush1.msra.mxu0 %v4202
      %4768 = vmatprep.subr.mxu0 %v4205
      %4769 = vmatpush1.msra.mxu0 %v4204
      %4770 = vmatprep.subr.mxu0 %v4207
      %4771 = vmatpush1.msra.mxu0 %v4206
      %4772 = vmatprep.subr.mxu0 %v4209
      %4773 = vmatpush1.msra.mxu0 %v4208
      %4774 = vmatprep.subr.mxu0 %v4211
      %4775 = vmatpush1.msra.mxu0 %v4210
      %4776 = vmatprep.subr.mxu0 %v4213
      %4777 = vmatpush1.msra.mxu0 %v4212
      %4778 = vmatprep.subr.mxu0 %v4215
      %4779 = vmatpush1.msra.mxu0 %v4214
      %4780 = vmatprep.subr.mxu0 %v4217
      %4781 = vmatpush1.msra.mxu0 %v4216
      %4782 = vmatprep.subr.mxu0 %v4219
      %4783 = vmatpush1.msra.mxu0 %v4218
      %4784 = vmatprep.subr.mxu0 %v4221
      %4785 = vmatpush1.msra.mxu0 %v4220
      %4786 = vmatprep.subr.mxu0 %v4223
      %4787 = vmatpush1.msra.mxu0 %v4222
      %4788 = vmatprep.subr.mxu0 %v4225
      %4789 = vmatpush1.msra.mxu0 %v4224
      %4790 = vmatprep.subr.mxu0 %v4227
      %4791 = vmatpush1.msra.mxu0 %v4226
      %4792 = vmatprep.subr.mxu0 %v4229
      %4793 = vmatpush1.msra.mxu0 %v4228
      %4794 = vmatprep.subr.mxu0 %v4231
      %4795 = vmatpush1.msra.mxu0 %v4230
      %4796 = vmatprep.subr.mxu0 %v4233
      %4797 = vmatpush1.msra.mxu0 %v4232
      %4798 = vmatprep.subr.mxu0 %v4235
      %4799 = vmatpush1.msra.mxu0 %v4234
      %4800 = vmatprep.subr.mxu0 %v4237
      %4801 = vmatpush1.msra.mxu0 %v4236
      %4802 = vmatprep.subr.mxu0 %v4239
      %4803 = vmatpush1.msra.mxu0 %v4238
      %4804 = vmatprep.subr.mxu0 %v4241
      %4805 = vmatpush1.msra.mxu0 %v4240
      %4806 = vmatprep.subr.mxu0 %v4243
      %4807 = vmatpush1.msra.mxu0 %v4242
      %4808 = vmatprep.subr.mxu0 %v4245
      %4809 = vmatpush1.msra.mxu0 %v4244
      %4810 = vmatprep.subr.mxu0 %v4247
      %4811 = vmatpush1.msra.mxu0 %v4246
      %4812 = vmatprep.subr.mxu0 %v4249
      %4813 = vmatpush1.msra.mxu0 %v4248
      %4814 = vmatprep.subr.mxu0 %v4251
      %4815 = vmatpush1.msra.mxu0 %v4250
      %4816 = vmatprep.subr.mxu0 %v4253
      %4817 = vmatpush1.msra.mxu0 %v4252
      %4818 = vmatprep.subr.mxu0 %v4255
      %4819 = vmatpush1.msra.mxu0 %v4254
      %4820 = vmatprep.subr.mxu0 %v4257
      %4821 = vmatpush1.msra.mxu0 %v4256
      %4822 = vmatprep.subr.mxu0 %v4259
      %4823 = vmatpush1.msra.mxu0 %v4258
      %4824 = vmatprep.mubr.f32.mxu0 %v296
      %4825 = vmatmul.mubr.f32.gmra.mrb[0].mxu0 %v295
      %v4826 = vpop.f32.mrb[0].mxu0
      %v4827 = vadd.f32 %v4750, %v4826
      %v4828 = vpop.f32.mrb[0].mxu0
      %v4829 = vadd.f32 %v4752, %v4828
      %4830 = vmatprep.mubr.f32.mxu0 %v312
      %4831 = vmatmul.mubr.f32.gmra.mrb[0].mxu0 %v311
      %v4832 = vpop.f32.mrb[0].mxu0
      %v4833 = vadd.f32 %v4756, %v4832
      %v4834 = vpop.f32.mrb[0].mxu0
      %v4835 = vadd.f32 %v4758, %v4834
      %4836 = vdwg.mxu0
      %4837 = vmatprep.subr.mxu0 %v4261
      %4838 = vmatpush1.msra.mxu0 %v4260
      %4839 = vmatprep.subr.mxu0 %v4263
      %4840 = vmatpush1.msra.mxu0 %v4262
      %4841 = vmatprep.subr.mxu0 %v4265
      %4842 = vmatpush1.msra.mxu0 %v4264
      %4843 = vmatprep.subr.mxu0 %v4267
      %4844 = vmatpush1.msra.mxu0 %v4266
      %4845 = vmatprep.subr.mxu0 %v4269
      %4846 = vmatpush1.msra.mxu0 %v4268
      %4847 = vmatprep.subr.mxu0 %v4271
      %4848 = vmatpush1.msra.mxu0 %v4270
      %4849 = vmatprep.subr.mxu0 %v4273
      %4850 = vmatpush1.msra.mxu0 %v4272
      %4851 = vmatprep.subr.mxu0 %v4275
      %4852 = vmatpush1.msra.mxu0 %v4274
      %4853 = vmatprep.subr.mxu0 %v4277
      %4854 = vmatpush1.msra.mxu0 %v4276
      %4855 = vmatprep.subr.mxu0 %v4279
      %4856 = vmatpush1.msra.mxu0 %v4278
      %4857 = vmatprep.subr.mxu0 %v4281
      %4858 = vmatpush1.msra.mxu0 %v4280
      %4859 = vmatprep.subr.mxu0 %v4283
      %4860 = vmatpush1.msra.mxu0 %v4282
      %4861 = vmatprep.subr.mxu0 %v4285
      %4862 = vmatpush1.msra.mxu0 %v4284
      %4863 = vmatprep.subr.mxu0 %v4287
      %4864 = vmatpush1.msra.mxu0 %v4286
      %4865 = vmatprep.subr.mxu0 %v4289
      %4866 = vmatpush1.msra.mxu0 %v4288
      %4867 = vmatprep.subr.mxu0 %v4291
      %4868 = vmatpush1.msra.mxu0 %v4290
      %4869 = vmatprep.subr.mxu0 %v4293
      %4870 = vmatpush1.msra.mxu0 %v4292
      %4871 = vmatprep.subr.mxu0 %v4295
      %4872 = vmatpush1.msra.mxu0 %v4294
      %4873 = vmatprep.subr.mxu0 %v4297
      %4874 = vmatpush1.msra.mxu0 %v4296
      %4875 = vmatprep.subr.mxu0 %v4299
      %4876 = vmatpush1.msra.mxu0 %v4298
      %4877 = vmatprep.subr.mxu0 %v4301
      %4878 = vmatpush1.msra.mxu0 %v4300
      %4879 = vmatprep.subr.mxu0 %v4303
      %4880 = vmatpush1.msra.mxu0 %v4302
      %4881 = vmatprep.subr.mxu0 %v4305
      %4882 = vmatpush1.msra.mxu0 %v4304
      %4883 = vmatprep.subr.mxu0 %v4307
      %4884 = vmatpush1.msra.mxu0 %v4306
      %4885 = vmatprep.subr.mxu0 %v4309
      %4886 = vmatpush1.msra.mxu0 %v4308
      %4887 = vmatprep.subr.mxu0 %v4311
      %4888 = vmatpush1.msra.mxu0 %v4310
      %4889 = vmatprep.subr.mxu0 %v4313
      %4890 = vmatpush1.msra.mxu0 %v4312
      %4891 = vmatprep.subr.mxu0 %v4315
      %4892 = vmatpush1.msra.mxu0 %v4314
      %4893 = vmatprep.subr.mxu0 %v4317
      %4894 = vmatpush1.msra.mxu0 %v4316
      %4895 = vmatprep.subr.mxu0 %v4319
      %4896 = vmatpush1.msra.mxu0 %v4318
      %4897 = vmatprep.subr.mxu0 %v4321
      %4898 = vmatpush1.msra.mxu0 %v4320
      %4899 = vmatprep.subr.mxu0 %v4323
      %4900 = vmatpush1.msra.mxu0 %v4322
      %4901 = vmatprep.mubr.f32.mxu0 %v298
      %4902 = vmatmul.mubr.f32.gmra.mrb[0].mxu0 %v297
      %v4903 = vpop.f32.mrb[0].mxu0
      %v4904 = vadd.f32 %v4827, %v4903
      %v4905 = vpop.f32.mrb[0].mxu0
      %v4906 = vadd.f32 %v4829, %v4905
      %4907 = vmatprep.mubr.f32.mxu0 %v314
      %4908 = vmatmul.mubr.f32.gmra.mrb[0].mxu0 %v313
      %v4909 = vpop.f32.mrb[0].mxu0
      %v4910 = vadd.f32 %v4833, %v4909
      %v4911 = vpop.f32.mrb[0].mxu0
      %v4912 = vadd.f32 %v4835, %v4911
      %4913 = vdwg.mxu0
      %4914 = vmatprep.subr.mxu0 %v4325
      %4915 = vmatpush1.msra.mxu0 %v4324
      %4916 = vmatprep.subr.mxu0 %v4327
      %4917 = vmatpush1.msra.mxu0 %v4326
      %4918 = vmatprep.subr.mxu0 %v4329
      %4919 = vmatpush1.msra.mxu0 %v4328
      %4920 = vmatprep.subr.mxu0 %v4331
      %4921 = vmatpush1.msra.mxu0 %v4330
      %4922 = vmatprep.subr.mxu0 %v4333
      %4923 = vmatpush1.msra.mxu0 %v4332
      %4924 = vmatprep.subr.mxu0 %v4335
      %4925 = vmatpush1.msra.mxu0 %v4334
      %4926 = vmatprep.subr.mxu0 %v4337
      %4927 = vmatpush1.msra.mxu0 %v4336
      %4928 = vmatprep.subr.mxu0 %v4339
      %4929 = vmatpush1.msra.mxu0 %v4338
      %4930 = vmatprep.subr.mxu0 %v4341
      %4931 = vmatpush1.msra.mxu0 %v4340
      %4932 = vmatprep.subr.mxu0 %v4343
      %4933 = vmatpush1.msra.mxu0 %v4342
      %4934 = vmatprep.subr.mxu0 %v4345
      %4935 = vmatpush1.msra.mxu0 %v4344
      %4936 = vmatprep.subr.mxu0 %v4347
      %4937 = vmatpush1.msra.mxu0 %v4346
      %4938 = vmatprep.subr.mxu0 %v4349
      %4939 = vmatpush1.msra.mxu0 %v4348
      %4940 = vmatprep.subr.mxu0 %v4351
      %4941 = vmatpush1.msra.mxu0 %v4350
      %4942 = vmatprep.subr.mxu0 %v4353
      %4943 = vmatpush1.msra.mxu0 %v4352
      %4944 = vmatprep.subr.mxu0 %v4355
      %4945 = vmatpush1.msra.mxu0 %v4354
      %4946 = vmatprep.subr.mxu0 %v4357
      %4947 = vmatpush1.msra.mxu0 %v4356
      %4948 = vmatprep.subr.mxu0 %v4359
      %4949 = vmatpush1.msra.mxu0 %v4358
      %4950 = vmatprep.subr.mxu0 %v4361
      %4951 = vmatpush1.msra.mxu0 %v4360
      %4952 = vmatprep.subr.mxu0 %v4363
      %4953 = vmatpush1.msra.mxu0 %v4362
      %4954 = vmatprep.subr.mxu0 %v4365
      %4955 = vmatpush1.msra.mxu0 %v4364
      %4956 = vmatprep.subr.mxu0 %v4367
      %4957 = vmatpush1.msra.mxu0 %v4366
      %4958 = vmatprep.subr.mxu0 %v4369
      %4959 = vmatpush1.msra.mxu0 %v4368
      %4960 = vmatprep.subr.mxu0 %v4371
      %4961 = vmatpush1.msra.mxu0 %v4370
      %4962 = vmatprep.subr.mxu0 %v4373
      %4963 = vmatpush1.msra.mxu0 %v4372
      %4964 = vmatprep.subr.mxu0 %v4375
      %4965 = vmatpush1.msra.mxu0 %v4374
      %4966 = vmatprep.subr.mxu0 %v4377
      %4967 = vmatpush1.msra.mxu0 %v4376
      %4968 = vmatprep.subr.mxu0 %v4379
      %4969 = vmatpush1.msra.mxu0 %v4378
      %4970 = vmatprep.subr.mxu0 %v4381
      %4971 = vmatpush1.msra.mxu0 %v4380
      %4972 = vmatprep.subr.mxu0 %v4383
      %4973 = vmatpush1.msra.mxu0 %v4382
      %4974 = vmatprep.subr.mxu0 %v4385
      %4975 = vmatpush1.msra.mxu0 %v4384
      %4976 = vmatprep.subr.mxu0 %v4387
      %4977 = vmatpush1.msra.mxu0 %v4386
      %4978 = vmatprep.mubr.f32.mxu0 %v300
      %4979 = vmatmul.mubr.f32.gmra.mrb[0].mxu0 %v299
      %v4980 = vpop.f32.mrb[0].mxu0
      %v4981 = vadd.f32 %v4904, %v4980
      %v4982 = vpop.f32.mrb[0].mxu0
      %v4983 = vadd.f32 %v4906, %v4982
      %4984 = vmatprep.mubr.f32.mxu0 %v316
      %4985 = vmatmul.mubr.f32.gmra.mrb[0].mxu0 %v315
      %v4986 = vpop.f32.mrb[0].mxu0
      %v4987 = vadd.f32 %v4910, %v4986
      %v4988 = vpop.f32.mrb[0].mxu0
      %v4989 = vadd.f32 %v4912, %v4988
      %4990 = vdwg.mxu0
      %4991 = vmatprep.subr.mxu0 %v4389
      %4992 = vmatpush1.msra.mxu0 %v4388
      %4993 = vmatprep.subr.mxu0 %v4391
      %4994 = vmatpush1.msra.mxu0 %v4390
      %4995 = vmatprep.subr.mxu0 %v4393
      %4996 = vmatpush1.msra.mxu0 %v4392
      %4997 = vmatprep.subr.mxu0 %v4395
      %4998 = vmatpush1.msra.mxu0 %v4394
      %4999 = vmatprep.subr.mxu0 %v4397
      %5000 = vmatpush1.msra.mxu0 %v4396
      %5001 = vmatprep.subr.mxu0 %v4399
      %5002 = vmatpush1.msra.mxu0 %v4398
      %5003 = vmatprep.subr.mxu0 %v4401
      %5004 = vmatpush1.msra.mxu0 %v4400
      %5005 = vmatprep.subr.mxu0 %v4403
      %5006 = vmatpush1.msra.mxu0 %v4402
      %5007 = vmatprep.subr.mxu0 %v4405
      %5008 = vmatpush1.msra.mxu0 %v4404
      %5009 = vmatprep.subr.mxu0 %v4407
      %5010 = vmatpush1.msra.mxu0 %v4406
      %5011 = vmatprep.subr.mxu0 %v4409
      %5012 = vmatpush1.msra.mxu0 %v4408
      %5013 = vmatprep.subr.mxu0 %v4411
      %5014 = vmatpush1.msra.mxu0 %v4410
      %5015 = vmatprep.subr.mxu0 %v4413
      %5016 = vmatpush1.msra.mxu0 %v4412
      %5017 = vmatprep.subr.mxu0 %v4415
      %5018 = vmatpush1.msra.mxu0 %v4414
      %5019 = vmatprep.subr.mxu0 %v4417
      %5020 = vmatpush1.msra.mxu0 %v4416
      %5021 = vmatprep.subr.mxu0 %v4419
      %5022 = vmatpush1.msra.mxu0 %v4418
      %5023 = vmatprep.subr.mxu0 %v4421
      %5024 = vmatpush1.msra.mxu0 %v4420
      %5025 = vmatprep.subr.mxu0 %v4423
      %5026 = vmatpush1.msra.mxu0 %v4422
      %5027 = vmatprep.subr.mxu0 %v4425
      %5028 = vmatpush1.msra.mxu0 %v4424
      %5029 = vmatprep.subr.mxu0 %v4427
      %5030 = vmatpush1.msra.mxu0 %v4426
      %5031 = vmatprep.subr.mxu0 %v4429
      %5032 = vmatpush1.msra.mxu0 %v4428
      %5033 = vmatprep.subr.mxu0 %v4431
      %5034 = vmatpush1.msra.mxu0 %v4430
      %5035 = vmatprep.subr.mxu0 %v4433
      %5036 = vmatpush1.msra.mxu0 %v4432
      %5037 = vmatprep.subr.mxu0 %v4435
      %5038 = vmatpush1.msra.mxu0 %v4434
      %5039 = vmatprep.subr.mxu0 %v4437
      %5040 = vmatpush1.msra.mxu0 %v4436
      %5041 = vmatprep.subr.mxu0 %v4439
      %5042 = vmatpush1.msra.mxu0 %v4438
      %5043 = vmatprep.subr.mxu0 %v4441
      %5044 = vmatpush1.msra.mxu0 %v4440
      %5045 = vmatprep.subr.mxu0 %v4443
      %5046 = vmatpush1.msra.mxu0 %v4442
      %5047 = vmatprep.subr.mxu0 %v4445
      %5048 = vmatpush1.msra.mxu0 %v4444
      %5049 = vmatprep.subr.mxu0 %v4447
      %5050 = vmatpush1.msra.mxu0 %v4446
      %5051 = vmatprep.subr.mxu0 %v4449
      %5052 = vmatpush1.msra.mxu0 %v4448
      %5053 = vmatprep.subr.mxu0 %v4451
      %5054 = vmatpush1.msra.mxu0 %v4450
      %5055 = vmatprep.mubr.f32.mxu0 %v302
      %5056 = vmatmul.mubr.f32.gmra.mrb[0].mxu0 %v301
      %v5057 = vpop.f32.mrb[0].mxu0
      %v5058 = vadd.f32 %v4981, %v5057
      %v5059 = vpop.f32.mrb[0].mxu0
      %v5060 = vadd.f32 %v4983, %v5059
      %5061 = vmatprep.mubr.f32.mxu0 %v318
      %5062 = vmatmul.mubr.f32.gmra.mrb[0].mxu0 %v317
      %v5063 = vpop.f32.mrb[0].mxu0
      %v5064 = vadd.f32 %v4987, %v5063
      %v5065 = vpop.f32.mrb[0].mxu0
      %v5066 = vadd.f32 %v4989, %v5065
      %5067 = vdwg.mxu0
      %v5068 = vadd.f32 %v5058, %v1452
      %v5069 = vadd.f32 %v5060, %v1452
      %v5070 = vsel %vm1456, %v5068, 0.0
      %v5071 = vsel %vm1458, %v5069, 0.0
      %v5072 = vadd.f32 %v5070, %v5071
      %5073 = vadd.xlane.f32.xlu0 %v5072
      %v5074 = vpop.xlane.xlu0 %5073
      %v5075 = vmul.f32 %v5074, 0.0051020407
      %v5076 = vmul.f32 %v5068, %v5075
      %v5077 = vmul.f32 %v5069, %v5075
      %v5078 = vsel %vm1456, %v5076, 0.0
      %v5079 = vrot.slane %v5078, 4
      %v5080 = vadd.f32 %v5078, %v5079
      %v5081 = vrot.slane %v5080, 2
      %v5082 = vadd.f32 %v5080, %v5081
      %v5083 = vrot.slane %v5082, 1
      %v5084 = vadd.f32 %v5082, %v5083
      %v5085 = vsel %vm1458, %v5077, 0.0
      %v5086 = vrot.slane %v5085, 4
      %v5087 = vadd.f32 %v5085, %v5086
      %v5088 = vrot.slane %v5087, 2
      %v5089 = vadd.f32 %v5087, %v5088
      %v5090 = vrot.slane %v5089, 1
      %v5091 = vadd.f32 %v5089, %v5090
      %v5092 = vmul.f32 %v5084, 0.25
      %v5093 = vmul.f32 %v5091, 0.25
      %v5094 = vmul.f32 %v5092, %v5064
      %v5095 = vmul.f32 %v5093, %v5066
      %v5098 = vrot.slane %v5094, 4
      %v5099 = vrot.slane %v5095, 4
      %v5102 = vadd.f32 %v5058, %v5098
      %v5103 = vadd.f32 %v5060, %v5099
      %v5104 = vsel %vm1492, %v5102, 0.0
      %v5105 = vsel %vm1494, %v5103, 0.0
      %v5106 = vadd.f32 %v5104, %v5105
      %5107 = vadd.xlane.f32.xlu0 %v5106
      %v5108 = vpop.xlane.xlu0 %5107
      %v5109 = vmul.f32 %v5108, 0.0051020407
      %v5110 = vadd.f32 %v5109, %v1501
      %v5113 = vcombine.low %v5068, %v5069
      %s5115 = scalar_lea.vmem %s273, 24
      %5116 = vst.msk [vmem:[%s5115] sm:$0xff] %vm1508, %v5113
      %v5119 = vcombine.low %v5092, %v5093
      %v5121 = vunpack.c.l.s4 1966171168
      %v5122 = vunpack.c.0.s8 %v5121
      %v5123 = vlaneseq
      %v5124 = vshrl.u32 %v5123, 7
      %v5125 = vsub.s32 %v5122, %v5124
      %v5126 = vrot.slane %v5119, %v5125
      %v5128 = vunpack.c.l.s4 1966171168
      %v5129 = vunpack.c.0.s8 %v5128
      %v5130 = vlaneseq
      %v5131 = vshrl.u32 %v5130, 7
      %v5132 = vsub.s32 %v5129, %v5131
      %v5133 = vrot.slane %v5126, %v5132
      %s5135 = scalar_lea.vmem %s279, 6
      %5136 = vst.msk [vmem:[%s5135] sm:$0x3] %vm1531, %v5133
      %s5137 = scalar_lea.vmem %s285, 24
      %5138 = vst.msk [vmem:[%s5137] sm:$0xf] %vm1533, %v5075
      %5139 = vst.msk [vmem:[%s5137] sm:$0xf0] %vm1535, %v5110
      %s5140 = scalar_lea.vmem %s266, 16384
      %v5141 = vld [vmem:[%s5140] sm:$0xff]
      %v5142 = vld [vmem:[%s5140 + $0x8] sm:$0xff]
      %v5143 = vld [vmem:[%s5140 + $0x10] sm:$0xff]
      %v5144 = vld [vmem:[%s5140 + $0x18] sm:$0xff]
      %v5145 = vld [vmem:[%s5140 + $0x20] sm:$0xff]
      %v5146 = vld [vmem:[%s5140 + $0x28] sm:$0xff]
      %v5147 = vld [vmem:[%s5140 + $0x30] sm:$0xff]
      %v5148 = vld [vmem:[%s5140 + $0x38] sm:$0xff]
      %v5149 = vld [vmem:[%s5140 + $0x40] sm:$0xff]
      %v5150 = vld [vmem:[%s5140 + $0x48] sm:$0xff]
      %v5151 = vld [vmem:[%s5140 + $0x50] sm:$0xff]
      %v5152 = vld [vmem:[%s5140 + $0x58] sm:$0xff]
      %v5153 = vld [vmem:[%s5140 + $0x60] sm:$0xff]
      %v5154 = vld [vmem:[%s5140 + $0x68] sm:$0xff]
      %v5155 = vld [vmem:[%s5140 + $0x70] sm:$0xff]
      %v5156 = vld [vmem:[%s5140 + $0x78] sm:$0xff]
      %v5157 = vld [vmem:[%s5140 + $0x80] sm:$0xff]
      %v5158 = vld [vmem:[%s5140 + $0x88] sm:$0xff]
      %v5159 = vld [vmem:[%s5140 + $0x90] sm:$0xff]
      %v5160 = vld [vmem:[%s5140 + $0x98] sm:$0xff]
      %v5161 = vld [vmem:[%s5140 + $0xa0] sm:$0xff]
      %v5162 = vld [vmem:[%s5140 + $0xa8] sm:$0xff]
      %v5163 = vld [vmem:[%s5140 + $0xb0] sm:$0xff]
      %v5164 = vld [vmem:[%s5140 + $0xb8] sm:$0xff]
      %v5165 = vld [vmem:[%s5140 + $0xc0] sm:$0xff]
      %v5166 = vld [vmem:[%s5140 + $0xc8] sm:$0xff]
      %v5167 = vld [vmem:[%s5140 + $0xd0] sm:$0xff]
      %v5168 = vld [vmem:[%s5140 + $0xd8] sm:$0xff]
      %v5169 = vld [vmem:[%s5140 + $0xe0] sm:$0xff]
      %v5170 = vld [vmem:[%s5140 + $0xe8] sm:$0xff]
      %v5171 = vld [vmem:[%s5140 + $0xf0] sm:$0xff]
      %v5172 = vld [vmem:[%s5140 + $0xf8] sm:$0xff]
      %v5173 = vld [vmem:[%s5140 + $0x100] sm:$0xff]
      %v5174 = vld [vmem:[%s5140 + $0x108] sm:$0xff]
      %v5175 = vld [vmem:[%s5140 + $0x110] sm:$0xff]
      %v5176 = vld [vmem:[%s5140 + $0x118] sm:$0xff]
      %v5177 = vld [vmem:[%s5140 + $0x120] sm:$0xff]
      %v5178 = vld [vmem:[%s5140 + $0x128] sm:$0xff]
      %v5179 = vld [vmem:[%s5140 + $0x130] sm:$0xff]
      %v5180 = vld [vmem:[%s5140 + $0x138] sm:$0xff]
      %v5181 = vld [vmem:[%s5140 + $0x140] sm:$0xff]
      %v5182 = vld [vmem:[%s5140 + $0x148] sm:$0xff]
      %v5183 = vld [vmem:[%s5140 + $0x150] sm:$0xff]
      %v5184 = vld [vmem:[%s5140 + $0x158] sm:$0xff]
      %v5185 = vld [vmem:[%s5140 + $0x160] sm:$0xff]
      %v5186 = vld [vmem:[%s5140 + $0x168] sm:$0xff]
      %v5187 = vld [vmem:[%s5140 + $0x170] sm:$0xff]
      %v5188 = vld [vmem:[%s5140 + $0x178] sm:$0xff]
      %v5189 = vld [vmem:[%s5140 + $0x180] sm:$0xff]
      %v5190 = vld [vmem:[%s5140 + $0x188] sm:$0xff]
      %v5191 = vld [vmem:[%s5140 + $0x190] sm:$0xff]
      %v5192 = vld [vmem:[%s5140 + $0x198] sm:$0xff]
      %v5193 = vld [vmem:[%s5140 + $0x1a0] sm:$0xff]
      %v5194 = vld [vmem:[%s5140 + $0x1a8] sm:$0xff]
      %v5195 = vld [vmem:[%s5140 + $0x1b0] sm:$0xff]
      %v5196 = vld [vmem:[%s5140 + $0x1b8] sm:$0xff]
      %v5197 = vld [vmem:[%s5140 + $0x1c0] sm:$0xff]
      %v5198 = vld [vmem:[%s5140 + $0x1c8] sm:$0xff]
      %v5199 = vld [vmem:[%s5140 + $0x1d0] sm:$0xff]
      %v5200 = vld [vmem:[%s5140 + $0x1d8] sm:$0xff]
      %v5201 = vld [vmem:[%s5140 + $0x1e0] sm:$0xff]
      %v5202 = vld [vmem:[%s5140 + $0x1e8] sm:$0xff]
      %v5203 = vld [vmem:[%s5140 + $0x1f0] sm:$0xff]
      %v5204 = vld [vmem:[%s5140 + $0x1f8] sm:$0xff]
      %v5205 = vld [vmem:[%s5140 + $0x200] sm:$0xff]
      %v5206 = vld [vmem:[%s5140 + $0x208] sm:$0xff]
      %v5207 = vld [vmem:[%s5140 + $0x210] sm:$0xff]
      %v5208 = vld [vmem:[%s5140 + $0x218] sm:$0xff]
      %v5209 = vld [vmem:[%s5140 + $0x220] sm:$0xff]
      %v5210 = vld [vmem:[%s5140 + $0x228] sm:$0xff]
      %v5211 = vld [vmem:[%s5140 + $0x230] sm:$0xff]
      %v5212 = vld [vmem:[%s5140 + $0x238] sm:$0xff]
      %v5213 = vld [vmem:[%s5140 + $0x240] sm:$0xff]
      %v5214 = vld [vmem:[%s5140 + $0x248] sm:$0xff]
      %v5215 = vld [vmem:[%s5140 + $0x250] sm:$0xff]
      %v5216 = vld [vmem:[%s5140 + $0x258] sm:$0xff]
      %v5217 = vld [vmem:[%s5140 + $0x260] sm:$0xff]
      %v5218 = vld [vmem:[%s5140 + $0x268] sm:$0xff]
      %v5219 = vld [vmem:[%s5140 + $0x270] sm:$0xff]
      %v5220 = vld [vmem:[%s5140 + $0x278] sm:$0xff]
      %v5221 = vld [vmem:[%s5140 + $0x280] sm:$0xff]
      %v5222 = vld [vmem:[%s5140 + $0x288] sm:$0xff]
      %v5223 = vld [vmem:[%s5140 + $0x290] sm:$0xff]
      %v5224 = vld [vmem:[%s5140 + $0x298] sm:$0xff]
      %v5225 = vld [vmem:[%s5140 + $0x2a0] sm:$0xff]
      %v5226 = vld [vmem:[%s5140 + $0x2a8] sm:$0xff]
      %v5227 = vld [vmem:[%s5140 + $0x2b0] sm:$0xff]
      %v5228 = vld [vmem:[%s5140 + $0x2b8] sm:$0xff]
      %v5229 = vld [vmem:[%s5140 + $0x2c0] sm:$0xff]
      %v5230 = vld [vmem:[%s5140 + $0x2c8] sm:$0xff]
      %v5231 = vld [vmem:[%s5140 + $0x2d0] sm:$0xff]
      %v5232 = vld [vmem:[%s5140 + $0x2d8] sm:$0xff]
      %v5233 = vld [vmem:[%s5140 + $0x2e0] sm:$0xff]
      %v5234 = vld [vmem:[%s5140 + $0x2e8] sm:$0xff]
      %v5235 = vld [vmem:[%s5140 + $0x2f0] sm:$0xff]
      %v5236 = vld [vmem:[%s5140 + $0x2f8] sm:$0xff]
      %v5237 = vld [vmem:[%s5140 + $0x300] sm:$0xff]
      %v5238 = vld [vmem:[%s5140 + $0x308] sm:$0xff]
      %v5239 = vld [vmem:[%s5140 + $0x310] sm:$0xff]
      %v5240 = vld [vmem:[%s5140 + $0x318] sm:$0xff]
      %v5241 = vld [vmem:[%s5140 + $0x320] sm:$0xff]
      %v5242 = vld [vmem:[%s5140 + $0x328] sm:$0xff]
      %v5243 = vld [vmem:[%s5140 + $0x330] sm:$0xff]
      %v5244 = vld [vmem:[%s5140 + $0x338] sm:$0xff]
      %v5245 = vld [vmem:[%s5140 + $0x340] sm:$0xff]
      %v5246 = vld [vmem:[%s5140 + $0x348] sm:$0xff]
      %v5247 = vld [vmem:[%s5140 + $0x350] sm:$0xff]
      %v5248 = vld [vmem:[%s5140 + $0x358] sm:$0xff]
      %v5249 = vld [vmem:[%s5140 + $0x360] sm:$0xff]
      %v5250 = vld [vmem:[%s5140 + $0x368] sm:$0xff]
      %v5251 = vld [vmem:[%s5140 + $0x370] sm:$0xff]
      %v5252 = vld [vmem:[%s5140 + $0x378] sm:$0xff]
      %v5253 = vld [vmem:[%s5140 + $0x380] sm:$0xff]
      %v5254 = vld [vmem:[%s5140 + $0x388] sm:$0xff]
      %v5255 = vld [vmem:[%s5140 + $0x390] sm:$0xff]
      %v5256 = vld [vmem:[%s5140 + $0x398] sm:$0xff]
      %v5257 = vld [vmem:[%s5140 + $0x3a0] sm:$0xff]
      %v5258 = vld [vmem:[%s5140 + $0x3a8] sm:$0xff]
      %v5259 = vld [vmem:[%s5140 + $0x3b0] sm:$0xff]
      %v5260 = vld [vmem:[%s5140 + $0x3b8] sm:$0xff]
      %v5261 = vld [vmem:[%s5140 + $0x3c0] sm:$0xff]
      %v5262 = vld [vmem:[%s5140 + $0x3c8] sm:$0xff]
      %v5263 = vld [vmem:[%s5140 + $0x3d0] sm:$0xff]
      %v5264 = vld [vmem:[%s5140 + $0x3d8] sm:$0xff]
      %v5265 = vld [vmem:[%s5140 + $0x3e0] sm:$0xff]
      %v5266 = vld [vmem:[%s5140 + $0x3e8] sm:$0xff]
      %v5267 = vld [vmem:[%s5140 + $0x3f0] sm:$0xff]
      %v5268 = vld [vmem:[%s5140 + $0x3f8] sm:$0xff]
      %v5269 = vld [vmem:[%s5140 + $0x400] sm:$0xff]
      %v5270 = vld [vmem:[%s5140 + $0x408] sm:$0xff]
      %v5271 = vld [vmem:[%s5140 + $0x410] sm:$0xff]
      %v5272 = vld [vmem:[%s5140 + $0x418] sm:$0xff]
      %v5273 = vld [vmem:[%s5140 + $0x420] sm:$0xff]
      %v5274 = vld [vmem:[%s5140 + $0x428] sm:$0xff]
      %v5275 = vld [vmem:[%s5140 + $0x430] sm:$0xff]
      %v5276 = vld [vmem:[%s5140 + $0x438] sm:$0xff]
      %v5277 = vld [vmem:[%s5140 + $0x440] sm:$0xff]
      %v5278 = vld [vmem:[%s5140 + $0x448] sm:$0xff]
      %v5279 = vld [vmem:[%s5140 + $0x450] sm:$0xff]
      %v5280 = vld [vmem:[%s5140 + $0x458] sm:$0xff]
      %v5281 = vld [vmem:[%s5140 + $0x460] sm:$0xff]
      %v5282 = vld [vmem:[%s5140 + $0x468] sm:$0xff]
      %v5283 = vld [vmem:[%s5140 + $0x470] sm:$0xff]
      %v5284 = vld [vmem:[%s5140 + $0x478] sm:$0xff]
      %v5285 = vld [vmem:[%s5140 + $0x480] sm:$0xff]
      %v5286 = vld [vmem:[%s5140 + $0x488] sm:$0xff]
      %v5287 = vld [vmem:[%s5140 + $0x490] sm:$0xff]
      %v5288 = vld [vmem:[%s5140 + $0x498] sm:$0xff]
      %v5289 = vld [vmem:[%s5140 + $0x4a0] sm:$0xff]
      %v5290 = vld [vmem:[%s5140 + $0x4a8] sm:$0xff]
      %v5291 = vld [vmem:[%s5140 + $0x4b0] sm:$0xff]
      %v5292 = vld [vmem:[%s5140 + $0x4b8] sm:$0xff]
      %v5293 = vld [vmem:[%s5140 + $0x4c0] sm:$0xff]
      %v5294 = vld [vmem:[%s5140 + $0x4c8] sm:$0xff]
      %v5295 = vld [vmem:[%s5140 + $0x4d0] sm:$0xff]
      %v5296 = vld [vmem:[%s5140 + $0x4d8] sm:$0xff]
      %v5297 = vld [vmem:[%s5140 + $0x4e0] sm:$0xff]
      %v5298 = vld [vmem:[%s5140 + $0x4e8] sm:$0xff]
      %v5299 = vld [vmem:[%s5140 + $0x4f0] sm:$0xff]
      %v5300 = vld [vmem:[%s5140 + $0x4f8] sm:$0xff]
      %v5301 = vld [vmem:[%s5140 + $0x500] sm:$0xff]
      %v5302 = vld [vmem:[%s5140 + $0x508] sm:$0xff]
      %v5303 = vld [vmem:[%s5140 + $0x510] sm:$0xff]
      %v5304 = vld [vmem:[%s5140 + $0x518] sm:$0xff]
      %v5305 = vld [vmem:[%s5140 + $0x520] sm:$0xff]
      %v5306 = vld [vmem:[%s5140 + $0x528] sm:$0xff]
      %v5307 = vld [vmem:[%s5140 + $0x530] sm:$0xff]
      %v5308 = vld [vmem:[%s5140 + $0x538] sm:$0xff]
      %v5309 = vld [vmem:[%s5140 + $0x540] sm:$0xff]
      %v5310 = vld [vmem:[%s5140 + $0x548] sm:$0xff]
      %v5311 = vld [vmem:[%s5140 + $0x550] sm:$0xff]
      %v5312 = vld [vmem:[%s5140 + $0x558] sm:$0xff]
      %v5313 = vld [vmem:[%s5140 + $0x560] sm:$0xff]
      %v5314 = vld [vmem:[%s5140 + $0x568] sm:$0xff]
      %v5315 = vld [vmem:[%s5140 + $0x570] sm:$0xff]
      %v5316 = vld [vmem:[%s5140 + $0x578] sm:$0xff]
      %v5317 = vld [vmem:[%s5140 + $0x580] sm:$0xff]
      %v5318 = vld [vmem:[%s5140 + $0x588] sm:$0xff]
      %v5319 = vld [vmem:[%s5140 + $0x590] sm:$0xff]
      %v5320 = vld [vmem:[%s5140 + $0x598] sm:$0xff]
      %v5321 = vld [vmem:[%s5140 + $0x5a0] sm:$0xff]
      %v5322 = vld [vmem:[%s5140 + $0x5a8] sm:$0xff]
      %v5323 = vld [vmem:[%s5140 + $0x5b0] sm:$0xff]
      %v5324 = vld [vmem:[%s5140 + $0x5b8] sm:$0xff]
      %v5325 = vld [vmem:[%s5140 + $0x5c0] sm:$0xff]
      %v5326 = vld [vmem:[%s5140 + $0x5c8] sm:$0xff]
      %v5327 = vld [vmem:[%s5140 + $0x5d0] sm:$0xff]
      %v5328 = vld [vmem:[%s5140 + $0x5d8] sm:$0xff]
      %v5329 = vld [vmem:[%s5140 + $0x5e0] sm:$0xff]
      %v5330 = vld [vmem:[%s5140 + $0x5e8] sm:$0xff]
      %v5331 = vld [vmem:[%s5140 + $0x5f0] sm:$0xff]
      %v5332 = vld [vmem:[%s5140 + $0x5f8] sm:$0xff]
      %v5333 = vld [vmem:[%s5140 + $0x600] sm:$0xff]
      %v5334 = vld [vmem:[%s5140 + $0x608] sm:$0xff]
      %v5335 = vld [vmem:[%s5140 + $0x610] sm:$0xff]
      %v5336 = vld [vmem:[%s5140 + $0x618] sm:$0xff]
      %v5337 = vld [vmem:[%s5140 + $0x620] sm:$0xff]
      %v5338 = vld [vmem:[%s5140 + $0x628] sm:$0xff]
      %v5339 = vld [vmem:[%s5140 + $0x630] sm:$0xff]
      %v5340 = vld [vmem:[%s5140 + $0x638] sm:$0xff]
      %v5341 = vld [vmem:[%s5140 + $0x640] sm:$0xff]
      %v5342 = vld [vmem:[%s5140 + $0x648] sm:$0xff]
      %v5343 = vld [vmem:[%s5140 + $0x650] sm:$0xff]
      %v5344 = vld [vmem:[%s5140 + $0x658] sm:$0xff]
      %v5345 = vld [vmem:[%s5140 + $0x660] sm:$0xff]
      %v5346 = vld [vmem:[%s5140 + $0x668] sm:$0xff]
      %v5347 = vld [vmem:[%s5140 + $0x670] sm:$0xff]
      %v5348 = vld [vmem:[%s5140 + $0x678] sm:$0xff]
      %v5349 = vld [vmem:[%s5140 + $0x680] sm:$0xff]
      %v5350 = vld [vmem:[%s5140 + $0x688] sm:$0xff]
      %v5351 = vld [vmem:[%s5140 + $0x690] sm:$0xff]
      %v5352 = vld [vmem:[%s5140 + $0x698] sm:$0xff]
      %v5353 = vld [vmem:[%s5140 + $0x6a0] sm:$0xff]
      %v5354 = vld [vmem:[%s5140 + $0x6a8] sm:$0xff]
      %v5355 = vld [vmem:[%s5140 + $0x6b0] sm:$0xff]
      %v5356 = vld [vmem:[%s5140 + $0x6b8] sm:$0xff]
      %v5357 = vld [vmem:[%s5140 + $0x6c0] sm:$0xff]
      %v5358 = vld [vmem:[%s5140 + $0x6c8] sm:$0xff]
      %v5359 = vld [vmem:[%s5140 + $0x6d0] sm:$0xff]
      %v5360 = vld [vmem:[%s5140 + $0x6d8] sm:$0xff]
      %v5361 = vld [vmem:[%s5140 + $0x6e0] sm:$0xff]
      %v5362 = vld [vmem:[%s5140 + $0x6e8] sm:$0xff]
      %v5363 = vld [vmem:[%s5140 + $0x6f0] sm:$0xff]
      %v5364 = vld [vmem:[%s5140 + $0x6f8] sm:$0xff]
      %v5365 = vld [vmem:[%s5140 + $0x700] sm:$0xff]
      %v5366 = vld [vmem:[%s5140 + $0x708] sm:$0xff]
      %v5367 = vld [vmem:[%s5140 + $0x710] sm:$0xff]
      %v5368 = vld [vmem:[%s5140 + $0x718] sm:$0xff]
      %v5369 = vld [vmem:[%s5140 + $0x720] sm:$0xff]
      %v5370 = vld [vmem:[%s5140 + $0x728] sm:$0xff]
      %v5371 = vld [vmem:[%s5140 + $0x730] sm:$0xff]
      %v5372 = vld [vmem:[%s5140 + $0x738] sm:$0xff]
      %v5373 = vld [vmem:[%s5140 + $0x740] sm:$0xff]
      %v5374 = vld [vmem:[%s5140 + $0x748] sm:$0xff]
      %v5375 = vld [vmem:[%s5140 + $0x750] sm:$0xff]
      %v5376 = vld [vmem:[%s5140 + $0x758] sm:$0xff]
      %v5377 = vld [vmem:[%s5140 + $0x760] sm:$0xff]
      %v5378 = vld [vmem:[%s5140 + $0x768] sm:$0xff]
      %v5379 = vld [vmem:[%s5140 + $0x770] sm:$0xff]
      %v5380 = vld [vmem:[%s5140 + $0x778] sm:$0xff]
      %v5381 = vld [vmem:[%s5140 + $0x780] sm:$0xff]
      %v5382 = vld [vmem:[%s5140 + $0x788] sm:$0xff]
      %v5383 = vld [vmem:[%s5140 + $0x790] sm:$0xff]
      %v5384 = vld [vmem:[%s5140 + $0x798] sm:$0xff]
      %v5385 = vld [vmem:[%s5140 + $0x7a0] sm:$0xff]
      %v5386 = vld [vmem:[%s5140 + $0x7a8] sm:$0xff]
      %v5387 = vld [vmem:[%s5140 + $0x7b0] sm:$0xff]
      %v5388 = vld [vmem:[%s5140 + $0x7b8] sm:$0xff]
      %v5389 = vld [vmem:[%s5140 + $0x7c0] sm:$0xff]
      %v5390 = vld [vmem:[%s5140 + $0x7c8] sm:$0xff]
      %v5391 = vld [vmem:[%s5140 + $0x7d0] sm:$0xff]
      %v5392 = vld [vmem:[%s5140 + $0x7d8] sm:$0xff]
      %v5393 = vld [vmem:[%s5140 + $0x7e0] sm:$0xff]
      %v5394 = vld [vmem:[%s5140 + $0x7e8] sm:$0xff]
      %v5395 = vld [vmem:[%s5140 + $0x7f0] sm:$0xff]
      %v5396 = vld [vmem:[%s5140 + $0x7f8] sm:$0xff]
      %v5397 = vld [vmem:[%s5140 + $0x800] sm:$0xff]
      %v5398 = vld [vmem:[%s5140 + $0x808] sm:$0xff]
      %v5399 = vld [vmem:[%s5140 + $0x810] sm:$0xff]
      %v5400 = vld [vmem:[%s5140 + $0x818] sm:$0xff]
      %v5401 = vld [vmem:[%s5140 + $0x820] sm:$0xff]
      %v5402 = vld [vmem:[%s5140 + $0x828] sm:$0xff]
      %v5403 = vld [vmem:[%s5140 + $0x830] sm:$0xff]
      %v5404 = vld [vmem:[%s5140 + $0x838] sm:$0xff]
      %v5405 = vld [vmem:[%s5140 + $0x840] sm:$0xff]
      %v5406 = vld [vmem:[%s5140 + $0x848] sm:$0xff]
      %v5407 = vld [vmem:[%s5140 + $0x850] sm:$0xff]
      %v5408 = vld [vmem:[%s5140 + $0x858] sm:$0xff]
      %v5409 = vld [vmem:[%s5140 + $0x860] sm:$0xff]
      %v5410 = vld [vmem:[%s5140 + $0x868] sm:$0xff]
      %v5411 = vld [vmem:[%s5140 + $0x870] sm:$0xff]
      %v5412 = vld [vmem:[%s5140 + $0x878] sm:$0xff]
      %v5413 = vld [vmem:[%s5140 + $0x880] sm:$0xff]
      %v5414 = vld [vmem:[%s5140 + $0x888] sm:$0xff]
      %v5415 = vld [vmem:[%s5140 + $0x890] sm:$0xff]
      %v5416 = vld [vmem:[%s5140 + $0x898] sm:$0xff]
      %v5417 = vld [vmem:[%s5140 + $0x8a0] sm:$0xff]
      %v5418 = vld [vmem:[%s5140 + $0x8a8] sm:$0xff]
      %v5419 = vld [vmem:[%s5140 + $0x8b0] sm:$0xff]
      %v5420 = vld [vmem:[%s5140 + $0x8b8] sm:$0xff]
      %v5421 = vld [vmem:[%s5140 + $0x8c0] sm:$0xff]
      %v5422 = vld [vmem:[%s5140 + $0x8c8] sm:$0xff]
      %v5423 = vld [vmem:[%s5140 + $0x8d0] sm:$0xff]
      %v5424 = vld [vmem:[%s5140 + $0x8d8] sm:$0xff]
      %v5425 = vld [vmem:[%s5140 + $0x8e0] sm:$0xff]
      %v5426 = vld [vmem:[%s5140 + $0x8e8] sm:$0xff]
      %v5427 = vld [vmem:[%s5140 + $0x8f0] sm:$0xff]
      %v5428 = vld [vmem:[%s5140 + $0x8f8] sm:$0xff]
      %v5429 = vld [vmem:[%s5140 + $0x900] sm:$0xff]
      %v5430 = vld [vmem:[%s5140 + $0x908] sm:$0xff]
      %v5431 = vld [vmem:[%s5140 + $0x910] sm:$0xff]
      %v5432 = vld [vmem:[%s5140 + $0x918] sm:$0xff]
      %v5433 = vld [vmem:[%s5140 + $0x920] sm:$0xff]
      %v5434 = vld [vmem:[%s5140 + $0x928] sm:$0xff]
      %v5435 = vld [vmem:[%s5140 + $0x930] sm:$0xff]
      %v5436 = vld [vmem:[%s5140 + $0x938] sm:$0xff]
      %v5437 = vld [vmem:[%s5140 + $0x940] sm:$0xff]
      %v5438 = vld [vmem:[%s5140 + $0x948] sm:$0xff]
      %v5439 = vld [vmem:[%s5140 + $0x950] sm:$0xff]
      %v5440 = vld [vmem:[%s5140 + $0x958] sm:$0xff]
      %v5441 = vld [vmem:[%s5140 + $0x960] sm:$0xff]
      %v5442 = vld [vmem:[%s5140 + $0x968] sm:$0xff]
      %v5443 = vld [vmem:[%s5140 + $0x970] sm:$0xff]
      %v5444 = vld [vmem:[%s5140 + $0x978] sm:$0xff]
      %v5445 = vld [vmem:[%s5140 + $0x980] sm:$0xff]
      %v5446 = vld [vmem:[%s5140 + $0x988] sm:$0xff]
      %v5447 = vld [vmem:[%s5140 + $0x990] sm:$0xff]
      %v5448 = vld [vmem:[%s5140 + $0x998] sm:$0xff]
      %v5449 = vld [vmem:[%s5140 + $0x9a0] sm:$0xff]
      %v5450 = vld [vmem:[%s5140 + $0x9a8] sm:$0xff]
      %v5451 = vld [vmem:[%s5140 + $0x9b0] sm:$0xff]
      %v5452 = vld [vmem:[%s5140 + $0x9b8] sm:$0xff]
      %v5453 = vld [vmem:[%s5140 + $0x9c0] sm:$0xff]
      %v5454 = vld [vmem:[%s5140 + $0x9c8] sm:$0xff]
      %v5455 = vld [vmem:[%s5140 + $0x9d0] sm:$0xff]
      %v5456 = vld [vmem:[%s5140 + $0x9d8] sm:$0xff]
      %v5457 = vld [vmem:[%s5140 + $0x9e0] sm:$0xff]
      %v5458 = vld [vmem:[%s5140 + $0x9e8] sm:$0xff]
      %v5459 = vld [vmem:[%s5140 + $0x9f0] sm:$0xff]
      %v5460 = vld [vmem:[%s5140 + $0x9f8] sm:$0xff]
      %v5461 = vld [vmem:[%s5140 + $0xa00] sm:$0xff]
      %v5462 = vld [vmem:[%s5140 + $0xa08] sm:$0xff]
      %v5463 = vld [vmem:[%s5140 + $0xa10] sm:$0xff]
      %v5464 = vld [vmem:[%s5140 + $0xa18] sm:$0xff]
      %v5465 = vld [vmem:[%s5140 + $0xa20] sm:$0xff]
      %v5466 = vld [vmem:[%s5140 + $0xa28] sm:$0xff]
      %v5467 = vld [vmem:[%s5140 + $0xa30] sm:$0xff]
      %v5468 = vld [vmem:[%s5140 + $0xa38] sm:$0xff]
      %v5469 = vld [vmem:[%s5140 + $0xa40] sm:$0xff]
      %v5470 = vld [vmem:[%s5140 + $0xa48] sm:$0xff]
      %v5471 = vld [vmem:[%s5140 + $0xa50] sm:$0xff]
      %v5472 = vld [vmem:[%s5140 + $0xa58] sm:$0xff]
      %v5473 = vld [vmem:[%s5140 + $0xa60] sm:$0xff]
      %v5474 = vld [vmem:[%s5140 + $0xa68] sm:$0xff]
      %v5475 = vld [vmem:[%s5140 + $0xa70] sm:$0xff]
      %v5476 = vld [vmem:[%s5140 + $0xa78] sm:$0xff]
      %v5477 = vld [vmem:[%s5140 + $0xa80] sm:$0xff]
      %v5478 = vld [vmem:[%s5140 + $0xa88] sm:$0xff]
      %v5479 = vld [vmem:[%s5140 + $0xa90] sm:$0xff]
      %v5480 = vld [vmem:[%s5140 + $0xa98] sm:$0xff]
      %v5481 = vld [vmem:[%s5140 + $0xaa0] sm:$0xff]
      %v5482 = vld [vmem:[%s5140 + $0xaa8] sm:$0xff]
      %v5483 = vld [vmem:[%s5140 + $0xab0] sm:$0xff]
      %v5484 = vld [vmem:[%s5140 + $0xab8] sm:$0xff]
      %v5485 = vld [vmem:[%s5140 + $0xac0] sm:$0xff]
      %v5486 = vld [vmem:[%s5140 + $0xac8] sm:$0xff]
      %v5487 = vld [vmem:[%s5140 + $0xad0] sm:$0xff]
      %v5488 = vld [vmem:[%s5140 + $0xad8] sm:$0xff]
      %v5489 = vld [vmem:[%s5140 + $0xae0] sm:$0xff]
      %v5490 = vld [vmem:[%s5140 + $0xae8] sm:$0xff]
      %v5491 = vld [vmem:[%s5140 + $0xaf0] sm:$0xff]
      %v5492 = vld [vmem:[%s5140 + $0xaf8] sm:$0xff]
      %v5493 = vld [vmem:[%s5140 + $0xb00] sm:$0xff]
      %v5494 = vld [vmem:[%s5140 + $0xb08] sm:$0xff]
      %v5495 = vld [vmem:[%s5140 + $0xb10] sm:$0xff]
      %v5496 = vld [vmem:[%s5140 + $0xb18] sm:$0xff]
      %v5497 = vld [vmem:[%s5140 + $0xb20] sm:$0xff]
      %v5498 = vld [vmem:[%s5140 + $0xb28] sm:$0xff]
      %v5499 = vld [vmem:[%s5140 + $0xb30] sm:$0xff]
      %v5500 = vld [vmem:[%s5140 + $0xb38] sm:$0xff]
      %v5501 = vld [vmem:[%s5140 + $0xb40] sm:$0xff]
      %v5502 = vld [vmem:[%s5140 + $0xb48] sm:$0xff]
      %v5503 = vld [vmem:[%s5140 + $0xb50] sm:$0xff]
      %v5504 = vld [vmem:[%s5140 + $0xb58] sm:$0xff]
      %v5505 = vld [vmem:[%s5140 + $0xb60] sm:$0xff]
      %v5506 = vld [vmem:[%s5140 + $0xb68] sm:$0xff]
      %v5507 = vld [vmem:[%s5140 + $0xb70] sm:$0xff]
      %v5508 = vld [vmem:[%s5140 + $0xb78] sm:$0xff]
      %v5509 = vld [vmem:[%s5140 + $0xb80] sm:$0xff]
      %v5510 = vld [vmem:[%s5140 + $0xb88] sm:$0xff]
      %v5511 = vld [vmem:[%s5140 + $0xb90] sm:$0xff]
      %v5512 = vld [vmem:[%s5140 + $0xb98] sm:$0xff]
      %v5513 = vld [vmem:[%s5140 + $0xba0] sm:$0xff]
      %v5514 = vld [vmem:[%s5140 + $0xba8] sm:$0xff]
      %v5515 = vld [vmem:[%s5140 + $0xbb0] sm:$0xff]
      %v5516 = vld [vmem:[%s5140 + $0xbb8] sm:$0xff]
      %v5517 = vld [vmem:[%s5140 + $0xbc0] sm:$0xff]
      %v5518 = vld [vmem:[%s5140 + $0xbc8] sm:$0xff]
      %v5519 = vld [vmem:[%s5140 + $0xbd0] sm:$0xff]
      %v5520 = vld [vmem:[%s5140 + $0xbd8] sm:$0xff]
      %v5521 = vld [vmem:[%s5140 + $0xbe0] sm:$0xff]
      %v5522 = vld [vmem:[%s5140 + $0xbe8] sm:$0xff]
      %v5523 = vld [vmem:[%s5140 + $0xbf0] sm:$0xff]
      %v5524 = vld [vmem:[%s5140 + $0xbf8] sm:$0xff]
      %v5525 = vld [vmem:[%s5140 + $0xc00] sm:$0xff]
      %v5526 = vld [vmem:[%s5140 + $0xc08] sm:$0xff]
      %v5527 = vld [vmem:[%s5140 + $0xc10] sm:$0xff]
      %v5528 = vld [vmem:[%s5140 + $0xc18] sm:$0xff]
      %v5529 = vld [vmem:[%s5140 + $0xc20] sm:$0xff]
      %v5530 = vld [vmem:[%s5140 + $0xc28] sm:$0xff]
      %v5531 = vld [vmem:[%s5140 + $0xc30] sm:$0xff]
      %v5532 = vld [vmem:[%s5140 + $0xc38] sm:$0xff]
      %v5533 = vld [vmem:[%s5140 + $0xc40] sm:$0xff]
      %v5534 = vld [vmem:[%s5140 + $0xc48] sm:$0xff]
      %v5535 = vld [vmem:[%s5140 + $0xc50] sm:$0xff]
      %v5536 = vld [vmem:[%s5140 + $0xc58] sm:$0xff]
      %v5537 = vld [vmem:[%s5140 + $0xc60] sm:$0xff]
      %v5538 = vld [vmem:[%s5140 + $0xc68] sm:$0xff]
      %v5539 = vld [vmem:[%s5140 + $0xc70] sm:$0xff]
      %v5540 = vld [vmem:[%s5140 + $0xc78] sm:$0xff]
      %v5541 = vld [vmem:[%s5140 + $0xc80] sm:$0xff]
      %v5542 = vld [vmem:[%s5140 + $0xc88] sm:$0xff]
      %v5543 = vld [vmem:[%s5140 + $0xc90] sm:$0xff]
      %v5544 = vld [vmem:[%s5140 + $0xc98] sm:$0xff]
      %v5545 = vld [vmem:[%s5140 + $0xca0] sm:$0xff]
      %v5546 = vld [vmem:[%s5140 + $0xca8] sm:$0xff]
      %v5547 = vld [vmem:[%s5140 + $0xcb0] sm:$0xff]
      %v5548 = vld [vmem:[%s5140 + $0xcb8] sm:$0xff]
      %v5549 = vld [vmem:[%s5140 + $0xcc0] sm:$0xff]
      %v5550 = vld [vmem:[%s5140 + $0xcc8] sm:$0xff]
      %v5551 = vld [vmem:[%s5140 + $0xcd0] sm:$0xff]
      %v5552 = vld [vmem:[%s5140 + $0xcd8] sm:$0xff]
      %v5553 = vld [vmem:[%s5140 + $0xce0] sm:$0xff]
      %v5554 = vld [vmem:[%s5140 + $0xce8] sm:$0xff]
      %v5555 = vld [vmem:[%s5140 + $0xcf0] sm:$0xff]
      %v5556 = vld [vmem:[%s5140 + $0xcf8] sm:$0xff]
      %v5557 = vld [vmem:[%s5140 + $0xd00] sm:$0xff]
      %v5558 = vld [vmem:[%s5140 + $0xd08] sm:$0xff]
      %v5559 = vld [vmem:[%s5140 + $0xd10] sm:$0xff]
      %v5560 = vld [vmem:[%s5140 + $0xd18] sm:$0xff]
      %v5561 = vld [vmem:[%s5140 + $0xd20] sm:$0xff]
      %v5562 = vld [vmem:[%s5140 + $0xd28] sm:$0xff]
      %v5563 = vld [vmem:[%s5140 + $0xd30] sm:$0xff]
      %v5564 = vld [vmem:[%s5140 + $0xd38] sm:$0xff]
      %v5565 = vld [vmem:[%s5140 + $0xd40] sm:$0xff]
      %v5566 = vld [vmem:[%s5140 + $0xd48] sm:$0xff]
      %v5567 = vld [vmem:[%s5140 + $0xd50] sm:$0xff]
      %v5568 = vld [vmem:[%s5140 + $0xd58] sm:$0xff]
      %v5569 = vld [vmem:[%s5140 + $0xd60] sm:$0xff]
      %v5570 = vld [vmem:[%s5140 + $0xd68] sm:$0xff]
      %v5571 = vld [vmem:[%s5140 + $0xd70] sm:$0xff]
      %v5572 = vld [vmem:[%s5140 + $0xd78] sm:$0xff]
      %v5573 = vld [vmem:[%s5140 + $0xd80] sm:$0xff]
      %v5574 = vld [vmem:[%s5140 + $0xd88] sm:$0xff]
      %v5575 = vld [vmem:[%s5140 + $0xd90] sm:$0xff]
      %v5576 = vld [vmem:[%s5140 + $0xd98] sm:$0xff]
      %v5577 = vld [vmem:[%s5140 + $0xda0] sm:$0xff]
      %v5578 = vld [vmem:[%s5140 + $0xda8] sm:$0xff]
      %v5579 = vld [vmem:[%s5140 + $0xdb0] sm:$0xff]
      %v5580 = vld [vmem:[%s5140 + $0xdb8] sm:$0xff]
      %v5581 = vld [vmem:[%s5140 + $0xdc0] sm:$0xff]
      %v5582 = vld [vmem:[%s5140 + $0xdc8] sm:$0xff]
      %v5583 = vld [vmem:[%s5140 + $0xdd0] sm:$0xff]
      %v5584 = vld [vmem:[%s5140 + $0xdd8] sm:$0xff]
      %v5585 = vld [vmem:[%s5140 + $0xde0] sm:$0xff]
      %v5586 = vld [vmem:[%s5140 + $0xde8] sm:$0xff]
      %v5587 = vld [vmem:[%s5140 + $0xdf0] sm:$0xff]
      %v5588 = vld [vmem:[%s5140 + $0xdf8] sm:$0xff]
      %v5589 = vld [vmem:[%s5140 + $0xe00] sm:$0xff]
      %v5590 = vld [vmem:[%s5140 + $0xe08] sm:$0xff]
      %v5591 = vld [vmem:[%s5140 + $0xe10] sm:$0xff]
      %v5592 = vld [vmem:[%s5140 + $0xe18] sm:$0xff]
      %v5593 = vld [vmem:[%s5140 + $0xe20] sm:$0xff]
      %v5594 = vld [vmem:[%s5140 + $0xe28] sm:$0xff]
      %v5595 = vld [vmem:[%s5140 + $0xe30] sm:$0xff]
      %v5596 = vld [vmem:[%s5140 + $0xe38] sm:$0xff]
      %v5597 = vld [vmem:[%s5140 + $0xe40] sm:$0xff]
      %v5598 = vld [vmem:[%s5140 + $0xe48] sm:$0xff]
      %v5599 = vld [vmem:[%s5140 + $0xe50] sm:$0xff]
      %v5600 = vld [vmem:[%s5140 + $0xe58] sm:$0xff]
      %v5601 = vld [vmem:[%s5140 + $0xe60] sm:$0xff]
      %v5602 = vld [vmem:[%s5140 + $0xe68] sm:$0xff]
      %v5603 = vld [vmem:[%s5140 + $0xe70] sm:$0xff]
      %v5604 = vld [vmem:[%s5140 + $0xe78] sm:$0xff]
      %v5605 = vld [vmem:[%s5140 + $0xe80] sm:$0xff]
      %v5606 = vld [vmem:[%s5140 + $0xe88] sm:$0xff]
      %v5607 = vld [vmem:[%s5140 + $0xe90] sm:$0xff]
      %v5608 = vld [vmem:[%s5140 + $0xe98] sm:$0xff]
      %v5609 = vld [vmem:[%s5140 + $0xea0] sm:$0xff]
      %v5610 = vld [vmem:[%s5140 + $0xea8] sm:$0xff]
      %v5611 = vld [vmem:[%s5140 + $0xeb0] sm:$0xff]
      %v5612 = vld [vmem:[%s5140 + $0xeb8] sm:$0xff]
      %v5613 = vld [vmem:[%s5140 + $0xec0] sm:$0xff]
      %v5614 = vld [vmem:[%s5140 + $0xec8] sm:$0xff]
      %v5615 = vld [vmem:[%s5140 + $0xed0] sm:$0xff]
      %v5616 = vld [vmem:[%s5140 + $0xed8] sm:$0xff]
      %v5617 = vld [vmem:[%s5140 + $0xee0] sm:$0xff]
      %v5618 = vld [vmem:[%s5140 + $0xee8] sm:$0xff]
      %v5619 = vld [vmem:[%s5140 + $0xef0] sm:$0xff]
      %v5620 = vld [vmem:[%s5140 + $0xef8] sm:$0xff]
      %v5621 = vld [vmem:[%s5140 + $0xf00] sm:$0xff]
      %v5622 = vld [vmem:[%s5140 + $0xf08] sm:$0xff]
      %v5623 = vld [vmem:[%s5140 + $0xf10] sm:$0xff]
      %v5624 = vld [vmem:[%s5140 + $0xf18] sm:$0xff]
      %v5625 = vld [vmem:[%s5140 + $0xf20] sm:$0xff]
      %v5626 = vld [vmem:[%s5140 + $0xf28] sm:$0xff]
      %v5627 = vld [vmem:[%s5140 + $0xf30] sm:$0xff]
      %v5628 = vld [vmem:[%s5140 + $0xf38] sm:$0xff]
      %v5629 = vld [vmem:[%s5140 + $0xf40] sm:$0xff]
      %v5630 = vld [vmem:[%s5140 + $0xf48] sm:$0xff]
      %v5631 = vld [vmem:[%s5140 + $0xf50] sm:$0xff]
      %v5632 = vld [vmem:[%s5140 + $0xf58] sm:$0xff]
      %v5633 = vld [vmem:[%s5140 + $0xf60] sm:$0xff]
      %v5634 = vld [vmem:[%s5140 + $0xf68] sm:$0xff]
      %v5635 = vld [vmem:[%s5140 + $0xf70] sm:$0xff]
      %v5636 = vld [vmem:[%s5140 + $0xf78] sm:$0xff]
      %v5637 = vld [vmem:[%s5140 + $0xf80] sm:$0xff]
      %v5638 = vld [vmem:[%s5140 + $0xf88] sm:$0xff]
      %v5639 = vld [vmem:[%s5140 + $0xf90] sm:$0xff]
      %v5640 = vld [vmem:[%s5140 + $0xf98] sm:$0xff]
      %v5641 = vld [vmem:[%s5140 + $0xfa0] sm:$0xff]
      %v5642 = vld [vmem:[%s5140 + $0xfa8] sm:$0xff]
      %v5643 = vld [vmem:[%s5140 + $0xfb0] sm:$0xff]
      %v5644 = vld [vmem:[%s5140 + $0xfb8] sm:$0xff]
      %v5645 = vld [vmem:[%s5140 + $0xfc0] sm:$0xff]
      %v5646 = vld [vmem:[%s5140 + $0xfc8] sm:$0xff]
      %v5647 = vld [vmem:[%s5140 + $0xfd0] sm:$0xff]
      %v5648 = vld [vmem:[%s5140 + $0xfd8] sm:$0xff]
      %v5649 = vld [vmem:[%s5140 + $0xfe0] sm:$0xff]
      %v5650 = vld [vmem:[%s5140 + $0xfe8] sm:$0xff]
      %v5651 = vld [vmem:[%s5140 + $0xff0] sm:$0xff]
      %v5652 = vld [vmem:[%s5140 + $0xff8] sm:$0xff]
      %5653 = vmatprep.subr.mxu0 %v5142
      %5654 = vmatpush1.msra.mxu0 %v5141
      %5655 = vmatprep.subr.mxu0 %v5144
      %5656 = vmatpush1.msra.mxu0 %v5143
      %5657 = vmatprep.subr.mxu0 %v5146
      %5658 = vmatpush1.msra.mxu0 %v5145
      %5659 = vmatprep.subr.mxu0 %v5148
      %5660 = vmatpush1.msra.mxu0 %v5147
      %5661 = vmatprep.subr.mxu0 %v5150
      %5662 = vmatpush1.msra.mxu0 %v5149
      %5663 = vmatprep.subr.mxu0 %v5152
      %5664 = vmatpush1.msra.mxu0 %v5151
      %5665 = vmatprep.subr.mxu0 %v5154
      %5666 = vmatpush1.msra.mxu0 %v5153
      %5667 = vmatprep.subr.mxu0 %v5156
      %5668 = vmatpush1.msra.mxu0 %v5155
      %5669 = vmatprep.subr.mxu0 %v5158
      %5670 = vmatpush1.msra.mxu0 %v5157
      %5671 = vmatprep.subr.mxu0 %v5160
      %5672 = vmatpush1.msra.mxu0 %v5159
      %5673 = vmatprep.subr.mxu0 %v5162
      %5674 = vmatpush1.msra.mxu0 %v5161
      %5675 = vmatprep.subr.mxu0 %v5164
      %5676 = vmatpush1.msra.mxu0 %v5163
      %5677 = vmatprep.subr.mxu0 %v5166
      %5678 = vmatpush1.msra.mxu0 %v5165
      %5679 = vmatprep.subr.mxu0 %v5168
      %5680 = vmatpush1.msra.mxu0 %v5167
      %5681 = vmatprep.subr.mxu0 %v5170
      %5682 = vmatpush1.msra.mxu0 %v5169
      %5683 = vmatprep.subr.mxu0 %v5172
      %5684 = vmatpush1.msra.mxu0 %v5171
      %5685 = vmatprep.subr.mxu0 %v5174
      %5686 = vmatpush1.msra.mxu0 %v5173
      %5687 = vmatprep.subr.mxu0 %v5176
      %5688 = vmatpush1.msra.mxu0 %v5175
      %5689 = vmatprep.subr.mxu0 %v5178
      %5690 = vmatpush1.msra.mxu0 %v5177
      %5691 = vmatprep.subr.mxu0 %v5180
      %5692 = vmatpush1.msra.mxu0 %v5179
      %5693 = vmatprep.subr.mxu0 %v5182
      %5694 = vmatpush1.msra.mxu0 %v5181
      %5695 = vmatprep.subr.mxu0 %v5184
      %5696 = vmatpush1.msra.mxu0 %v5183
      %5697 = vmatprep.subr.mxu0 %v5186
      %5698 = vmatpush1.msra.mxu0 %v5185
      %5699 = vmatprep.subr.mxu0 %v5188
      %5700 = vmatpush1.msra.mxu0 %v5187
      %5701 = vmatprep.subr.mxu0 %v5190
      %5702 = vmatpush1.msra.mxu0 %v5189
      %5703 = vmatprep.subr.mxu0 %v5192
      %5704 = vmatpush1.msra.mxu0 %v5191
      %5705 = vmatprep.subr.mxu0 %v5194
      %5706 = vmatpush1.msra.mxu0 %v5193
      %5707 = vmatprep.subr.mxu0 %v5196
      %5708 = vmatpush1.msra.mxu0 %v5195
      %5709 = vmatprep.subr.mxu0 %v5198
      %5710 = vmatpush1.msra.mxu0 %v5197
      %5711 = vmatprep.subr.mxu0 %v5200
      %5712 = vmatpush1.msra.mxu0 %v5199
      %5713 = vmatprep.subr.mxu0 %v5202
      %5714 = vmatpush1.msra.mxu0 %v5201
      %5715 = vmatprep.subr.mxu0 %v5204
      %5716 = vmatpush1.msra.mxu0 %v5203
      %5717 = vmatprep.mubr.f32.mxu0 %v288
      %5718 = vmatmul.mubr.f32.gmra.mrb[0].mxu0 %v287
      %v5719 = vpop.f32.mrb[0].mxu0
      %v5720 = vadd.f32 0.0, %v5719
      %v5721 = vpop.f32.mrb[0].mxu0
      %v5722 = vadd.f32 0.0, %v5721
      %5723 = vmatprep.mubr.f32.mxu0 %v304
      %5724 = vmatmul.mubr.f32.gmra.mrb[0].mxu0 %v303
      %v5725 = vpop.f32.mrb[0].mxu0
      %v5726 = vadd.f32 0.0, %v5725
      %v5727 = vpop.f32.mrb[0].mxu0
      %v5728 = vadd.f32 0.0, %v5727
      %5729 = vdwg.mxu0
      %5730 = vmatprep.subr.mxu0 %v5206
      %5731 = vmatpush1.msra.mxu0 %v5205
      %5732 = vmatprep.subr.mxu0 %v5208
      %5733 = vmatpush1.msra.mxu0 %v5207
      %5734 = vmatprep.subr.mxu0 %v5210
      %5735 = vmatpush1.msra.mxu0 %v5209
      %5736 = vmatprep.subr.mxu0 %v5212
      %5737 = vmatpush1.msra.mxu0 %v5211
      %5738 = vmatprep.subr.mxu0 %v5214
      %5739 = vmatpush1.msra.mxu0 %v5213
      %5740 = vmatprep.subr.mxu0 %v5216
      %5741 = vmatpush1.msra.mxu0 %v5215
      %5742 = vmatprep.subr.mxu0 %v5218
      %5743 = vmatpush1.msra.mxu0 %v5217
      %5744 = vmatprep.subr.mxu0 %v5220
      %5745 = vmatpush1.msra.mxu0 %v5219
      %5746 = vmatprep.subr.mxu0 %v5222
      %5747 = vmatpush1.msra.mxu0 %v5221
      %5748 = vmatprep.subr.mxu0 %v5224
      %5749 = vmatpush1.msra.mxu0 %v5223
      %5750 = vmatprep.subr.mxu0 %v5226
      %5751 = vmatpush1.msra.mxu0 %v5225
      %5752 = vmatprep.subr.mxu0 %v5228
      %5753 = vmatpush1.msra.mxu0 %v5227
      %5754 = vmatprep.subr.mxu0 %v5230
      %5755 = vmatpush1.msra.mxu0 %v5229
      %5756 = vmatprep.subr.mxu0 %v5232
      %5757 = vmatpush1.msra.mxu0 %v5231
      %5758 = vmatprep.subr.mxu0 %v5234
      %5759 = vmatpush1.msra.mxu0 %v5233
      %5760 = vmatprep.subr.mxu0 %v5236
      %5761 = vmatpush1.msra.mxu0 %v5235
      %5762 = vmatprep.subr.mxu0 %v5238
      %5763 = vmatpush1.msra.mxu0 %v5237
      %5764 = vmatprep.subr.mxu0 %v5240
      %5765 = vmatpush1.msra.mxu0 %v5239
      %5766 = vmatprep.subr.mxu0 %v5242
      %5767 = vmatpush1.msra.mxu0 %v5241
      %5768 = vmatprep.subr.mxu0 %v5244
      %5769 = vmatpush1.msra.mxu0 %v5243
      %5770 = vmatprep.subr.mxu0 %v5246
      %5771 = vmatpush1.msra.mxu0 %v5245
      %5772 = vmatprep.subr.mxu0 %v5248
      %5773 = vmatpush1.msra.mxu0 %v5247
      %5774 = vmatprep.subr.mxu0 %v5250
      %5775 = vmatpush1.msra.mxu0 %v5249
      %5776 = vmatprep.subr.mxu0 %v5252
      %5777 = vmatpush1.msra.mxu0 %v5251
      %5778 = vmatprep.subr.mxu0 %v5254
      %5779 = vmatpush1.msra.mxu0 %v5253
      %5780 = vmatprep.subr.mxu0 %v5256
      %5781 = vmatpush1.msra.mxu0 %v5255
      %5782 = vmatprep.subr.mxu0 %v5258
      %5783 = vmatpush1.msra.mxu0 %v5257
      %5784 = vmatprep.subr.mxu0 %v5260
      %5785 = vmatpush1.msra.mxu0 %v5259
      %5786 = vmatprep.subr.mxu0 %v5262
      %5787 = vmatpush1.msra.mxu0 %v5261
      %5788 = vmatprep.subr.mxu0 %v5264
      %5789 = vmatpush1.msra.mxu0 %v5263
      %5790 = vmatprep.subr.mxu0 %v5266
      %5791 = vmatpush1.msra.mxu0 %v5265
      %5792 = vmatprep.subr.mxu0 %v5268
      %5793 = vmatpush1.msra.mxu0 %v5267
      %5794 = vmatprep.mubr.f32.mxu0 %v290
      %5795 = vmatmul.mubr.f32.gmra.mrb[0].mxu0 %v289
      %v5796 = vpop.f32.mrb[0].mxu0
      %v5797 = vadd.f32 %v5720, %v5796
      %v5798 = vpop.f32.mrb[0].mxu0
      %v5799 = vadd.f32 %v5722, %v5798
      %5800 = vmatprep.mubr.f32.mxu0 %v306
      %5801 = vmatmul.mubr.f32.gmra.mrb[0].mxu0 %v305
      %v5802 = vpop.f32.mrb[0].mxu0
      %v5803 = vadd.f32 %v5726, %v5802
      %v5804 = vpop.f32.mrb[0].mxu0
      %v5805 = vadd.f32 %v5728, %v5804
      %5806 = vdwg.mxu0
      %5807 = vmatprep.subr.mxu0 %v5270
      %5808 = vmatpush1.msra.mxu0 %v5269
      %5809 = vmatprep.subr.mxu0 %v5272
      %5810 = vmatpush1.msra.mxu0 %v5271
      %5811 = vmatprep.subr.mxu0 %v5274
      %5812 = vmatpush1.msra.mxu0 %v5273
      %5813 = vmatprep.subr.mxu0 %v5276
      %5814 = vmatpush1.msra.mxu0 %v5275
      %5815 = vmatprep.subr.mxu0 %v5278
      %5816 = vmatpush1.msra.mxu0 %v5277
      %5817 = vmatprep.subr.mxu0 %v5280
      %5818 = vmatpush1.msra.mxu0 %v5279
      %5819 = vmatprep.subr.mxu0 %v5282
      %5820 = vmatpush1.msra.mxu0 %v5281
      %5821 = vmatprep.subr.mxu0 %v5284
      %5822 = vmatpush1.msra.mxu0 %v5283
      %5823 = vmatprep.subr.mxu0 %v5286
      %5824 = vmatpush1.msra.mxu0 %v5285
      %5825 = vmatprep.subr.mxu0 %v5288
      %5826 = vmatpush1.msra.mxu0 %v5287
      %5827 = vmatprep.subr.mxu0 %v5290
      %5828 = vmatpush1.msra.mxu0 %v5289
      %5829 = vmatprep.subr.mxu0 %v5292
      %5830 = vmatpush1.msra.mxu0 %v5291
      %5831 = vmatprep.subr.mxu0 %v5294
      %5832 = vmatpush1.msra.mxu0 %v5293
      %5833 = vmatprep.subr.mxu0 %v5296
      %5834 = vmatpush1.msra.mxu0 %v5295
      %5835 = vmatprep.subr.mxu0 %v5298
      %5836 = vmatpush1.msra.mxu0 %v5297
      %5837 = vmatprep.subr.mxu0 %v5300
      %5838 = vmatpush1.msra.mxu0 %v5299
      %5839 = vmatprep.subr.mxu0 %v5302
      %5840 = vmatpush1.msra.mxu0 %v5301
      %5841 = vmatprep.subr.mxu0 %v5304
      %5842 = vmatpush1.msra.mxu0 %v5303
      %5843 = vmatprep.subr.mxu0 %v5306
      %5844 = vmatpush1.msra.mxu0 %v5305
      %5845 = vmatprep.subr.mxu0 %v5308
      %5846 = vmatpush1.msra.mxu0 %v5307
      %5847 = vmatprep.subr.mxu0 %v5310
      %5848 = vmatpush1.msra.mxu0 %v5309
      %5849 = vmatprep.subr.mxu0 %v5312
      %5850 = vmatpush1.msra.mxu0 %v5311
      %5851 = vmatprep.subr.mxu0 %v5314
      %5852 = vmatpush1.msra.mxu0 %v5313
      %5853 = vmatprep.subr.mxu0 %v5316
      %5854 = vmatpush1.msra.mxu0 %v5315
      %5855 = vmatprep.subr.mxu0 %v5318
      %5856 = vmatpush1.msra.mxu0 %v5317
      %5857 = vmatprep.subr.mxu0 %v5320
      %5858 = vmatpush1.msra.mxu0 %v5319
      %5859 = vmatprep.subr.mxu0 %v5322
      %5860 = vmatpush1.msra.mxu0 %v5321
      %5861 = vmatprep.subr.mxu0 %v5324
      %5862 = vmatpush1.msra.mxu0 %v5323
      %5863 = vmatprep.subr.mxu0 %v5326
      %5864 = vmatpush1.msra.mxu0 %v5325
      %5865 = vmatprep.subr.mxu0 %v5328
      %5866 = vmatpush1.msra.mxu0 %v5327
      %5867 = vmatprep.subr.mxu0 %v5330
      %5868 = vmatpush1.msra.mxu0 %v5329
      %5869 = vmatprep.subr.mxu0 %v5332
      %5870 = vmatpush1.msra.mxu0 %v5331
      %5871 = vmatprep.mubr.f32.mxu0 %v292
      %5872 = vmatmul.mubr.f32.gmra.mrb[0].mxu0 %v291
      %v5873 = vpop.f32.mrb[0].mxu0
      %v5874 = vadd.f32 %v5797, %v5873
      %v5875 = vpop.f32.mrb[0].mxu0
      %v5876 = vadd.f32 %v5799, %v5875
      %5877 = vmatprep.mubr.f32.mxu0 %v308
      %5878 = vmatmul.mubr.f32.gmra.mrb[0].mxu0 %v307
      %v5879 = vpop.f32.mrb[0].mxu0
      %v5880 = vadd.f32 %v5803, %v5879
      %v5881 = vpop.f32.mrb[0].mxu0
      %v5882 = vadd.f32 %v5805, %v5881
      %5883 = vdwg.mxu0
      %5884 = vmatprep.subr.mxu0 %v5334
      %5885 = vmatpush1.msra.mxu0 %v5333
      %5886 = vmatprep.subr.mxu0 %v5336
      %5887 = vmatpush1.msra.mxu0 %v5335
      %5888 = vmatprep.subr.mxu0 %v5338
      %5889 = vmatpush1.msra.mxu0 %v5337
      %5890 = vmatprep.subr.mxu0 %v5340
      %5891 = vmatpush1.msra.mxu0 %v5339
      %5892 = vmatprep.subr.mxu0 %v5342
      %5893 = vmatpush1.msra.mxu0 %v5341
      %5894 = vmatprep.subr.mxu0 %v5344
      %5895 = vmatpush1.msra.mxu0 %v5343
      %5896 = vmatprep.subr.mxu0 %v5346
      %5897 = vmatpush1.msra.mxu0 %v5345
      %5898 = vmatprep.subr.mxu0 %v5348
      %5899 = vmatpush1.msra.mxu0 %v5347
      %5900 = vmatprep.subr.mxu0 %v5350
      %5901 = vmatpush1.msra.mxu0 %v5349
      %5902 = vmatprep.subr.mxu0 %v5352
      %5903 = vmatpush1.msra.mxu0 %v5351
      %5904 = vmatprep.subr.mxu0 %v5354
      %5905 = vmatpush1.msra.mxu0 %v5353
      %5906 = vmatprep.subr.mxu0 %v5356
      %5907 = vmatpush1.msra.mxu0 %v5355
      %5908 = vmatprep.subr.mxu0 %v5358
      %5909 = vmatpush1.msra.mxu0 %v5357
      %5910 = vmatprep.subr.mxu0 %v5360
      %5911 = vmatpush1.msra.mxu0 %v5359
      %5912 = vmatprep.subr.mxu0 %v5362
      %5913 = vmatpush1.msra.mxu0 %v5361
      %5914 = vmatprep.subr.mxu0 %v5364
      %5915 = vmatpush1.msra.mxu0 %v5363
      %5916 = vmatprep.subr.mxu0 %v5366
      %5917 = vmatpush1.msra.mxu0 %v5365
      %5918 = vmatprep.subr.mxu0 %v5368
      %5919 = vmatpush1.msra.mxu0 %v5367
      %5920 = vmatprep.subr.mxu0 %v5370
      %5921 = vmatpush1.msra.mxu0 %v5369
      %5922 = vmatprep.subr.mxu0 %v5372
      %5923 = vmatpush1.msra.mxu0 %v5371
      %5924 = vmatprep.subr.mxu0 %v5374
      %5925 = vmatpush1.msra.mxu0 %v5373
      %5926 = vmatprep.subr.mxu0 %v5376
      %5927 = vmatpush1.msra.mxu0 %v5375
      %5928 = vmatprep.subr.mxu0 %v5378
      %5929 = vmatpush1.msra.mxu0 %v5377
      %5930 = vmatprep.subr.mxu0 %v5380
      %5931 = vmatpush1.msra.mxu0 %v5379
      %5932 = vmatprep.subr.mxu0 %v5382
      %5933 = vmatpush1.msra.mxu0 %v5381
      %5934 = vmatprep.subr.mxu0 %v5384
      %5935 = vmatpush1.msra.mxu0 %v5383
      %5936 = vmatprep.subr.mxu0 %v5386
      %5937 = vmatpush1.msra.mxu0 %v5385
      %5938 = vmatprep.subr.mxu0 %v5388
      %5939 = vmatpush1.msra.mxu0 %v5387
      %5940 = vmatprep.subr.mxu0 %v5390
      %5941 = vmatpush1.msra.mxu0 %v5389
      %5942 = vmatprep.subr.mxu0 %v5392
      %5943 = vmatpush1.msra.mxu0 %v5391
      %5944 = vmatprep.subr.mxu0 %v5394
      %5945 = vmatpush1.msra.mxu0 %v5393
      %5946 = vmatprep.subr.mxu0 %v5396
      %5947 = vmatpush1.msra.mxu0 %v5395
      %5948 = vmatprep.mubr.f32.mxu0 %v294
      %5949 = vmatmul.mubr.f32.gmra.mrb[0].mxu0 %v293
      %v5950 = vpop.f32.mrb[0].mxu0
      %v5951 = vadd.f32 %v5874, %v5950
      %v5952 = vpop.f32.mrb[0].mxu0
      %v5953 = vadd.f32 %v5876, %v5952
      %5954 = vmatprep.mubr.f32.mxu0 %v310
      %5955 = vmatmul.mubr.f32.gmra.mrb[0].mxu0 %v309
      %v5956 = vpop.f32.mrb[0].mxu0
      %v5957 = vadd.f32 %v5880, %v5956
      %v5958 = vpop.f32.mrb[0].mxu0
      %v5959 = vadd.f32 %v5882, %v5958
      %5960 = vdwg.mxu0
      %5961 = vmatprep.subr.mxu0 %v5398
      %5962 = vmatpush1.msra.mxu0 %v5397
      %5963 = vmatprep.subr.mxu0 %v5400
      %5964 = vmatpush1.msra.mxu0 %v5399
      %5965 = vmatprep.subr.mxu0 %v5402
      %5966 = vmatpush1.msra.mxu0 %v5401
      %5967 = vmatprep.subr.mxu0 %v5404
      %5968 = vmatpush1.msra.mxu0 %v5403
      %5969 = vmatprep.subr.mxu0 %v5406
      %5970 = vmatpush1.msra.mxu0 %v5405
      %5971 = vmatprep.subr.mxu0 %v5408
      %5972 = vmatpush1.msra.mxu0 %v5407
      %5973 = vmatprep.subr.mxu0 %v5410
      %5974 = vmatpush1.msra.mxu0 %v5409
      %5975 = vmatprep.subr.mxu0 %v5412
      %5976 = vmatpush1.msra.mxu0 %v5411
      %5977 = vmatprep.subr.mxu0 %v5414
      %5978 = vmatpush1.msra.mxu0 %v5413
      %5979 = vmatprep.subr.mxu0 %v5416
      %5980 = vmatpush1.msra.mxu0 %v5415
      %5981 = vmatprep.subr.mxu0 %v5418
      %5982 = vmatpush1.msra.mxu0 %v5417
      %5983 = vmatprep.subr.mxu0 %v5420
      %5984 = vmatpush1.msra.mxu0 %v5419
      %5985 = vmatprep.subr.mxu0 %v5422
      %5986 = vmatpush1.msra.mxu0 %v5421
      %5987 = vmatprep.subr.mxu0 %v5424
      %5988 = vmatpush1.msra.mxu0 %v5423
      %5989 = vmatprep.subr.mxu0 %v5426
      %5990 = vmatpush1.msra.mxu0 %v5425
      %5991 = vmatprep.subr.mxu0 %v5428
      %5992 = vmatpush1.msra.mxu0 %v5427
      %5993 = vmatprep.subr.mxu0 %v5430
      %5994 = vmatpush1.msra.mxu0 %v5429
      %5995 = vmatprep.subr.mxu0 %v5432
      %5996 = vmatpush1.msra.mxu0 %v5431
      %5997 = vmatprep.subr.mxu0 %v5434
      %5998 = vmatpush1.msra.mxu0 %v5433
      %5999 = vmatprep.subr.mxu0 %v5436
      %6000 = vmatpush1.msra.mxu0 %v5435
      %6001 = vmatprep.subr.mxu0 %v5438
      %6002 = vmatpush1.msra.mxu0 %v5437
      %6003 = vmatprep.subr.mxu0 %v5440
      %6004 = vmatpush1.msra.mxu0 %v5439
      %6005 = vmatprep.subr.mxu0 %v5442
      %6006 = vmatpush1.msra.mxu0 %v5441
      %6007 = vmatprep.subr.mxu0 %v5444
      %6008 = vmatpush1.msra.mxu0 %v5443
      %6009 = vmatprep.subr.mxu0 %v5446
      %6010 = vmatpush1.msra.mxu0 %v5445
      %6011 = vmatprep.subr.mxu0 %v5448
      %6012 = vmatpush1.msra.mxu0 %v5447
      %6013 = vmatprep.subr.mxu0 %v5450
      %6014 = vmatpush1.msra.mxu0 %v5449
      %6015 = vmatprep.subr.mxu0 %v5452
      %6016 = vmatpush1.msra.mxu0 %v5451
      %6017 = vmatprep.subr.mxu0 %v5454
      %6018 = vmatpush1.msra.mxu0 %v5453
      %6019 = vmatprep.subr.mxu0 %v5456
      %6020 = vmatpush1.msra.mxu0 %v5455
      %6021 = vmatprep.subr.mxu0 %v5458
      %6022 = vmatpush1.msra.mxu0 %v5457
      %6023 = vmatprep.subr.mxu0 %v5460
      %6024 = vmatpush1.msra.mxu0 %v5459
      %6025 = vmatprep.mubr.f32.mxu0 %v296
      %6026 = vmatmul.mubr.f32.gmra.mrb[0].mxu0 %v295
      %v6027 = vpop.f32.mrb[0].mxu0
      %v6028 = vadd.f32 %v5951, %v6027
      %v6029 = vpop.f32.mrb[0].mxu0
      %v6030 = vadd.f32 %v5953, %v6029
      %6031 = vmatprep.mubr.f32.mxu0 %v312
      %6032 = vmatmul.mubr.f32.gmra.mrb[0].mxu0 %v311
      %v6033 = vpop.f32.mrb[0].mxu0
      %v6034 = vadd.f32 %v5957, %v6033
      %v6035 = vpop.f32.mrb[0].mxu0
      %v6036 = vadd.f32 %v5959, %v6035
      %6037 = vdwg.mxu0
      %6038 = vmatprep.subr.mxu0 %v5462
      %6039 = vmatpush1.msra.mxu0 %v5461
      %6040 = vmatprep.subr.mxu0 %v5464
      %6041 = vmatpush1.msra.mxu0 %v5463
      %6042 = vmatprep.subr.mxu0 %v5466
      %6043 = vmatpush1.msra.mxu0 %v5465
      %6044 = vmatprep.subr.mxu0 %v5468
      %6045 = vmatpush1.msra.mxu0 %v5467
      %6046 = vmatprep.subr.mxu0 %v5470
      %6047 = vmatpush1.msra.mxu0 %v5469
      %6048 = vmatprep.subr.mxu0 %v5472
      %6049 = vmatpush1.msra.mxu0 %v5471
      %6050 = vmatprep.subr.mxu0 %v5474
      %6051 = vmatpush1.msra.mxu0 %v5473
      %6052 = vmatprep.subr.mxu0 %v5476
      %6053 = vmatpush1.msra.mxu0 %v5475
      %6054 = vmatprep.subr.mxu0 %v5478
      %6055 = vmatpush1.msra.mxu0 %v5477
      %6056 = vmatprep.subr.mxu0 %v5480
      %6057 = vmatpush1.msra.mxu0 %v5479
      %6058 = vmatprep.subr.mxu0 %v5482
      %6059 = vmatpush1.msra.mxu0 %v5481
      %6060 = vmatprep.subr.mxu0 %v5484
      %6061 = vmatpush1.msra.mxu0 %v5483
      %6062 = vmatprep.subr.mxu0 %v5486
      %6063 = vmatpush1.msra.mxu0 %v5485
      %6064 = vmatprep.subr.mxu0 %v5488
      %6065 = vmatpush1.msra.mxu0 %v5487
      %6066 = vmatprep.subr.mxu0 %v5490
      %6067 = vmatpush1.msra.mxu0 %v5489
      %6068 = vmatprep.subr.mxu0 %v5492
      %6069 = vmatpush1.msra.mxu0 %v5491
      %6070 = vmatprep.subr.mxu0 %v5494
      %6071 = vmatpush1.msra.mxu0 %v5493
      %6072 = vmatprep.subr.mxu0 %v5496
      %6073 = vmatpush1.msra.mxu0 %v5495
      %6074 = vmatprep.subr.mxu0 %v5498
      %6075 = vmatpush1.msra.mxu0 %v5497
      %6076 = vmatprep.subr.mxu0 %v5500
      %6077 = vmatpush1.msra.mxu0 %v5499
      %6078 = vmatprep.subr.mxu0 %v5502
      %6079 = vmatpush1.msra.mxu0 %v5501
      %6080 = vmatprep.subr.mxu0 %v5504
      %6081 = vmatpush1.msra.mxu0 %v5503
      %6082 = vmatprep.subr.mxu0 %v5506
      %6083 = vmatpush1.msra.mxu0 %v5505
      %6084 = vmatprep.subr.mxu0 %v5508
      %6085 = vmatpush1.msra.mxu0 %v5507
      %6086 = vmatprep.subr.mxu0 %v5510
      %6087 = vmatpush1.msra.mxu0 %v5509
      %6088 = vmatprep.subr.mxu0 %v5512
      %6089 = vmatpush1.msra.mxu0 %v5511
      %6090 = vmatprep.subr.mxu0 %v5514
      %6091 = vmatpush1.msra.mxu0 %v5513
      %6092 = vmatprep.subr.mxu0 %v5516
      %6093 = vmatpush1.msra.mxu0 %v5515
      %6094 = vmatprep.subr.mxu0 %v5518
      %6095 = vmatpush1.msra.mxu0 %v5517
      %6096 = vmatprep.subr.mxu0 %v5520
      %6097 = vmatpush1.msra.mxu0 %v5519
      %6098 = vmatprep.subr.mxu0 %v5522
      %6099 = vmatpush1.msra.mxu0 %v5521
      %6100 = vmatprep.subr.mxu0 %v5524
      %6101 = vmatpush1.msra.mxu0 %v5523
      %6102 = vmatprep.mubr.f32.mxu0 %v298
      %6103 = vmatmul.mubr.f32.gmra.mrb[0].mxu0 %v297
      %v6104 = vpop.f32.mrb[0].mxu0
      %v6105 = vadd.f32 %v6028, %v6104
      %v6106 = vpop.f32.mrb[0].mxu0
      %v6107 = vadd.f32 %v6030, %v6106
      %6108 = vmatprep.mubr.f32.mxu0 %v314
      %6109 = vmatmul.mubr.f32.gmra.mrb[0].mxu0 %v313
      %v6110 = vpop.f32.mrb[0].mxu0
      %v6111 = vadd.f32 %v6034, %v6110
      %v6112 = vpop.f32.mrb[0].mxu0
      %v6113 = vadd.f32 %v6036, %v6112
      %6114 = vdwg.mxu0
      %6115 = vmatprep.subr.mxu0 %v5526
      %6116 = vmatpush1.msra.mxu0 %v5525
      %6117 = vmatprep.subr.mxu0 %v5528
      %6118 = vmatpush1.msra.mxu0 %v5527
      %6119 = vmatprep.subr.mxu0 %v5530
      %6120 = vmatpush1.msra.mxu0 %v5529
      %6121 = vmatprep.subr.mxu0 %v5532
      %6122 = vmatpush1.msra.mxu0 %v5531
      %6123 = vmatprep.subr.mxu0 %v5534
      %6124 = vmatpush1.msra.mxu0 %v5533
      %6125 = vmatprep.subr.mxu0 %v5536
      %6126 = vmatpush1.msra.mxu0 %v5535
      %6127 = vmatprep.subr.mxu0 %v5538
      %6128 = vmatpush1.msra.mxu0 %v5537
      %6129 = vmatprep.subr.mxu0 %v5540
      %6130 = vmatpush1.msra.mxu0 %v5539
      %6131 = vmatprep.subr.mxu0 %v5542
      %6132 = vmatpush1.msra.mxu0 %v5541
      %6133 = vmatprep.subr.mxu0 %v5544
      %6134 = vmatpush1.msra.mxu0 %v5543
      %6135 = vmatprep.subr.mxu0 %v5546
      %6136 = vmatpush1.msra.mxu0 %v5545
      %6137 = vmatprep.subr.mxu0 %v5548
      %6138 = vmatpush1.msra.mxu0 %v5547
      %6139 = vmatprep.subr.mxu0 %v5550
      %6140 = vmatpush1.msra.mxu0 %v5549
      %6141 = vmatprep.subr.mxu0 %v5552
      %6142 = vmatpush1.msra.mxu0 %v5551
      %6143 = vmatprep.subr.mxu0 %v5554
      %6144 = vmatpush1.msra.mxu0 %v5553
      %6145 = vmatprep.subr.mxu0 %v5556
      %6146 = vmatpush1.msra.mxu0 %v5555
      %6147 = vmatprep.subr.mxu0 %v5558
      %6148 = vmatpush1.msra.mxu0 %v5557
      %6149 = vmatprep.subr.mxu0 %v5560
      %6150 = vmatpush1.msra.mxu0 %v5559
      %6151 = vmatprep.subr.mxu0 %v5562
      %6152 = vmatpush1.msra.mxu0 %v5561
      %6153 = vmatprep.subr.mxu0 %v5564
      %6154 = vmatpush1.msra.mxu0 %v5563
      %6155 = vmatprep.subr.mxu0 %v5566
      %6156 = vmatpush1.msra.mxu0 %v5565
      %6157 = vmatprep.subr.mxu0 %v5568
      %6158 = vmatpush1.msra.mxu0 %v5567
      %6159 = vmatprep.subr.mxu0 %v5570
      %6160 = vmatpush1.msra.mxu0 %v5569
      %6161 = vmatprep.subr.mxu0 %v5572
      %6162 = vmatpush1.msra.mxu0 %v5571
      %6163 = vmatprep.subr.mxu0 %v5574
      %6164 = vmatpush1.msra.mxu0 %v5573
      %6165 = vmatprep.subr.mxu0 %v5576
      %6166 = vmatpush1.msra.mxu0 %v5575
      %6167 = vmatprep.subr.mxu0 %v5578
      %6168 = vmatpush1.msra.mxu0 %v5577
      %6169 = vmatprep.subr.mxu0 %v5580
      %6170 = vmatpush1.msra.mxu0 %v5579
      %6171 = vmatprep.subr.mxu0 %v5582
      %6172 = vmatpush1.msra.mxu0 %v5581
      %6173 = vmatprep.subr.mxu0 %v5584
      %6174 = vmatpush1.msra.mxu0 %v5583
      %6175 = vmatprep.subr.mxu0 %v5586
      %6176 = vmatpush1.msra.mxu0 %v5585
      %6177 = vmatprep.subr.mxu0 %v5588
      %6178 = vmatpush1.msra.mxu0 %v5587
      %6179 = vmatprep.mubr.f32.mxu0 %v300
      %6180 = vmatmul.mubr.f32.gmra.mrb[0].mxu0 %v299
      %v6181 = vpop.f32.mrb[0].mxu0
      %v6182 = vadd.f32 %v6105, %v6181
      %v6183 = vpop.f32.mrb[0].mxu0
      %v6184 = vadd.f32 %v6107, %v6183
      %6185 = vmatprep.mubr.f32.mxu0 %v316
      %6186 = vmatmul.mubr.f32.gmra.mrb[0].mxu0 %v315
      %v6187 = vpop.f32.mrb[0].mxu0
      %v6188 = vadd.f32 %v6111, %v6187
      %v6189 = vpop.f32.mrb[0].mxu0
      %v6190 = vadd.f32 %v6113, %v6189
      %6191 = vdwg.mxu0
      %6192 = vmatprep.subr.mxu0 %v5590
      %6193 = vmatpush1.msra.mxu0 %v5589
      %6194 = vmatprep.subr.mxu0 %v5592
      %6195 = vmatpush1.msra.mxu0 %v5591
      %6196 = vmatprep.subr.mxu0 %v5594
      %6197 = vmatpush1.msra.mxu0 %v5593
      %6198 = vmatprep.subr.mxu0 %v5596
      %6199 = vmatpush1.msra.mxu0 %v5595
      %6200 = vmatprep.subr.mxu0 %v5598
      %6201 = vmatpush1.msra.mxu0 %v5597
      %6202 = vmatprep.subr.mxu0 %v5600
      %6203 = vmatpush1.msra.mxu0 %v5599
      %6204 = vmatprep.subr.mxu0 %v5602
      %6205 = vmatpush1.msra.mxu0 %v5601
      %6206 = vmatprep.subr.mxu0 %v5604
      %6207 = vmatpush1.msra.mxu0 %v5603
      %6208 = vmatprep.subr.mxu0 %v5606
      %6209 = vmatpush1.msra.mxu0 %v5605
      %6210 = vmatprep.subr.mxu0 %v5608
      %6211 = vmatpush1.msra.mxu0 %v5607
      %6212 = vmatprep.subr.mxu0 %v5610
      %6213 = vmatpush1.msra.mxu0 %v5609
      %6214 = vmatprep.subr.mxu0 %v5612
      %6215 = vmatpush1.msra.mxu0 %v5611
      %6216 = vmatprep.subr.mxu0 %v5614
      %6217 = vmatpush1.msra.mxu0 %v5613
      %6218 = vmatprep.subr.mxu0 %v5616
      %6219 = vmatpush1.msra.mxu0 %v5615
      %6220 = vmatprep.subr.mxu0 %v5618
      %6221 = vmatpush1.msra.mxu0 %v5617
      %6222 = vmatprep.subr.mxu0 %v5620
      %6223 = vmatpush1.msra.mxu0 %v5619
      %6224 = vmatprep.subr.mxu0 %v5622
      %6225 = vmatpush1.msra.mxu0 %v5621
      %6226 = vmatprep.subr.mxu0 %v5624
      %6227 = vmatpush1.msra.mxu0 %v5623
      %6228 = vmatprep.subr.mxu0 %v5626
      %6229 = vmatpush1.msra.mxu0 %v5625
      %6230 = vmatprep.subr.mxu0 %v5628
      %6231 = vmatpush1.msra.mxu0 %v5627
      %6232 = vmatprep.subr.mxu0 %v5630
      %6233 = vmatpush1.msra.mxu0 %v5629
      %6234 = vmatprep.subr.mxu0 %v5632
      %6235 = vmatpush1.msra.mxu0 %v5631
      %6236 = vmatprep.subr.mxu0 %v5634
      %6237 = vmatpush1.msra.mxu0 %v5633
      %6238 = vmatprep.subr.mxu0 %v5636
      %6239 = vmatpush1.msra.mxu0 %v5635
      %6240 = vmatprep.subr.mxu0 %v5638
      %6241 = vmatpush1.msra.mxu0 %v5637
      %6242 = vmatprep.subr.mxu0 %v5640
      %6243 = vmatpush1.msra.mxu0 %v5639
      %6244 = vmatprep.subr.mxu0 %v5642
      %6245 = vmatpush1.msra.mxu0 %v5641
      %6246 = vmatprep.subr.mxu0 %v5644
      %6247 = vmatpush1.msra.mxu0 %v5643
      %6248 = vmatprep.subr.mxu0 %v5646
      %6249 = vmatpush1.msra.mxu0 %v5645
      %6250 = vmatprep.subr.mxu0 %v5648
      %6251 = vmatpush1.msra.mxu0 %v5647
      %6252 = vmatprep.subr.mxu0 %v5650
      %6253 = vmatpush1.msra.mxu0 %v5649
      %6254 = vmatprep.subr.mxu0 %v5652
      %6255 = vmatpush1.msra.mxu0 %v5651
      %6256 = vmatprep.mubr.f32.mxu0 %v302
      %6257 = vmatmul.mubr.f32.gmra.mrb[0].mxu0 %v301
      %v6258 = vpop.f32.mrb[0].mxu0
      %v6259 = vadd.f32 %v6182, %v6258
      %v6260 = vpop.f32.mrb[0].mxu0
      %v6261 = vadd.f32 %v6184, %v6260
      %6262 = vmatprep.mubr.f32.mxu0 %v318
      %6263 = vmatmul.mubr.f32.gmra.mrb[0].mxu0 %v317
      %v6264 = vpop.f32.mrb[0].mxu0
      %v6265 = vadd.f32 %v6188, %v6264
      %v6266 = vpop.f32.mrb[0].mxu0
      %v6267 = vadd.f32 %v6190, %v6266
      %6268 = vdwg.mxu0
      %v6269 = vadd.f32 %v6259, %v1452
      %v6270 = vadd.f32 %v6261, %v1452
      %v6271 = vsel %vm1456, %v6269, 0.0
      %v6272 = vsel %vm1458, %v6270, 0.0
      %v6273 = vadd.f32 %v6271, %v6272
      %6274 = vadd.xlane.f32.xlu0 %v6273
      %v6275 = vpop.xlane.xlu0 %6274
      %v6276 = vmul.f32 %v6275, 0.0051020407
      %v6277 = vmul.f32 %v6269, %v6276
      %v6278 = vmul.f32 %v6270, %v6276
      %v6279 = vsel %vm1456, %v6277, 0.0
      %v6280 = vrot.slane %v6279, 4
      %v6281 = vadd.f32 %v6279, %v6280
      %v6282 = vrot.slane %v6281, 2
      %v6283 = vadd.f32 %v6281, %v6282
      %v6284 = vrot.slane %v6283, 1
      %v6285 = vadd.f32 %v6283, %v6284
      %v6286 = vsel %vm1458, %v6278, 0.0
      %v6287 = vrot.slane %v6286, 4
      %v6288 = vadd.f32 %v6286, %v6287
      %v6289 = vrot.slane %v6288, 2
      %v6290 = vadd.f32 %v6288, %v6289
      %v6291 = vrot.slane %v6290, 1
      %v6292 = vadd.f32 %v6290, %v6291
      %v6293 = vmul.f32 %v6285, 0.25
      %v6294 = vmul.f32 %v6292, 0.25
      %v6295 = vmul.f32 %v6293, %v6265
      %v6296 = vmul.f32 %v6294, %v6267
      %v6299 = vrot.slane %v6295, 4
      %v6300 = vrot.slane %v6296, 4
      %v6303 = vadd.f32 %v6259, %v6299
      %v6304 = vadd.f32 %v6261, %v6300
      %v6305 = vsel %vm1492, %v6303, 0.0
      %v6306 = vsel %vm1494, %v6304, 0.0
      %v6307 = vadd.f32 %v6305, %v6306
      %6308 = vadd.xlane.f32.xlu0 %v6307
      %v6309 = vpop.xlane.xlu0 %6308
      %v6310 = vmul.f32 %v6309, 0.0051020407
      %v6311 = vadd.f32 %v6310, %v1501
      %v6314 = vcombine.low %v6269, %v6270
      %s6316 = scalar_lea.vmem %s273, 32
      %6317 = vst.msk [vmem:[%s6316] sm:$0xff] %vm1508, %v6314
      %v6320 = vcombine.low %v6293, %v6294
      %v6322 = vunpack.c.l.s4 1966171168
      %v6323 = vunpack.c.0.s8 %v6322
      %v6324 = vlaneseq
      %v6325 = vshrl.u32 %v6324, 7
      %v6326 = vsub.s32 %v6323, %v6325
      %v6327 = vrot.slane %v6320, %v6326
      %v6329 = vunpack.c.l.s4 1966171168
      %v6330 = vunpack.c.0.s8 %v6329
      %v6331 = vlaneseq
      %v6332 = vshrl.u32 %v6331, 7
      %v6333 = vsub.s32 %v6330, %v6332
      %v6334 = vrot.slane %v6327, %v6333
      %s6336 = scalar_lea.vmem %s279, 8
      %6337 = vst.msk [vmem:[%s6336] sm:$0x3] %vm1531, %v6334
      %s6338 = scalar_lea.vmem %s285, 32
      %6339 = vst.msk [vmem:[%s6338] sm:$0xf] %vm1533, %v6276
      %6340 = vst.msk [vmem:[%s6338] sm:$0xf0] %vm1535, %v6311
      %s6341 = smul.u32 5, %s18
      %p6342 = scmp.lt.s32.totalorder %s6341, 9
      %s6343 = scalar_select %p6342, %s6341, 9
      %s6344 = smul.addr %s6343, 2
      %s6345 = smul.addr %s6344, 4
      %s6346 = scalar_lea.vmem %s4, %s6345
      %s6347 = smul.u32 5, %s18
      %p6348 = scmp.lt.s32.totalorder %s6347, 9
      %s6349 = scalar_select %p6348, %s6347, 9
      %s6350 = smul.addr %s6349, 2
      %s6351 = scalar_lea.vmem %s5, %s6350
      %s6352 = smul.u32 5, %s18
      %p6353 = scmp.lt.s32.totalorder %s6352, 9
      %s6354 = scalar_select %p6353, %s6352, 9
      %s6355 = smul.addr %s6354, 8
      %s6356 = scalar_lea.vmem %s6, %s6355
      // Predicated region
      $region37: #{_forward_impl.1} parent=35 // pred_check
        %p6357 = pneg %p125
      $region38: #{_forward_impl.1} parent=35 // pred_check_branch
        %6359 = sbr.rel (%p6357) target = $region40
      $region39: #{_forward_impl.1} parent=35 // pred_region
        %s6360 = smul.u32 5, %s18
      $region40: #{_forward_impl.1} parent=35 // pred_fallthru
        _
      // Predicated region
      $region41: #{_forward_impl.1} parent=35 // pred_check
        %p6361 = pneg %p151
      $region42: #{_forward_impl.1} parent=35 // pred_check_branch
        %6363 = sbr.rel (%p6361) target = $region44
      $region43: #{_forward_impl.1} parent=35 // pred_region
        %s6364 = smul.u32 5, %s18
      $region44: #{_forward_impl.1} parent=35 // pred_fallthru
        _
      // Predicated region
      $region45: #{_forward_impl.1} parent=35 // pred_check
        %p6365 = pneg %p177
      $region46: #{_forward_impl.1} parent=35 // pred_check_branch
        %6367 = sbr.rel (%p6365) target = $region48
      $region47: #{_forward_impl.1} parent=35 // pred_region
        %s6368 = smul.u32 5, %s18
      $region48: #{_forward_impl.1} parent=35 // pred_fallthru
        _
    $region36: #{_forward_impl.1} parent=5 // pred_fallthru
      _
    %p6369 = scmp.le.s32.totalorder 2, %s13
    // Predicated region
    $region49: #{_forward_impl.1} parent=5 // pred_check
      %p6370 = pneg %p6369
    $region50: #{_forward_impl.1} parent=5 // pred_check_branch
      %6372 = sbr.rel (%p6370) target = $region52
    $region51: #{_forward_impl.1} parent=5 // pred_region
      %s6373 = ssub.s32 %s13, 2
      // Predicated region
      $region53: #{_forward_impl.1} parent=51 // pred_check
        %p6374 = pneg %p131
      $region54: #{_forward_impl.1} parent=51 // pred_check_branch
        %6376 = sbr.rel (%p6374) target = $region56
      $region55: #{_forward_impl.1} parent=51 // pred_region
        %s6377 = smul.u32 5, %s19
        %p6378 = scmp.lt.s32.totalorder %s6377, 9
        %s6379 = scalar_select %p6378, %s6377, 9
        %s6380 = smul.addr %s6379, 2
        %s6381 = smul.addr %s6380, 4
        %s6382 = scalar_lea.vmem %s4, %s6381
      $region56: #{_forward_impl.1} parent=51 // pred_fallthru
        _
      // Predicated region
      $region57: #{_forward_impl.1} parent=51 // pred_check
        %p6383 = pneg %p157
      $region58: #{_forward_impl.1} parent=51 // pred_check_branch
        %6385 = sbr.rel (%p6383) target = $region60
      $region59: #{_forward_impl.1} parent=51 // pred_region
        %s6386 = smul.u32 5, %s19
        %p6387 = scmp.lt.s32.totalorder %s6386, 9
        %s6388 = scalar_select %p6387, %s6386, 9
        %s6389 = smul.addr %s6388, 2
        %s6390 = scalar_lea.vmem %s5, %s6389
      $region60: #{_forward_impl.1} parent=51 // pred_fallthru
        _
      // Predicated region
      $region61: #{_forward_impl.1} parent=51 // pred_check
        %p6391 = pneg %p183
      $region62: #{_forward_impl.1} parent=51 // pred_check_branch
        %6393 = sbr.rel (%p6391) target = $region64
      $region63: #{_forward_impl.1} parent=51 // pred_region
        %s6394 = smul.u32 5, %s19
        %p6395 = scmp.lt.s32.totalorder %s6394, 9
        %s6396 = scalar_select %p6395, %s6394, 9
        %s6397 = smul.addr %s6396, 8
        %s6398 = scalar_lea.vmem %s6, %s6397
      $region64: #{_forward_impl.1} parent=51 // pred_fallthru
        _
    $region52: #{_forward_impl.1} parent=5 // pred_fallthru
      _
  $region6: #{_forward_impl.1} parent=0 // loop_footer
    %s17 = sadd.s32 1, %s13
  $region7: #{_forward_impl.1} parent=0 // loop_footer_branch
    %12 = sbr.rel target = $region3
  $region8: #{_forward_impl.1} parent=0 // loop_exit
    _

</llo_original>
